<compile_context>
chip_gen: v5e
topology: v5e:2x2
jax: 0.10.0
libtpu: 0.0.40
codegen_flags: <defaults>
</compile_context>

<pallas_src>
import functools
import math

import jax
import jax.numpy as jnp
from jax.experimental import pallas as pl
from jax.experimental.pallas import tpu as pltpu

NEG_INF = -1e30
ENC_ROWS = 128          # encoder_outputs rows kept for the attention bmm (input_len <= 128)


def _round_up(x, m):
    return ((x + m - 1) // m) * m


# ----------------------------------------------------------------------------- kernel
def _gru_combine(gi, gh, h, Hp):
    """PyTorch GRUCell gate combine; gi/gh: (1, 3*Hp) f32 with gate order r, z, n."""
    r = jax.nn.sigmoid(gi[:, :Hp] + gh[:, :Hp])
    z = jax.nn.sigmoid(gi[:, Hp:2 * Hp] + gh[:, Hp:2 * Hp])
    n = jnp.tanh(gi[:, 2 * Hp:] + r * gh[:, 2 * Hp:])
    return (1.0 - z) * n + z * h


def _seq2seq_kernel(enc_tok_ref, dec_tok_ref,
                    enc_emb_ref, enc_wih_ref, enc_whh_ref, enc_bi_ref, enc_bh_ref,
                    dec_emb_ref, wattn_e_ref, wattn_h_ref, battn_ref,
                    wcomb_e_ref, wcomb_a_ref, bcomb_ref,
                    dec_wih_ref, dec_whh_ref, dec_bi_ref, dec_bh_ref,
                    wout_ref, bout_ref,
                    logp_ref, enc_scr,
                    *, Hp, input_len, target_len):
    f32 = jnp.float32
    bf16 = jnp.bfloat16

    # ------------------------------- encoder -------------------------------
    enc_scr[...] = jnp.zeros_like(enc_scr)          # rows >= input_len stay exactly 0

    # token-only path, hoisted & batched over all input tokens
    emb_rows = [enc_emb_ref[pl.ds(enc_tok_ref[t], 1), :] for t in range(input_len)]
    emb_all = jnp.concatenate(emb_rows, axis=0).astype(bf16)            # (L, Hp)
    gi_all = jnp.dot(emb_all, enc_wih_ref[...],
                     preferred_element_type=f32) + enc_bi_ref[...]      # (L, 3Hp)

    h = jnp.zeros((1, Hp), f32)
    for i in range(input_len):                       # serial recurrence: h-path only
        gh = jnp.dot(h.astype(bf16), enc_whh_ref[...],
                     preferred_element_type=f32) + enc_bh_ref[...]
        h = _gru_combine(gi_all[i:i + 1, :], gh, h, Hp)
        enc_scr[pl.ds(i, 1), :] = h                  # encoder_outputs row i (in VMEM)

    enc_mat = enc_scr[...]                           # (ENC_ROWS, Hp), f32

    # --------------------------- decoder (teacher forcing) ---------------------------
    demb_rows = [dec_emb_ref[pl.ds(dec_tok_ref[t], 1), :] for t in range(target_len)]
    demb_all = jnp.concatenate(demb_rows, axis=0).astype(bf16)          # (T, Hp)
    # token-only (h-independent) matmuls, batched once before the recurrence:
    attn_e_all = jnp.dot(demb_all, wattn_e_ref[...],
                         preferred_element_type=f32) + battn_ref[...]   # (T, MLp)
    comb_e_all = jnp.dot(demb_all, wcomb_e_ref[...],
                         preferred_element_type=f32) + bcomb_ref[...]   # (T, Hp)

    logp_rows = []
    for t in range(target_len):
        # attention logits over max_length positions (padded lanes carry -1e30 bias)
        logits = attn_e_all[t:t + 1, :] + jnp.dot(
            h.astype(bf16), wattn_h_ref[...], preferred_element_type=f32)
        m = jnp.max(logits, axis=-1, keepdims=True)
        e = jnp.exp(logits - m)
        attn_w = e / jnp.sum(e, axis=-1, keepdims=True)                 # exact softmax

        # bmm(attn_w, encoder_outputs): rows >= input_len are zero -> truncate exactly
        attn_applied = jnp.dot(attn_w[:, :ENC_ROWS], enc_mat,
                               preferred_element_type=f32)              # (1, Hp)

        # attn_combine([emb, attn_applied]) -> relu
        g = comb_e_all[t:t + 1, :] + jnp.dot(
            attn_applied.astype(bf16), wcomb_a_ref[...], preferred_element_type=f32)
        g = jnp.maximum(g, 0.0)

        # GRU cell (x path cannot be hoisted: g depends on h through attention)
        gi = jnp.dot(g.astype(bf16), dec_wih_ref[...],
                     preferred_element_type=f32) + dec_bi_ref[...]
        gh = jnp.dot(h.astype(bf16), dec_whh_ref[...],
                     preferred_element_type=f32) + dec_bh_ref[...]
        h = _gru_combine(gi, gh, h, Hp)

        # out projection -> log_softmax (padded vocab lanes carry -1e30 bias)
        ol = jnp.dot(h.astype(bf16), wout_ref[...],
                     preferred_element_type=f32) + bout_ref[...]
        om = jnp.max(ol, axis=-1, keepdims=True)
        sh = ol - om
        logp_rows.append(sh - jnp.log(jnp.sum(jnp.exp(sh), axis=-1, keepdims=True)))

    logp_ref[...] = jnp.concatenate(logp_rows, axis=0)                  # (T, Vp)


# ----------------------------------------------------------------------------- params
def init_params(key, input_size, hidden_size, max_length):
    """Deterministic synthetic parameters, PyTorch-style shapes / init ranges."""
    V, H, ML = input_size, hidden_size, max_length
    ks = iter(jax.random.split(key, 16))
    bH = 1.0 / math.sqrt(H)
    b2H = 1.0 / math.sqrt(2 * H)

    def unif(shape, bound):
        return jax.random.uniform(next(ks), shape, jnp.float32, -bound, bound)

    return {
        "enc_embedding": jax.random.normal(next(ks), (V, H), jnp.float32),
        "enc_gru": dict(w_ih=unif((3 * H, H), bH), w_hh=unif((3 * H, H), bH),
                        b_ih=unif((3 * H,), bH), b_hh=unif((3 * H,), bH)),
        "dec_embedding": jax.random.normal(next(ks), (V, H), jnp.float32),
        "attn": dict(w=unif((ML, 2 * H), b2H), b=unif((ML,), b2H)),
        "attn_combine": dict(w=unif((H, 2 * H), b2H), b=unif((H,), b2H)),
        "dec_gru": dict(w_ih=unif((3 * H, H), bH), w_hh=unif((3 * H, H), bH),
                        b_ih=unif((3 * H,), bH), b_hh=unif((3 * H,), bH)),
        "out": dict(w=unif((V, H), bH), b=unif((V,), bH)),
    }


def prepare_params(params, hidden_size, max_length):
    """One-time weight re-layout: transpose, split x/h paths, pad to 128 lanes, bf16."""
    H = hidden_size
    Hp = _round_up(H, 128)
    V = params["out"]["w"].shape[0]
    Vp = _round_up(V, 128)
    ML = max_length
    MLp = _round_up(ML, 128)
    f32, bf16 = jnp.float32, jnp.bfloat16

    def pad2(x, rows, cols):
        return jnp.zeros((rows, cols), f32).at[:x.shape[0], :x.shape[1]].set(x)

    # embedding tables: f32 (dynamic per-token row gather), padded lanes zero
    enc_emb = pad2(params["enc_embedding"], V, Hp)
    dec_emb = pad2(params["dec_embedding"], V, Hp)

    # GRUs -> split x-path / h-path weights (Hp, 3Hp), gate order r, z, n
    def prep_gru(gru):
        w_ih, w_hh = gru["w_ih"], gru["w_hh"]          # (3H, H)
        b_ih, b_hh = gru["b_ih"], gru["b_hh"]          # (3H,)
        W_i = jnp.zeros((Hp, 3 * Hp), f32)
        W_h = jnp.zeros((Hp, 3 * Hp), f32)
        b_i = jnp.zeros((1, 3 * Hp), f32)
        b_h = jnp.zeros((1, 3 * Hp), f32)
        for g in range(3):
            W_i = W_i.at[:H, g * Hp:g * Hp + H].set(w_ih[g * H:(g + 1) * H, :].T)
            W_h = W_h.at[:H, g * Hp:g * Hp + H].set(w_hh[g * H:(g + 1) * H, :].T)
            b_i = b_i.at[0, g * Hp:g * Hp + H].set(b_ih[g * H:(g + 1) * H])
            b_h = b_h.at[0, g * Hp:g * Hp + H].set(b_hh[g * H:(g + 1) * H])
        return W_i.astype(bf16), W_h.astype(bf16), b_i, b_h

    enc_wih, enc_whh, enc_bi, enc_bh = prep_gru(params["enc_gru"])
    dec_wih, dec_whh, dec_bi, dec_bh = prep_gru(params["dec_gru"])

    # attn Linear(2H -> ML): split into emb-rows / hidden-rows; padded bias = -1e30
    wa = params["attn"]["w"]                           # (ML, 2H)
    w_attn_e = jnp.zeros((Hp, MLp), f32).at[:H, :ML].set(wa[:, :H].T).astype(bf16)
    w_attn_h = jnp.zeros((Hp, MLp), f32).at[:H, :ML].set(wa[:, H:].T).astype(bf16)
    b_attn = jnp.full((1, MLp), NEG_INF, f32).at[0, :ML].set(params["attn"]["b"])

    # attn_combine Linear(2H -> H): split into emb / attn_applied halves
    wc = params["attn_combine"]["w"]                   # (H, 2H)
    w_comb_e = jnp.zeros((Hp, Hp), f32).at[:H, :H].set(wc[:, :H].T).astype(bf16)
    w_comb_a = jnp.zeros((Hp, Hp), f32).at[:H, :H].set(wc[:, H:].T).astype(bf16)
    b_comb = jnp.zeros((1, Hp), f32).at[0, :H].set(params["attn_combine"]["b"])

    # out Linear(H -> V): padded vocab bias = -1e30 (mask for log_softmax)
    w_out = jnp.zeros((Hp, Vp), f32).at[:H, :V].set(params["out"]["w"].T).astype(bf16)
    b_out = jnp.full((1, Vp), NEG_INF, f32).at[0, :V].set(params["out"]["b"])

    return dict(enc_emb=enc_emb, dec_emb=dec_emb,
                enc_wih=enc_wih, enc_whh=enc_whh, enc_bi=enc_bi, enc_bh=enc_bh,
                dec_wih=dec_wih, dec_whh=dec_whh, dec_bi=dec_bi, dec_bh=dec_bh,
                w_attn_e=w_attn_e, w_attn_h=w_attn_h, b_attn=b_attn,
                w_comb_e=w_comb_e, w_comb_a=w_comb_a, b_comb=b_comb,
                w_out=w_out, b_out=b_out)


# ----------------------------------------------------------------------------- forward
@jax.jit
def seq_to_seq_forward(prepped, input_tokens, target_tokens):
    f32 = jnp.float32
    Hp = prepped["enc_emb"].shape[1]
    Vp = prepped["w_out"].shape[1]
    input_len = input_tokens.shape[0]
    target_len = target_tokens.shape[0]
    assert input_len <= ENC_ROWS    # attention bmm truncation requires this

    # TODO(synk): decoder_input undefined in source; use SOS=0 + always teacher forcing
    dec_inputs = jnp.concatenate(
        [jnp.zeros((1,), jnp.int32), target_tokens[:-1].astype(jnp.int32)])

    weight_keys = ("enc_emb", "enc_wih", "enc_whh", "enc_bi", "enc_bh",
                   "dec_emb", "w_attn_e", "w_attn_h", "b_attn",
                   "w_comb_e", "w_comb_a", "b_comb",
                   "dec_wih", "dec_whh", "dec_bi", "dec_bh",
                   "w_out", "b_out")
    weights = [prepped[k] for k in weight_keys]

    def const(shape):
        return pl.BlockSpec(shape, lambda i, et, dt: (0, 0))

    logp = pl.pallas_call(
        functools.partial(_seq2seq_kernel, Hp=Hp,
                          input_len=input_len, target_len=target_len),
        out_shape=jax.ShapeDtypeStruct((target_len, Vp), f32),
        grid_spec=pltpu.PrefetchScalarGridSpec(
            num_scalar_prefetch=2,                 # encoder tokens, decoder tokens
            grid=(1,),                             # single invocation; loops unrolled in-kernel
            in_specs=[const(w.shape) for w in weights],
            out_specs=const((target_len, Vp)),
            scratch_shapes=[pltpu.VMEM((ENC_ROWS, Hp), f32)]),   # encoder_outputs
        compiler_params=pltpu.CompilerParams(
            dimension_semantics=("arbitrary",),
            vmem_limit_bytes=32 * 1024 * 1024),
    )(input_tokens.astype(jnp.int32), dec_inputs, *weights)

    # (target_len, 1, Vp) padded log-probs; caller slices to the true vocab
    return logp.reshape(target_len, 1, Vp)


# ----------------------------------------------------------------------------- main
if __name__ == "__main__":
    key = jax.random.PRNGKey(0)
    k_params, k_in, k_tgt = jax.random.split(key, 3)

    VOCAB = 64          # input_size == output_size
    HIDDEN = 32
    MAX_LENGTH = 2000   # AttnDecoderRNN default
    INPUT_LEN = 6
    TARGET_LEN = 5

    params = init_params(k_params, VOCAB, HIDDEN, MAX_LENGTH)
    prepped = prepare_params(params, HIDDEN, MAX_LENGTH)   # one-time re-layout / padding
    input_tokens = jax.random.randint(k_in, (INPUT_LEN,), 0, VOCAB, dtype=jnp.int32)
    target_tokens = jax.random.randint(k_tgt, (TARGET_LEN,), 0, VOCAB, dtype=jnp.int32)

    logp_pad = seq_to_seq_forward(prepped, input_tokens, target_tokens)
    logp_pad = jax.block_until_ready(logp_pad)
    decoder_outputs = logp_pad[:, :, :VOCAB]   # drop padded vocab lanes

    assert decoder_outputs.shape == (TARGET_LEN, 1, VOCAB)
    # log_softmax rows must exponentiate-sum to 1 over the true vocabulary
    row_sums = jnp.exp(decoder_outputs).sum(axis=-1)
    assert bool(jnp.all(jnp.abs(row_sums - 1.0) < 1e-3))
    assert bool(jnp.all(jnp.isfinite(decoder_outputs)))

    print("KERNEL_OK")
</pallas_src>

<mosaic_0001>
module attributes {stable_mosaic.version = 11 : i64} {
  func.func @_seq2seq_kernel(%arg0: i32, %arg1: memref<6xi32, #tpu.memory_space<smem>>, %arg2: memref<5xi32, #tpu.memory_space<smem>>, %arg3: memref<64x128xf32, #tpu.memory_space<vmem>>, %arg4: memref<128x384xbf16, #tpu.memory_space<vmem>>, %arg5: memref<128x384xbf16, #tpu.memory_space<vmem>>, %arg6: memref<1x384xf32, #tpu.memory_space<vmem>>, %arg7: memref<1x384xf32, #tpu.memory_space<vmem>>, %arg8: memref<64x128xf32, #tpu.memory_space<vmem>>, %arg9: memref<128x2048xbf16, #tpu.memory_space<vmem>>, %arg10: memref<128x2048xbf16, #tpu.memory_space<vmem>>, %arg11: memref<1x2048xf32, #tpu.memory_space<vmem>>, %arg12: memref<128x128xbf16, #tpu.memory_space<vmem>>, %arg13: memref<128x128xbf16, #tpu.memory_space<vmem>>, %arg14: memref<1x128xf32, #tpu.memory_space<vmem>>, %arg15: memref<128x384xbf16, #tpu.memory_space<vmem>>, %arg16: memref<128x384xbf16, #tpu.memory_space<vmem>>, %arg17: memref<1x384xf32, #tpu.memory_space<vmem>>, %arg18: memref<1x384xf32, #tpu.memory_space<vmem>>, %arg19: memref<128x128xbf16, #tpu.memory_space<vmem>>, %arg20: memref<1x128xf32, #tpu.memory_space<vmem>>, %arg21: memref<5x128xf32, #tpu.memory_space<vmem>>, %arg22: memref<128x128xf32, #tpu.memory_space<vmem>>) attributes {dimension_semantics = [#tpu.dimension_semantics<arbitrary>], iteration_bounds = array<i64: 1>, scalar_prefetch = 2 : i64, scratch_operands = 1 : i64, tpu.core_type = #tpu.core_type<tc>, window_params = [{pipeline_mode = #tpu.pipeline_mode<synchronous>, transform_indices = @transform_0, window_bounds = array<i64: 64, 128>}, {pipeline_mode = #tpu.pipeline_mode<synchronous>, transform_indices = @transform_1, window_bounds = array<i64: 128, 384>}, {pipeline_mode = #tpu.pipeline_mode<synchronous>, transform_indices = @transform_2, window_bounds = array<i64: 128, 384>}, {pipeline_mode = #tpu.pipeline_mode<synchronous>, transform_indices = @transform_3, window_bounds = array<i64: 1, 384>}, {pipeline_mode = #tpu.pipeline_mode<synchronous>, transform_indices = @transform_4, window_bounds = array<i64: 1, 384>}, {pipeline_mode = #tpu.pipeline_mode<synchronous>, transform_indices = @transform_5, window_bounds = array<i64: 64, 128>}, {pipeline_mode = #tpu.pipeline_mode<synchronous>, transform_indices = @transform_6, window_bounds = array<i64: 128, 2048>}, {pipeline_mode = #tpu.pipeline_mode<synchronous>, transform_indices = @transform_7, window_bounds = array<i64: 128, 2048>}, {pipeline_mode = #tpu.pipeline_mode<synchronous>, transform_indices = @transform_8, window_bounds = array<i64: 1, 2048>}, {pipeline_mode = #tpu.pipeline_mode<synchronous>, transform_indices = @transform_9, window_bounds = array<i64: 128, 128>}, {pipeline_mode = #tpu.pipeline_mode<synchronous>, transform_indices = @transform_10, window_bounds = array<i64: 128, 128>}, {pipeline_mode = #tpu.pipeline_mode<synchronous>, transform_indices = @transform_11, window_bounds = array<i64: 1, 128>}, {pipeline_mode = #tpu.pipeline_mode<synchronous>, transform_indices = @transform_12, window_bounds = array<i64: 128, 384>}, {pipeline_mode = #tpu.pipeline_mode<synchronous>, transform_indices = @transform_13, window_bounds = array<i64: 128, 384>}, {pipeline_mode = #tpu.pipeline_mode<synchronous>, transform_indices = @transform_14, window_bounds = array<i64: 1, 384>}, {pipeline_mode = #tpu.pipeline_mode<synchronous>, transform_indices = @transform_15, window_bounds = array<i64: 1, 384>}, {pipeline_mode = #tpu.pipeline_mode<synchronous>, transform_indices = @transform_16, window_bounds = array<i64: 128, 128>}, {pipeline_mode = #tpu.pipeline_mode<synchronous>, transform_indices = @transform_17, window_bounds = array<i64: 1, 128>}, {pipeline_mode = #tpu.pipeline_mode<synchronous>, transform_indices = @transform_18, window_bounds = array<i64: 5, 128>}]} {
    %cst = arith.constant 0.000000e+00 : f32
    %0 = vector.broadcast %cst : f32 to vector<128x128xf32>
    %c0 = arith.constant 0 : index
    %c0_0 = arith.constant 0 : index
    %1 = vector.load %arg22[%c0, %c0_0] : memref<128x128xf32, #tpu.memory_space<vmem>>, vector<128x128xf32>
    tpu.vector_store %arg22[%c0, %c0_0], %0 {strides = array<i32>} : memref<128x128xf32, #tpu.memory_space<vmem>>, vector<128x128xf32>,
    %c0_1 = arith.constant 0 : index
    %2 = memref.load %arg1[%c0_1] : memref<6xi32, #tpu.memory_space<smem>>
    %3 = arith.index_cast %2 : i32 to index
    %c0_2 = arith.constant 0 : index
    %4 = vector.load %arg3[%3, %c0_2] : memref<64x128xf32, #tpu.memory_space<vmem>>, vector<1x128xf32>
    %c1 = arith.constant 1 : index
    %5 = memref.load %arg1[%c1] : memref<6xi32, #tpu.memory_space<smem>>
    %6 = arith.index_cast %5 : i32 to index
    %c0_3 = arith.constant 0 : index
    %7 = vector.load %arg3[%6, %c0_3] : memref<64x128xf32, #tpu.memory_space<vmem>>, vector<1x128xf32>
    %c2 = arith.constant 2 : index
    %8 = memref.load %arg1[%c2] : memref<6xi32, #tpu.memory_space<smem>>
    %9 = arith.index_cast %8 : i32 to index
    %c0_4 = arith.constant 0 : index
    %10 = vector.load %arg3[%9, %c0_4] : memref<64x128xf32, #tpu.memory_space<vmem>>, vector<1x128xf32>
    %c3 = arith.constant 3 : index
    %11 = memref.load %arg1[%c3] : memref<6xi32, #tpu.memory_space<smem>>
    %12 = arith.index_cast %11 : i32 to index
    %c0_5 = arith.constant 0 : index
    %13 = vector.load %arg3[%12, %c0_5] : memref<64x128xf32, #tpu.memory_space<vmem>>, vector<1x128xf32>
    %c4 = arith.constant 4 : index
    %14 = memref.load %arg1[%c4] : memref<6xi32, #tpu.memory_space<smem>>
    %15 = arith.index_cast %14 : i32 to index
    %c0_6 = arith.constant 0 : index
    %16 = vector.load %arg3[%15, %c0_6] : memref<64x128xf32, #tpu.memory_space<vmem>>, vector<1x128xf32>
    %c5 = arith.constant 5 : index
    %17 = memref.load %arg1[%c5] : memref<6xi32, #tpu.memory_space<smem>>
    %18 = arith.index_cast %17 : i32 to index
    %c0_7 = arith.constant 0 : index
    %19 = vector.load %arg3[%18, %c0_7] : memref<64x128xf32, #tpu.memory_space<vmem>>, vector<1x128xf32>
    %20 = tpu.concatenate %4, %7, %10, %13, %16, %19 in 0 : vector<1x128xf32>, vector<1x128xf32>, vector<1x128xf32>, vector<1x128xf32>, vector<1x128xf32>, vector<1x128xf32> -> vector<6x128xf32>
    %21 = arith.truncf %20 : vector<6x128xf32> to vector<6x128xbf16>
    %c0_8 = arith.constant 0 : index
    %c0_9 = arith.constant 0 : index
    %22 = vector.load %arg4[%c0_8, %c0_9] : memref<128x384xbf16, #tpu.memory_space<vmem>>, vector<128x384xbf16>
    %cst_10 = arith.constant dense<0.000000e+00> : vector<6x384xf32>
    %23 = tpu.matmul %21, %22, %cst_10 {dimension_numbers = #tpu.dot_dimension_numbers<[1], [0], [0], [1], [0, 0, 1, 1], [], []>} : vector<6x128xbf16>, vector<128x384xbf16>, vector<6x384xf32> -> vector<6x384xf32>
    %c0_11 = arith.constant 0 : index
    %c0_12 = arith.constant 0 : index
    %24 = vector.load %arg6[%c0_11, %c0_12] : memref<1x384xf32, #tpu.memory_space<vmem>>, vector<1x384xf32>
    %25 = vector.broadcast %24 : vector<1x384xf32> to vector<6x384xf32>
    %26 = arith.addf %23, %25 : vector<6x384xf32>
    %cst_13 = arith.constant 0.000000e+00 : f32
    %27 = vector.broadcast %cst_13 : f32 to vector<1x128xf32>
    %28 = arith.truncf %27 : vector<1x128xf32> to vector<1x128xbf16>
    %c0_14 = arith.constant 0 : index
    %c0_15 = arith.constant 0 : index
    %29 = vector.load %arg5[%c0_14, %c0_15] : memref<128x384xbf16, #tpu.memory_space<vmem>>, vector<128x384xbf16>
    %cst_16 = arith.constant dense<0.000000e+00> : vector<1x384xf32>
    %30 = tpu.matmul %28, %29, %cst_16 {dimension_numbers = #tpu.dot_dimension_numbers<[1], [0], [0], [1], [0, 0, 1, 1], [], []>} : vector<1x128xbf16>, vector<128x384xbf16>, vector<1x384xf32> -> vector<1x384xf32>
    %c0_17 = arith.constant 0 : index
    %c0_18 = arith.constant 0 : index
    %31 = vector.load %arg7[%c0_17, %c0_18] : memref<1x384xf32, #tpu.memory_space<vmem>>, vector<1x384xf32>
    %32 = arith.addf %30, %31 : vector<1x384xf32>
    %33 = vector.extract_strided_slice %26 {offsets = [0, 0], sizes = [1, 384], strides = [1, 1]} : vector<6x384xf32> to vector<1x384xf32>
    %34 = vector.extract_strided_slice %33 {offsets = [0, 0], sizes = [1, 128], strides = [1, 1]} : vector<1x384xf32> to vector<1x128xf32>
    %35 = vector.extract_strided_slice %32 {offsets = [0, 0], sizes = [1, 128], strides = [1, 1]} : vector<1x384xf32> to vector<1x128xf32>
    %36 = arith.addf %34, %35 : vector<1x128xf32>
    %37 = arith.negf %36 : vector<1x128xf32>
    %38 = math.exp %37 : vector<1x128xf32>
    %cst_19 = arith.constant 1.000000e+00 : f32
    %39 = vector.broadcast %cst_19 : f32 to vector<1x128xf32>
    %40 = arith.addf %39, %38 : vector<1x128xf32>
    %41 = arith.divf %39, %40 : vector<1x128xf32>
    %42 = vector.extract_strided_slice %33 {offsets = [0, 128], sizes = [1, 128], strides = [1, 1]} : vector<1x384xf32> to vector<1x128xf32>
    %43 = vector.extract_strided_slice %32 {offsets = [0, 128], sizes = [1, 128], strides = [1, 1]} : vector<1x384xf32> to vector<1x128xf32>
    %44 = arith.addf %42, %43 : vector<1x128xf32>
    %45 = arith.negf %44 : vector<1x128xf32>
    %46 = math.exp %45 : vector<1x128xf32>
    %cst_20 = arith.constant 1.000000e+00 : f32
    %47 = vector.broadcast %cst_20 : f32 to vector<1x128xf32>
    %48 = arith.addf %47, %46 : vector<1x128xf32>
    %49 = arith.divf %47, %48 : vector<1x128xf32>
    %50 = vector.extract_strided_slice %33 {offsets = [0, 256], sizes = [1, 128], strides = [1, 1]} : vector<1x384xf32> to vector<1x128xf32>
    %51 = vector.extract_strided_slice %32 {offsets = [0, 256], sizes = [1, 128], strides = [1, 1]} : vector<1x384xf32> to vector<1x128xf32>
    %52 = arith.mulf %41, %51 : vector<1x128xf32>
    %53 = arith.addf %50, %52 : vector<1x128xf32>
    %54 = math.tanh %53 : vector<1x128xf32>
    %cst_21 = arith.constant 1.000000e+00 : f32
    %55 = vector.broadcast %cst_21 : f32 to vector<1x128xf32>
    %56 = arith.subf %55, %49 : vector<1x128xf32>
    %57 = arith.mulf %56, %54 : vector<1x128xf32>
    %58 = arith.mulf %49, %27 : vector<1x128xf32>
    %59 = arith.addf %57, %58 : vector<1x128xf32>
    %c0_22 = arith.constant 0 : index
    %c0_23 = arith.constant 0 : index
    %60 = vector.load %arg22[%c0_22, %c0_23] : memref<128x128xf32, #tpu.memory_space<vmem>>, vector<1x128xf32>
    tpu.vector_store %arg22[%c0_22, %c0_23], %59 {strides = array<i32>} : memref<128x128xf32, #tpu.memory_space<vmem>>, vector<1x128xf32>,
    %61 = arith.truncf %59 : vector<1x128xf32> to vector<1x128xbf16>
    %c0_24 = arith.constant 0 : index
    %c0_25 = arith.constant 0 : index
    %62 = vector.load %arg5[%c0_24, %c0_25] : memref<128x384xbf16, #tpu.memory_space<vmem>>, vector<128x384xbf16>
    %cst_26 = arith.constant dense<0.000000e+00> : vector<1x384xf32>
    %63 = tpu.matmul %61, %62, %cst_26 {dimension_numbers = #tpu.dot_dimension_numbers<[1], [0], [0], [1], [0, 0, 1, 1], [], []>} : vector<1x128xbf16>, vector<128x384xbf16>, vector<1x384xf32> -> vector<1x384xf32>
    %c0_27 = arith.constant 0 : index
    %c0_28 = arith.constant 0 : index
    %64 = vector.load %arg7[%c0_27, %c0_28] : memref<1x384xf32, #tpu.memory_space<vmem>>, vector<1x384xf32>
    %65 = arith.addf %63, %64 : vector<1x384xf32>
    %66 = vector.extract_strided_slice %26 {offsets = [1, 0], sizes = [1, 384], strides = [1, 1]} : vector<6x384xf32> to vector<1x384xf32>
    %67 = vector.extract_strided_slice %66 {offsets = [0, 0], sizes = [1, 128], strides = [1, 1]} : vector<1x384xf32> to vector<1x128xf32>
    %68 = vector.extract_strided_slice %65 {offsets = [0, 0], sizes = [1, 128], strides = [1, 1]} : vector<1x384xf32> to vector<1x128xf32>
    %69 = arith.addf %67, %68 : vector<1x128xf32>
    %70 = arith.negf %69 : vector<1x128xf32>
    %71 = math.exp %70 : vector<1x128xf32>
    %cst_29 = arith.constant 1.000000e+00 : f32
    %72 = vector.broadcast %cst_29 : f32 to vector<1x128xf32>
    %73 = arith.addf %72, %71 : vector<1x128xf32>
    %74 = arith.divf %72, %73 : vector<1x128xf32>
    %75 = vector.extract_strided_slice %66 {offsets = [0, 128], sizes = [1, 128], strides = [1, 1]} : vector<1x384xf32> to vector<1x128xf32>
    %76 = vector.extract_strided_slice %65 {offsets = [0, 128], sizes = [1, 128], strides = [1, 1]} : vector<1x384xf32> to vector<1x128xf32>
    %77 = arith.addf %75, %76 : vector<1x128xf32>
    %78 = arith.negf %77 : vector<1x128xf32>
    %79 = math.exp %78 : vector<1x128xf32>
    %cst_30 = arith.constant 1.000000e+00 : f32
    %80 = vector.broadcast %cst_30 : f32 to vector<1x128xf32>
    %81 = arith.addf %80, %79 : vector<1x128xf32>
    %82 = arith.divf %80, %81 : vector<1x128xf32>
    %83 = vector.extract_strided_slice %66 {offsets = [0, 256], sizes = [1, 128], strides = [1, 1]} : vector<1x384xf32> to vector<1x128xf32>
    %84 = vector.extract_strided_slice %65 {offsets = [0, 256], sizes = [1, 128], strides = [1, 1]} : vector<1x384xf32> to vector<1x128xf32>
    %85 = arith.mulf %74, %84 : vector<1x128xf32>
    %86 = arith.addf %83, %85 : vector<1x128xf32>
    %87 = math.tanh %86 : vector<1x128xf32>
    %cst_31 = arith.constant 1.000000e+00 : f32
    %88 = vector.broadcast %cst_31 : f32 to vector<1x128xf32>
    %89 = arith.subf %88, %82 : vector<1x128xf32>
    %90 = arith.mulf %89, %87 : vector<1x128xf32>
    %91 = arith.mulf %82, %59 : vector<1x128xf32>
    %92 = arith.addf %90, %91 : vector<1x128xf32>
    %c1_32 = arith.constant 1 : index
    %c0_33 = arith.constant 0 : index
    %93 = vector.load %arg22[%c1_32, %c0_33] : memref<128x128xf32, #tpu.memory_space<vmem>>, vector<1x128xf32>
    tpu.vector_store %arg22[%c1_32, %c0_33], %92 {strides = array<i32>} : memref<128x128xf32, #tpu.memory_space<vmem>>, vector<1x128xf32>,
    %94 = arith.truncf %92 : vector<1x128xf32> to vector<1x128xbf16>
    %c0_34 = arith.constant 0 : index
    %c0_35 = arith.constant 0 : index
    %95 = vector.load %arg5[%c0_34, %c0_35] : memref<128x384xbf16, #tpu.memory_space<vmem>>, vector<128x384xbf16>
    %cst_36 = arith.constant dense<0.000000e+00> : vector<1x384xf32>
    %96 = tpu.matmul %94, %95, %cst_36 {dimension_numbers = #tpu.dot_dimension_numbers<[1], [0], [0], [1], [0, 0, 1, 1], [], []>} : vector<1x128xbf16>, vector<128x384xbf16>, vector<1x384xf32> -> vector<1x384xf32>
    %c0_37 = arith.constant 0 : index
    %c0_38 = arith.constant 0 : index
    %97 = vector.load %arg7[%c0_37, %c0_38] : memref<1x384xf32, #tpu.memory_space<vmem>>, vector<1x384xf32>
    %98 = arith.addf %96, %97 : vector<1x384xf32>
    %99 = vector.extract_strided_slice %26 {offsets = [2, 0], sizes = [1, 384], strides = [1, 1]} : vector<6x384xf32> to vector<1x384xf32>
    %100 = vector.extract_strided_slice %99 {offsets = [0, 0], sizes = [1, 128], strides = [1, 1]} : vector<1x384xf32> to vector<1x128xf32>
    %101 = vector.extract_strided_slice %98 {offsets = [0, 0], sizes = [1, 128], strides = [1, 1]} : vector<1x384xf32> to vector<1x128xf32>
    %102 = arith.addf %100, %101 : vector<1x128xf32>
    %103 = arith.negf %102 : vector<1x128xf32>
    %104 = math.exp %103 : vector<1x128xf32>
    %cst_39 = arith.constant 1.000000e+00 : f32
    %105 = vector.broadcast %cst_39 : f32 to vector<1x128xf32>
    %106 = arith.addf %105, %104 : vector<1x128xf32>
    %107 = arith.divf %105, %106 : vector<1x128xf32>
    %108 = vector.extract_strided_slice %99 {offsets = [0, 128], sizes = [1, 128], strides = [1, 1]} : vector<1x384xf32> to vector<1x128xf32>
    %109 = vector.extract_strided_slice %98 {offsets = [0, 128], sizes = [1, 128], strides = [1, 1]} : vector<1x384xf32> to vector<1x128xf32>
    %110 = arith.addf %108, %109 : vector<1x128xf32>
    %111 = arith.negf %110 : vector<1x128xf32>
    %112 = math.exp %111 : vector<1x128xf32>
    %cst_40 = arith.constant 1.000000e+00 : f32
    %113 = vector.broadcast %cst_40 : f32 to vector<1x128xf32>
    %114 = arith.addf %113, %112 : vector<1x128xf32>
    %115 = arith.divf %113, %114 : vector<1x128xf32>
    %116 = vector.extract_strided_slice %99 {offsets = [0, 256], sizes = [1, 128], strides = [1, 1]} : vector<1x384xf32> to vector<1x128xf32>
    %117 = vector.extract_strided_slice %98 {offsets = [0, 256], sizes = [1, 128], strides = [1, 1]} : vector<1x384xf32> to vector<1x128xf32>
    %118 = arith.mulf %107, %117 : vector<1x128xf32>
    %119 = arith.addf %116, %118 : vector<1x128xf32>
    %120 = math.tanh %119 : vector<1x128xf32>
    %cst_41 = arith.constant 1.000000e+00 : f32
    %121 = vector.broadcast %cst_41 : f32 to vector<1x128xf32>
    %122 = arith.subf %121, %115 : vector<1x128xf32>
    %123 = arith.mulf %122, %120 : vector<1x128xf32>
    %124 = arith.mulf %115, %92 : vector<1x128xf32>
    %125 = arith.addf %123, %124 : vector<1x128xf32>
    %c2_42 = arith.constant 2 : index
    %c0_43 = arith.constant 0 : index
    %126 = vector.load %arg22[%c2_42, %c0_43] : memref<128x128xf32, #tpu.memory_space<vmem>>, vector<1x128xf32>
    tpu.vector_store %arg22[%c2_42, %c0_43], %125 {strides = array<i32>} : memref<128x128xf32, #tpu.memory_space<vmem>>, vector<1x128xf32>,
    %127 = arith.truncf %125 : vector<1x128xf32> to vector<1x128xbf16>
    %c0_44 = arith.constant 0 : index
    %c0_45 = arith.constant 0 : index
    %128 = vector.load %arg5[%c0_44, %c0_45] : memref<128x384xbf16, #tpu.memory_space<vmem>>, vector<128x384xbf16>
    %cst_46 = arith.constant dense<0.000000e+00> : vector<1x384xf32>
    %129 = tpu.matmul %127, %128, %cst_46 {dimension_numbers = #tpu.dot_dimension_numbers<[1], [0], [0], [1], [0, 0, 1, 1], [], []>} : vector<1x128xbf16>, vector<128x384xbf16>, vector<1x384xf32> -> vector<1x384xf32>
    %c0_47 = arith.constant 0 : index
    %c0_48 = arith.constant 0 : index
    %130 = vector.load %arg7[%c0_47, %c0_48] : memref<1x384xf32, #tpu.memory_space<vmem>>, vector<1x384xf32>
    %131 = arith.addf %129, %130 : vector<1x384xf32>
    %132 = vector.extract_strided_slice %26 {offsets = [3, 0], sizes = [1, 384], strides = [1, 1]} : vector<6x384xf32> to vector<1x384xf32>
    %133 = vector.extract_strided_slice %132 {offsets = [0, 0], sizes = [1, 128], strides = [1, 1]} : vector<1x384xf32> to vector<1x128xf32>
    %134 = vector.extract_strided_slice %131 {offsets = [0, 0], sizes = [1, 128], strides = [1, 1]} : vector<1x384xf32> to vector<1x128xf32>
    %135 = arith.addf %133, %134 : vector<1x128xf32>
    %136 = arith.negf %135 : vector<1x128xf32>
    %137 = math.exp %136 : vector<1x128xf32>
    %cst_49 = arith.constant 1.000000e+00 : f32
    %138 = vector.broadcast %cst_49 : f32 to vector<1x128xf32>
    %139 = arith.addf %138, %137 : vector<1x128xf32>
    %140 = arith.divf %138, %139 : vector<1x128xf32>
    %141 = vector.extract_strided_slice %132 {offsets = [0, 128], sizes = [1, 128], strides = [1, 1]} : vector<1x384xf32> to vector<1x128xf32>
    %142 = vector.extract_strided_slice %131 {offsets = [0, 128], sizes = [1, 128], strides = [1, 1]} : vector<1x384xf32> to vector<1x128xf32>
    %143 = arith.addf %141, %142 : vector<1x128xf32>
    %144 = arith.negf %143 : vector<1x128xf32>
    %145 = math.exp %144 : vector<1x128xf32>
    %cst_50 = arith.constant 1.000000e+00 : f32
    %146 = vector.broadcast %cst_50 : f32 to vector<1x128xf32>
    %147 = arith.addf %146, %145 : vector<1x128xf32>
    %148 = arith.divf %146, %147 : vector<1x128xf32>
    %149 = vector.extract_strided_slice %132 {offsets = [0, 256], sizes = [1, 128], strides = [1, 1]} : vector<1x384xf32> to vector<1x128xf32>
    %150 = vector.extract_strided_slice %131 {offsets = [0, 256], sizes = [1, 128], strides = [1, 1]} : vector<1x384xf32> to vector<1x128xf32>
    %151 = arith.mulf %140, %150 : vector<1x128xf32>
    %152 = arith.addf %149, %151 : vector<1x128xf32>
    %153 = math.tanh %152 : vector<1x128xf32>
    %cst_51 = arith.constant 1.000000e+00 : f32
    %154 = vector.broadcast %cst_51 : f32 to vector<1x128xf32>
    %155 = arith.subf %154, %148 : vector<1x128xf32>
    %156 = arith.mulf %155, %153 : vector<1x128xf32>
    %157 = arith.mulf %148, %125 : vector<1x128xf32>
    %158 = arith.addf %156, %157 : vector<1x128xf32>
    %c3_52 = arith.constant 3 : index
    %c0_53 = arith.constant 0 : index
    %159 = vector.load %arg22[%c3_52, %c0_53] : memref<128x128xf32, #tpu.memory_space<vmem>>, vector<1x128xf32>
    tpu.vector_store %arg22[%c3_52, %c0_53], %158 {strides = array<i32>} : memref<128x128xf32, #tpu.memory_space<vmem>>, vector<1x128xf32>,
    %160 = arith.truncf %158 : vector<1x128xf32> to vector<1x128xbf16>
    %c0_54 = arith.constant 0 : index
    %c0_55 = arith.constant 0 : index
    %161 = vector.load %arg5[%c0_54, %c0_55] : memref<128x384xbf16, #tpu.memory_space<vmem>>, vector<128x384xbf16>
    %cst_56 = arith.constant dense<0.000000e+00> : vector<1x384xf32>
    %162 = tpu.matmul %160, %161, %cst_56 {dimension_numbers = #tpu.dot_dimension_numbers<[1], [0], [0], [1], [0, 0, 1, 1], [], []>} : vector<1x128xbf16>, vector<128x384xbf16>, vector<1x384xf32> -> vector<1x384xf32>
    %c0_57 = arith.constant 0 : index
    %c0_58 = arith.constant 0 : index
    %163 = vector.load %arg7[%c0_57, %c0_58] : memref<1x384xf32, #tpu.memory_space<vmem>>, vector<1x384xf32>
    %164 = arith.addf %162, %163 : vector<1x384xf32>
    %165 = vector.extract_strided_slice %26 {offsets = [4, 0], sizes = [1, 384], strides = [1, 1]} : vector<6x384xf32> to vector<1x384xf32>
    %166 = vector.extract_strided_slice %165 {offsets = [0, 0], sizes = [1, 128], strides = [1, 1]} : vector<1x384xf32> to vector<1x128xf32>
    %167 = vector.extract_strided_slice %164 {offsets = [0, 0], sizes = [1, 128], strides = [1, 1]} : vector<1x384xf32> to vector<1x128xf32>
    %168 = arith.addf %166, %167 : vector<1x128xf32>
    %169 = arith.negf %168 : vector<1x128xf32>
    %170 = math.exp %169 : vector<1x128xf32>
    %cst_59 = arith.constant 1.000000e+00 : f32
    %171 = vector.broadcast %cst_59 : f32 to vector<1x128xf32>
    %172 = arith.addf %171, %170 : vector<1x128xf32>
    %173 = arith.divf %171, %172 : vector<1x128xf32>
    %174 = vector.extract_strided_slice %165 {offsets = [0, 128], sizes = [1, 128], strides = [1, 1]} : vector<1x384xf32> to vector<1x128xf32>
    %175 = vector.extract_strided_slice %164 {offsets = [0, 128], sizes = [1, 128], strides = [1, 1]} : vector<1x384xf32> to vector<1x128xf32>
    %176 = arith.addf %174, %175 : vector<1x128xf32>
    %177 = arith.negf %176 : vector<1x128xf32>
    %178 = math.exp %177 : vector<1x128xf32>
    %cst_60 = arith.constant 1.000000e+00 : f32
    %179 = vector.broadcast %cst_60 : f32 to vector<1x128xf32>
    %180 = arith.addf %179, %178 : vector<1x128xf32>
    %181 = arith.divf %179, %180 : vector<1x128xf32>
    %182 = vector.extract_strided_slice %165 {offsets = [0, 256], sizes = [1, 128], strides = [1, 1]} : vector<1x384xf32> to vector<1x128xf32>
    %183 = vector.extract_strided_slice %164 {offsets = [0, 256], sizes = [1, 128], strides = [1, 1]} : vector<1x384xf32> to vector<1x128xf32>
    %184 = arith.mulf %173, %183 : vector<1x128xf32>
    %185 = arith.addf %182, %184 : vector<1x128xf32>
    %186 = math.tanh %185 : vector<1x128xf32>
    %cst_61 = arith.constant 1.000000e+00 : f32
    %187 = vector.broadcast %cst_61 : f32 to vector<1x128xf32>
    %188 = arith.subf %187, %181 : vector<1x128xf32>
    %189 = arith.mulf %188, %186 : vector<1x128xf32>
    %190 = arith.mulf %181, %158 : vector<1x128xf32>
    %191 = arith.addf %189, %190 : vector<1x128xf32>
    %c4_62 = arith.constant 4 : index
    %c0_63 = arith.constant 0 : index
    %192 = vector.load %arg22[%c4_62, %c0_63] : memref<128x128xf32, #tpu.memory_space<vmem>>, vector<1x128xf32>
    tpu.vector_store %arg22[%c4_62, %c0_63], %191 {strides = array<i32>} : memref<128x128xf32, #tpu.memory_space<vmem>>, vector<1x128xf32>,
    %193 = arith.truncf %191 : vector<1x128xf32> to vector<1x128xbf16>
    %c0_64 = arith.constant 0 : index
    %c0_65 = arith.constant 0 : index
    %194 = vector.load %arg5[%c0_64, %c0_65] : memref<128x384xbf16, #tpu.memory_space<vmem>>, vector<128x384xbf16>
    %cst_66 = arith.constant dense<0.000000e+00> : vector<1x384xf32>
    %195 = tpu.matmul %193, %194, %cst_66 {dimension_numbers = #tpu.dot_dimension_numbers<[1], [0], [0], [1], [0, 0, 1, 1], [], []>} : vector<1x128xbf16>, vector<128x384xbf16>, vector<1x384xf32> -> vector<1x384xf32>
    %c0_67 = arith.constant 0 : index
    %c0_68 = arith.constant 0 : index
    %196 = vector.load %arg7[%c0_67, %c0_68] : memref<1x384xf32, #tpu.memory_space<vmem>>, vector<1x384xf32>
    %197 = arith.addf %195, %196 : vector<1x384xf32>
    %198 = vector.extract_strided_slice %26 {offsets = [5, 0], sizes = [1, 384], strides = [1, 1]} : vector<6x384xf32> to vector<1x384xf32>
    %199 = vector.extract_strided_slice %198 {offsets = [0, 0], sizes = [1, 128], strides = [1, 1]} : vector<1x384xf32> to vector<1x128xf32>
    %200 = vector.extract_strided_slice %197 {offsets = [0, 0], sizes = [1, 128], strides = [1, 1]} : vector<1x384xf32> to vector<1x128xf32>
    %201 = arith.addf %199, %200 : vector<1x128xf32>
    %202 = arith.negf %201 : vector<1x128xf32>
    %203 = math.exp %202 : vector<1x128xf32>
    %cst_69 = arith.constant 1.000000e+00 : f32
    %204 = vector.broadcast %cst_69 : f32 to vector<1x128xf32>
    %205 = arith.addf %204, %203 : vector<1x128xf32>
    %206 = arith.divf %204, %205 : vector<1x128xf32>
    %207 = vector.extract_strided_slice %198 {offsets = [0, 128], sizes = [1, 128], strides = [1, 1]} : vector<1x384xf32> to vector<1x128xf32>
    %208 = vector.extract_strided_slice %197 {offsets = [0, 128], sizes = [1, 128], strides = [1, 1]} : vector<1x384xf32> to vector<1x128xf32>
    %209 = arith.addf %207, %208 : vector<1x128xf32>
    %210 = arith.negf %209 : vector<1x128xf32>
    %211 = math.exp %210 : vector<1x128xf32>
    %cst_70 = arith.constant 1.000000e+00 : f32
    %212 = vector.broadcast %cst_70 : f32 to vector<1x128xf32>
    %213 = arith.addf %212, %211 : vector<1x128xf32>
    %214 = arith.divf %212, %213 : vector<1x128xf32>
    %215 = vector.extract_strided_slice %198 {offsets = [0, 256], sizes = [1, 128], strides = [1, 1]} : vector<1x384xf32> to vector<1x128xf32>
    %216 = vector.extract_strided_slice %197 {offsets = [0, 256], sizes = [1, 128], strides = [1, 1]} : vector<1x384xf32> to vector<1x128xf32>
    %217 = arith.mulf %206, %216 : vector<1x128xf32>
    %218 = arith.addf %215, %217 : vector<1x128xf32>
    %219 = math.tanh %218 : vector<1x128xf32>
    %cst_71 = arith.constant 1.000000e+00 : f32
    %220 = vector.broadcast %cst_71 : f32 to vector<1x128xf32>
    %221 = arith.subf %220, %214 : vector<1x128xf32>
    %222 = arith.mulf %221, %219 : vector<1x128xf32>
    %223 = arith.mulf %214, %191 : vector<1x128xf32>
    %224 = arith.addf %222, %223 : vector<1x128xf32>
    %c5_72 = arith.constant 5 : index
    %c0_73 = arith.constant 0 : index
    %225 = vector.load %arg22[%c5_72, %c0_73] : memref<128x128xf32, #tpu.memory_space<vmem>>, vector<1x128xf32>
    tpu.vector_store %arg22[%c5_72, %c0_73], %224 {strides = array<i32>} : memref<128x128xf32, #tpu.memory_space<vmem>>, vector<1x128xf32>,
    %c0_74 = arith.constant 0 : index
    %c0_75 = arith.constant 0 : index
    %226 = vector.load %arg22[%c0_74, %c0_75] : memref<128x128xf32, #tpu.memory_space<vmem>>, vector<128x128xf32>
    %c0_76 = arith.constant 0 : index
    %227 = memref.load %arg2[%c0_76] : memref<5xi32, #tpu.memory_space<smem>>
    %228 = arith.index_cast %227 : i32 to index
    %c0_77 = arith.constant 0 : index
    %229 = vector.load %arg8[%228, %c0_77] : memref<64x128xf32, #tpu.memory_space<vmem>>, vector<1x128xf32>
    %c1_78 = arith.constant 1 : index
    %230 = memref.load %arg2[%c1_78] : memref<5xi32, #tpu.memory_space<smem>>
    %231 = arith.index_cast %230 : i32 to index
    %c0_79 = arith.constant 0 : index
    %232 = vector.load %arg8[%231, %c0_79] : memref<64x128xf32, #tpu.memory_space<vmem>>, vector<1x128xf32>
    %c2_80 = arith.constant 2 : index
    %233 = memref.load %arg2[%c2_80] : memref<5xi32, #tpu.memory_space<smem>>
    %234 = arith.index_cast %233 : i32 to index
    %c0_81 = arith.constant 0 : index
    %235 = vector.load %arg8[%234, %c0_81] : memref<64x128xf32, #tpu.memory_space<vmem>>, vector<1x128xf32>
    %c3_82 = arith.constant 3 : index
    %236 = memref.load %arg2[%c3_82] : memref<5xi32, #tpu.memory_space<smem>>
    %237 = arith.index_cast %236 : i32 to index
    %c0_83 = arith.constant 0 : index
    %238 = vector.load %arg8[%237, %c0_83] : memref<64x128xf32, #tpu.memory_space<vmem>>, vector<1x128xf32>
    %c4_84 = arith.constant 4 : index
    %239 = memref.load %arg2[%c4_84] : memref<5xi32, #tpu.memory_space<smem>>
    %240 = arith.index_cast %239 : i32 to index
    %c0_85 = arith.constant 0 : index
    %241 = vector.load %arg8[%240, %c0_85] : memref<64x128xf32, #tpu.memory_space<vmem>>, vector<1x128xf32>
    %242 = tpu.concatenate %229, %232, %235, %238, %241 in 0 : vector<1x128xf32>, vector<1x128xf32>, vector<1x128xf32>, vector<1x128xf32>, vector<1x128xf32> -> vector<5x128xf32>
    %243 = arith.truncf %242 : vector<5x128xf32> to vector<5x128xbf16>
    %c0_86 = arith.constant 0 : index
    %c0_87 = arith.constant 0 : index
    %244 = vector.load %arg9[%c0_86, %c0_87] : memref<128x2048xbf16, #tpu.memory_space<vmem>>, vector<128x2048xbf16>
    %cst_88 = arith.constant dense<0.000000e+00> : vector<5x2048xf32>
    %245 = tpu.matmul %243, %244, %cst_88 {dimension_numbers = #tpu.dot_dimension_numbers<[1], [0], [0], [1], [0, 0, 1, 1], [], []>} : vector<5x128xbf16>, vector<128x2048xbf16>, vector<5x2048xf32> -> vector<5x2048xf32>
    %c0_89 = arith.constant 0 : index
    %c0_90 = arith.constant 0 : index
    %246 = vector.load %arg11[%c0_89, %c0_90] : memref<1x2048xf32, #tpu.memory_space<vmem>>, vector<1x2048xf32>
    %247 = vector.broadcast %246 : vector<1x2048xf32> to vector<5x2048xf32>
    %248 = arith.addf %245, %247 : vector<5x2048xf32>
    %c0_91 = arith.constant 0 : index
    %c0_92 = arith.constant 0 : index
    %249 = vector.load %arg12[%c0_91, %c0_92] : memref<128x128xbf16, #tpu.memory_space<vmem>>, vector<128x128xbf16>
    %cst_93 = arith.constant dense<0.000000e+00> : vector<5x128xf32>
    %250 = tpu.matmul %243, %249, %cst_93 {dimension_numbers = #tpu.dot_dimension_numbers<[1], [0], [0], [1], [0, 0, 1, 1], [], []>} : vector<5x128xbf16>, vector<128x128xbf16>, vector<5x128xf32> -> vector<5x128xf32>
    %c0_94 = arith.constant 0 : index
    %c0_95 = arith.constant 0 : index
    %251 = vector.load %arg14[%c0_94, %c0_95] : memref<1x128xf32, #tpu.memory_space<vmem>>, vector<1x128xf32>
    %252 = vector.broadcast %251 : vector<1x128xf32> to vector<5x128xf32>
    %253 = arith.addf %250, %252 : vector<5x128xf32>
    %254 = vector.extract_strided_slice %248 {offsets = [0, 0], sizes = [1, 2048], strides = [1, 1]} : vector<5x2048xf32> to vector<1x2048xf32>
    %255 = arith.truncf %224 : vector<1x128xf32> to vector<1x128xbf16>
    %c0_96 = arith.constant 0 : index
    %c0_97 = arith.constant 0 : index
    %256 = vector.load %arg10[%c0_96, %c0_97] : memref<128x2048xbf16, #tpu.memory_space<vmem>>, vector<128x2048xbf16>
    %cst_98 = arith.constant dense<0.000000e+00> : vector<1x2048xf32>
    %257 = tpu.matmul %255, %256, %cst_98 {dimension_numbers = #tpu.dot_dimension_numbers<[1], [0], [0], [1], [0, 0, 1, 1], [], []>} : vector<1x128xbf16>, vector<128x2048xbf16>, vector<1x2048xf32> -> vector<1x2048xf32>
    %258 = arith.addf %254, %257 : vector<1x2048xf32>
    %cst_99 = arith.constant dense<0xFF800000> : vector<1xf32>
    %259 = vector.multi_reduction <maximumf>, %258, %cst_99 [1] : vector<1x2048xf32> to vector<1xf32>
    %260 = vector.shape_cast %259 : vector<1xf32> to vector<1x1xf32>
    %261 = vector.broadcast %260 : vector<1x1xf32> to vector<1x2048xf32>
    %262 = arith.subf %258, %261 : vector<1x2048xf32>
    %263 = math.exp %262 : vector<1x2048xf32>
    %cst_100 = arith.constant dense<0.000000e+00> : vector<1xf32>
    %264 = vector.multi_reduction <add>, %263, %cst_100 [1] : vector<1x2048xf32> to vector<1xf32>
    %265 = vector.shape_cast %264 : vector<1xf32> to vector<1x1xf32>
    %266 = vector.broadcast %265 : vector<1x1xf32> to vector<1x2048xf32>
    %267 = arith.divf %263, %266 : vector<1x2048xf32>
    %268 = vector.extract_strided_slice %267 {offsets = [0, 0], sizes = [1, 128], strides = [1, 1]} : vector<1x2048xf32> to vector<1x128xf32>
    %cst_101 = arith.constant dense<0.000000e+00> : vector<1x128xf32>
    %269 = tpu.matmul %268, %226, %cst_101 {dimension_numbers = #tpu.dot_dimension_numbers<[1], [0], [0], [1], [0, 0, 1, 1], [], []>} : vector<1x128xf32>, vector<128x128xf32>, vector<1x128xf32> -> vector<1x128xf32>
    %270 = vector.extract_strided_slice %253 {offsets = [0, 0], sizes = [1, 128], strides = [1, 1]} : vector<5x128xf32> to vector<1x128xf32>
    %271 = arith.truncf %269 : vector<1x128xf32> to vector<1x128xbf16>
    %c0_102 = arith.constant 0 : index
    %c0_103 = arith.constant 0 : index
    %272 = vector.load %arg13[%c0_102, %c0_103] : memref<128x128xbf16, #tpu.memory_space<vmem>>, vector<128x128xbf16>
    %cst_104 = arith.constant dense<0.000000e+00> : vector<1x128xf32>
    %273 = tpu.matmul %271, %272, %cst_104 {dimension_numbers = #tpu.dot_dimension_numbers<[1], [0], [0], [1], [0, 0, 1, 1], [], []>} : vector<1x128xbf16>, vector<128x128xbf16>, vector<1x128xf32> -> vector<1x128xf32>
    %274 = arith.addf %270, %273 : vector<1x128xf32>
    %cst_105 = arith.constant 0.000000e+00 : f32
    %275 = vector.broadcast %cst_105 : f32 to vector<1x128xf32>
    %276 = arith.maximumf %274, %275 : vector<1x128xf32>
    %277 = arith.truncf %276 : vector<1x128xf32> to vector<1x128xbf16>
    %c0_106 = arith.constant 0 : index
    %c0_107 = arith.constant 0 : index
    %278 = vector.load %arg15[%c0_106, %c0_107] : memref<128x384xbf16, #tpu.memory_space<vmem>>, vector<128x384xbf16>
    %cst_108 = arith.constant dense<0.000000e+00> : vector<1x384xf32>
    %279 = tpu.matmul %277, %278, %cst_108 {dimension_numbers = #tpu.dot_dimension_numbers<[1], [0], [0], [1], [0, 0, 1, 1], [], []>} : vector<1x128xbf16>, vector<128x384xbf16>, vector<1x384xf32> -> vector<1x384xf32>
    %c0_109 = arith.constant 0 : index
    %c0_110 = arith.constant 0 : index
    %280 = vector.load %arg17[%c0_109, %c0_110] : memref<1x384xf32, #tpu.memory_space<vmem>>, vector<1x384xf32>
    %281 = arith.addf %279, %280 : vector<1x384xf32>
    %282 = arith.truncf %224 : vector<1x128xf32> to vector<1x128xbf16>
    %c0_111 = arith.constant 0 : index
    %c0_112 = arith.constant 0 : index
    %283 = vector.load %arg16[%c0_111, %c0_112] : memref<128x384xbf16, #tpu.memory_space<vmem>>, vector<128x384xbf16>
    %cst_113 = arith.constant dense<0.000000e+00> : vector<1x384xf32>
    %284 = tpu.matmul %282, %283, %cst_113 {dimension_numbers = #tpu.dot_dimension_numbers<[1], [0], [0], [1], [0, 0, 1, 1], [], []>} : vector<1x128xbf16>, vector<128x384xbf16>, vector<1x384xf32> -> vector<1x384xf32>
    %c0_114 = arith.constant 0 : index
    %c0_115 = arith.constant 0 : index
    %285 = vector.load %arg18[%c0_114, %c0_115] : memref<1x384xf32, #tpu.memory_space<vmem>>, vector<1x384xf32>
    %286 = arith.addf %284, %285 : vector<1x384xf32>
    %287 = vector.extract_strided_slice %281 {offsets = [0, 0], sizes = [1, 128], strides = [1, 1]} : vector<1x384xf32> to vector<1x128xf32>
    %288 = vector.extract_strided_slice %286 {offsets = [0, 0], sizes = [1, 128], strides = [1, 1]} : vector<1x384xf32> to vector<1x128xf32>
    %289 = arith.addf %287, %288 : vector<1x128xf32>
    %290 = arith.negf %289 : vector<1x128xf32>
    %291 = math.exp %290 : vector<1x128xf32>
    %cst_116 = arith.constant 1.000000e+00 : f32
    %292 = vector.broadcast %cst_116 : f32 to vector<1x128xf32>
    %293 = arith.addf %292, %291 : vector<1x128xf32>
    %294 = arith.divf %292, %293 : vector<1x128xf32>
    %295 = vector.extract_strided_slice %281 {offsets = [0, 128], sizes = [1, 128], strides = [1, 1]} : vector<1x384xf32> to vector<1x128xf32>
    %296 = vector.extract_strided_slice %286 {offsets = [0, 128], sizes = [1, 128], strides = [1, 1]} : vector<1x384xf32> to vector<1x128xf32>
    %297 = arith.addf %295, %296 : vector<1x128xf32>
    %298 = arith.negf %297 : vector<1x128xf32>
    %299 = math.exp %298 : vector<1x128xf32>
    %cst_117 = arith.constant 1.000000e+00 : f32
    %300 = vector.broadcast %cst_117 : f32 to vector<1x128xf32>
    %301 = arith.addf %300, %299 : vector<1x128xf32>
    %302 = arith.divf %300, %301 : vector<1x128xf32>
    %303 = vector.extract_strided_slice %281 {offsets = [0, 256], sizes = [1, 128], strides = [1, 1]} : vector<1x384xf32> to vector<1x128xf32>
    %304 = vector.extract_strided_slice %286 {offsets = [0, 256], sizes = [1, 128], strides = [1, 1]} : vector<1x384xf32> to vector<1x128xf32>
    %305 = arith.mulf %294, %304 : vector<1x128xf32>
    %306 = arith.addf %303, %305 : vector<1x128xf32>
    %307 = math.tanh %306 : vector<1x128xf32>
    %cst_118 = arith.constant 1.000000e+00 : f32
    %308 = vector.broadcast %cst_118 : f32 to vector<1x128xf32>
    %309 = arith.subf %308, %302 : vector<1x128xf32>
    %310 = arith.mulf %309, %307 : vector<1x128xf32>
    %311 = arith.mulf %302, %224 : vector<1x128xf32>
    %312 = arith.addf %310, %311 : vector<1x128xf32>
    %313 = arith.truncf %312 : vector<1x128xf32> to vector<1x128xbf16>
    %c0_119 = arith.constant 0 : index
    %c0_120 = arith.constant 0 : index
    %314 = vector.load %arg19[%c0_119, %c0_120] : memref<128x128xbf16, #tpu.memory_space<vmem>>, vector<128x128xbf16>
    %cst_121 = arith.constant dense<0.000000e+00> : vector<1x128xf32>
    %315 = tpu.matmul %313, %314, %cst_121 {dimension_numbers = #tpu.dot_dimension_numbers<[1], [0], [0], [1], [0, 0, 1, 1], [], []>} : vector<1x128xbf16>, vector<128x128xbf16>, vector<1x128xf32> -> vector<1x128xf32>
    %c0_122 = arith.constant 0 : index
    %c0_123 = arith.constant 0 : index
    %316 = vector.load %arg20[%c0_122, %c0_123] : memref<1x128xf32, #tpu.memory_space<vmem>>, vector<1x128xf32>
    %317 = arith.addf %315, %316 : vector<1x128xf32>
    %cst_124 = arith.constant dense<0xFF800000> : vector<1xf32>
    %318 = vector.multi_reduction <maximumf>, %317, %cst_124 [1] : vector<1x128xf32> to vector<1xf32>
    %319 = vector.shape_cast %318 : vector<1xf32> to vector<1x1xf32>
    %320 = vector.broadcast %319 : vector<1x1xf32> to vector<1x128xf32>
    %321 = arith.subf %317, %320 : vector<1x128xf32>
    %322 = math.exp %321 : vector<1x128xf32>
    %cst_125 = arith.constant dense<0.000000e+00> : vector<1xf32>
    %323 = vector.multi_reduction <add>, %322, %cst_125 [1] : vector<1x128xf32> to vector<1xf32>
    %324 = vector.shape_cast %323 : vector<1xf32> to vector<1x1xf32>
    %325 = math.log %324 : vector<1x1xf32>
    %326 = vector.broadcast %325 : vector<1x1xf32> to vector<1x128xf32>
    %327 = arith.subf %321, %326 : vector<1x128xf32>
    %328 = vector.extract_strided_slice %248 {offsets = [1, 0], sizes = [1, 2048], strides = [1, 1]} : vector<5x2048xf32> to vector<1x2048xf32>
    %329 = arith.truncf %312 : vector<1x128xf32> to vector<1x128xbf16>
    %c0_126 = arith.constant 0 : index
    %c0_127 = arith.constant 0 : index
    %330 = vector.load %arg10[%c0_126, %c0_127] : memref<128x2048xbf16, #tpu.memory_space<vmem>>, vector<128x2048xbf16>
    %cst_128 = arith.constant dense<0.000000e+00> : vector<1x2048xf32>
    %331 = tpu.matmul %329, %330, %cst_128 {dimension_numbers = #tpu.dot_dimension_numbers<[1], [0], [0], [1], [0, 0, 1, 1], [], []>} : vector<1x128xbf16>, vector<128x2048xbf16>, vector<1x2048xf32> -> vector<1x2048xf32>
    %332 = arith.addf %328, %331 : vector<1x2048xf32>
    %cst_129 = arith.constant dense<0xFF800000> : vector<1xf32>
    %333 = vector.multi_reduction <maximumf>, %332, %cst_129 [1] : vector<1x2048xf32> to vector<1xf32>
    %334 = vector.shape_cast %333 : vector<1xf32> to vector<1x1xf32>
    %335 = vector.broadcast %334 : vector<1x1xf32> to vector<1x2048xf32>
    %336 = arith.subf %332, %335 : vector<1x2048xf32>
    %337 = math.exp %336 : vector<1x2048xf32>
    %cst_130 = arith.constant dense<0.000000e+00> : vector<1xf32>
    %338 = vector.multi_reduction <add>, %337, %cst_130 [1] : vector<1x2048xf32> to vector<1xf32>
    %339 = vector.shape_cast %338 : vector<1xf32> to vector<1x1xf32>
    %340 = vector.broadcast %339 : vector<1x1xf32> to vector<1x2048xf32>
    %341 = arith.divf %337, %340 : vector<1x2048xf32>
    %342 = vector.extract_strided_slice %341 {offsets = [0, 0], sizes = [1, 128], strides = [1, 1]} : vector<1x2048xf32> to vector<1x128xf32>
    %cst_131 = arith.constant dense<0.000000e+00> : vector<1x128xf32>
    %343 = tpu.matmul %342, %226, %cst_131 {dimension_numbers = #tpu.dot_dimension_numbers<[1], [0], [0], [1], [0, 0, 1, 1], [], []>} : vector<1x128xf32>, vector<128x128xf32>, vector<1x128xf32> -> vector<1x128xf32>
    %344 = vector.extract_strided_slice %253 {offsets = [1, 0], sizes = [1, 128], strides = [1, 1]} : vector<5x128xf32> to vector<1x128xf32>
    %345 = arith.truncf %343 : vector<1x128xf32> to vector<1x128xbf16>
    %c0_132 = arith.constant 0 : index
    %c0_133 = arith.constant 0 : index
    %346 = vector.load %arg13[%c0_132, %c0_133] : memref<128x128xbf16, #tpu.memory_space<vmem>>, vector<128x128xbf16>
    %cst_134 = arith.constant dense<0.000000e+00> : vector<1x128xf32>
    %347 = tpu.matmul %345, %346, %cst_134 {dimension_numbers = #tpu.dot_dimension_numbers<[1], [0], [0], [1], [0, 0, 1, 1], [], []>} : vector<1x128xbf16>, vector<128x128xbf16>, vector<1x128xf32> -> vector<1x128xf32>
    %348 = arith.addf %344, %347 : vector<1x128xf32>
    %cst_135 = arith.constant 0.000000e+00 : f32
    %349 = vector.broadcast %cst_135 : f32 to vector<1x128xf32>
    %350 = arith.maximumf %348, %349 : vector<1x128xf32>
    %351 = arith.truncf %350 : vector<1x128xf32> to vector<1x128xbf16>
    %c0_136 = arith.constant 0 : index
    %c0_137 = arith.constant 0 : index
    %352 = vector.load %arg15[%c0_136, %c0_137] : memref<128x384xbf16, #tpu.memory_space<vmem>>, vector<128x384xbf16>
    %cst_138 = arith.constant dense<0.000000e+00> : vector<1x384xf32>
    %353 = tpu.matmul %351, %352, %cst_138 {dimension_numbers = #tpu.dot_dimension_numbers<[1], [0], [0], [1], [0, 0, 1, 1], [], []>} : vector<1x128xbf16>, vector<128x384xbf16>, vector<1x384xf32> -> vector<1x384xf32>
    %c0_139 = arith.constant 0 : index
    %c0_140 = arith.constant 0 : index
    %354 = vector.load %arg17[%c0_139, %c0_140] : memref<1x384xf32, #tpu.memory_space<vmem>>, vector<1x384xf32>
    %355 = arith.addf %353, %354 : vector<1x384xf32>
    %356 = arith.truncf %312 : vector<1x128xf32> to vector<1x128xbf16>
    %c0_141 = arith.constant 0 : index
    %c0_142 = arith.constant 0 : index
    %357 = vector.load %arg16[%c0_141, %c0_142] : memref<128x384xbf16, #tpu.memory_space<vmem>>, vector<128x384xbf16>
    %cst_143 = arith.constant dense<0.000000e+00> : vector<1x384xf32>
    %358 = tpu.matmul %356, %357, %cst_143 {dimension_numbers = #tpu.dot_dimension_numbers<[1], [0], [0], [1], [0, 0, 1, 1], [], []>} : vector<1x128xbf16>, vector<128x384xbf16>, vector<1x384xf32> -> vector<1x384xf32>
    %c0_144 = arith.constant 0 : index
    %c0_145 = arith.constant 0 : index
    %359 = vector.load %arg18[%c0_144, %c0_145] : memref<1x384xf32, #tpu.memory_space<vmem>>, vector<1x384xf32>
    %360 = arith.addf %358, %359 : vector<1x384xf32>
    %361 = vector.extract_strided_slice %355 {offsets = [0, 0], sizes = [1, 128], strides = [1, 1]} : vector<1x384xf32> to vector<1x128xf32>
    %362 = vector.extract_strided_slice %360 {offsets = [0, 0], sizes = [1, 128], strides = [1, 1]} : vector<1x384xf32> to vector<1x128xf32>
    %363 = arith.addf %361, %362 : vector<1x128xf32>
    %364 = arith.negf %363 : vector<1x128xf32>
    %365 = math.exp %364 : vector<1x128xf32>
    %cst_146 = arith.constant 1.000000e+00 : f32
    %366 = vector.broadcast %cst_146 : f32 to vector<1x128xf32>
    %367 = arith.addf %366, %365 : vector<1x128xf32>
    %368 = arith.divf %366, %367 : vector<1x128xf32>
    %369 = vector.extract_strided_slice %355 {offsets = [0, 128], sizes = [1, 128], strides = [1, 1]} : vector<1x384xf32> to vector<1x128xf32>
    %370 = vector.extract_strided_slice %360 {offsets = [0, 128], sizes = [1, 128], strides = [1, 1]} : vector<1x384xf32> to vector<1x128xf32>
    %371 = arith.addf %369, %370 : vector<1x128xf32>
    %372 = arith.negf %371 : vector<1x128xf32>
    %373 = math.exp %372 : vector<1x128xf32>
    %cst_147 = arith.constant 1.000000e+00 : f32
    %374 = vector.broadcast %cst_147 : f32 to vector<1x128xf32>
    %375 = arith.addf %374, %373 : vector<1x128xf32>
    %376 = arith.divf %374, %375 : vector<1x128xf32>
    %377 = vector.extract_strided_slice %355 {offsets = [0, 256], sizes = [1, 128], strides = [1, 1]} : vector<1x384xf32> to vector<1x128xf32>
    %378 = vector.extract_strided_slice %360 {offsets = [0, 256], sizes = [1, 128], strides = [1, 1]} : vector<1x384xf32> to vector<1x128xf32>
    %379 = arith.mulf %368, %378 : vector<1x128xf32>
    %380 = arith.addf %377, %379 : vector<1x128xf32>
    %381 = math.tanh %380 : vector<1x128xf32>
    %cst_148 = arith.constant 1.000000e+00 : f32
    %382 = vector.broadcast %cst_148 : f32 to vector<1x128xf32>
    %383 = arith.subf %382, %376 : vector<1x128xf32>
    %384 = arith.mulf %383, %381 : vector<1x128xf32>
    %385 = arith.mulf %376, %312 : vector<1x128xf32>
    %386 = arith.addf %384, %385 : vector<1x128xf32>
    %387 = arith.truncf %386 : vector<1x128xf32> to vector<1x128xbf16>
    %c0_149 = arith.constant 0 : index
    %c0_150 = arith.constant 0 : index
    %388 = vector.load %arg19[%c0_149, %c0_150] : memref<128x128xbf16, #tpu.memory_space<vmem>>, vector<128x128xbf16>
    %cst_151 = arith.constant dense<0.000000e+00> : vector<1x128xf32>
    %389 = tpu.matmul %387, %388, %cst_151 {dimension_numbers = #tpu.dot_dimension_numbers<[1], [0], [0], [1], [0, 0, 1, 1], [], []>} : vector<1x128xbf16>, vector<128x128xbf16>, vector<1x128xf32> -> vector<1x128xf32>
    %c0_152 = arith.constant 0 : index
    %c0_153 = arith.constant 0 : index
    %390 = vector.load %arg20[%c0_152, %c0_153] : memref<1x128xf32, #tpu.memory_space<vmem>>, vector<1x128xf32>
    %391 = arith.addf %389, %390 : vector<1x128xf32>
    %cst_154 = arith.constant dense<0xFF800000> : vector<1xf32>
    %392 = vector.multi_reduction <maximumf>, %391, %cst_154 [1] : vector<1x128xf32> to vector<1xf32>
    %393 = vector.shape_cast %392 : vector<1xf32> to vector<1x1xf32>
    %394 = vector.broadcast %393 : vector<1x1xf32> to vector<1x128xf32>
    %395 = arith.subf %391, %394 : vector<1x128xf32>
    %396 = math.exp %395 : vector<1x128xf32>
    %cst_155 = arith.constant dense<0.000000e+00> : vector<1xf32>
    %397 = vector.multi_reduction <add>, %396, %cst_155 [1] : vector<1x128xf32> to vector<1xf32>
    %398 = vector.shape_cast %397 : vector<1xf32> to vector<1x1xf32>
    %399 = math.log %398 : vector<1x1xf32>
    %400 = vector.broadcast %399 : vector<1x1xf32> to vector<1x128xf32>
    %401 = arith.subf %395, %400 : vector<1x128xf32>
    %402 = vector.extract_strided_slice %248 {offsets = [2, 0], sizes = [1, 2048], strides = [1, 1]} : vector<5x2048xf32> to vector<1x2048xf32>
    %403 = arith.truncf %386 : vector<1x128xf32> to vector<1x128xbf16>
    %c0_156 = arith.constant 0 : index
    %c0_157 = arith.constant 0 : index
    %404 = vector.load %arg10[%c0_156, %c0_157] : memref<128x2048xbf16, #tpu.memory_space<vmem>>, vector<128x2048xbf16>
    %cst_158 = arith.constant dense<0.000000e+00> : vector<1x2048xf32>
    %405 = tpu.matmul %403, %404, %cst_158 {dimension_numbers = #tpu.dot_dimension_numbers<[1], [0], [0], [1], [0, 0, 1, 1], [], []>} : vector<1x128xbf16>, vector<128x2048xbf16>, vector<1x2048xf32> -> vector<1x2048xf32>
    %406 = arith.addf %402, %405 : vector<1x2048xf32>
    %cst_159 = arith.constant dense<0xFF800000> : vector<1xf32>
    %407 = vector.multi_reduction <maximumf>, %406, %cst_159 [1] : vector<1x2048xf32> to vector<1xf32>
    %408 = vector.shape_cast %407 : vector<1xf32> to vector<1x1xf32>
    %409 = vector.broadcast %408 : vector<1x1xf32> to vector<1x2048xf32>
    %410 = arith.subf %406, %409 : vector<1x2048xf32>
    %411 = math.exp %410 : vector<1x2048xf32>
    %cst_160 = arith.constant dense<0.000000e+00> : vector<1xf32>
    %412 = vector.multi_reduction <add>, %411, %cst_160 [1] : vector<1x2048xf32> to vector<1xf32>
    %413 = vector.shape_cast %412 : vector<1xf32> to vector<1x1xf32>
    %414 = vector.broadcast %413 : vector<1x1xf32> to vector<1x2048xf32>
    %415 = arith.divf %411, %414 : vector<1x2048xf32>
    %416 = vector.extract_strided_slice %415 {offsets = [0, 0], sizes = [1, 128], strides = [1, 1]} : vector<1x2048xf32> to vector<1x128xf32>
    %cst_161 = arith.constant dense<0.000000e+00> : vector<1x128xf32>
    %417 = tpu.matmul %416, %226, %cst_161 {dimension_numbers = #tpu.dot_dimension_numbers<[1], [0], [0], [1], [0, 0, 1, 1], [], []>} : vector<1x128xf32>, vector<128x128xf32>, vector<1x128xf32> -> vector<1x128xf32>
    %418 = vector.extract_strided_slice %253 {offsets = [2, 0], sizes = [1, 128], strides = [1, 1]} : vector<5x128xf32> to vector<1x128xf32>
    %419 = arith.truncf %417 : vector<1x128xf32> to vector<1x128xbf16>
    %c0_162 = arith.constant 0 : index
    %c0_163 = arith.constant 0 : index
    %420 = vector.load %arg13[%c0_162, %c0_163] : memref<128x128xbf16, #tpu.memory_space<vmem>>, vector<128x128xbf16>
    %cst_164 = arith.constant dense<0.000000e+00> : vector<1x128xf32>
    %421 = tpu.matmul %419, %420, %cst_164 {dimension_numbers = #tpu.dot_dimension_numbers<[1], [0], [0], [1], [0, 0, 1, 1], [], []>} : vector<1x128xbf16>, vector<128x128xbf16>, vector<1x128xf32> -> vector<1x128xf32>
    %422 = arith.addf %418, %421 : vector<1x128xf32>
    %cst_165 = arith.constant 0.000000e+00 : f32
    %423 = vector.broadcast %cst_165 : f32 to vector<1x128xf32>
    %424 = arith.maximumf %422, %423 : vector<1x128xf32>
    %425 = arith.truncf %424 : vector<1x128xf32> to vector<1x128xbf16>
    %c0_166 = arith.constant 0 : index
    %c0_167 = arith.constant 0 : index
    %426 = vector.load %arg15[%c0_166, %c0_167] : memref<128x384xbf16, #tpu.memory_space<vmem>>, vector<128x384xbf16>
    %cst_168 = arith.constant dense<0.000000e+00> : vector<1x384xf32>
    %427 = tpu.matmul %425, %426, %cst_168 {dimension_numbers = #tpu.dot_dimension_numbers<[1], [0], [0], [1], [0, 0, 1, 1], [], []>} : vector<1x128xbf16>, vector<128x384xbf16>, vector<1x384xf32> -> vector<1x384xf32>
    %c0_169 = arith.constant 0 : index
    %c0_170 = arith.constant 0 : index
    %428 = vector.load %arg17[%c0_169, %c0_170] : memref<1x384xf32, #tpu.memory_space<vmem>>, vector<1x384xf32>
    %429 = arith.addf %427, %428 : vector<1x384xf32>
    %430 = arith.truncf %386 : vector<1x128xf32> to vector<1x128xbf16>
    %c0_171 = arith.constant 0 : index
    %c0_172 = arith.constant 0 : index
    %431 = vector.load %arg16[%c0_171, %c0_172] : memref<128x384xbf16, #tpu.memory_space<vmem>>, vector<128x384xbf16>
    %cst_173 = arith.constant dense<0.000000e+00> : vector<1x384xf32>
    %432 = tpu.matmul %430, %431, %cst_173 {dimension_numbers = #tpu.dot_dimension_numbers<[1], [0], [0], [1], [0, 0, 1, 1], [], []>} : vector<1x128xbf16>, vector<128x384xbf16>, vector<1x384xf32> -> vector<1x384xf32>
    %c0_174 = arith.constant 0 : index
    %c0_175 = arith.constant 0 : index
    %433 = vector.load %arg18[%c0_174, %c0_175] : memref<1x384xf32, #tpu.memory_space<vmem>>, vector<1x384xf32>
    %434 = arith.addf %432, %433 : vector<1x384xf32>
    %435 = vector.extract_strided_slice %429 {offsets = [0, 0], sizes = [1, 128], strides = [1, 1]} : vector<1x384xf32> to vector<1x128xf32>
    %436 = vector.extract_strided_slice %434 {offsets = [0, 0], sizes = [1, 128], strides = [1, 1]} : vector<1x384xf32> to vector<1x128xf32>
    %437 = arith.addf %435, %436 : vector<1x128xf32>
    %438 = arith.negf %437 : vector<1x128xf32>
    %439 = math.exp %438 : vector<1x128xf32>
    %cst_176 = arith.constant 1.000000e+00 : f32
    %440 = vector.broadcast %cst_176 : f32 to vector<1x128xf32>
    %441 = arith.addf %440, %439 : vector<1x128xf32>
    %442 = arith.divf %440, %441 : vector<1x128xf32>
    %443 = vector.extract_strided_slice %429 {offsets = [0, 128], sizes = [1, 128], strides = [1, 1]} : vector<1x384xf32> to vector<1x128xf32>
    %444 = vector.extract_strided_slice %434 {offsets = [0, 128], sizes = [1, 128], strides = [1, 1]} : vector<1x384xf32> to vector<1x128xf32>
    %445 = arith.addf %443, %444 : vector<1x128xf32>
    %446 = arith.negf %445 : vector<1x128xf32>
    %447 = math.exp %446 : vector<1x128xf32>
    %cst_177 = arith.constant 1.000000e+00 : f32
    %448 = vector.broadcast %cst_177 : f32 to vector<1x128xf32>
    %449 = arith.addf %448, %447 : vector<1x128xf32>
    %450 = arith.divf %448, %449 : vector<1x128xf32>
    %451 = vector.extract_strided_slice %429 {offsets = [0, 256], sizes = [1, 128], strides = [1, 1]} : vector<1x384xf32> to vector<1x128xf32>
    %452 = vector.extract_strided_slice %434 {offsets = [0, 256], sizes = [1, 128], strides = [1, 1]} : vector<1x384xf32> to vector<1x128xf32>
    %453 = arith.mulf %442, %452 : vector<1x128xf32>
    %454 = arith.addf %451, %453 : vector<1x128xf32>
    %455 = math.tanh %454 : vector<1x128xf32>
    %cst_178 = arith.constant 1.000000e+00 : f32
    %456 = vector.broadcast %cst_178 : f32 to vector<1x128xf32>
    %457 = arith.subf %456, %450 : vector<1x128xf32>
    %458 = arith.mulf %457, %455 : vector<1x128xf32>
    %459 = arith.mulf %450, %386 : vector<1x128xf32>
    %460 = arith.addf %458, %459 : vector<1x128xf32>
    %461 = arith.truncf %460 : vector<1x128xf32> to vector<1x128xbf16>
    %c0_179 = arith.constant 0 : index
    %c0_180 = arith.constant 0 : index
    %462 = vector.load %arg19[%c0_179, %c0_180] : memref<128x128xbf16, #tpu.memory_space<vmem>>, vector<128x128xbf16>
    %cst_181 = arith.constant dense<0.000000e+00> : vector<1x128xf32>
    %463 = tpu.matmul %461, %462, %cst_181 {dimension_numbers = #tpu.dot_dimension_numbers<[1], [0], [0], [1], [0, 0, 1, 1], [], []>} : vector<1x128xbf16>, vector<128x128xbf16>, vector<1x128xf32> -> vector<1x128xf32>
    %c0_182 = arith.constant 0 : index
    %c0_183 = arith.constant 0 : index
    %464 = vector.load %arg20[%c0_182, %c0_183] : memref<1x128xf32, #tpu.memory_space<vmem>>, vector<1x128xf32>
    %465 = arith.addf %463, %464 : vector<1x128xf32>
    %cst_184 = arith.constant dense<0xFF800000> : vector<1xf32>
    %466 = vector.multi_reduction <maximumf>, %465, %cst_184 [1] : vector<1x128xf32> to vector<1xf32>
    %467 = vector.shape_cast %466 : vector<1xf32> to vector<1x1xf32>
    %468 = vector.broadcast %467 : vector<1x1xf32> to vector<1x128xf32>
    %469 = arith.subf %465, %468 : vector<1x128xf32>
    %470 = math.exp %469 : vector<1x128xf32>
    %cst_185 = arith.constant dense<0.000000e+00> : vector<1xf32>
    %471 = vector.multi_reduction <add>, %470, %cst_185 [1] : vector<1x128xf32> to vector<1xf32>
    %472 = vector.shape_cast %471 : vector<1xf32> to vector<1x1xf32>
    %473 = math.log %472 : vector<1x1xf32>
    %474 = vector.broadcast %473 : vector<1x1xf32> to vector<1x128xf32>
    %475 = arith.subf %469, %474 : vector<1x128xf32>
    %476 = vector.extract_strided_slice %248 {offsets = [3, 0], sizes = [1, 2048], strides = [1, 1]} : vector<5x2048xf32> to vector<1x2048xf32>
    %477 = arith.truncf %460 : vector<1x128xf32> to vector<1x128xbf16>
    %c0_186 = arith.constant 0 : index
    %c0_187 = arith.constant 0 : index
    %478 = vector.load %arg10[%c0_186, %c0_187] : memref<128x2048xbf16, #tpu.memory_space<vmem>>, vector<128x2048xbf16>
    %cst_188 = arith.constant dense<0.000000e+00> : vector<1x2048xf32>
    %479 = tpu.matmul %477, %478, %cst_188 {dimension_numbers = #tpu.dot_dimension_numbers<[1], [0], [0], [1], [0, 0, 1, 1], [], []>} : vector<1x128xbf16>, vector<128x2048xbf16>, vector<1x2048xf32> -> vector<1x2048xf32>
    %480 = arith.addf %476, %479 : vector<1x2048xf32>
    %cst_189 = arith.constant dense<0xFF800000> : vector<1xf32>
    %481 = vector.multi_reduction <maximumf>, %480, %cst_189 [1] : vector<1x2048xf32> to vector<1xf32>
    %482 = vector.shape_cast %481 : vector<1xf32> to vector<1x1xf32>
    %483 = vector.broadcast %482 : vector<1x1xf32> to vector<1x2048xf32>
    %484 = arith.subf %480, %483 : vector<1x2048xf32>
    %485 = math.exp %484 : vector<1x2048xf32>
    %cst_190 = arith.constant dense<0.000000e+00> : vector<1xf32>
    %486 = vector.multi_reduction <add>, %485, %cst_190 [1] : vector<1x2048xf32> to vector<1xf32>
    %487 = vector.shape_cast %486 : vector<1xf32> to vector<1x1xf32>
    %488 = vector.broadcast %487 : vector<1x1xf32> to vector<1x2048xf32>
    %489 = arith.divf %485, %488 : vector<1x2048xf32>
    %490 = vector.extract_strided_slice %489 {offsets = [0, 0], sizes = [1, 128], strides = [1, 1]} : vector<1x2048xf32> to vector<1x128xf32>
    %cst_191 = arith.constant dense<0.000000e+00> : vector<1x128xf32>
    %491 = tpu.matmul %490, %226, %cst_191 {dimension_numbers = #tpu.dot_dimension_numbers<[1], [0], [0], [1], [0, 0, 1, 1], [], []>} : vector<1x128xf32>, vector<128x128xf32>, vector<1x128xf32> -> vector<1x128xf32>
    %492 = vector.extract_strided_slice %253 {offsets = [3, 0], sizes = [1, 128], strides = [1, 1]} : vector<5x128xf32> to vector<1x128xf32>
    %493 = arith.truncf %491 : vector<1x128xf32> to vector<1x128xbf16>
    %c0_192 = arith.constant 0 : index
    %c0_193 = arith.constant 0 : index
    %494 = vector.load %arg13[%c0_192, %c0_193] : memref<128x128xbf16, #tpu.memory_space<vmem>>, vector<128x128xbf16>
    %cst_194 = arith.constant dense<0.000000e+00> : vector<1x128xf32>
    %495 = tpu.matmul %493, %494, %cst_194 {dimension_numbers = #tpu.dot_dimension_numbers<[1], [0], [0], [1], [0, 0, 1, 1], [], []>} : vector<1x128xbf16>, vector<128x128xbf16>, vector<1x128xf32> -> vector<1x128xf32>
    %496 = arith.addf %492, %495 : vector<1x128xf32>
    %cst_195 = arith.constant 0.000000e+00 : f32
    %497 = vector.broadcast %cst_195 : f32 to vector<1x128xf32>
    %498 = arith.maximumf %496, %497 : vector<1x128xf32>
    %499 = arith.truncf %498 : vector<1x128xf32> to vector<1x128xbf16>
    %c0_196 = arith.constant 0 : index
    %c0_197 = arith.constant 0 : index
    %500 = vector.load %arg15[%c0_196, %c0_197] : memref<128x384xbf16, #tpu.memory_space<vmem>>, vector<128x384xbf16>
    %cst_198 = arith.constant dense<0.000000e+00> : vector<1x384xf32>
    %501 = tpu.matmul %499, %500, %cst_198 {dimension_numbers = #tpu.dot_dimension_numbers<[1], [0], [0], [1], [0, 0, 1, 1], [], []>} : vector<1x128xbf16>, vector<128x384xbf16>, vector<1x384xf32> -> vector<1x384xf32>
    %c0_199 = arith.constant 0 : index
    %c0_200 = arith.constant 0 : index
    %502 = vector.load %arg17[%c0_199, %c0_200] : memref<1x384xf32, #tpu.memory_space<vmem>>, vector<1x384xf32>
    %503 = arith.addf %501, %502 : vector<1x384xf32>
    %504 = arith.truncf %460 : vector<1x128xf32> to vector<1x128xbf16>
    %c0_201 = arith.constant 0 : index
    %c0_202 = arith.constant 0 : index
    %505 = vector.load %arg16[%c0_201, %c0_202] : memref<128x384xbf16, #tpu.memory_space<vmem>>, vector<128x384xbf16>
    %cst_203 = arith.constant dense<0.000000e+00> : vector<1x384xf32>
    %506 = tpu.matmul %504, %505, %cst_203 {dimension_numbers = #tpu.dot_dimension_numbers<[1], [0], [0], [1], [0, 0, 1, 1], [], []>} : vector<1x128xbf16>, vector<128x384xbf16>, vector<1x384xf32> -> vector<1x384xf32>
    %c0_204 = arith.constant 0 : index
    %c0_205 = arith.constant 0 : index
    %507 = vector.load %arg18[%c0_204, %c0_205] : memref<1x384xf32, #tpu.memory_space<vmem>>, vector<1x384xf32>
    %508 = arith.addf %506, %507 : vector<1x384xf32>
    %509 = vector.extract_strided_slice %503 {offsets = [0, 0], sizes = [1, 128], strides = [1, 1]} : vector<1x384xf32> to vector<1x128xf32>
    %510 = vector.extract_strided_slice %508 {offsets = [0, 0], sizes = [1, 128], strides = [1, 1]} : vector<1x384xf32> to vector<1x128xf32>
    %511 = arith.addf %509, %510 : vector<1x128xf32>
    %512 = arith.negf %511 : vector<1x128xf32>
    %513 = math.exp %512 : vector<1x128xf32>
    %cst_206 = arith.constant 1.000000e+00 : f32
    %514 = vector.broadcast %cst_206 : f32 to vector<1x128xf32>
    %515 = arith.addf %514, %513 : vector<1x128xf32>
    %516 = arith.divf %514, %515 : vector<1x128xf32>
    %517 = vector.extract_strided_slice %503 {offsets = [0, 128], sizes = [1, 128], strides = [1, 1]} : vector<1x384xf32> to vector<1x128xf32>
    %518 = vector.extract_strided_slice %508 {offsets = [0, 128], sizes = [1, 128], strides = [1, 1]} : vector<1x384xf32> to vector<1x128xf32>
    %519 = arith.addf %517, %518 : vector<1x128xf32>
    %520 = arith.negf %519 : vector<1x128xf32>
    %521 = math.exp %520 : vector<1x128xf32>
    %cst_207 = arith.constant 1.000000e+00 : f32
    %522 = vector.broadcast %cst_207 : f32 to vector<1x128xf32>
    %523 = arith.addf %522, %521 : vector<1x128xf32>
    %524 = arith.divf %522, %523 : vector<1x128xf32>
    %525 = vector.extract_strided_slice %503 {offsets = [0, 256], sizes = [1, 128], strides = [1, 1]} : vector<1x384xf32> to vector<1x128xf32>
    %526 = vector.extract_strided_slice %508 {offsets = [0, 256], sizes = [1, 128], strides = [1, 1]} : vector<1x384xf32> to vector<1x128xf32>
    %527 = arith.mulf %516, %526 : vector<1x128xf32>
    %528 = arith.addf %525, %527 : vector<1x128xf32>
    %529 = math.tanh %528 : vector<1x128xf32>
    %cst_208 = arith.constant 1.000000e+00 : f32
    %530 = vector.broadcast %cst_208 : f32 to vector<1x128xf32>
    %531 = arith.subf %530, %524 : vector<1x128xf32>
    %532 = arith.mulf %531, %529 : vector<1x128xf32>
    %533 = arith.mulf %524, %460 : vector<1x128xf32>
    %534 = arith.addf %532, %533 : vector<1x128xf32>
    %535 = arith.truncf %534 : vector<1x128xf32> to vector<1x128xbf16>
    %c0_209 = arith.constant 0 : index
    %c0_210 = arith.constant 0 : index
    %536 = vector.load %arg19[%c0_209, %c0_210] : memref<128x128xbf16, #tpu.memory_space<vmem>>, vector<128x128xbf16>
    %cst_211 = arith.constant dense<0.000000e+00> : vector<1x128xf32>
    %537 = tpu.matmul %535, %536, %cst_211 {dimension_numbers = #tpu.dot_dimension_numbers<[1], [0], [0], [1], [0, 0, 1, 1], [], []>} : vector<1x128xbf16>, vector<128x128xbf16>, vector<1x128xf32> -> vector<1x128xf32>
    %c0_212 = arith.constant 0 : index
    %c0_213 = arith.constant 0 : index
    %538 = vector.load %arg20[%c0_212, %c0_213] : memref<1x128xf32, #tpu.memory_space<vmem>>, vector<1x128xf32>
    %539 = arith.addf %537, %538 : vector<1x128xf32>
    %cst_214 = arith.constant dense<0xFF800000> : vector<1xf32>
    %540 = vector.multi_reduction <maximumf>, %539, %cst_214 [1] : vector<1x128xf32> to vector<1xf32>
    %541 = vector.shape_cast %540 : vector<1xf32> to vector<1x1xf32>
    %542 = vector.broadcast %541 : vector<1x1xf32> to vector<1x128xf32>
    %543 = arith.subf %539, %542 : vector<1x128xf32>
    %544 = math.exp %543 : vector<1x128xf32>
    %cst_215 = arith.constant dense<0.000000e+00> : vector<1xf32>
    %545 = vector.multi_reduction <add>, %544, %cst_215 [1] : vector<1x128xf32> to vector<1xf32>
    %546 = vector.shape_cast %545 : vector<1xf32> to vector<1x1xf32>
    %547 = math.log %546 : vector<1x1xf32>
    %548 = vector.broadcast %547 : vector<1x1xf32> to vector<1x128xf32>
    %549 = arith.subf %543, %548 : vector<1x128xf32>
    %550 = vector.extract_strided_slice %248 {offsets = [4, 0], sizes = [1, 2048], strides = [1, 1]} : vector<5x2048xf32> to vector<1x2048xf32>
    %551 = arith.truncf %534 : vector<1x128xf32> to vector<1x128xbf16>
    %c0_216 = arith.constant 0 : index
    %c0_217 = arith.constant 0 : index
    %552 = vector.load %arg10[%c0_216, %c0_217] : memref<128x2048xbf16, #tpu.memory_space<vmem>>, vector<128x2048xbf16>
    %cst_218 = arith.constant dense<0.000000e+00> : vector<1x2048xf32>
    %553 = tpu.matmul %551, %552, %cst_218 {dimension_numbers = #tpu.dot_dimension_numbers<[1], [0], [0], [1], [0, 0, 1, 1], [], []>} : vector<1x128xbf16>, vector<128x2048xbf16>, vector<1x2048xf32> -> vector<1x2048xf32>
    %554 = arith.addf %550, %553 : vector<1x2048xf32>
    %cst_219 = arith.constant dense<0xFF800000> : vector<1xf32>
    %555 = vector.multi_reduction <maximumf>, %554, %cst_219 [1] : vector<1x2048xf32> to vector<1xf32>
    %556 = vector.shape_cast %555 : vector<1xf32> to vector<1x1xf32>
    %557 = vector.broadcast %556 : vector<1x1xf32> to vector<1x2048xf32>
    %558 = arith.subf %554, %557 : vector<1x2048xf32>
    %559 = math.exp %558 : vector<1x2048xf32>
    %cst_220 = arith.constant dense<0.000000e+00> : vector<1xf32>
    %560 = vector.multi_reduction <add>, %559, %cst_220 [1] : vector<1x2048xf32> to vector<1xf32>
    %561 = vector.shape_cast %560 : vector<1xf32> to vector<1x1xf32>
    %562 = vector.broadcast %561 : vector<1x1xf32> to vector<1x2048xf32>
    %563 = arith.divf %559, %562 : vector<1x2048xf32>
    %564 = vector.extract_strided_slice %563 {offsets = [0, 0], sizes = [1, 128], strides = [1, 1]} : vector<1x2048xf32> to vector<1x128xf32>
    %cst_221 = arith.constant dense<0.000000e+00> : vector<1x128xf32>
    %565 = tpu.matmul %564, %226, %cst_221 {dimension_numbers = #tpu.dot_dimension_numbers<[1], [0], [0], [1], [0, 0, 1, 1], [], []>} : vector<1x128xf32>, vector<128x128xf32>, vector<1x128xf32> -> vector<1x128xf32>
    %566 = vector.extract_strided_slice %253 {offsets = [4, 0], sizes = [1, 128], strides = [1, 1]} : vector<5x128xf32> to vector<1x128xf32>
    %567 = arith.truncf %565 : vector<1x128xf32> to vector<1x128xbf16>
    %c0_222 = arith.constant 0 : index
    %c0_223 = arith.constant 0 : index
    %568 = vector.load %arg13[%c0_222, %c0_223] : memref<128x128xbf16, #tpu.memory_space<vmem>>, vector<128x128xbf16>
    %cst_224 = arith.constant dense<0.000000e+00> : vector<1x128xf32>
    %569 = tpu.matmul %567, %568, %cst_224 {dimension_numbers = #tpu.dot_dimension_numbers<[1], [0], [0], [1], [0, 0, 1, 1], [], []>} : vector<1x128xbf16>, vector<128x128xbf16>, vector<1x128xf32> -> vector<1x128xf32>
    %570 = arith.addf %566, %569 : vector<1x128xf32>
    %cst_225 = arith.constant 0.000000e+00 : f32
    %571 = vector.broadcast %cst_225 : f32 to vector<1x128xf32>
    %572 = arith.maximumf %570, %571 : vector<1x128xf32>
    %573 = arith.truncf %572 : vector<1x128xf32> to vector<1x128xbf16>
    %c0_226 = arith.constant 0 : index
    %c0_227 = arith.constant 0 : index
    %574 = vector.load %arg15[%c0_226, %c0_227] : memref<128x384xbf16, #tpu.memory_space<vmem>>, vector<128x384xbf16>
    %cst_228 = arith.constant dense<0.000000e+00> : vector<1x384xf32>
    %575 = tpu.matmul %573, %574, %cst_228 {dimension_numbers = #tpu.dot_dimension_numbers<[1], [0], [0], [1], [0, 0, 1, 1], [], []>} : vector<1x128xbf16>, vector<128x384xbf16>, vector<1x384xf32> -> vector<1x384xf32>
    %c0_229 = arith.constant 0 : index
    %c0_230 = arith.constant 0 : index
    %576 = vector.load %arg17[%c0_229, %c0_230] : memref<1x384xf32, #tpu.memory_space<vmem>>, vector<1x384xf32>
    %577 = arith.addf %575, %576 : vector<1x384xf32>
    %578 = arith.truncf %534 : vector<1x128xf32> to vector<1x128xbf16>
    %c0_231 = arith.constant 0 : index
    %c0_232 = arith.constant 0 : index
    %579 = vector.load %arg16[%c0_231, %c0_232] : memref<128x384xbf16, #tpu.memory_space<vmem>>, vector<128x384xbf16>
    %cst_233 = arith.constant dense<0.000000e+00> : vector<1x384xf32>
    %580 = tpu.matmul %578, %579, %cst_233 {dimension_numbers = #tpu.dot_dimension_numbers<[1], [0], [0], [1], [0, 0, 1, 1], [], []>} : vector<1x128xbf16>, vector<128x384xbf16>, vector<1x384xf32> -> vector<1x384xf32>
    %c0_234 = arith.constant 0 : index
    %c0_235 = arith.constant 0 : index
    %581 = vector.load %arg18[%c0_234, %c0_235] : memref<1x384xf32, #tpu.memory_space<vmem>>, vector<1x384xf32>
    %582 = arith.addf %580, %581 : vector<1x384xf32>
    %583 = vector.extract_strided_slice %577 {offsets = [0, 0], sizes = [1, 128], strides = [1, 1]} : vector<1x384xf32> to vector<1x128xf32>
    %584 = vector.extract_strided_slice %582 {offsets = [0, 0], sizes = [1, 128], strides = [1, 1]} : vector<1x384xf32> to vector<1x128xf32>
    %585 = arith.addf %583, %584 : vector<1x128xf32>
    %586 = arith.negf %585 : vector<1x128xf32>
    %587 = math.exp %586 : vector<1x128xf32>
    %cst_236 = arith.constant 1.000000e+00 : f32
    %588 = vector.broadcast %cst_236 : f32 to vector<1x128xf32>
    %589 = arith.addf %588, %587 : vector<1x128xf32>
    %590 = arith.divf %588, %589 : vector<1x128xf32>
    %591 = vector.extract_strided_slice %577 {offsets = [0, 128], sizes = [1, 128], strides = [1, 1]} : vector<1x384xf32> to vector<1x128xf32>
    %592 = vector.extract_strided_slice %582 {offsets = [0, 128], sizes = [1, 128], strides = [1, 1]} : vector<1x384xf32> to vector<1x128xf32>
    %593 = arith.addf %591, %592 : vector<1x128xf32>
    %594 = arith.negf %593 : vector<1x128xf32>
    %595 = math.exp %594 : vector<1x128xf32>
    %cst_237 = arith.constant 1.000000e+00 : f32
    %596 = vector.broadcast %cst_237 : f32 to vector<1x128xf32>
    %597 = arith.addf %596, %595 : vector<1x128xf32>
    %598 = arith.divf %596, %597 : vector<1x128xf32>
    %599 = vector.extract_strided_slice %577 {offsets = [0, 256], sizes = [1, 128], strides = [1, 1]} : vector<1x384xf32> to vector<1x128xf32>
    %600 = vector.extract_strided_slice %582 {offsets = [0, 256], sizes = [1, 128], strides = [1, 1]} : vector<1x384xf32> to vector<1x128xf32>
    %601 = arith.mulf %590, %600 : vector<1x128xf32>
    %602 = arith.addf %599, %601 : vector<1x128xf32>
    %603 = math.tanh %602 : vector<1x128xf32>
    %cst_238 = arith.constant 1.000000e+00 : f32
    %604 = vector.broadcast %cst_238 : f32 to vector<1x128xf32>
    %605 = arith.subf %604, %598 : vector<1x128xf32>
    %606 = arith.mulf %605, %603 : vector<1x128xf32>
    %607 = arith.mulf %598, %534 : vector<1x128xf32>
    %608 = arith.addf %606, %607 : vector<1x128xf32>
    %609 = arith.truncf %608 : vector<1x128xf32> to vector<1x128xbf16>
    %c0_239 = arith.constant 0 : index
    %c0_240 = arith.constant 0 : index
    %610 = vector.load %arg19[%c0_239, %c0_240] : memref<128x128xbf16, #tpu.memory_space<vmem>>, vector<128x128xbf16>
    %cst_241 = arith.constant dense<0.000000e+00> : vector<1x128xf32>
    %611 = tpu.matmul %609, %610, %cst_241 {dimension_numbers = #tpu.dot_dimension_numbers<[1], [0], [0], [1], [0, 0, 1, 1], [], []>} : vector<1x128xbf16>, vector<128x128xbf16>, vector<1x128xf32> -> vector<1x128xf32>
    %c0_242 = arith.constant 0 : index
    %c0_243 = arith.constant 0 : index
    %612 = vector.load %arg20[%c0_242, %c0_243] : memref<1x128xf32, #tpu.memory_space<vmem>>, vector<1x128xf32>
    %613 = arith.addf %611, %612 : vector<1x128xf32>
    %cst_244 = arith.constant dense<0xFF800000> : vector<1xf32>
    %614 = vector.multi_reduction <maximumf>, %613, %cst_244 [1] : vector<1x128xf32> to vector<1xf32>
    %615 = vector.shape_cast %614 : vector<1xf32> to vector<1x1xf32>
    %616 = vector.broadcast %615 : vector<1x1xf32> to vector<1x128xf32>
    %617 = arith.subf %613, %616 : vector<1x128xf32>
    %618 = math.exp %617 : vector<1x128xf32>
    %cst_245 = arith.constant dense<0.000000e+00> : vector<1xf32>
    %619 = vector.multi_reduction <add>, %618, %cst_245 [1] : vector<1x128xf32> to vector<1xf32>
    %620 = vector.shape_cast %619 : vector<1xf32> to vector<1x1xf32>
    %621 = math.log %620 : vector<1x1xf32>
    %622 = vector.broadcast %621 : vector<1x1xf32> to vector<1x128xf32>
    %623 = arith.subf %617, %622 : vector<1x128xf32>
    %624 = tpu.concatenate %327, %401, %475, %549, %623 in 0 : vector<1x128xf32>, vector<1x128xf32>, vector<1x128xf32>, vector<1x128xf32>, vector<1x128xf32> -> vector<5x128xf32>
    %c0_246 = arith.constant 0 : index
    %c0_247 = arith.constant 0 : index
    %625 = vector.load %arg21[%c0_246, %c0_247] : memref<5x128xf32, #tpu.memory_space<vmem>>, vector<5x128xf32>
    tpu.vector_store %arg21[%c0_246, %c0_247], %624 {strides = array<i32>} : memref<5x128xf32, #tpu.memory_space<vmem>>, vector<5x128xf32>,
    return
  }
  func.func @transform_0(%arg0: i32, %arg1: memref<6xi32, #tpu.memory_space<smem>>, %arg2: memref<5xi32, #tpu.memory_space<smem>>) -> (i32, i32) {
    %c0_i32 = arith.constant 0 : i32
    %c0_i32_0 = arith.constant 0 : i32
    %c0_i32_1 = arith.constant 0 : i32
    return %c0_i32, %c0_i32_0 : i32, i32
  }
  func.func @transform_1(%arg0: i32, %arg1: memref<6xi32, #tpu.memory_space<smem>>, %arg2: memref<5xi32, #tpu.memory_space<smem>>) -> (i32, i32) {
    %c0_i32 = arith.constant 0 : i32
    %c0_i32_0 = arith.constant 0 : i32
    %c0_i32_1 = arith.constant 0 : i32
    return %c0_i32, %c0_i32_0 : i32, i32
  }
  func.func @transform_2(%arg0: i32, %arg1: memref<6xi32, #tpu.memory_space<smem>>, %arg2: memref<5xi32, #tpu.memory_space<smem>>) -> (i32, i32) {
    %c0_i32 = arith.constant 0 : i32
    %c0_i32_0 = arith.constant 0 : i32
    %c0_i32_1 = arith.constant 0 : i32
    return %c0_i32, %c0_i32_0 : i32, i32
  }
  func.func @transform_3(%arg0: i32, %arg1: memref<6xi32, #tpu.memory_space<smem>>, %arg2: memref<5xi32, #tpu.memory_space<smem>>) -> (i32, i32) {
    %c0_i32 = arith.constant 0 : i32
    %c0_i32_0 = arith.constant 0 : i32
    %c0_i32_1 = arith.constant 0 : i32
    return %c0_i32, %c0_i32_0 : i32, i32
  }
  func.func @transform_4(%arg0: i32, %arg1: memref<6xi32, #tpu.memory_space<smem>>, %arg2: memref<5xi32, #tpu.memory_space<smem>>) -> (i32, i32) {
    %c0_i32 = arith.constant 0 : i32
    %c0_i32_0 = arith.constant 0 : i32
    %c0_i32_1 = arith.constant 0 : i32
    return %c0_i32, %c0_i32_0 : i32, i32
  }
  func.func @transform_5(%arg0: i32, %arg1: memref<6xi32, #tpu.memory_space<smem>>, %arg2: memref<5xi32, #tpu.memory_space<smem>>) -> (i32, i32) {
    %c0_i32 = arith.constant 0 : i32
    %c0_i32_0 = arith.constant 0 : i32
    %c0_i32_1 = arith.constant 0 : i32
    return %c0_i32, %c0_i32_0 : i32, i32
  }
  func.func @transform_6(%arg0: i32, %arg1: memref<6xi32, #tpu.memory_space<smem>>, %arg2: memref<5xi32, #tpu.memory_space<smem>>) -> (i32, i32) {
    %c0_i32 = arith.constant 0 : i32
    %c0_i32_0 = arith.constant 0 : i32
    %c0_i32_1 = arith.constant 0 : i32
    return %c0_i32, %c0_i32_0 : i32, i32
  }
  func.func @transform_7(%arg0: i32, %arg1: memref<6xi32, #tpu.memory_space<smem>>, %arg2: memref<5xi32, #tpu.memory_space<smem>>) -> (i32, i32) {
    %c0_i32 = arith.constant 0 : i32
    %c0_i32_0 = arith.constant 0 : i32
    %c0_i32_1 = arith.constant 0 : i32
    return %c0_i32, %c0_i32_0 : i32, i32
  }
  func.func @transform_8(%arg0: i32, %arg1: memref<6xi32, #tpu.memory_space<smem>>, %arg2: memref<5xi32, #tpu.memory_space<smem>>) -> (i32, i32) {
    %c0_i32 = arith.constant 0 : i32
    %c0_i32_0 = arith.constant 0 : i32
    %c0_i32_1 = arith.constant 0 : i32
    return %c0_i32, %c0_i32_0 : i32, i32
  }
  func.func @transform_9(%arg0: i32, %arg1: memref<6xi32, #tpu.memory_space<smem>>, %arg2: memref<5xi32, #tpu.memory_space<smem>>) -> (i32, i32) {
    %c0_i32 = arith.constant 0 : i32
    %c0_i32_0 = arith.constant 0 : i32
    %c0_i32_1 = arith.constant 0 : i32
    return %c0_i32, %c0_i32_0 : i32, i32
  }
  func.func @transform_10(%arg0: i32, %arg1: memref<6xi32, #tpu.memory_space<smem>>, %arg2: memref<5xi32, #tpu.memory_space<smem>>) -> (i32, i32) {
    %c0_i32 = arith.constant 0 : i32
    %c0_i32_0 = arith.constant 0 : i32
    %c0_i32_1 = arith.constant 0 : i32
    return %c0_i32, %c0_i32_0 : i32, i32
  }
  func.func @transform_11(%arg0: i32, %arg1: memref<6xi32, #tpu.memory_space<smem>>, %arg2: memref<5xi32, #tpu.memory_space<smem>>) -> (i32, i32) {
    %c0_i32 = arith.constant 0 : i32
    %c0_i32_0 = arith.constant 0 : i32
    %c0_i32_1 = arith.constant 0 : i32
    return %c0_i32, %c0_i32_0 : i32, i32
  }
  func.func @transform_12(%arg0: i32, %arg1: memref<6xi32, #tpu.memory_space<smem>>, %arg2: memref<5xi32, #tpu.memory_space<smem>>) -> (i32, i32) {
    %c0_i32 = arith.constant 0 : i32
    %c0_i32_0 = arith.constant 0 : i32
    %c0_i32_1 = arith.constant 0 : i32
    return %c0_i32, %c0_i32_0 : i32, i32
  }
  func.func @transform_13(%arg0: i32, %arg1: memref<6xi32, #tpu.memory_space<smem>>, %arg2: memref<5xi32, #tpu.memory_space<smem>>) -> (i32, i32) {
    %c0_i32 = arith.constant 0 : i32
    %c0_i32_0 = arith.constant 0 : i32
    %c0_i32_1 = arith.constant 0 : i32
    return %c0_i32, %c0_i32_0 : i32, i32
  }
  func.func @transform_14(%arg0: i32, %arg1: memref<6xi32, #tpu.memory_space<smem>>, %arg2: memref<5xi32, #tpu.memory_space<smem>>) -> (i32, i32) {
    %c0_i32 = arith.constant 0 : i32
    %c0_i32_0 = arith.constant 0 : i32
    %c0_i32_1 = arith.constant 0 : i32
    return %c0_i32, %c0_i32_0 : i32, i32
  }
  func.func @transform_15(%arg0: i32, %arg1: memref<6xi32, #tpu.memory_space<smem>>, %arg2: memref<5xi32, #tpu.memory_space<smem>>) -> (i32, i32) {
    %c0_i32 = arith.constant 0 : i32
    %c0_i32_0 = arith.constant 0 : i32
    %c0_i32_1 = arith.constant 0 : i32
    return %c0_i32, %c0_i32_0 : i32, i32
  }
  func.func @transform_16(%arg0: i32, %arg1: memref<6xi32, #tpu.memory_space<smem>>, %arg2: memref<5xi32, #tpu.memory_space<smem>>) -> (i32, i32) {
    %c0_i32 = arith.constant 0 : i32
    %c0_i32_0 = arith.constant 0 : i32
    %c0_i32_1 = arith.constant 0 : i32
    return %c0_i32, %c0_i32_0 : i32, i32
  }
  func.func @transform_17(%arg0: i32, %arg1: memref<6xi32, #tpu.memory_space<smem>>, %arg2: memref<5xi32, #tpu.memory_space<smem>>) -> (i32, i32) {
    %c0_i32 = arith.constant 0 : i32
    %c0_i32_0 = arith.constant 0 : i32
    %c0_i32_1 = arith.constant 0 : i32
    return %c0_i32, %c0_i32_0 : i32, i32
  }
  func.func @transform_18(%arg0: i32, %arg1: memref<6xi32, #tpu.memory_space<smem>>, %arg2: memref<5xi32, #tpu.memory_space<smem>>) -> (i32, i32) {
    %c0_i32 = arith.constant 0 : i32
    %c0_i32_0 = arith.constant 0 : i32
    %c0_i32_1 = arith.constant 0 : i32
    return %c0_i32, %c0_i32_0 : i32, i32
  }
}

</mosaic_0001>

<llo_original>
// kernel: seq_to_seq_forward.1
$region0: #{seq_to_seq_forward.1}
  #allocation0 [shape = 'u32[]', space=smem, size = 0x4, offset = 0x4, fixed_abs, tag = 'smem constant byte address 0x4 - core index']
  #allocation1 [shape = 'u32[72,128]{1,0:T(1,128)}', space=vmem, size = 0x9000, scoped, tag = 'internal scratch']
  #allocation2 [shape = 'f32[128,128]{1,0:T(8,128)}', space=vmem, size = 0x10000, scoped, tag = 'scratch operand']
  #allocation3 [shape = 's32[1]{0}', space=sflag, size = 0x4, scoped, tag = 'scoped memory for seq_to_seq_forward.1']
  #allocation4 [shape = 'u8[512]{0}', space=smem, size = 0x200, scoped, tag = 'prefetched SMEM operand 0']
  #allocation5 [shape = 'u8[512]{0}', space=smem, size = 0x200, scoped, tag = 'prefetched SMEM operand 1']
  %s0 = inlined_call_operand.vmem [shape: s32[6], index: 0, kind: input, shape index: {}]
  %s1 = inlined_call_operand.vmem [shape: s32[5], index: 1, kind: input, shape index: {}]
  %s2 = inlined_call_operand.hbm [shape: f32[64,128], index: 2, kind: input, shape index: {}]
  %s3 = inlined_call_operand.hbm [shape: bf16[128,384], index: 3, kind: input, shape index: {}]
  %s4 = inlined_call_operand.hbm [shape: bf16[128,384], index: 4, kind: input, shape index: {}]
  %s5 = inlined_call_operand.vmem [shape: f32[1,384], index: 5, kind: input, shape index: {}]
  %s6 = inlined_call_operand.vmem [shape: f32[1,384], index: 6, kind: input, shape index: {}]
  %s7 = inlined_call_operand.hbm [shape: f32[64,128], index: 7, kind: input, shape index: {}]
  %s8 = inlined_call_operand.hbm [shape: bf16[128,2048], index: 8, kind: input, shape index: {}]
  %s9 = inlined_call_operand.hbm [shape: bf16[128,2048], index: 9, kind: input, shape index: {}]
  %s10 = inlined_call_operand.hbm [shape: f32[1,2048], index: 10, kind: input, shape index: {}]
  %s11 = inlined_call_operand.hbm [shape: bf16[128,128], index: 11, kind: input, shape index: {}]
  %s12 = inlined_call_operand.hbm [shape: bf16[128,128], index: 12, kind: input, shape index: {}]
  %s13 = inlined_call_operand.hbm [shape: f32[1,128], index: 13, kind: input, shape index: {}]
  %s14 = inlined_call_operand.hbm [shape: bf16[128,384], index: 14, kind: input, shape index: {}]
  %s15 = inlined_call_operand.hbm [shape: bf16[128,384], index: 15, kind: input, shape index: {}]
  %s16 = inlined_call_operand.hbm [shape: f32[1,384], index: 16, kind: input, shape index: {}]
  %s17 = inlined_call_operand.hbm [shape: f32[1,384], index: 17, kind: input, shape index: {}]
  %s18 = inlined_call_operand.hbm [shape: bf16[128,128], index: 18, kind: input, shape index: {}]
  %s19 = inlined_call_operand.hbm [shape: f32[1,128], index: 19, kind: input, shape index: {}]
  %s20 = inlined_call_operand.vmem [shape: f32[5,128], index: 20, kind: output, shape index: {}]
  %s21 = sld [smem:[#allocation0]]
  $region146: #{seq_to_seq_forward.1} parent=0
    _
  %s23 = ssub.s32 1, %s21
  %s24 = scalar_select 0, %s23, %s21
  %s26 = sshll.u32 %s0, 4
  %s27 = int_to_ptr.vmem [resolvable:$true] %s26
  %29 = dma.vmem_to_smem %s27, 16, [#allocation4], [#allocation3]
  %s31 = sshll.u32 %s1, 4
  %s32 = int_to_ptr.vmem [resolvable:$true] %s31
  %34 = dma.vmem_to_smem %s32, 16, [#allocation5], [#allocation3]
  %36 = dma.done [#allocation3], 32
  %37 = sfence
  $region1: #{seq_to_seq_forward.1} parent=0
    #allocation6 [shape = 'u8[32768]{0}', space=vmem, size = 0x8000, scoped, tag = 'input window, operand 2, single buffered']
    #allocation7 [shape = 's32[1]{0}', space=sflag, size = 0x4, scoped, tag = 'scoped memory for seq_to_seq_forward.1']
    #allocation8 [shape = 'u8[98304]{0}', space=vmem, size = 0x18000, scoped, tag = 'input window, operand 3, single buffered']
    #allocation9 [shape = 's32[1]{0}', space=sflag, size = 0x4, scoped, tag = 'scoped memory for seq_to_seq_forward.1']
    #allocation10 [shape = 'u8[98304]{0}', space=vmem, size = 0x18000, scoped, tag = 'input window, operand 4, single buffered']
    #allocation11 [shape = 'u8[32768]{0}', space=vmem, size = 0x8000, scoped, tag = 'input window, operand 7, single buffered']
    #allocation12 [shape = 's32[1]{0}', space=sflag, size = 0x4, scoped, tag = 'scoped memory for seq_to_seq_forward.1']
    #allocation13 [shape = 'u8[524288]{0}', space=vmem, size = 0x80000, scoped, tag = 'input window, operand 8, single buffered']
    #allocation14 [shape = 'u8[524288]{0}', space=vmem, size = 0x80000, scoped, tag = 'input window, operand 9, single buffered']
    #allocation15 [shape = 's32[1]{0}', space=sflag, size = 0x4, scoped, tag = 'scoped memory for seq_to_seq_forward.1']
    #allocation16 [shape = 'u8[8192]{0}', space=vmem, size = 0x2000, scoped, tag = 'input window, operand 10, single buffered']
    #allocation17 [shape = 'u8[32768]{0}', space=vmem, size = 0x8000, scoped, tag = 'input window, operand 11, single buffered']
    #allocation18 [shape = 's32[1]{0}', space=sflag, size = 0x4, scoped, tag = 'scoped memory for seq_to_seq_forward.1']
    #allocation19 [shape = 'u8[32768]{0}', space=vmem, size = 0x8000, scoped, tag = 'input window, operand 12, single buffered']
    #allocation20 [shape = 'u8[512]{0}', space=vmem, size = 0x400, scoped, tag = 'input window, operand 13, single buffered']
    #allocation21 [shape = 's32[1]{0}', space=sflag, size = 0x4, scoped, tag = 'scoped memory for seq_to_seq_forward.1']
    #allocation22 [shape = 'u8[98304]{0}', space=vmem, size = 0x18000, scoped, tag = 'input window, operand 14, single buffered']
    #allocation23 [shape = 'u8[98304]{0}', space=vmem, size = 0x18000, scoped, tag = 'input window, operand 15, single buffered']
    #allocation24 [shape = 's32[1]{0}', space=sflag, size = 0x4, scoped, tag = 'scoped memory for seq_to_seq_forward.1']
    #allocation25 [shape = 'u8[1536]{0}', space=vmem, size = 0x800, scoped, tag = 'input window, operand 16, single buffered']
    #allocation26 [shape = 'u8[1536]{0}', space=vmem, size = 0x800, scoped, tag = 'input window, operand 17, single buffered']
    #allocation27 [shape = 's32[1]{0}', space=sflag, size = 0x4, scoped, tag = 'scoped memory for seq_to_seq_forward.1']
    #allocation28 [shape = 'u8[32768]{0}', space=vmem, size = 0x8000, scoped, tag = 'input window, operand 18, single buffered']
    #allocation29 [shape = 'u8[512]{0}', space=vmem, size = 0x400, scoped, tag = 'input window, operand 19, single buffered']
    #allocation30 [shape = 's32[1]{0}', space=sflag, size = 0x4, scoped, tag = 'scoped memory for seq_to_seq_forward.1']
    %38 = vsyncpa [#allocation7], 0
    %39 = vsyncpa [#allocation9], 0
    %40 = vsyncpa [#allocation12], 0
    %41 = vsyncpa [#allocation15], 0
    %42 = vsyncpa [#allocation18], 0
    %43 = vsyncpa [#allocation21], 0
    %44 = vsyncpa [#allocation24], 0
    %45 = vsyncpa [#allocation27], 0
    %46 = vsyncpa [#allocation30], 0
    // Predicated region
    $region2: #{seq_to_seq_forward.1} parent=1 // pred_check
      _
    $region3: #{seq_to_seq_forward.1} parent=1 // pred_check_branch
      %48 = sbr.rel (0) target = $region5
    $region4: #{seq_to_seq_forward.1} parent=1 // pred_region
      %50 = vsyncadd [#allocation7], 0
      %s51 = sshll.u32 %s2, 4
      %s52 = int_to_ptr.hbm [resolvable:$true] %s51
      %s53 = sshll.u32 [#allocation6], 4
      %s54 = int_to_ptr.vmem [resolvable:$true] %s53
      %59 = dma.hbm_to_vmem [thread:$0]  %s52, 1024, %s54, [#allocation7], 128, 128, 8
    $region5: #{seq_to_seq_forward.1} parent=1 // pred_fallthru
      _
    // Predicated region
    $region6: #{seq_to_seq_forward.1} parent=1 // pred_check
      _
    $region7: #{seq_to_seq_forward.1} parent=1 // pred_check_branch
      %61 = sbr.rel (0) target = $region9
    $region8: #{seq_to_seq_forward.1} parent=1 // pred_region
      %63 = vsyncadd [#allocation9], 0
      %s64 = sshll.u32 %s3, 4
      %s65 = int_to_ptr.hbm [resolvable:$true] %s64
      %s66 = sshll.u32 [#allocation8], 4
      %s67 = int_to_ptr.vmem [resolvable:$true] %s66
      %72 = dma.hbm_to_vmem [thread:$0]  %s65, 3072, %s67, [#allocation9], 192, 192, 12
    $region9: #{seq_to_seq_forward.1} parent=1 // pred_fallthru
      _
    // Predicated region
    $region10: #{seq_to_seq_forward.1} parent=1 // pred_check
      _
    $region11: #{seq_to_seq_forward.1} parent=1 // pred_check_branch
      %74 = sbr.rel (0) target = $region13
    $region12: #{seq_to_seq_forward.1} parent=1 // pred_region
      %76 = vsyncadd [#allocation9], 0
      %s77 = sshll.u32 %s4, 4
      %s78 = int_to_ptr.hbm [resolvable:$true] %s77
      %s79 = sshll.u32 [#allocation10], 4
      %s80 = int_to_ptr.vmem [resolvable:$true] %s79
      %85 = dma.hbm_to_vmem [thread:$0]  %s78, 3072, %s80, [#allocation9], 192, 192, 12
    $region13: #{seq_to_seq_forward.1} parent=1 // pred_fallthru
      _
    // Predicated region
    $region14: #{seq_to_seq_forward.1} parent=1 // pred_check
      _
    $region15: #{seq_to_seq_forward.1} parent=1 // pred_check_branch
      %87 = sbr.rel (0) target = $region17
    $region16: #{seq_to_seq_forward.1} parent=1 // pred_region
      _
    $region17: #{seq_to_seq_forward.1} parent=1 // pred_fallthru
      _
    // Predicated region
    $region18: #{seq_to_seq_forward.1} parent=1 // pred_check
      _
    $region19: #{seq_to_seq_forward.1} parent=1 // pred_check_branch
      %89 = sbr.rel (0) target = $region21
    $region20: #{seq_to_seq_forward.1} parent=1 // pred_region
      _
    $region21: #{seq_to_seq_forward.1} parent=1 // pred_fallthru
      _
    // Predicated region
    $region22: #{seq_to_seq_forward.1} parent=1 // pred_check
      _
    $region23: #{seq_to_seq_forward.1} parent=1 // pred_check_branch
      %91 = sbr.rel (0) target = $region25
    $region24: #{seq_to_seq_forward.1} parent=1 // pred_region
      %93 = vsyncadd [#allocation12], 0
      %s94 = sshll.u32 %s7, 4
      %s95 = int_to_ptr.hbm [resolvable:$true] %s94
      %s96 = sshll.u32 [#allocation11], 4
      %s97 = int_to_ptr.vmem [resolvable:$true] %s96
      %102 = dma.hbm_to_vmem [thread:$0]  %s95, 1024, %s97, [#allocation12], 128, 128, 8
    $region25: #{seq_to_seq_forward.1} parent=1 // pred_fallthru
      _
    // Predicated region
    $region26: #{seq_to_seq_forward.1} parent=1 // pred_check
      _
    $region27: #{seq_to_seq_forward.1} parent=1 // pred_check_branch
      %104 = sbr.rel (0) target = $region29
    $region28: #{seq_to_seq_forward.1} parent=1 // pred_region
      %106 = vsyncadd [#allocation12], 0
      %s107 = sshll.u32 %s8, 4
      %s108 = int_to_ptr.hbm [resolvable:$true] %s107
      %s109 = sshll.u32 [#allocation13], 4
      %s110 = int_to_ptr.vmem [resolvable:$true] %s109
      %115 = dma.hbm_to_vmem [thread:$0]  %s108, 16384, %s110, [#allocation12], 1024, 1024, 64
    $region29: #{seq_to_seq_forward.1} parent=1 // pred_fallthru
      _
    // Predicated region
    $region30: #{seq_to_seq_forward.1} parent=1 // pred_check
      _
    $region31: #{seq_to_seq_forward.1} parent=1 // pred_check_branch
      %117 = sbr.rel (0) target = $region33
    $region32: #{seq_to_seq_forward.1} parent=1 // pred_region
      %119 = vsyncadd [#allocation15], 0
      %s120 = sshll.u32 %s9, 4
      %s121 = int_to_ptr.hbm [resolvable:$true] %s120
      %s122 = sshll.u32 [#allocation14], 4
      %s123 = int_to_ptr.vmem [resolvable:$true] %s122
      %128 = dma.hbm_to_vmem [thread:$0]  %s121, 16384, %s123, [#allocation15], 1024, 1024, 64
    $region33: #{seq_to_seq_forward.1} parent=1 // pred_fallthru
      _
    // Predicated region
    $region34: #{seq_to_seq_forward.1} parent=1 // pred_check
      _
    $region35: #{seq_to_seq_forward.1} parent=1 // pred_check_branch
      %130 = sbr.rel (0) target = $region37
    $region36: #{seq_to_seq_forward.1} parent=1 // pred_region
      %132 = vsyncadd [#allocation15], 0
      %s134 = sshll.u32 %s10, 4
      %s135 = int_to_ptr.hbm [resolvable:$true] %s134
      %s136 = sshll.u32 [#allocation16], 4
      %s137 = int_to_ptr.vmem [resolvable:$true] %s136
      %139 = dma.hbm_to_vmem [thread:$0]  %s135, 256, %s137, [#allocation15]
    $region37: #{seq_to_seq_forward.1} parent=1 // pred_fallthru
      _
    // Predicated region
    $region38: #{seq_to_seq_forward.1} parent=1 // pred_check
      _
    $region39: #{seq_to_seq_forward.1} parent=1 // pred_check_branch
      %141 = sbr.rel (0) target = $region41
    $region40: #{seq_to_seq_forward.1} parent=1 // pred_region
      %143 = vsyncadd [#allocation18], 0
      %s144 = sshll.u32 %s11, 4
      %s145 = int_to_ptr.hbm [resolvable:$true] %s144
      %s146 = sshll.u32 [#allocation17], 4
      %s147 = int_to_ptr.vmem [resolvable:$true] %s146
      %152 = dma.hbm_to_vmem [thread:$0]  %s145, 1024, %s147, [#allocation18], 64, 64, 4
    $region41: #{seq_to_seq_forward.1} parent=1 // pred_fallthru
      _
    // Predicated region
    $region42: #{seq_to_seq_forward.1} parent=1 // pred_check
      _
    $region43: #{seq_to_seq_forward.1} parent=1 // pred_check_branch
      %154 = sbr.rel (0) target = $region45
    $region44: #{seq_to_seq_forward.1} parent=1 // pred_region
      %156 = vsyncadd [#allocation18], 0
      %s157 = sshll.u32 %s12, 4
      %s158 = int_to_ptr.hbm [resolvable:$true] %s157
      %s159 = sshll.u32 [#allocation19], 4
      %s160 = int_to_ptr.vmem [resolvable:$true] %s159
      %165 = dma.hbm_to_vmem [thread:$0]  %s158, 1024, %s160, [#allocation18], 64, 64, 4
    $region45: #{seq_to_seq_forward.1} parent=1 // pred_fallthru
      _
    // Predicated region
    $region46: #{seq_to_seq_forward.1} parent=1 // pred_check
      _
    $region47: #{seq_to_seq_forward.1} parent=1 // pred_check_branch
      %167 = sbr.rel (0) target = $region49
    $region48: #{seq_to_seq_forward.1} parent=1 // pred_region
      %169 = vsyncadd [#allocation21], 0
      %s171 = sshll.u32 %s13, 4
      %s172 = int_to_ptr.hbm [resolvable:$true] %s171
      %s173 = sshll.u32 [#allocation20], 4
      %s174 = int_to_ptr.vmem [resolvable:$true] %s173
      %176 = dma.hbm_to_vmem [thread:$0]  %s172, 16, %s174, [#allocation21]
    $region49: #{seq_to_seq_forward.1} parent=1 // pred_fallthru
      _
    // Predicated region
    $region50: #{seq_to_seq_forward.1} parent=1 // pred_check
      _
    $region51: #{seq_to_seq_forward.1} parent=1 // pred_check_branch
      %178 = sbr.rel (0) target = $region53
    $region52: #{seq_to_seq_forward.1} parent=1 // pred_region
      %180 = vsyncadd [#allocation21], 0
      %s181 = sshll.u32 %s14, 4
      %s182 = int_to_ptr.hbm [resolvable:$true] %s181
      %s183 = sshll.u32 [#allocation22], 4
      %s184 = int_to_ptr.vmem [resolvable:$true] %s183
      %189 = dma.hbm_to_vmem [thread:$0]  %s182, 3072, %s184, [#allocation21], 192, 192, 12
    $region53: #{seq_to_seq_forward.1} parent=1 // pred_fallthru
      _
    // Predicated region
    $region54: #{seq_to_seq_forward.1} parent=1 // pred_check
      _
    $region55: #{seq_to_seq_forward.1} parent=1 // pred_check_branch
      %191 = sbr.rel (0) target = $region57
    $region56: #{seq_to_seq_forward.1} parent=1 // pred_region
      %193 = vsyncadd [#allocation24], 0
      %s194 = sshll.u32 %s15, 4
      %s195 = int_to_ptr.hbm [resolvable:$true] %s194
      %s196 = sshll.u32 [#allocation23], 4
      %s197 = int_to_ptr.vmem [resolvable:$true] %s196
      %202 = dma.hbm_to_vmem [thread:$0]  %s195, 3072, %s197, [#allocation24], 192, 192, 12
    $region57: #{seq_to_seq_forward.1} parent=1 // pred_fallthru
      _
    // Predicated region
    $region58: #{seq_to_seq_forward.1} parent=1 // pred_check
      _
    $region59: #{seq_to_seq_forward.1} parent=1 // pred_check_branch
      %204 = sbr.rel (0) target = $region61
    $region60: #{seq_to_seq_forward.1} parent=1 // pred_region
      %206 = vsyncadd [#allocation24], 0
      %s208 = sshll.u32 %s16, 4
      %s209 = int_to_ptr.hbm [resolvable:$true] %s208
      %s210 = sshll.u32 [#allocation25], 4
      %s211 = int_to_ptr.vmem [resolvable:$true] %s210
      %213 = dma.hbm_to_vmem [thread:$0]  %s209, 48, %s211, [#allocation24]
    $region61: #{seq_to_seq_forward.1} parent=1 // pred_fallthru
      _
    // Predicated region
    $region62: #{seq_to_seq_forward.1} parent=1 // pred_check
      _
    $region63: #{seq_to_seq_forward.1} parent=1 // pred_check_branch
      %215 = sbr.rel (0) target = $region65
    $region64: #{seq_to_seq_forward.1} parent=1 // pred_region
      %217 = vsyncadd [#allocation27], 0
      %s219 = sshll.u32 %s17, 4
      %s220 = int_to_ptr.hbm [resolvable:$true] %s219
      %s221 = sshll.u32 [#allocation26], 4
      %s222 = int_to_ptr.vmem [resolvable:$true] %s221
      %224 = dma.hbm_to_vmem [thread:$0]  %s220, 48, %s222, [#allocation27]
    $region65: #{seq_to_seq_forward.1} parent=1 // pred_fallthru
      _
    // Predicated region
    $region66: #{seq_to_seq_forward.1} parent=1 // pred_check
      _
    $region67: #{seq_to_seq_forward.1} parent=1 // pred_check_branch
      %226 = sbr.rel (0) target = $region69
    $region68: #{seq_to_seq_forward.1} parent=1 // pred_region
      %228 = vsyncadd [#allocation27], 0
      %s229 = sshll.u32 %s18, 4
      %s230 = int_to_ptr.hbm [resolvable:$true] %s229
      %s231 = sshll.u32 [#allocation28], 4
      %s232 = int_to_ptr.vmem [resolvable:$true] %s231
      %237 = dma.hbm_to_vmem [thread:$0]  %s230, 1024, %s232, [#allocation27], 64, 64, 4
    $region69: #{seq_to_seq_forward.1} parent=1 // pred_fallthru
      _
    // Predicated region
    $region70: #{seq_to_seq_forward.1} parent=1 // pred_check
      _
    $region71: #{seq_to_seq_forward.1} parent=1 // pred_check_branch
      %239 = sbr.rel (0) target = $region73
    $region72: #{seq_to_seq_forward.1} parent=1 // pred_region
      %241 = vsyncadd [#allocation30], 0
      %s243 = sshll.u32 %s19, 4
      %s244 = int_to_ptr.hbm [resolvable:$true] %s243
      %s245 = sshll.u32 [#allocation29], 4
      %s246 = int_to_ptr.vmem [resolvable:$true] %s245
      %248 = dma.hbm_to_vmem [thread:$0]  %s244, 16, %s246, [#allocation30]
    $region73: #{seq_to_seq_forward.1} parent=1 // pred_fallthru
      _
    // Predicated region
    $region74: #{seq_to_seq_forward.1} parent=1 // pred_check
      _
    $region75: #{seq_to_seq_forward.1} parent=1 // pred_check_branch
      %250 = sbr.rel (0) target = $region77
    $region76: #{seq_to_seq_forward.1} parent=1 // pred_region
      %252 = dma.done [#allocation7], 1024
    $region77: #{seq_to_seq_forward.1} parent=1 // pred_fallthru
      _
    // Predicated region
    $region78: #{seq_to_seq_forward.1} parent=1 // pred_check
      _
    $region79: #{seq_to_seq_forward.1} parent=1 // pred_check_branch
      %254 = sbr.rel (0) target = $region81
    $region80: #{seq_to_seq_forward.1} parent=1 // pred_region
      %256 = dma.done [#allocation9], 3072
    $region81: #{seq_to_seq_forward.1} parent=1 // pred_fallthru
      _
    // Predicated region
    $region82: #{seq_to_seq_forward.1} parent=1 // pred_check
      _
    $region83: #{seq_to_seq_forward.1} parent=1 // pred_check_branch
      %258 = sbr.rel (0) target = $region85
    $region84: #{seq_to_seq_forward.1} parent=1 // pred_region
      %260 = dma.done [#allocation9], 3072
    $region85: #{seq_to_seq_forward.1} parent=1 // pred_fallthru
      _
    // Predicated region
    $region86: #{seq_to_seq_forward.1} parent=1 // pred_check
      _
    $region87: #{seq_to_seq_forward.1} parent=1 // pred_check_branch
      %262 = sbr.rel (0) target = $region89
    $region88: #{seq_to_seq_forward.1} parent=1 // pred_region
      %264 = dma.done [#allocation12], 1024
    $region89: #{seq_to_seq_forward.1} parent=1 // pred_fallthru
      _
    // Predicated region
    $region90: #{seq_to_seq_forward.1} parent=1 // pred_check
      _
    $region91: #{seq_to_seq_forward.1} parent=1 // pred_check_branch
      %266 = sbr.rel (0) target = $region93
    $region92: #{seq_to_seq_forward.1} parent=1 // pred_region
      %268 = dma.done [#allocation12], 16384
    $region93: #{seq_to_seq_forward.1} parent=1 // pred_fallthru
      _
    // Predicated region
    $region94: #{seq_to_seq_forward.1} parent=1 // pred_check
      _
    $region95: #{seq_to_seq_forward.1} parent=1 // pred_check_branch
      %270 = sbr.rel (0) target = $region97
    $region96: #{seq_to_seq_forward.1} parent=1 // pred_region
      %272 = dma.done [#allocation15], 16384
    $region97: #{seq_to_seq_forward.1} parent=1 // pred_fallthru
      _
    // Predicated region
    $region98: #{seq_to_seq_forward.1} parent=1 // pred_check
      _
    $region99: #{seq_to_seq_forward.1} parent=1 // pred_check_branch
      %274 = sbr.rel (0) target = $region101
    $region100: #{seq_to_seq_forward.1} parent=1 // pred_region
      %276 = dma.done [#allocation15], 256
    $region101: #{seq_to_seq_forward.1} parent=1 // pred_fallthru
      _
    // Predicated region
    $region102: #{seq_to_seq_forward.1} parent=1 // pred_check
      _
    $region103: #{seq_to_seq_forward.1} parent=1 // pred_check_branch
      %278 = sbr.rel (0) target = $region105
    $region104: #{seq_to_seq_forward.1} parent=1 // pred_region
      %280 = dma.done [#allocation18], 1024
    $region105: #{seq_to_seq_forward.1} parent=1 // pred_fallthru
      _
    // Predicated region
    $region106: #{seq_to_seq_forward.1} parent=1 // pred_check
      _
    $region107: #{seq_to_seq_forward.1} parent=1 // pred_check_branch
      %282 = sbr.rel (0) target = $region109
    $region108: #{seq_to_seq_forward.1} parent=1 // pred_region
      %284 = dma.done [#allocation18], 1024
    $region109: #{seq_to_seq_forward.1} parent=1 // pred_fallthru
      _
    // Predicated region
    $region110: #{seq_to_seq_forward.1} parent=1 // pred_check
      _
    $region111: #{seq_to_seq_forward.1} parent=1 // pred_check_branch
      %286 = sbr.rel (0) target = $region113
    $region112: #{seq_to_seq_forward.1} parent=1 // pred_region
      %288 = dma.done [#allocation21], 16
    $region113: #{seq_to_seq_forward.1} parent=1 // pred_fallthru
      _
    // Predicated region
    $region114: #{seq_to_seq_forward.1} parent=1 // pred_check
      _
    $region115: #{seq_to_seq_forward.1} parent=1 // pred_check_branch
      %290 = sbr.rel (0) target = $region117
    $region116: #{seq_to_seq_forward.1} parent=1 // pred_region
      %292 = dma.done [#allocation21], 3072
    $region117: #{seq_to_seq_forward.1} parent=1 // pred_fallthru
      _
    // Predicated region
    $region118: #{seq_to_seq_forward.1} parent=1 // pred_check
      _
    $region119: #{seq_to_seq_forward.1} parent=1 // pred_check_branch
      %294 = sbr.rel (0) target = $region121
    $region120: #{seq_to_seq_forward.1} parent=1 // pred_region
      %296 = dma.done [#allocation24], 3072
    $region121: #{seq_to_seq_forward.1} parent=1 // pred_fallthru
      _
    // Predicated region
    $region122: #{seq_to_seq_forward.1} parent=1 // pred_check
      _
    $region123: #{seq_to_seq_forward.1} parent=1 // pred_check_branch
      %298 = sbr.rel (0) target = $region125
    $region124: #{seq_to_seq_forward.1} parent=1 // pred_region
      %300 = dma.done [#allocation24], 48
    $region125: #{seq_to_seq_forward.1} parent=1 // pred_fallthru
      _
    // Predicated region
    $region126: #{seq_to_seq_forward.1} parent=1 // pred_check
      _
    $region127: #{seq_to_seq_forward.1} parent=1 // pred_check_branch
      %302 = sbr.rel (0) target = $region129
    $region128: #{seq_to_seq_forward.1} parent=1 // pred_region
      %304 = dma.done [#allocation27], 48
    $region129: #{seq_to_seq_forward.1} parent=1 // pred_fallthru
      _
    // Predicated region
    $region130: #{seq_to_seq_forward.1} parent=1 // pred_check
      _
    $region131: #{seq_to_seq_forward.1} parent=1 // pred_check_branch
      %306 = sbr.rel (0) target = $region133
    $region132: #{seq_to_seq_forward.1} parent=1 // pred_region
      %308 = dma.done [#allocation27], 1024
    $region133: #{seq_to_seq_forward.1} parent=1 // pred_fallthru
      _
    // Predicated region
    $region134: #{seq_to_seq_forward.1} parent=1 // pred_check
      _
    $region135: #{seq_to_seq_forward.1} parent=1 // pred_check_branch
      %310 = sbr.rel (0) target = $region137
    $region136: #{seq_to_seq_forward.1} parent=1 // pred_region
      %312 = dma.done [#allocation30], 16
    $region137: #{seq_to_seq_forward.1} parent=1 // pred_fallthru
      _
    %314 = vst [vmem:[#allocation2] sm:$0xff] 0.0
    %315 = vst [vmem:[#allocation2 + $0x8] sm:$0xff] 0.0
    %316 = vst [vmem:[#allocation2 + $0x10] sm:$0xff] 0.0
    %317 = vst [vmem:[#allocation2 + $0x18] sm:$0xff] 0.0
    %318 = vst [vmem:[#allocation2 + $0x20] sm:$0xff] 0.0
    %319 = vst [vmem:[#allocation2 + $0x28] sm:$0xff] 0.0
    %320 = vst [vmem:[#allocation2 + $0x30] sm:$0xff] 0.0
    %321 = vst [vmem:[#allocation2 + $0x38] sm:$0xff] 0.0
    %322 = vst [vmem:[#allocation2 + $0x40] sm:$0xff] 0.0
    %323 = vst [vmem:[#allocation2 + $0x48] sm:$0xff] 0.0
    %324 = vst [vmem:[#allocation2 + $0x50] sm:$0xff] 0.0
    %325 = vst [vmem:[#allocation2 + $0x58] sm:$0xff] 0.0
    %326 = vst [vmem:[#allocation2 + $0x60] sm:$0xff] 0.0
    %327 = vst [vmem:[#allocation2 + $0x68] sm:$0xff] 0.0
    %328 = vst [vmem:[#allocation2 + $0x70] sm:$0xff] 0.0
    %329 = vst [vmem:[#allocation2 + $0x78] sm:$0xff] 0.0
    %s330 = sld [smem:[#allocation4]]
    %s331 = scalar_lea.vmem [#allocation6], %s330
    %v332 = vld [vmem:[%s331] sm:$0x1]
    %s333 = sld [smem:[#allocation4 + $0x1]]
    %s334 = scalar_lea.vmem [#allocation6], %s333
    %v335 = vld [vmem:[%s334] sm:$0x1]
    %s336 = sld [smem:[#allocation4 + $0x2]]
    %s337 = scalar_lea.vmem [#allocation6], %s336
    %v338 = vld [vmem:[%s337] sm:$0x1]
    %s339 = sld [smem:[#allocation4 + $0x3]]
    %s340 = scalar_lea.vmem [#allocation6], %s339
    %v341 = vld [vmem:[%s340] sm:$0x1]
    %s342 = sld [smem:[#allocation4 + $0x4]]
    %s343 = scalar_lea.vmem [#allocation6], %s342
    %v344 = vld [vmem:[%s343] sm:$0x1]
    %s345 = sld [smem:[#allocation4 + $0x5]]
    %s346 = scalar_lea.vmem [#allocation6], %s345
    %v347 = vld [vmem:[%s346] sm:$0x1]
    %v349 = vrot.slane %v335, 7
    %v352 = vrot.slane %v338, 6
    %v355 = vrot.slane %v341, 5
    %v358 = vrot.slane %v344, 4
    %v361 = vrot.slane %v347, 3
    %vm363 = vcmask 1040384
    %v364 = vsel %vm363, %v332, %v349
    %vm365 = vcmask 1041408
    %v366 = vsel %vm365, %v364, %v352
    %vm367 = vcmask 1042432
    %v368 = vsel %vm367, %v366, %v355
    %vm369 = vcmask 1043456
    %v370 = vsel %vm369, %v368, %v358
    %vm371 = vcmask 1044480
    %v372 = vsel %vm371, %v370, %v361
    %v373 = vpack.c.bf16 %v372, %v372
    %v374 = vld [vmem:[#allocation8] sm:$0xff]
    %v375 = vld [vmem:[#allocation8 + $0x8] sm:$0xf]
    %v376 = vld [vmem:[#allocation8 + $0xc] sm:$0xff]
    %v377 = vld [vmem:[#allocation8 + $0x14] sm:$0xf]
    %v378 = vld [vmem:[#allocation8 + $0x18] sm:$0xff]
    %v379 = vld [vmem:[#allocation8 + $0x20] sm:$0xf]
    %v380 = vld [vmem:[#allocation8 + $0x24] sm:$0xff]
    %v381 = vld [vmem:[#allocation8 + $0x2c] sm:$0xf]
    %v382 = vld [vmem:[#allocation8 + $0x30] sm:$0xff]
    %v383 = vld [vmem:[#allocation8 + $0x38] sm:$0xf]
    %v384 = vld [vmem:[#allocation8 + $0x3c] sm:$0xff]
    %v385 = vld [vmem:[#allocation8 + $0x44] sm:$0xf]
    %v386 = vld [vmem:[#allocation8 + $0x48] sm:$0xff]
    %v387 = vld [vmem:[#allocation8 + $0x50] sm:$0xf]
    %v388 = vld [vmem:[#allocation8 + $0x54] sm:$0xff]
    %v389 = vld [vmem:[#allocation8 + $0x5c] sm:$0xf]
    %v390 = vld [vmem:[#allocation8 + $0x60] sm:$0xff]
    %v391 = vld [vmem:[#allocation8 + $0x68] sm:$0xf]
    %v392 = vld [vmem:[#allocation8 + $0x6c] sm:$0xff]
    %v393 = vld [vmem:[#allocation8 + $0x74] sm:$0xf]
    %v394 = vld [vmem:[#allocation8 + $0x78] sm:$0xff]
    %v395 = vld [vmem:[#allocation8 + $0x80] sm:$0xf]
    %v396 = vld [vmem:[#allocation8 + $0x84] sm:$0xff]
    %v397 = vld [vmem:[#allocation8 + $0x8c] sm:$0xf]
    %v398 = vld [vmem:[#allocation8 + $0x90] sm:$0xff]
    %v399 = vld [vmem:[#allocation8 + $0x98] sm:$0xf]
    %v400 = vld [vmem:[#allocation8 + $0x9c] sm:$0xff]
    %v401 = vld [vmem:[#allocation8 + $0xa4] sm:$0xf]
    %v402 = vld [vmem:[#allocation8 + $0xa8] sm:$0xff]
    %v403 = vld [vmem:[#allocation8 + $0xb0] sm:$0xf]
    %v404 = vld [vmem:[#allocation8 + $0xb4] sm:$0xff]
    %v405 = vld [vmem:[#allocation8 + $0xbc] sm:$0xf]
    %v406 = vld [vmem:[%s5] sm:$0x7]
    %v408 = vperm.slane %v406, 0
    %v409 = vperm.slane %v406, 1
    %v410 = vperm.slane %v406, 2
    %v446 = vunpack.c.l.b16 %v374
    %v447 = vunpack.c.h.b16 %v374
    %v448 = vunpack.c.l.b16 %v375
    %v449 = vunpack.c.l.b16 %v376
    %v450 = vunpack.c.h.b16 %v376
    %v451 = vunpack.c.l.b16 %v377
    %v452 = vunpack.c.l.b16 %v378
    %v453 = vunpack.c.h.b16 %v378
    %v454 = vunpack.c.l.b16 %v379
    %v455 = vunpack.c.l.b16 %v380
    %v456 = vunpack.c.h.b16 %v380
    %v457 = vunpack.c.l.b16 %v381
    %v458 = vunpack.c.l.b16 %v382
    %v459 = vunpack.c.h.b16 %v382
    %v460 = vunpack.c.l.b16 %v383
    %v461 = vunpack.c.l.b16 %v384
    %v462 = vunpack.c.h.b16 %v384
    %v463 = vunpack.c.l.b16 %v385
    %v464 = vunpack.c.l.b16 %v386
    %v465 = vunpack.c.h.b16 %v386
    %v466 = vunpack.c.l.b16 %v387
    %v467 = vunpack.c.l.b16 %v388
    %v468 = vunpack.c.h.b16 %v388
    %v469 = vunpack.c.l.b16 %v389
    %v470 = vunpack.c.l.b16 %v390
    %v471 = vunpack.c.h.b16 %v390
    %v472 = vunpack.c.l.b16 %v391
    %v473 = vunpack.c.l.b16 %v392
    %v474 = vunpack.c.h.b16 %v392
    %v475 = vunpack.c.l.b16 %v393
    %v476 = vunpack.c.l.b16 %v394
    %v477 = vunpack.c.h.b16 %v394
    %v478 = vunpack.c.l.b16 %v395
    %v479 = vunpack.c.l.b16 %v396
    %v480 = vunpack.c.h.b16 %v396
    %v481 = vunpack.c.l.b16 %v397
    %v482 = vunpack.c.l.b16 %v398
    %v483 = vunpack.c.h.b16 %v398
    %v484 = vunpack.c.l.b16 %v399
    %v485 = vunpack.c.l.b16 %v400
    %v486 = vunpack.c.h.b16 %v400
    %v487 = vunpack.c.l.b16 %v401
    %v488 = vunpack.c.l.b16 %v402
    %v489 = vunpack.c.h.b16 %v402
    %v490 = vunpack.c.l.b16 %v403
    %v491 = vunpack.c.l.b16 %v404
    %v492 = vunpack.c.h.b16 %v404
    %v493 = vunpack.c.l.b16 %v405
    %v494 = vpack.c.b16 %v449, %v446
    %v495 = vpack.c.b16 %v450, %v447
    %v496 = vpack.c.b16 %v451, %v448
    %v497 = vpack.c.b16 %v455, %v452
    %v498 = vpack.c.b16 %v456, %v453
    %v499 = vpack.c.b16 %v457, %v454
    %v500 = vpack.c.b16 %v461, %v458
    %v501 = vpack.c.b16 %v462, %v459
    %v502 = vpack.c.b16 %v463, %v460
    %v503 = vpack.c.b16 %v467, %v464
    %v504 = vpack.c.b16 %v468, %v465
    %v505 = vpack.c.b16 %v469, %v466
    %v506 = vpack.c.b16 %v473, %v470
    %v507 = vpack.c.b16 %v474, %v471
    %v508 = vpack.c.b16 %v475, %v472
    %v509 = vpack.c.b16 %v479, %v476
    %v510 = vpack.c.b16 %v480, %v477
    %v511 = vpack.c.b16 %v481, %v478
    %v512 = vpack.c.b16 %v485, %v482
    %v513 = vpack.c.b16 %v486, %v483
    %v514 = vpack.c.b16 %v487, %v484
    %v515 = vpack.c.b16 %v491, %v488
    %v516 = vpack.c.b16 %v492, %v489
    %v517 = vpack.c.b16 %v493, %v490
    %542 = vmatpush.bf16.msra.mxu0 %v515
    %543 = vmatpush.bf16.msra.mxu0 %v512
    %544 = vmatpush.bf16.msra.mxu0 %v509
    %545 = vmatpush.bf16.msra.mxu0 %v506
    %546 = vmatpush.bf16.msra.mxu0 %v503
    %547 = vmatpush.bf16.msra.mxu0 %v500
    %548 = vmatpush.bf16.msra.mxu0 %v497
    %549 = vmatpush.bf16.msra.mxu0 %v494
    %550 = vmatmul.bf16.gmra.mxu0 %v373
    %v551 = vpop.f32.mrf.mxu0
    %v552 = vadd.f32 %v408, %v551
    %v553 = vpop.f32.mrf.mxu0
    %554 = vdwg.mxu0
    %555 = vmatpush.bf16.msra.mxu0 %v516
    %556 = vmatpush.bf16.msra.mxu0 %v513
    %557 = vmatpush.bf16.msra.mxu0 %v510
    %558 = vmatpush.bf16.msra.mxu0 %v507
    %559 = vmatpush.bf16.msra.mxu0 %v504
    %560 = vmatpush.bf16.msra.mxu0 %v501
    %561 = vmatpush.bf16.msra.mxu0 %v498
    %562 = vmatpush.bf16.msra.mxu0 %v495
    %563 = vmatmul.bf16.gmra.mxu0 %v373
    %v564 = vpop.f32.mrf.mxu0
    %v565 = vadd.f32 %v409, %v564
    %v566 = vpop.f32.mrf.mxu0
    %567 = vdwg.mxu0
    %568 = vmatpush.bf16.msra.mxu0 %v517
    %569 = vmatpush.bf16.msra.mxu0 %v514
    %570 = vmatpush.bf16.msra.mxu0 %v511
    %571 = vmatpush.bf16.msra.mxu0 %v508
    %572 = vmatpush.bf16.msra.mxu0 %v505
    %573 = vmatpush.bf16.msra.mxu0 %v502
    %574 = vmatpush.bf16.msra.mxu0 %v499
    %575 = vmatpush.bf16.msra.mxu0 %v496
    %576 = vmatmul.bf16.gmra.mxu0 %v373
    %v577 = vpop.f32.mrf.mxu0
    %v578 = vadd.f32 %v410, %v577
    %v579 = vpop.f32.mrf.mxu0
    %580 = vdwg.mxu0
    %v581 = vld [vmem:[#allocation10] sm:$0xff]
    %v582 = vld [vmem:[#allocation10 + $0x8] sm:$0xf]
    %v583 = vld [vmem:[#allocation10 + $0xc] sm:$0xff]
    %v584 = vld [vmem:[#allocation10 + $0x14] sm:$0xf]
    %v585 = vld [vmem:[#allocation10 + $0x18] sm:$0xff]
    %v586 = vld [vmem:[#allocation10 + $0x20] sm:$0xf]
    %v587 = vld [vmem:[#allocation10 + $0x24] sm:$0xff]
    %v588 = vld [vmem:[#allocation10 + $0x2c] sm:$0xf]
    %v589 = vld [vmem:[#allocation10 + $0x30] sm:$0xff]
    %v590 = vld [vmem:[#allocation10 + $0x38] sm:$0xf]
    %v591 = vld [vmem:[#allocation10 + $0x3c] sm:$0xff]
    %v592 = vld [vmem:[#allocation10 + $0x44] sm:$0xf]
    %v593 = vld [vmem:[#allocation10 + $0x48] sm:$0xff]
    %v594 = vld [vmem:[#allocation10 + $0x50] sm:$0xf]
    %v595 = vld [vmem:[#allocation10 + $0x54] sm:$0xff]
    %v596 = vld [vmem:[#allocation10 + $0x5c] sm:$0xf]
    %v597 = vld [vmem:[#allocation10 + $0x60] sm:$0xff]
    %v598 = vld [vmem:[#allocation10 + $0x68] sm:$0xf]
    %v599 = vld [vmem:[#allocation10 + $0x6c] sm:$0xff]
    %v600 = vld [vmem:[#allocation10 + $0x74] sm:$0xf]
    %v601 = vld [vmem:[#allocation10 + $0x78] sm:$0xff]
    %v602 = vld [vmem:[#allocation10 + $0x80] sm:$0xf]
    %v603 = vld [vmem:[#allocation10 + $0x84] sm:$0xff]
    %v604 = vld [vmem:[#allocation10 + $0x8c] sm:$0xf]
    %v605 = vld [vmem:[#allocation10 + $0x90] sm:$0xff]
    %v606 = vld [vmem:[#allocation10 + $0x98] sm:$0xf]
    %v607 = vld [vmem:[#allocation10 + $0x9c] sm:$0xff]
    %v608 = vld [vmem:[#allocation10 + $0xa4] sm:$0xf]
    %v609 = vld [vmem:[#allocation10 + $0xa8] sm:$0xff]
    %v610 = vld [vmem:[#allocation10 + $0xb0] sm:$0xf]
    %v611 = vld [vmem:[#allocation10 + $0xb4] sm:$0xff]
    %v612 = vld [vmem:[#allocation10 + $0xbc] sm:$0xf]
    %v613 = vld [vmem:[%s6] sm:$0x7]
    %v646 = vunpack.c.l.b16 %v581
    %v647 = vunpack.c.h.b16 %v581
    %v648 = vunpack.c.l.b16 %v582
    %v649 = vunpack.c.l.b16 %v583
    %v650 = vunpack.c.h.b16 %v583
    %v651 = vunpack.c.l.b16 %v584
    %v652 = vunpack.c.l.b16 %v585
    %v653 = vunpack.c.h.b16 %v585
    %v654 = vunpack.c.l.b16 %v586
    %v655 = vunpack.c.l.b16 %v587
    %v656 = vunpack.c.h.b16 %v587
    %v657 = vunpack.c.l.b16 %v588
    %v658 = vunpack.c.l.b16 %v589
    %v659 = vunpack.c.h.b16 %v589
    %v660 = vunpack.c.l.b16 %v590
    %v661 = vunpack.c.l.b16 %v591
    %v662 = vunpack.c.h.b16 %v591
    %v663 = vunpack.c.l.b16 %v592
    %v664 = vunpack.c.l.b16 %v593
    %v665 = vunpack.c.h.b16 %v593
    %v666 = vunpack.c.l.b16 %v594
    %v667 = vunpack.c.l.b16 %v595
    %v668 = vunpack.c.h.b16 %v595
    %v669 = vunpack.c.l.b16 %v596
    %v670 = vunpack.c.l.b16 %v597
    %v671 = vunpack.c.h.b16 %v597
    %v672 = vunpack.c.l.b16 %v598
    %v673 = vunpack.c.l.b16 %v599
    %v674 = vunpack.c.h.b16 %v599
    %v675 = vunpack.c.l.b16 %v600
    %v676 = vunpack.c.l.b16 %v601
    %v677 = vunpack.c.h.b16 %v601
    %v678 = vunpack.c.l.b16 %v602
    %v679 = vunpack.c.l.b16 %v603
    %v680 = vunpack.c.h.b16 %v603
    %v681 = vunpack.c.l.b16 %v604
    %v682 = vunpack.c.l.b16 %v605
    %v683 = vunpack.c.h.b16 %v605
    %v684 = vunpack.c.l.b16 %v606
    %v685 = vunpack.c.l.b16 %v607
    %v686 = vunpack.c.h.b16 %v607
    %v687 = vunpack.c.l.b16 %v608
    %v688 = vunpack.c.l.b16 %v609
    %v689 = vunpack.c.h.b16 %v609
    %v690 = vunpack.c.l.b16 %v610
    %v691 = vunpack.c.l.b16 %v611
    %v692 = vunpack.c.h.b16 %v611
    %v693 = vunpack.c.l.b16 %v612
    %v694 = vpack.c.b16 %v649, %v646
    %v695 = vpack.c.b16 %v650, %v647
    %v696 = vpack.c.b16 %v651, %v648
    %v697 = vpack.c.b16 %v655, %v652
    %v698 = vpack.c.b16 %v656, %v653
    %v699 = vpack.c.b16 %v657, %v654
    %v700 = vpack.c.b16 %v661, %v658
    %v701 = vpack.c.b16 %v662, %v659
    %v702 = vpack.c.b16 %v663, %v660
    %v703 = vpack.c.b16 %v667, %v664
    %v704 = vpack.c.b16 %v668, %v665
    %v705 = vpack.c.b16 %v669, %v666
    %v706 = vpack.c.b16 %v673, %v670
    %v707 = vpack.c.b16 %v674, %v671
    %v708 = vpack.c.b16 %v675, %v672
    %v709 = vpack.c.b16 %v679, %v676
    %v710 = vpack.c.b16 %v680, %v677
    %v711 = vpack.c.b16 %v681, %v678
    %v712 = vpack.c.b16 %v685, %v682
    %v713 = vpack.c.b16 %v686, %v683
    %v714 = vpack.c.b16 %v687, %v684
    %v715 = vpack.c.b16 %v691, %v688
    %v716 = vpack.c.b16 %v692, %v689
    %v717 = vpack.c.b16 %v693, %v690
    %v743 = vperm.slane %v613, 0
    %v744 = vperm.slane %v613, 1
    %v745 = vperm.slane %v613, 2
    %749 = vmatpush.bf16.msra.mxu0 %v715
    %750 = vmatpush.bf16.msra.mxu0 %v712
    %751 = vmatpush.bf16.msra.mxu0 %v709
    %752 = vmatpush.bf16.msra.mxu0 %v706
    %753 = vmatpush.bf16.msra.mxu0 %v703
    %754 = vmatpush.bf16.msra.mxu0 %v700
    %755 = vmatpush.bf16.msra.mxu0 %v697
    %756 = vmatpush.bf16.msra.mxu0 %v694
    %757 = vmatmul.bf16.gmra.mxu0 0
    %v758 = vpop.f32.mrf.mxu0
    %v759 = vadd.f32 %v743, %v758
    %v760 = vpop.f32.mrf.mxu0
    %761 = vdwg.mxu0
    %762 = vmatpush.bf16.msra.mxu0 %v716
    %763 = vmatpush.bf16.msra.mxu0 %v713
    %764 = vmatpush.bf16.msra.mxu0 %v710
    %765 = vmatpush.bf16.msra.mxu0 %v707
    %766 = vmatpush.bf16.msra.mxu0 %v704
    %767 = vmatpush.bf16.msra.mxu0 %v701
    %768 = vmatpush.bf16.msra.mxu0 %v698
    %769 = vmatpush.bf16.msra.mxu0 %v695
    %770 = vmatmul.bf16.gmra.mxu0 0
    %v771 = vpop.f32.mrf.mxu0
    %v772 = vadd.f32 %v744, %v771
    %v773 = vpop.f32.mrf.mxu0
    %774 = vdwg.mxu0
    %775 = vmatpush.bf16.msra.mxu0 %v717
    %776 = vmatpush.bf16.msra.mxu0 %v714
    %777 = vmatpush.bf16.msra.mxu0 %v711
    %778 = vmatpush.bf16.msra.mxu0 %v708
    %779 = vmatpush.bf16.msra.mxu0 %v705
    %780 = vmatpush.bf16.msra.mxu0 %v702
    %781 = vmatpush.bf16.msra.mxu0 %v699
    %782 = vmatpush.bf16.msra.mxu0 %v696
    %783 = vmatmul.bf16.gmra.mxu0 0
    %v784 = vpop.f32.mrf.mxu0
    %v785 = vadd.f32 %v745, %v784
    %v786 = vpop.f32.mrf.mxu0
    %787 = vdwg.mxu0
    %v788 = vadd.f32 %v552, %v759
    %v789 = vxor.u32 %v788, 2147483648
    %v790 = vmul.f32 %v789, 1.442695
    %v791 = vpow.pop %v790
    %v792 = vadd.f32 %v791, 1.0
    %v793 = vrcp.pop %v792
    %v794 = vmul.f32 %v792, %v793
    %v795 = vsub.f32 1.0, %v794
    %v796 = vmul.f32 %v793, %v795
    %v797 = vadd.f32 %v793, %v796
    %vm798 = vweird.f32 %v792
    %vm799 = vweird.f32 %v793
    %vm800 = vmor %vm798, %vm799
    %v801 = vsel %vm800, %v793, %v797
    %v802 = vand.u32 2147483647, %v792
    %vm803 = vcmp.eq.f32.partialorder %v802, 8.507059e+37
    %v804 = vand.u32 %v792, 2147483648
    %v805 = vor.u32 1.1754944e-38, %v804
    %v806 = vsel %vm803, %v805, %v801
    %v807 = vmul.f32 1.0, %v806
    %v808 = vadd.f32 %v565, %v772
    %v809 = vxor.u32 %v808, 2147483648
    %v810 = vmul.f32 %v809, 1.442695
    %v811 = vpow.pop %v810
    %v812 = vadd.f32 %v811, 1.0
    %v813 = vrcp.pop %v812
    %v814 = vmul.f32 %v812, %v813
    %v815 = vsub.f32 1.0, %v814
    %v816 = vmul.f32 %v813, %v815
    %v817 = vadd.f32 %v813, %v816
    %vm818 = vweird.f32 %v812
    %vm819 = vweird.f32 %v813
    %vm820 = vmor %vm818, %vm819
    %v821 = vsel %vm820, %v813, %v817
    %v822 = vand.u32 2147483647, %v812
    %vm823 = vcmp.eq.f32.partialorder %v822, 8.507059e+37
    %v824 = vand.u32 %v812, 2147483648
    %v825 = vor.u32 1.1754944e-38, %v824
    %v826 = vsel %vm823, %v825, %v821
    %v827 = vmul.f32 1.0, %v826
    %v828 = vmul.f32 %v807, %v785
    %v829 = vadd.f32 %v578, %v828
    %v830 = vtanh.pop %v829
    %v831 = vsub.f32 1.0, %v827
    %v832 = vmul.f32 %v831, %v830
    %v833 = vmul.f32 %v827, 0.0
    %v834 = vadd.f32 %v832, %v833
    %835 = vst [vmem:[#allocation2] sm:$0x1] %v834
    %v836 = vpack.c.bf16 %v834, %v834
    %v837 = vld [vmem:[#allocation10] sm:$0xff]
    %v838 = vld [vmem:[#allocation10 + $0x8] sm:$0xf]
    %v839 = vld [vmem:[#allocation10 + $0xc] sm:$0xff]
    %v840 = vld [vmem:[#allocation10 + $0x14] sm:$0xf]
    %v841 = vld [vmem:[#allocation10 + $0x18] sm:$0xff]
    %v842 = vld [vmem:[#allocation10 + $0x20] sm:$0xf]
    %v843 = vld [vmem:[#allocation10 + $0x24] sm:$0xff]
    %v844 = vld [vmem:[#allocation10 + $0x2c] sm:$0xf]
    %v845 = vld [vmem:[#allocation10 + $0x30] sm:$0xff]
    %v846 = vld [vmem:[#allocation10 + $0x38] sm:$0xf]
    %v847 = vld [vmem:[#allocation10 + $0x3c] sm:$0xff]
    %v848 = vld [vmem:[#allocation10 + $0x44] sm:$0xf]
    %v849 = vld [vmem:[#allocation10 + $0x48] sm:$0xff]
    %v850 = vld [vmem:[#allocation10 + $0x50] sm:$0xf]
    %v851 = vld [vmem:[#allocation10 + $0x54] sm:$0xff]
    %v852 = vld [vmem:[#allocation10 + $0x5c] sm:$0xf]
    %v853 = vld [vmem:[#allocation10 + $0x60] sm:$0xff]
    %v854 = vld [vmem:[#allocation10 + $0x68] sm:$0xf]
    %v855 = vld [vmem:[#allocation10 + $0x6c] sm:$0xff]
    %v856 = vld [vmem:[#allocation10 + $0x74] sm:$0xf]
    %v857 = vld [vmem:[#allocation10 + $0x78] sm:$0xff]
    %v858 = vld [vmem:[#allocation10 + $0x80] sm:$0xf]
    %v859 = vld [vmem:[#allocation10 + $0x84] sm:$0xff]
    %v860 = vld [vmem:[#allocation10 + $0x8c] sm:$0xf]
    %v861 = vld [vmem:[#allocation10 + $0x90] sm:$0xff]
    %v862 = vld [vmem:[#allocation10 + $0x98] sm:$0xf]
    %v863 = vld [vmem:[#allocation10 + $0x9c] sm:$0xff]
    %v864 = vld [vmem:[#allocation10 + $0xa4] sm:$0xf]
    %v865 = vld [vmem:[#allocation10 + $0xa8] sm:$0xff]
    %v866 = vld [vmem:[#allocation10 + $0xb0] sm:$0xf]
    %v867 = vld [vmem:[#allocation10 + $0xb4] sm:$0xff]
    %v868 = vld [vmem:[#allocation10 + $0xbc] sm:$0xf]
    %v869 = vld [vmem:[%s6] sm:$0x7]
    %v902 = vunpack.c.l.b16 %v837
    %v903 = vunpack.c.h.b16 %v837
    %v904 = vunpack.c.l.b16 %v838
    %v905 = vunpack.c.l.b16 %v839
    %v906 = vunpack.c.h.b16 %v839
    %v907 = vunpack.c.l.b16 %v840
    %v908 = vunpack.c.l.b16 %v841
    %v909 = vunpack.c.h.b16 %v841
    %v910 = vunpack.c.l.b16 %v842
    %v911 = vunpack.c.l.b16 %v843
    %v912 = vunpack.c.h.b16 %v843
    %v913 = vunpack.c.l.b16 %v844
    %v914 = vunpack.c.l.b16 %v845
    %v915 = vunpack.c.h.b16 %v845
    %v916 = vunpack.c.l.b16 %v846
    %v917 = vunpack.c.l.b16 %v847
    %v918 = vunpack.c.h.b16 %v847
    %v919 = vunpack.c.l.b16 %v848
    %v920 = vunpack.c.l.b16 %v849
    %v921 = vunpack.c.h.b16 %v849
    %v922 = vunpack.c.l.b16 %v850
    %v923 = vunpack.c.l.b16 %v851
    %v924 = vunpack.c.h.b16 %v851
    %v925 = vunpack.c.l.b16 %v852
    %v926 = vunpack.c.l.b16 %v853
    %v927 = vunpack.c.h.b16 %v853
    %v928 = vunpack.c.l.b16 %v854
    %v929 = vunpack.c.l.b16 %v855
    %v930 = vunpack.c.h.b16 %v855
    %v931 = vunpack.c.l.b16 %v856
    %v932 = vunpack.c.l.b16 %v857
    %v933 = vunpack.c.h.b16 %v857
    %v934 = vunpack.c.l.b16 %v858
    %v935 = vunpack.c.l.b16 %v859
    %v936 = vunpack.c.h.b16 %v859
    %v937 = vunpack.c.l.b16 %v860
    %v938 = vunpack.c.l.b16 %v861
    %v939 = vunpack.c.h.b16 %v861
    %v940 = vunpack.c.l.b16 %v862
    %v941 = vunpack.c.l.b16 %v863
    %v942 = vunpack.c.h.b16 %v863
    %v943 = vunpack.c.l.b16 %v864
    %v944 = vunpack.c.l.b16 %v865
    %v945 = vunpack.c.h.b16 %v865
    %v946 = vunpack.c.l.b16 %v866
    %v947 = vunpack.c.l.b16 %v867
    %v948 = vunpack.c.h.b16 %v867
    %v949 = vunpack.c.l.b16 %v868
    %v950 = vpack.c.b16 %v905, %v902
    %v951 = vpack.c.b16 %v906, %v903
    %v952 = vpack.c.b16 %v907, %v904
    %v953 = vpack.c.b16 %v911, %v908
    %v954 = vpack.c.b16 %v912, %v909
    %v955 = vpack.c.b16 %v913, %v910
    %v956 = vpack.c.b16 %v917, %v914
    %v957 = vpack.c.b16 %v918, %v915
    %v958 = vpack.c.b16 %v919, %v916
    %v959 = vpack.c.b16 %v923, %v920
    %v960 = vpack.c.b16 %v924, %v921
    %v961 = vpack.c.b16 %v925, %v922
    %v962 = vpack.c.b16 %v929, %v926
    %v963 = vpack.c.b16 %v930, %v927
    %v964 = vpack.c.b16 %v931, %v928
    %v965 = vpack.c.b16 %v935, %v932
    %v966 = vpack.c.b16 %v936, %v933
    %v967 = vpack.c.b16 %v937, %v934
    %v968 = vpack.c.b16 %v941, %v938
    %v969 = vpack.c.b16 %v942, %v939
    %v970 = vpack.c.b16 %v943, %v940
    %v971 = vpack.c.b16 %v947, %v944
    %v972 = vpack.c.b16 %v948, %v945
    %v973 = vpack.c.b16 %v949, %v946
    %v999 = vperm.slane %v869, 0
    %v1000 = vperm.slane %v869, 1
    %v1001 = vperm.slane %v869, 2
    %1005 = vmatpush.bf16.msra.mxu0 %v971
    %1006 = vmatpush.bf16.msra.mxu0 %v968
    %1007 = vmatpush.bf16.msra.mxu0 %v965
    %1008 = vmatpush.bf16.msra.mxu0 %v962
    %1009 = vmatpush.bf16.msra.mxu0 %v959
    %1010 = vmatpush.bf16.msra.mxu0 %v956
    %1011 = vmatpush.bf16.msra.mxu0 %v953
    %1012 = vmatpush.bf16.msra.mxu0 %v950
    %1013 = vmatmul.bf16.gmra.mxu0 %v836
    %v1014 = vpop.f32.mrf.mxu0
    %v1015 = vadd.f32 %v999, %v1014
    %v1016 = vpop.f32.mrf.mxu0
    %1017 = vdwg.mxu0
    %1018 = vmatpush.bf16.msra.mxu0 %v972
    %1019 = vmatpush.bf16.msra.mxu0 %v969
    %1020 = vmatpush.bf16.msra.mxu0 %v966
    %1021 = vmatpush.bf16.msra.mxu0 %v963
    %1022 = vmatpush.bf16.msra.mxu0 %v960
    %1023 = vmatpush.bf16.msra.mxu0 %v957
    %1024 = vmatpush.bf16.msra.mxu0 %v954
    %1025 = vmatpush.bf16.msra.mxu0 %v951
    %1026 = vmatmul.bf16.gmra.mxu0 %v836
    %v1027 = vpop.f32.mrf.mxu0
    %v1028 = vadd.f32 %v1000, %v1027
    %v1029 = vpop.f32.mrf.mxu0
    %1030 = vdwg.mxu0
    %1031 = vmatpush.bf16.msra.mxu0 %v973
    %1032 = vmatpush.bf16.msra.mxu0 %v970
    %1033 = vmatpush.bf16.msra.mxu0 %v967
    %1034 = vmatpush.bf16.msra.mxu0 %v964
    %1035 = vmatpush.bf16.msra.mxu0 %v961
    %1036 = vmatpush.bf16.msra.mxu0 %v958
    %1037 = vmatpush.bf16.msra.mxu0 %v955
    %1038 = vmatpush.bf16.msra.mxu0 %v952
    %1039 = vmatmul.bf16.gmra.mxu0 %v836
    %v1040 = vpop.f32.mrf.mxu0
    %v1041 = vadd.f32 %v1001, %v1040
    %v1042 = vpop.f32.mrf.mxu0
    %1043 = vdwg.mxu0
    %v1045 = vrot.slane %v1015, 7
    %v1047 = vadd.f32 %v552, %v1045
    %v1048 = vxor.u32 %v1047, 2147483648
    %v1049 = vmul.f32 %v1048, 1.442695
    %v1050 = vpow.pop %v1049
    %v1051 = vadd.f32 %v1050, 1.0
    %v1052 = vrcp.pop %v1051
    %v1053 = vmul.f32 %v1051, %v1052
    %v1054 = vsub.f32 1.0, %v1053
    %v1055 = vmul.f32 %v1052, %v1054
    %v1056 = vadd.f32 %v1052, %v1055
    %vm1057 = vweird.f32 %v1051
    %vm1058 = vweird.f32 %v1052
    %vm1059 = vmor %vm1057, %vm1058
    %v1060 = vsel %vm1059, %v1052, %v1056
    %v1061 = vand.u32 2147483647, %v1051
    %vm1062 = vcmp.eq.f32.partialorder %v1061, 8.507059e+37
    %v1063 = vand.u32 %v1051, 2147483648
    %v1064 = vor.u32 1.1754944e-38, %v1063
    %v1065 = vsel %vm1062, %v1064, %v1060
    %v1066 = vmul.f32 1.0, %v1065
    %v1068 = vrot.slane %v1028, 7
    %v1070 = vadd.f32 %v565, %v1068
    %v1071 = vxor.u32 %v1070, 2147483648
    %v1072 = vmul.f32 %v1071, 1.442695
    %v1073 = vpow.pop %v1072
    %v1074 = vadd.f32 %v1073, 1.0
    %v1075 = vrcp.pop %v1074
    %v1076 = vmul.f32 %v1074, %v1075
    %v1077 = vsub.f32 1.0, %v1076
    %v1078 = vmul.f32 %v1075, %v1077
    %v1079 = vadd.f32 %v1075, %v1078
    %vm1080 = vweird.f32 %v1074
    %vm1081 = vweird.f32 %v1075
    %vm1082 = vmor %vm1080, %vm1081
    %v1083 = vsel %vm1082, %v1075, %v1079
    %v1084 = vand.u32 2147483647, %v1074
    %vm1085 = vcmp.eq.f32.partialorder %v1084, 8.507059e+37
    %v1086 = vand.u32 %v1074, 2147483648
    %v1087 = vor.u32 1.1754944e-38, %v1086
    %v1088 = vsel %vm1085, %v1087, %v1083
    %v1089 = vmul.f32 1.0, %v1088
    %v1091 = vrot.slane %v1041, 7
    %v1093 = vmul.f32 %v1066, %v1091
    %v1094 = vadd.f32 %v578, %v1093
    %v1095 = vtanh.pop %v1094
    %v1096 = vsub.f32 1.0, %v1089
    %v1097 = vmul.f32 %v1096, %v1095
    %v1099 = vrot.slane %v834, 7
    %v1101 = vmul.f32 %v1089, %v1099
    %v1102 = vadd.f32 %v1097, %v1101
    %1103 = vst [vmem:[#allocation2] sm:$0x2] %v1102
    %v1104 = vpack.c.bf16 %v1102, %v1102
    %v1105 = vld [vmem:[#allocation10] sm:$0xff]
    %v1106 = vld [vmem:[#allocation10 + $0x8] sm:$0xf]
    %v1107 = vld [vmem:[#allocation10 + $0xc] sm:$0xff]
    %v1108 = vld [vmem:[#allocation10 + $0x14] sm:$0xf]
    %v1109 = vld [vmem:[#allocation10 + $0x18] sm:$0xff]
    %v1110 = vld [vmem:[#allocation10 + $0x20] sm:$0xf]
    %v1111 = vld [vmem:[#allocation10 + $0x24] sm:$0xff]
    %v1112 = vld [vmem:[#allocation10 + $0x2c] sm:$0xf]
    %v1113 = vld [vmem:[#allocation10 + $0x30] sm:$0xff]
    %v1114 = vld [vmem:[#allocation10 + $0x38] sm:$0xf]
    %v1115 = vld [vmem:[#allocation10 + $0x3c] sm:$0xff]
    %v1116 = vld [vmem:[#allocation10 + $0x44] sm:$0xf]
    %v1117 = vld [vmem:[#allocation10 + $0x48] sm:$0xff]
    %v1118 = vld [vmem:[#allocation10 + $0x50] sm:$0xf]
    %v1119 = vld [vmem:[#allocation10 + $0x54] sm:$0xff]
    %v1120 = vld [vmem:[#allocation10 + $0x5c] sm:$0xf]
    %v1121 = vld [vmem:[#allocation10 + $0x60] sm:$0xff]
    %v1122 = vld [vmem:[#allocation10 + $0x68] sm:$0xf]
    %v1123 = vld [vmem:[#allocation10 + $0x6c] sm:$0xff]
    %v1124 = vld [vmem:[#allocation10 + $0x74] sm:$0xf]
    %v1125 = vld [vmem:[#allocation10 + $0x78] sm:$0xff]
    %v1126 = vld [vmem:[#allocation10 + $0x80] sm:$0xf]
    %v1127 = vld [vmem:[#allocation10 + $0x84] sm:$0xff]
    %v1128 = vld [vmem:[#allocation10 + $0x8c] sm:$0xf]
    %v1129 = vld [vmem:[#allocation10 + $0x90] sm:$0xff]
    %v1130 = vld [vmem:[#allocation10 + $0x98] sm:$0xf]
    %v1131 = vld [vmem:[#allocation10 + $0x9c] sm:$0xff]
    %v1132 = vld [vmem:[#allocation10 + $0xa4] sm:$0xf]
    %v1133 = vld [vmem:[#allocation10 + $0xa8] sm:$0xff]
    %v1134 = vld [vmem:[#allocation10 + $0xb0] sm:$0xf]
    %v1135 = vld [vmem:[#allocation10 + $0xb4] sm:$0xff]
    %v1136 = vld [vmem:[#allocation10 + $0xbc] sm:$0xf]
    %v1137 = vld [vmem:[%s6] sm:$0x7]
    %v1139 = vshrl.u32 %v1104, 16
    %v1174 = vunpack.c.l.b16 %v1105
    %v1175 = vunpack.c.h.b16 %v1105
    %v1176 = vunpack.c.l.b16 %v1106
    %v1177 = vunpack.c.l.b16 %v1107
    %v1178 = vunpack.c.h.b16 %v1107
    %v1179 = vunpack.c.l.b16 %v1108
    %v1180 = vunpack.c.l.b16 %v1109
    %v1181 = vunpack.c.h.b16 %v1109
    %v1182 = vunpack.c.l.b16 %v1110
    %v1183 = vunpack.c.l.b16 %v1111
    %v1184 = vunpack.c.h.b16 %v1111
    %v1185 = vunpack.c.l.b16 %v1112
    %v1186 = vunpack.c.l.b16 %v1113
    %v1187 = vunpack.c.h.b16 %v1113
    %v1188 = vunpack.c.l.b16 %v1114
    %v1189 = vunpack.c.l.b16 %v1115
    %v1190 = vunpack.c.h.b16 %v1115
    %v1191 = vunpack.c.l.b16 %v1116
    %v1192 = vunpack.c.l.b16 %v1117
    %v1193 = vunpack.c.h.b16 %v1117
    %v1194 = vunpack.c.l.b16 %v1118
    %v1195 = vunpack.c.l.b16 %v1119
    %v1196 = vunpack.c.h.b16 %v1119
    %v1197 = vunpack.c.l.b16 %v1120
    %v1198 = vunpack.c.l.b16 %v1121
    %v1199 = vunpack.c.h.b16 %v1121
    %v1200 = vunpack.c.l.b16 %v1122
    %v1201 = vunpack.c.l.b16 %v1123
    %v1202 = vunpack.c.h.b16 %v1123
    %v1203 = vunpack.c.l.b16 %v1124
    %v1204 = vunpack.c.l.b16 %v1125
    %v1205 = vunpack.c.h.b16 %v1125
    %v1206 = vunpack.c.l.b16 %v1126
    %v1207 = vunpack.c.l.b16 %v1127
    %v1208 = vunpack.c.h.b16 %v1127
    %v1209 = vunpack.c.l.b16 %v1128
    %v1210 = vunpack.c.l.b16 %v1129
    %v1211 = vunpack.c.h.b16 %v1129
    %v1212 = vunpack.c.l.b16 %v1130
    %v1213 = vunpack.c.l.b16 %v1131
    %v1214 = vunpack.c.h.b16 %v1131
    %v1215 = vunpack.c.l.b16 %v1132
    %v1216 = vunpack.c.l.b16 %v1133
    %v1217 = vunpack.c.h.b16 %v1133
    %v1218 = vunpack.c.l.b16 %v1134
    %v1219 = vunpack.c.l.b16 %v1135
    %v1220 = vunpack.c.h.b16 %v1135
    %v1221 = vunpack.c.l.b16 %v1136
    %v1222 = vpack.c.b16 %v1177, %v1174
    %v1223 = vpack.c.b16 %v1178, %v1175
    %v1224 = vpack.c.b16 %v1179, %v1176
    %v1225 = vpack.c.b16 %v1183, %v1180
    %v1226 = vpack.c.b16 %v1184, %v1181
    %v1227 = vpack.c.b16 %v1185, %v1182
    %v1228 = vpack.c.b16 %v1189, %v1186
    %v1229 = vpack.c.b16 %v1190, %v1187
    %v1230 = vpack.c.b16 %v1191, %v1188
    %v1231 = vpack.c.b16 %v1195, %v1192
    %v1232 = vpack.c.b16 %v1196, %v1193
    %v1233 = vpack.c.b16 %v1197, %v1194
    %v1234 = vpack.c.b16 %v1201, %v1198
    %v1235 = vpack.c.b16 %v1202, %v1199
    %v1236 = vpack.c.b16 %v1203, %v1200
    %v1237 = vpack.c.b16 %v1207, %v1204
    %v1238 = vpack.c.b16 %v1208, %v1205
    %v1239 = vpack.c.b16 %v1209, %v1206
    %v1240 = vpack.c.b16 %v1213, %v1210
    %v1241 = vpack.c.b16 %v1214, %v1211
    %v1242 = vpack.c.b16 %v1215, %v1212
    %v1243 = vpack.c.b16 %v1219, %v1216
    %v1244 = vpack.c.b16 %v1220, %v1217
    %v1245 = vpack.c.b16 %v1221, %v1218
    %v1271 = vperm.slane %v1137, 0
    %v1272 = vperm.slane %v1137, 1
    %v1273 = vperm.slane %v1137, 2
    %1277 = vmatpush.bf16.msra.mxu0 %v1243
    %1278 = vmatpush.bf16.msra.mxu0 %v1240
    %1279 = vmatpush.bf16.msra.mxu0 %v1237
    %1280 = vmatpush.bf16.msra.mxu0 %v1234
    %1281 = vmatpush.bf16.msra.mxu0 %v1231
    %1282 = vmatpush.bf16.msra.mxu0 %v1228
    %1283 = vmatpush.bf16.msra.mxu0 %v1225
    %1284 = vmatpush.bf16.msra.mxu0 %v1222
    %1285 = vmatmul.bf16.gmra.mxu0 %v1139
    %v1286 = vpop.f32.mrf.mxu0
    %v1287 = vadd.f32 %v1271, %v1286
    %v1288 = vpop.f32.mrf.mxu0
    %1289 = vdwg.mxu0
    %1290 = vmatpush.bf16.msra.mxu0 %v1244
    %1291 = vmatpush.bf16.msra.mxu0 %v1241
    %1292 = vmatpush.bf16.msra.mxu0 %v1238
    %1293 = vmatpush.bf16.msra.mxu0 %v1235
    %1294 = vmatpush.bf16.msra.mxu0 %v1232
    %1295 = vmatpush.bf16.msra.mxu0 %v1229
    %1296 = vmatpush.bf16.msra.mxu0 %v1226
    %1297 = vmatpush.bf16.msra.mxu0 %v1223
    %1298 = vmatmul.bf16.gmra.mxu0 %v1139
    %v1299 = vpop.f32.mrf.mxu0
    %v1300 = vadd.f32 %v1272, %v1299
    %v1301 = vpop.f32.mrf.mxu0
    %1302 = vdwg.mxu0
    %1303 = vmatpush.bf16.msra.mxu0 %v1245
    %1304 = vmatpush.bf16.msra.mxu0 %v1242
    %1305 = vmatpush.bf16.msra.mxu0 %v1239
    %1306 = vmatpush.bf16.msra.mxu0 %v1236
    %1307 = vmatpush.bf16.msra.mxu0 %v1233
    %1308 = vmatpush.bf16.msra.mxu0 %v1230
    %1309 = vmatpush.bf16.msra.mxu0 %v1227
    %1310 = vmatpush.bf16.msra.mxu0 %v1224
    %1311 = vmatmul.bf16.gmra.mxu0 %v1139
    %v1312 = vpop.f32.mrf.mxu0
    %v1313 = vadd.f32 %v1273, %v1312
    %v1314 = vpop.f32.mrf.mxu0
    %1315 = vdwg.mxu0
    %v1317 = vrot.slane %v1287, 6
    %v1319 = vadd.f32 %v552, %v1317
    %v1320 = vxor.u32 %v1319, 2147483648
    %v1321 = vmul.f32 %v1320, 1.442695
    %v1322 = vpow.pop %v1321
    %v1323 = vadd.f32 %v1322, 1.0
    %v1324 = vrcp.pop %v1323
    %v1325 = vmul.f32 %v1323, %v1324
    %v1326 = vsub.f32 1.0, %v1325
    %v1327 = vmul.f32 %v1324, %v1326
    %v1328 = vadd.f32 %v1324, %v1327
    %vm1329 = vweird.f32 %v1323
    %vm1330 = vweird.f32 %v1324
    %vm1331 = vmor %vm1329, %vm1330
    %v1332 = vsel %vm1331, %v1324, %v1328
    %v1333 = vand.u32 2147483647, %v1323
    %vm1334 = vcmp.eq.f32.partialorder %v1333, 8.507059e+37
    %v1335 = vand.u32 %v1323, 2147483648
    %v1336 = vor.u32 1.1754944e-38, %v1335
    %v1337 = vsel %vm1334, %v1336, %v1332
    %v1338 = vmul.f32 1.0, %v1337
    %v1340 = vrot.slane %v1300, 6
    %v1342 = vadd.f32 %v565, %v1340
    %v1343 = vxor.u32 %v1342, 2147483648
    %v1344 = vmul.f32 %v1343, 1.442695
    %v1345 = vpow.pop %v1344
    %v1346 = vadd.f32 %v1345, 1.0
    %v1347 = vrcp.pop %v1346
    %v1348 = vmul.f32 %v1346, %v1347
    %v1349 = vsub.f32 1.0, %v1348
    %v1350 = vmul.f32 %v1347, %v1349
    %v1351 = vadd.f32 %v1347, %v1350
    %vm1352 = vweird.f32 %v1346
    %vm1353 = vweird.f32 %v1347
    %vm1354 = vmor %vm1352, %vm1353
    %v1355 = vsel %vm1354, %v1347, %v1351
    %v1356 = vand.u32 2147483647, %v1346
    %vm1357 = vcmp.eq.f32.partialorder %v1356, 8.507059e+37
    %v1358 = vand.u32 %v1346, 2147483648
    %v1359 = vor.u32 1.1754944e-38, %v1358
    %v1360 = vsel %vm1357, %v1359, %v1355
    %v1361 = vmul.f32 1.0, %v1360
    %v1363 = vrot.slane %v1313, 6
    %v1365 = vmul.f32 %v1338, %v1363
    %v1366 = vadd.f32 %v578, %v1365
    %v1367 = vtanh.pop %v1366
    %v1368 = vsub.f32 1.0, %v1361
    %v1369 = vmul.f32 %v1368, %v1367
    %v1371 = vrot.slane %v1102, 7
    %v1373 = vmul.f32 %v1361, %v1371
    %v1374 = vadd.f32 %v1369, %v1373
    %1375 = vst [vmem:[#allocation2] sm:$0x4] %v1374
    %v1376 = vpack.c.bf16 %v1374, %v1374
    %v1377 = vld [vmem:[#allocation10] sm:$0xff]
    %v1378 = vld [vmem:[#allocation10 + $0x8] sm:$0xf]
    %v1379 = vld [vmem:[#allocation10 + $0xc] sm:$0xff]
    %v1380 = vld [vmem:[#allocation10 + $0x14] sm:$0xf]
    %v1381 = vld [vmem:[#allocation10 + $0x18] sm:$0xff]
    %v1382 = vld [vmem:[#allocation10 + $0x20] sm:$0xf]
    %v1383 = vld [vmem:[#allocation10 + $0x24] sm:$0xff]
    %v1384 = vld [vmem:[#allocation10 + $0x2c] sm:$0xf]
    %v1385 = vld [vmem:[#allocation10 + $0x30] sm:$0xff]
    %v1386 = vld [vmem:[#allocation10 + $0x38] sm:$0xf]
    %v1387 = vld [vmem:[#allocation10 + $0x3c] sm:$0xff]
    %v1388 = vld [vmem:[#allocation10 + $0x44] sm:$0xf]
    %v1389 = vld [vmem:[#allocation10 + $0x48] sm:$0xff]
    %v1390 = vld [vmem:[#allocation10 + $0x50] sm:$0xf]
    %v1391 = vld [vmem:[#allocation10 + $0x54] sm:$0xff]
    %v1392 = vld [vmem:[#allocation10 + $0x5c] sm:$0xf]
    %v1393 = vld [vmem:[#allocation10 + $0x60] sm:$0xff]
    %v1394 = vld [vmem:[#allocation10 + $0x68] sm:$0xf]
    %v1395 = vld [vmem:[#allocation10 + $0x6c] sm:$0xff]
    %v1396 = vld [vmem:[#allocation10 + $0x74] sm:$0xf]
    %v1397 = vld [vmem:[#allocation10 + $0x78] sm:$0xff]
    %v1398 = vld [vmem:[#allocation10 + $0x80] sm:$0xf]
    %v1399 = vld [vmem:[#allocation10 + $0x84] sm:$0xff]
    %v1400 = vld [vmem:[#allocation10 + $0x8c] sm:$0xf]
    %v1401 = vld [vmem:[#allocation10 + $0x90] sm:$0xff]
    %v1402 = vld [vmem:[#allocation10 + $0x98] sm:$0xf]
    %v1403 = vld [vmem:[#allocation10 + $0x9c] sm:$0xff]
    %v1404 = vld [vmem:[#allocation10 + $0xa4] sm:$0xf]
    %v1405 = vld [vmem:[#allocation10 + $0xa8] sm:$0xff]
    %v1406 = vld [vmem:[#allocation10 + $0xb0] sm:$0xf]
    %v1407 = vld [vmem:[#allocation10 + $0xb4] sm:$0xff]
    %v1408 = vld [vmem:[#allocation10 + $0xbc] sm:$0xf]
    %v1409 = vld [vmem:[%s6] sm:$0x7]
    %v1411 = vrot.slane %v1376, 1
    %v1445 = vunpack.c.l.b16 %v1377
    %v1446 = vunpack.c.h.b16 %v1377
    %v1447 = vunpack.c.l.b16 %v1378
    %v1448 = vunpack.c.l.b16 %v1379
    %v1449 = vunpack.c.h.b16 %v1379
    %v1450 = vunpack.c.l.b16 %v1380
    %v1451 = vunpack.c.l.b16 %v1381
    %v1452 = vunpack.c.h.b16 %v1381
    %v1453 = vunpack.c.l.b16 %v1382
    %v1454 = vunpack.c.l.b16 %v1383
    %v1455 = vunpack.c.h.b16 %v1383
    %v1456 = vunpack.c.l.b16 %v1384
    %v1457 = vunpack.c.l.b16 %v1385
    %v1458 = vunpack.c.h.b16 %v1385
    %v1459 = vunpack.c.l.b16 %v1386
    %v1460 = vunpack.c.l.b16 %v1387
    %v1461 = vunpack.c.h.b16 %v1387
    %v1462 = vunpack.c.l.b16 %v1388
    %v1463 = vunpack.c.l.b16 %v1389
    %v1464 = vunpack.c.h.b16 %v1389
    %v1465 = vunpack.c.l.b16 %v1390
    %v1466 = vunpack.c.l.b16 %v1391
    %v1467 = vunpack.c.h.b16 %v1391
    %v1468 = vunpack.c.l.b16 %v1392
    %v1469 = vunpack.c.l.b16 %v1393
    %v1470 = vunpack.c.h.b16 %v1393
    %v1471 = vunpack.c.l.b16 %v1394
    %v1472 = vunpack.c.l.b16 %v1395
    %v1473 = vunpack.c.h.b16 %v1395
    %v1474 = vunpack.c.l.b16 %v1396
    %v1475 = vunpack.c.l.b16 %v1397
    %v1476 = vunpack.c.h.b16 %v1397
    %v1477 = vunpack.c.l.b16 %v1398
    %v1478 = vunpack.c.l.b16 %v1399
    %v1479 = vunpack.c.h.b16 %v1399
    %v1480 = vunpack.c.l.b16 %v1400
    %v1481 = vunpack.c.l.b16 %v1401
    %v1482 = vunpack.c.h.b16 %v1401
    %v1483 = vunpack.c.l.b16 %v1402
    %v1484 = vunpack.c.l.b16 %v1403
    %v1485 = vunpack.c.h.b16 %v1403
    %v1486 = vunpack.c.l.b16 %v1404
    %v1487 = vunpack.c.l.b16 %v1405
    %v1488 = vunpack.c.h.b16 %v1405
    %v1489 = vunpack.c.l.b16 %v1406
    %v1490 = vunpack.c.l.b16 %v1407
    %v1491 = vunpack.c.h.b16 %v1407
    %v1492 = vunpack.c.l.b16 %v1408
    %v1493 = vpack.c.b16 %v1448, %v1445
    %v1494 = vpack.c.b16 %v1449, %v1446
    %v1495 = vpack.c.b16 %v1450, %v1447
    %v1496 = vpack.c.b16 %v1454, %v1451
    %v1497 = vpack.c.b16 %v1455, %v1452
    %v1498 = vpack.c.b16 %v1456, %v1453
    %v1499 = vpack.c.b16 %v1460, %v1457
    %v1500 = vpack.c.b16 %v1461, %v1458
    %v1501 = vpack.c.b16 %v1462, %v1459
    %v1502 = vpack.c.b16 %v1466, %v1463
    %v1503 = vpack.c.b16 %v1467, %v1464
    %v1504 = vpack.c.b16 %v1468, %v1465
    %v1505 = vpack.c.b16 %v1472, %v1469
    %v1506 = vpack.c.b16 %v1473, %v1470
    %v1507 = vpack.c.b16 %v1474, %v1471
    %v1508 = vpack.c.b16 %v1478, %v1475
    %v1509 = vpack.c.b16 %v1479, %v1476
    %v1510 = vpack.c.b16 %v1480, %v1477
    %v1511 = vpack.c.b16 %v1484, %v1481
    %v1512 = vpack.c.b16 %v1485, %v1482
    %v1513 = vpack.c.b16 %v1486, %v1483
    %v1514 = vpack.c.b16 %v1490, %v1487
    %v1515 = vpack.c.b16 %v1491, %v1488
    %v1516 = vpack.c.b16 %v1492, %v1489
    %v1542 = vperm.slane %v1409, 0
    %v1543 = vperm.slane %v1409, 1
    %v1544 = vperm.slane %v1409, 2
    %1548 = vmatpush.bf16.msra.mxu0 %v1514
    %1549 = vmatpush.bf16.msra.mxu0 %v1511
    %1550 = vmatpush.bf16.msra.mxu0 %v1508
    %1551 = vmatpush.bf16.msra.mxu0 %v1505
    %1552 = vmatpush.bf16.msra.mxu0 %v1502
    %1553 = vmatpush.bf16.msra.mxu0 %v1499
    %1554 = vmatpush.bf16.msra.mxu0 %v1496
    %1555 = vmatpush.bf16.msra.mxu0 %v1493
    %1556 = vmatmul.bf16.gmra.mxu0 %v1411
    %v1557 = vpop.f32.mrf.mxu0
    %v1558 = vadd.f32 %v1542, %v1557
    %v1559 = vpop.f32.mrf.mxu0
    %1560 = vdwg.mxu0
    %1561 = vmatpush.bf16.msra.mxu0 %v1515
    %1562 = vmatpush.bf16.msra.mxu0 %v1512
    %1563 = vmatpush.bf16.msra.mxu0 %v1509
    %1564 = vmatpush.bf16.msra.mxu0 %v1506
    %1565 = vmatpush.bf16.msra.mxu0 %v1503
    %1566 = vmatpush.bf16.msra.mxu0 %v1500
    %1567 = vmatpush.bf16.msra.mxu0 %v1497
    %1568 = vmatpush.bf16.msra.mxu0 %v1494
    %1569 = vmatmul.bf16.gmra.mxu0 %v1411
    %v1570 = vpop.f32.mrf.mxu0
    %v1571 = vadd.f32 %v1543, %v1570
    %v1572 = vpop.f32.mrf.mxu0
    %1573 = vdwg.mxu0
    %1574 = vmatpush.bf16.msra.mxu0 %v1516
    %1575 = vmatpush.bf16.msra.mxu0 %v1513
    %1576 = vmatpush.bf16.msra.mxu0 %v1510
    %1577 = vmatpush.bf16.msra.mxu0 %v1507
    %1578 = vmatpush.bf16.msra.mxu0 %v1504
    %1579 = vmatpush.bf16.msra.mxu0 %v1501
    %1580 = vmatpush.bf16.msra.mxu0 %v1498
    %1581 = vmatpush.bf16.msra.mxu0 %v1495
    %1582 = vmatmul.bf16.gmra.mxu0 %v1411
    %v1583 = vpop.f32.mrf.mxu0
    %v1584 = vadd.f32 %v1544, %v1583
    %v1585 = vpop.f32.mrf.mxu0
    %1586 = vdwg.mxu0
    %v1588 = vrot.slane %v1558, 5
    %v1590 = vadd.f32 %v552, %v1588
    %v1591 = vxor.u32 %v1590, 2147483648
    %v1592 = vmul.f32 %v1591, 1.442695
    %v1593 = vpow.pop %v1592
    %v1594 = vadd.f32 %v1593, 1.0
    %v1595 = vrcp.pop %v1594
    %v1596 = vmul.f32 %v1594, %v1595
    %v1597 = vsub.f32 1.0, %v1596
    %v1598 = vmul.f32 %v1595, %v1597
    %v1599 = vadd.f32 %v1595, %v1598
    %vm1600 = vweird.f32 %v1594
    %vm1601 = vweird.f32 %v1595
    %vm1602 = vmor %vm1600, %vm1601
    %v1603 = vsel %vm1602, %v1595, %v1599
    %v1604 = vand.u32 2147483647, %v1594
    %vm1605 = vcmp.eq.f32.partialorder %v1604, 8.507059e+37
    %v1606 = vand.u32 %v1594, 2147483648
    %v1607 = vor.u32 1.1754944e-38, %v1606
    %v1608 = vsel %vm1605, %v1607, %v1603
    %v1609 = vmul.f32 1.0, %v1608
    %v1611 = vrot.slane %v1571, 5
    %v1613 = vadd.f32 %v565, %v1611
    %v1614 = vxor.u32 %v1613, 2147483648
    %v1615 = vmul.f32 %v1614, 1.442695
    %v1616 = vpow.pop %v1615
    %v1617 = vadd.f32 %v1616, 1.0
    %v1618 = vrcp.pop %v1617
    %v1619 = vmul.f32 %v1617, %v1618
    %v1620 = vsub.f32 1.0, %v1619
    %v1621 = vmul.f32 %v1618, %v1620
    %v1622 = vadd.f32 %v1618, %v1621
    %vm1623 = vweird.f32 %v1617
    %vm1624 = vweird.f32 %v1618
    %vm1625 = vmor %vm1623, %vm1624
    %v1626 = vsel %vm1625, %v1618, %v1622
    %v1627 = vand.u32 2147483647, %v1617
    %vm1628 = vcmp.eq.f32.partialorder %v1627, 8.507059e+37
    %v1629 = vand.u32 %v1617, 2147483648
    %v1630 = vor.u32 1.1754944e-38, %v1629
    %v1631 = vsel %vm1628, %v1630, %v1626
    %v1632 = vmul.f32 1.0, %v1631
    %v1634 = vrot.slane %v1584, 5
    %v1636 = vmul.f32 %v1609, %v1634
    %v1637 = vadd.f32 %v578, %v1636
    %v1638 = vtanh.pop %v1637
    %v1639 = vsub.f32 1.0, %v1632
    %v1640 = vmul.f32 %v1639, %v1638
    %v1642 = vrot.slane %v1374, 7
    %v1644 = vmul.f32 %v1632, %v1642
    %v1645 = vadd.f32 %v1640, %v1644
    %1646 = vst [vmem:[#allocation2] sm:$0x8] %v1645
    %v1647 = vpack.c.bf16 %v1645, %v1645
    %v1648 = vld [vmem:[#allocation10] sm:$0xff]
    %v1649 = vld [vmem:[#allocation10 + $0x8] sm:$0xf]
    %v1650 = vld [vmem:[#allocation10 + $0xc] sm:$0xff]
    %v1651 = vld [vmem:[#allocation10 + $0x14] sm:$0xf]
    %v1652 = vld [vmem:[#allocation10 + $0x18] sm:$0xff]
    %v1653 = vld [vmem:[#allocation10 + $0x20] sm:$0xf]
    %v1654 = vld [vmem:[#allocation10 + $0x24] sm:$0xff]
    %v1655 = vld [vmem:[#allocation10 + $0x2c] sm:$0xf]
    %v1656 = vld [vmem:[#allocation10 + $0x30] sm:$0xff]
    %v1657 = vld [vmem:[#allocation10 + $0x38] sm:$0xf]
    %v1658 = vld [vmem:[#allocation10 + $0x3c] sm:$0xff]
    %v1659 = vld [vmem:[#allocation10 + $0x44] sm:$0xf]
    %v1660 = vld [vmem:[#allocation10 + $0x48] sm:$0xff]
    %v1661 = vld [vmem:[#allocation10 + $0x50] sm:$0xf]
    %v1662 = vld [vmem:[#allocation10 + $0x54] sm:$0xff]
    %v1663 = vld [vmem:[#allocation10 + $0x5c] sm:$0xf]
    %v1664 = vld [vmem:[#allocation10 + $0x60] sm:$0xff]
    %v1665 = vld [vmem:[#allocation10 + $0x68] sm:$0xf]
    %v1666 = vld [vmem:[#allocation10 + $0x6c] sm:$0xff]
    %v1667 = vld [vmem:[#allocation10 + $0x74] sm:$0xf]
    %v1668 = vld [vmem:[#allocation10 + $0x78] sm:$0xff]
    %v1669 = vld [vmem:[#allocation10 + $0x80] sm:$0xf]
    %v1670 = vld [vmem:[#allocation10 + $0x84] sm:$0xff]
    %v1671 = vld [vmem:[#allocation10 + $0x8c] sm:$0xf]
    %v1672 = vld [vmem:[#allocation10 + $0x90] sm:$0xff]
    %v1673 = vld [vmem:[#allocation10 + $0x98] sm:$0xf]
    %v1674 = vld [vmem:[#allocation10 + $0x9c] sm:$0xff]
    %v1675 = vld [vmem:[#allocation10 + $0xa4] sm:$0xf]
    %v1676 = vld [vmem:[#allocation10 + $0xa8] sm:$0xff]
    %v1677 = vld [vmem:[#allocation10 + $0xb0] sm:$0xf]
    %v1678 = vld [vmem:[#allocation10 + $0xb4] sm:$0xff]
    %v1679 = vld [vmem:[#allocation10 + $0xbc] sm:$0xf]
    %v1680 = vld [vmem:[%s6] sm:$0x7]
    %v1682 = vshrl.u32 %v1647, 16
    %v1684 = vrot.slane %v1682, 1
    %v1718 = vunpack.c.l.b16 %v1648
    %v1719 = vunpack.c.h.b16 %v1648
    %v1720 = vunpack.c.l.b16 %v1649
    %v1721 = vunpack.c.l.b16 %v1650
    %v1722 = vunpack.c.h.b16 %v1650
    %v1723 = vunpack.c.l.b16 %v1651
    %v1724 = vunpack.c.l.b16 %v1652
    %v1725 = vunpack.c.h.b16 %v1652
    %v1726 = vunpack.c.l.b16 %v1653
    %v1727 = vunpack.c.l.b16 %v1654
    %v1728 = vunpack.c.h.b16 %v1654
    %v1729 = vunpack.c.l.b16 %v1655
    %v1730 = vunpack.c.l.b16 %v1656
    %v1731 = vunpack.c.h.b16 %v1656
    %v1732 = vunpack.c.l.b16 %v1657
    %v1733 = vunpack.c.l.b16 %v1658
    %v1734 = vunpack.c.h.b16 %v1658
    %v1735 = vunpack.c.l.b16 %v1659
    %v1736 = vunpack.c.l.b16 %v1660
    %v1737 = vunpack.c.h.b16 %v1660
    %v1738 = vunpack.c.l.b16 %v1661
    %v1739 = vunpack.c.l.b16 %v1662
    %v1740 = vunpack.c.h.b16 %v1662
    %v1741 = vunpack.c.l.b16 %v1663
    %v1742 = vunpack.c.l.b16 %v1664
    %v1743 = vunpack.c.h.b16 %v1664
    %v1744 = vunpack.c.l.b16 %v1665
    %v1745 = vunpack.c.l.b16 %v1666
    %v1746 = vunpack.c.h.b16 %v1666
    %v1747 = vunpack.c.l.b16 %v1667
    %v1748 = vunpack.c.l.b16 %v1668
    %v1749 = vunpack.c.h.b16 %v1668
    %v1750 = vunpack.c.l.b16 %v1669
    %v1751 = vunpack.c.l.b16 %v1670
    %v1752 = vunpack.c.h.b16 %v1670
    %v1753 = vunpack.c.l.b16 %v1671
    %v1754 = vunpack.c.l.b16 %v1672
    %v1755 = vunpack.c.h.b16 %v1672
    %v1756 = vunpack.c.l.b16 %v1673
    %v1757 = vunpack.c.l.b16 %v1674
    %v1758 = vunpack.c.h.b16 %v1674
    %v1759 = vunpack.c.l.b16 %v1675
    %v1760 = vunpack.c.l.b16 %v1676
    %v1761 = vunpack.c.h.b16 %v1676
    %v1762 = vunpack.c.l.b16 %v1677
    %v1763 = vunpack.c.l.b16 %v1678
    %v1764 = vunpack.c.h.b16 %v1678
    %v1765 = vunpack.c.l.b16 %v1679
    %v1766 = vpack.c.b16 %v1721, %v1718
    %v1767 = vpack.c.b16 %v1722, %v1719
    %v1768 = vpack.c.b16 %v1723, %v1720
    %v1769 = vpack.c.b16 %v1727, %v1724
    %v1770 = vpack.c.b16 %v1728, %v1725
    %v1771 = vpack.c.b16 %v1729, %v1726
    %v1772 = vpack.c.b16 %v1733, %v1730
    %v1773 = vpack.c.b16 %v1734, %v1731
    %v1774 = vpack.c.b16 %v1735, %v1732
    %v1775 = vpack.c.b16 %v1739, %v1736
    %v1776 = vpack.c.b16 %v1740, %v1737
    %v1777 = vpack.c.b16 %v1741, %v1738
    %v1778 = vpack.c.b16 %v1745, %v1742
    %v1779 = vpack.c.b16 %v1746, %v1743
    %v1780 = vpack.c.b16 %v1747, %v1744
    %v1781 = vpack.c.b16 %v1751, %v1748
    %v1782 = vpack.c.b16 %v1752, %v1749
    %v1783 = vpack.c.b16 %v1753, %v1750
    %v1784 = vpack.c.b16 %v1757, %v1754
    %v1785 = vpack.c.b16 %v1758, %v1755
    %v1786 = vpack.c.b16 %v1759, %v1756
    %v1787 = vpack.c.b16 %v1763, %v1760
    %v1788 = vpack.c.b16 %v1764, %v1761
    %v1789 = vpack.c.b16 %v1765, %v1762
    %v1815 = vperm.slane %v1680, 0
    %v1816 = vperm.slane %v1680, 1
    %v1817 = vperm.slane %v1680, 2
    %1821 = vmatpush.bf16.msra.mxu0 %v1787
    %1822 = vmatpush.bf16.msra.mxu0 %v1784
    %1823 = vmatpush.bf16.msra.mxu0 %v1781
    %1824 = vmatpush.bf16.msra.mxu0 %v1778
    %1825 = vmatpush.bf16.msra.mxu0 %v1775
    %1826 = vmatpush.bf16.msra.mxu0 %v1772
    %1827 = vmatpush.bf16.msra.mxu0 %v1769
    %1828 = vmatpush.bf16.msra.mxu0 %v1766
    %1829 = vmatmul.bf16.gmra.mxu0 %v1684
    %v1830 = vpop.f32.mrf.mxu0
    %v1831 = vadd.f32 %v1815, %v1830
    %v1832 = vpop.f32.mrf.mxu0
    %1833 = vdwg.mxu0
    %1834 = vmatpush.bf16.msra.mxu0 %v1788
    %1835 = vmatpush.bf16.msra.mxu0 %v1785
    %1836 = vmatpush.bf16.msra.mxu0 %v1782
    %1837 = vmatpush.bf16.msra.mxu0 %v1779
    %1838 = vmatpush.bf16.msra.mxu0 %v1776
    %1839 = vmatpush.bf16.msra.mxu0 %v1773
    %1840 = vmatpush.bf16.msra.mxu0 %v1770
    %1841 = vmatpush.bf16.msra.mxu0 %v1767
    %1842 = vmatmul.bf16.gmra.mxu0 %v1684
    %v1843 = vpop.f32.mrf.mxu0
    %v1844 = vadd.f32 %v1816, %v1843
    %v1845 = vpop.f32.mrf.mxu0
    %1846 = vdwg.mxu0
    %1847 = vmatpush.bf16.msra.mxu0 %v1789
    %1848 = vmatpush.bf16.msra.mxu0 %v1786
    %1849 = vmatpush.bf16.msra.mxu0 %v1783
    %1850 = vmatpush.bf16.msra.mxu0 %v1780
    %1851 = vmatpush.bf16.msra.mxu0 %v1777
    %1852 = vmatpush.bf16.msra.mxu0 %v1774
    %1853 = vmatpush.bf16.msra.mxu0 %v1771
    %1854 = vmatpush.bf16.msra.mxu0 %v1768
    %1855 = vmatmul.bf16.gmra.mxu0 %v1684
    %v1856 = vpop.f32.mrf.mxu0
    %v1857 = vadd.f32 %v1817, %v1856
    %v1858 = vpop.f32.mrf.mxu0
    %1859 = vdwg.mxu0
    %v1861 = vrot.slane %v1831, 4
    %v1863 = vadd.f32 %v552, %v1861
    %v1864 = vxor.u32 %v1863, 2147483648
    %v1865 = vmul.f32 %v1864, 1.442695
    %v1866 = vpow.pop %v1865
    %v1867 = vadd.f32 %v1866, 1.0
    %v1868 = vrcp.pop %v1867
    %v1869 = vmul.f32 %v1867, %v1868
    %v1870 = vsub.f32 1.0, %v1869
    %v1871 = vmul.f32 %v1868, %v1870
    %v1872 = vadd.f32 %v1868, %v1871
    %vm1873 = vweird.f32 %v1867
    %vm1874 = vweird.f32 %v1868
    %vm1875 = vmor %vm1873, %vm1874
    %v1876 = vsel %vm1875, %v1868, %v1872
    %v1877 = vand.u32 2147483647, %v1867
    %vm1878 = vcmp.eq.f32.partialorder %v1877, 8.507059e+37
    %v1879 = vand.u32 %v1867, 2147483648
    %v1880 = vor.u32 1.1754944e-38, %v1879
    %v1881 = vsel %vm1878, %v1880, %v1876
    %v1882 = vmul.f32 1.0, %v1881
    %v1884 = vrot.slane %v1844, 4
    %v1886 = vadd.f32 %v565, %v1884
    %v1887 = vxor.u32 %v1886, 2147483648
    %v1888 = vmul.f32 %v1887, 1.442695
    %v1889 = vpow.pop %v1888
    %v1890 = vadd.f32 %v1889, 1.0
    %v1891 = vrcp.pop %v1890
    %v1892 = vmul.f32 %v1890, %v1891
    %v1893 = vsub.f32 1.0, %v1892
    %v1894 = vmul.f32 %v1891, %v1893
    %v1895 = vadd.f32 %v1891, %v1894
    %vm1896 = vweird.f32 %v1890
    %vm1897 = vweird.f32 %v1891
    %vm1898 = vmor %vm1896, %vm1897
    %v1899 = vsel %vm1898, %v1891, %v1895
    %v1900 = vand.u32 2147483647, %v1890
    %vm1901 = vcmp.eq.f32.partialorder %v1900, 8.507059e+37
    %v1902 = vand.u32 %v1890, 2147483648
    %v1903 = vor.u32 1.1754944e-38, %v1902
    %v1904 = vsel %vm1901, %v1903, %v1899
    %v1905 = vmul.f32 1.0, %v1904
    %v1907 = vrot.slane %v1857, 4
    %v1909 = vmul.f32 %v1882, %v1907
    %v1910 = vadd.f32 %v578, %v1909
    %v1911 = vtanh.pop %v1910
    %v1912 = vsub.f32 1.0, %v1905
    %v1913 = vmul.f32 %v1912, %v1911
    %v1915 = vrot.slane %v1645, 7
    %v1917 = vmul.f32 %v1905, %v1915
    %v1918 = vadd.f32 %v1913, %v1917
    %1919 = vst [vmem:[#allocation2] sm:$0x10] %v1918
    %v1920 = vpack.c.bf16 %v1918, %v1918
    %v1921 = vld [vmem:[#allocation10] sm:$0xff]
    %v1922 = vld [vmem:[#allocation10 + $0x8] sm:$0xf]
    %v1923 = vld [vmem:[#allocation10 + $0xc] sm:$0xff]
    %v1924 = vld [vmem:[#allocation10 + $0x14] sm:$0xf]
    %v1925 = vld [vmem:[#allocation10 + $0x18] sm:$0xff]
    %v1926 = vld [vmem:[#allocation10 + $0x20] sm:$0xf]
    %v1927 = vld [vmem:[#allocation10 + $0x24] sm:$0xff]
    %v1928 = vld [vmem:[#allocation10 + $0x2c] sm:$0xf]
    %v1929 = vld [vmem:[#allocation10 + $0x30] sm:$0xff]
    %v1930 = vld [vmem:[#allocation10 + $0x38] sm:$0xf]
    %v1931 = vld [vmem:[#allocation10 + $0x3c] sm:$0xff]
    %v1932 = vld [vmem:[#allocation10 + $0x44] sm:$0xf]
    %v1933 = vld [vmem:[#allocation10 + $0x48] sm:$0xff]
    %v1934 = vld [vmem:[#allocation10 + $0x50] sm:$0xf]
    %v1935 = vld [vmem:[#allocation10 + $0x54] sm:$0xff]
    %v1936 = vld [vmem:[#allocation10 + $0x5c] sm:$0xf]
    %v1937 = vld [vmem:[#allocation10 + $0x60] sm:$0xff]
    %v1938 = vld [vmem:[#allocation10 + $0x68] sm:$0xf]
    %v1939 = vld [vmem:[#allocation10 + $0x6c] sm:$0xff]
    %v1940 = vld [vmem:[#allocation10 + $0x74] sm:$0xf]
    %v1941 = vld [vmem:[#allocation10 + $0x78] sm:$0xff]
    %v1942 = vld [vmem:[#allocation10 + $0x80] sm:$0xf]
    %v1943 = vld [vmem:[#allocation10 + $0x84] sm:$0xff]
    %v1944 = vld [vmem:[#allocation10 + $0x8c] sm:$0xf]
    %v1945 = vld [vmem:[#allocation10 + $0x90] sm:$0xff]
    %v1946 = vld [vmem:[#allocation10 + $0x98] sm:$0xf]
    %v1947 = vld [vmem:[#allocation10 + $0x9c] sm:$0xff]
    %v1948 = vld [vmem:[#allocation10 + $0xa4] sm:$0xf]
    %v1949 = vld [vmem:[#allocation10 + $0xa8] sm:$0xff]
    %v1950 = vld [vmem:[#allocation10 + $0xb0] sm:$0xf]
    %v1951 = vld [vmem:[#allocation10 + $0xb4] sm:$0xff]
    %v1952 = vld [vmem:[#allocation10 + $0xbc] sm:$0xf]
    %v1953 = vld [vmem:[%s6] sm:$0x7]
    %v1955 = vrot.slane %v1920, 2
    %v1989 = vunpack.c.l.b16 %v1921
    %v1990 = vunpack.c.h.b16 %v1921
    %v1991 = vunpack.c.l.b16 %v1922
    %v1992 = vunpack.c.l.b16 %v1923
    %v1993 = vunpack.c.h.b16 %v1923
    %v1994 = vunpack.c.l.b16 %v1924
    %v1995 = vunpack.c.l.b16 %v1925
    %v1996 = vunpack.c.h.b16 %v1925
    %v1997 = vunpack.c.l.b16 %v1926
    %v1998 = vunpack.c.l.b16 %v1927
    %v1999 = vunpack.c.h.b16 %v1927
    %v2000 = vunpack.c.l.b16 %v1928
    %v2001 = vunpack.c.l.b16 %v1929
    %v2002 = vunpack.c.h.b16 %v1929
    %v2003 = vunpack.c.l.b16 %v1930
    %v2004 = vunpack.c.l.b16 %v1931
    %v2005 = vunpack.c.h.b16 %v1931
    %v2006 = vunpack.c.l.b16 %v1932
    %v2007 = vunpack.c.l.b16 %v1933
    %v2008 = vunpack.c.h.b16 %v1933
    %v2009 = vunpack.c.l.b16 %v1934
    %v2010 = vunpack.c.l.b16 %v1935
    %v2011 = vunpack.c.h.b16 %v1935
    %v2012 = vunpack.c.l.b16 %v1936
    %v2013 = vunpack.c.l.b16 %v1937
    %v2014 = vunpack.c.h.b16 %v1937
    %v2015 = vunpack.c.l.b16 %v1938
    %v2016 = vunpack.c.l.b16 %v1939
    %v2017 = vunpack.c.h.b16 %v1939
    %v2018 = vunpack.c.l.b16 %v1940
    %v2019 = vunpack.c.l.b16 %v1941
    %v2020 = vunpack.c.h.b16 %v1941
    %v2021 = vunpack.c.l.b16 %v1942
    %v2022 = vunpack.c.l.b16 %v1943
    %v2023 = vunpack.c.h.b16 %v1943
    %v2024 = vunpack.c.l.b16 %v1944
    %v2025 = vunpack.c.l.b16 %v1945
    %v2026 = vunpack.c.h.b16 %v1945
    %v2027 = vunpack.c.l.b16 %v1946
    %v2028 = vunpack.c.l.b16 %v1947
    %v2029 = vunpack.c.h.b16 %v1947
    %v2030 = vunpack.c.l.b16 %v1948
    %v2031 = vunpack.c.l.b16 %v1949
    %v2032 = vunpack.c.h.b16 %v1949
    %v2033 = vunpack.c.l.b16 %v1950
    %v2034 = vunpack.c.l.b16 %v1951
    %v2035 = vunpack.c.h.b16 %v1951
    %v2036 = vunpack.c.l.b16 %v1952
    %v2037 = vpack.c.b16 %v1992, %v1989
    %v2038 = vpack.c.b16 %v1993, %v1990
    %v2039 = vpack.c.b16 %v1994, %v1991
    %v2040 = vpack.c.b16 %v1998, %v1995
    %v2041 = vpack.c.b16 %v1999, %v1996
    %v2042 = vpack.c.b16 %v2000, %v1997
    %v2043 = vpack.c.b16 %v2004, %v2001
    %v2044 = vpack.c.b16 %v2005, %v2002
    %v2045 = vpack.c.b16 %v2006, %v2003
    %v2046 = vpack.c.b16 %v2010, %v2007
    %v2047 = vpack.c.b16 %v2011, %v2008
    %v2048 = vpack.c.b16 %v2012, %v2009
    %v2049 = vpack.c.b16 %v2016, %v2013
    %v2050 = vpack.c.b16 %v2017, %v2014
    %v2051 = vpack.c.b16 %v2018, %v2015
    %v2052 = vpack.c.b16 %v2022, %v2019
    %v2053 = vpack.c.b16 %v2023, %v2020
    %v2054 = vpack.c.b16 %v2024, %v2021
    %v2055 = vpack.c.b16 %v2028, %v2025
    %v2056 = vpack.c.b16 %v2029, %v2026
    %v2057 = vpack.c.b16 %v2030, %v2027
    %v2058 = vpack.c.b16 %v2034, %v2031
    %v2059 = vpack.c.b16 %v2035, %v2032
    %v2060 = vpack.c.b16 %v2036, %v2033
    %v2086 = vperm.slane %v1953, 0
    %v2087 = vperm.slane %v1953, 1
    %v2088 = vperm.slane %v1953, 2
    %2092 = vmatpush.bf16.msra.mxu0 %v2058
    %2093 = vmatpush.bf16.msra.mxu0 %v2055
    %2094 = vmatpush.bf16.msra.mxu0 %v2052
    %2095 = vmatpush.bf16.msra.mxu0 %v2049
    %2096 = vmatpush.bf16.msra.mxu0 %v2046
    %2097 = vmatpush.bf16.msra.mxu0 %v2043
    %2098 = vmatpush.bf16.msra.mxu0 %v2040
    %2099 = vmatpush.bf16.msra.mxu0 %v2037
    %2100 = vmatmul.bf16.gmra.mxu0 %v1955
    %v2101 = vpop.f32.mrf.mxu0
    %v2102 = vadd.f32 %v2086, %v2101
    %v2103 = vpop.f32.mrf.mxu0
    %2104 = vdwg.mxu0
    %2105 = vmatpush.bf16.msra.mxu0 %v2059
    %2106 = vmatpush.bf16.msra.mxu0 %v2056
    %2107 = vmatpush.bf16.msra.mxu0 %v2053
    %2108 = vmatpush.bf16.msra.mxu0 %v2050
    %2109 = vmatpush.bf16.msra.mxu0 %v2047
    %2110 = vmatpush.bf16.msra.mxu0 %v2044
    %2111 = vmatpush.bf16.msra.mxu0 %v2041
    %2112 = vmatpush.bf16.msra.mxu0 %v2038
    %2113 = vmatmul.bf16.gmra.mxu0 %v1955
    %v2114 = vpop.f32.mrf.mxu0
    %v2115 = vadd.f32 %v2087, %v2114
    %v2116 = vpop.f32.mrf.mxu0
    %2117 = vdwg.mxu0
    %2118 = vmatpush.bf16.msra.mxu0 %v2060
    %2119 = vmatpush.bf16.msra.mxu0 %v2057
    %2120 = vmatpush.bf16.msra.mxu0 %v2054
    %2121 = vmatpush.bf16.msra.mxu0 %v2051
    %2122 = vmatpush.bf16.msra.mxu0 %v2048
    %2123 = vmatpush.bf16.msra.mxu0 %v2045
    %2124 = vmatpush.bf16.msra.mxu0 %v2042
    %2125 = vmatpush.bf16.msra.mxu0 %v2039
    %2126 = vmatmul.bf16.gmra.mxu0 %v1955
    %v2127 = vpop.f32.mrf.mxu0
    %v2128 = vadd.f32 %v2088, %v2127
    %v2129 = vpop.f32.mrf.mxu0
    %2130 = vdwg.mxu0
    %v2132 = vrot.slane %v2102, 3
    %v2134 = vadd.f32 %v552, %v2132
    %v2135 = vxor.u32 %v2134, 2147483648
    %v2136 = vmul.f32 %v2135, 1.442695
    %v2137 = vpow.pop %v2136
    %v2138 = vadd.f32 %v2137, 1.0
    %v2139 = vrcp.pop %v2138
    %v2140 = vmul.f32 %v2138, %v2139
    %v2141 = vsub.f32 1.0, %v2140
    %v2142 = vmul.f32 %v2139, %v2141
    %v2143 = vadd.f32 %v2139, %v2142
    %vm2144 = vweird.f32 %v2138
    %vm2145 = vweird.f32 %v2139
    %vm2146 = vmor %vm2144, %vm2145
    %v2147 = vsel %vm2146, %v2139, %v2143
    %v2148 = vand.u32 2147483647, %v2138
    %vm2149 = vcmp.eq.f32.partialorder %v2148, 8.507059e+37
    %v2150 = vand.u32 %v2138, 2147483648
    %v2151 = vor.u32 1.1754944e-38, %v2150
    %v2152 = vsel %vm2149, %v2151, %v2147
    %v2153 = vmul.f32 1.0, %v2152
    %v2155 = vrot.slane %v2115, 3
    %v2157 = vadd.f32 %v565, %v2155
    %v2158 = vxor.u32 %v2157, 2147483648
    %v2159 = vmul.f32 %v2158, 1.442695
    %v2160 = vpow.pop %v2159
    %v2161 = vadd.f32 %v2160, 1.0
    %v2162 = vrcp.pop %v2161
    %v2163 = vmul.f32 %v2161, %v2162
    %v2164 = vsub.f32 1.0, %v2163
    %v2165 = vmul.f32 %v2162, %v2164
    %v2166 = vadd.f32 %v2162, %v2165
    %vm2167 = vweird.f32 %v2161
    %vm2168 = vweird.f32 %v2162
    %vm2169 = vmor %vm2167, %vm2168
    %v2170 = vsel %vm2169, %v2162, %v2166
    %v2171 = vand.u32 2147483647, %v2161
    %vm2172 = vcmp.eq.f32.partialorder %v2171, 8.507059e+37
    %v2173 = vand.u32 %v2161, 2147483648
    %v2174 = vor.u32 1.1754944e-38, %v2173
    %v2175 = vsel %vm2172, %v2174, %v2170
    %v2176 = vmul.f32 1.0, %v2175
    %v2178 = vrot.slane %v2128, 3
    %v2180 = vmul.f32 %v2153, %v2178
    %v2181 = vadd.f32 %v578, %v2180
    %v2182 = vtanh.pop %v2181
    %v2183 = vsub.f32 1.0, %v2176
    %v2184 = vmul.f32 %v2183, %v2182
    %v2186 = vrot.slane %v1918, 7
    %v2188 = vmul.f32 %v2176, %v2186
    %v2189 = vadd.f32 %v2184, %v2188
    %2190 = vst [vmem:[#allocation2] sm:$0x20] %v2189
    %v2191 = vld [vmem:[#allocation2] sm:$0xff]
    %v2192 = vld [vmem:[#allocation2 + $0x8] sm:$0xff]
    %v2193 = vld [vmem:[#allocation2 + $0x10] sm:$0xff]
    %v2194 = vld [vmem:[#allocation2 + $0x18] sm:$0xff]
    %v2195 = vld [vmem:[#allocation2 + $0x20] sm:$0xff]
    %v2196 = vld [vmem:[#allocation2 + $0x28] sm:$0xff]
    %v2197 = vld [vmem:[#allocation2 + $0x30] sm:$0xff]
    %v2198 = vld [vmem:[#allocation2 + $0x38] sm:$0xff]
    %v2199 = vld [vmem:[#allocation2 + $0x40] sm:$0xff]
    %v2200 = vld [vmem:[#allocation2 + $0x48] sm:$0xff]
    %v2201 = vld [vmem:[#allocation2 + $0x50] sm:$0xff]
    %v2202 = vld [vmem:[#allocation2 + $0x58] sm:$0xff]
    %v2203 = vld [vmem:[#allocation2 + $0x60] sm:$0xff]
    %v2204 = vld [vmem:[#allocation2 + $0x68] sm:$0xff]
    %v2205 = vld [vmem:[#allocation2 + $0x70] sm:$0xff]
    %v2206 = vld [vmem:[#allocation2 + $0x78] sm:$0xff]
    %s2207 = sld [smem:[#allocation5]]
    %s2208 = scalar_lea.vmem [#allocation11], %s2207
    %v2209 = vld [vmem:[%s2208] sm:$0x1]
    %s2210 = sld [smem:[#allocation5 + $0x1]]
    %s2211 = scalar_lea.vmem [#allocation11], %s2210
    %v2212 = vld [vmem:[%s2211] sm:$0x1]
    %s2213 = sld [smem:[#allocation5 + $0x2]]
    %s2214 = scalar_lea.vmem [#allocation11], %s2213
    %v2215 = vld [vmem:[%s2214] sm:$0x1]
    %s2216 = sld [smem:[#allocation5 + $0x3]]
    %s2217 = scalar_lea.vmem [#allocation11], %s2216
    %v2218 = vld [vmem:[%s2217] sm:$0x1]
    %s2219 = sld [smem:[#allocation5 + $0x4]]
    %s2220 = scalar_lea.vmem [#allocation11], %s2219
    %v2221 = vld [vmem:[%s2220] sm:$0x1]
    %v2223 = vrot.slane %v2212, 7
    %v2226 = vrot.slane %v2215, 6
    %v2229 = vrot.slane %v2218, 5
    %v2232 = vrot.slane %v2221, 4
    %v2234 = vsel %vm363, %v2209, %v2223
    %v2235 = vsel %vm365, %v2234, %v2226
    %v2236 = vsel %vm367, %v2235, %v2229
    %v2237 = vsel %vm369, %v2236, %v2232
    %v2238 = vpack.c.bf16 %v2237, %v2237
    %v2239 = vld [vmem:[#allocation13] sm:$0xff]
    %v2240 = vld [vmem:[#allocation13 + $0x8] sm:$0xff]
    %v2241 = vld [vmem:[#allocation13 + $0x10] sm:$0xff]
    %v2242 = vld [vmem:[#allocation13 + $0x18] sm:$0xff]
    %v2243 = vld [vmem:[#allocation13 + $0x20] sm:$0xff]
    %v2244 = vld [vmem:[#allocation13 + $0x28] sm:$0xff]
    %v2245 = vld [vmem:[#allocation13 + $0x30] sm:$0xff]
    %v2246 = vld [vmem:[#allocation13 + $0x38] sm:$0xff]
    %v2247 = vld [vmem:[#allocation13 + $0x40] sm:$0xff]
    %v2248 = vld [vmem:[#allocation13 + $0x48] sm:$0xff]
    %v2249 = vld [vmem:[#allocation13 + $0x50] sm:$0xff]
    %v2250 = vld [vmem:[#allocation13 + $0x58] sm:$0xff]
    %v2251 = vld [vmem:[#allocation13 + $0x60] sm:$0xff]
    %v2252 = vld [vmem:[#allocation13 + $0x68] sm:$0xff]
    %v2253 = vld [vmem:[#allocation13 + $0x70] sm:$0xff]
    %v2254 = vld [vmem:[#allocation13 + $0x78] sm:$0xff]
    %v2255 = vld [vmem:[#allocation13 + $0x80] sm:$0xff]
    %v2256 = vld [vmem:[#allocation13 + $0x88] sm:$0xff]
    %v2257 = vld [vmem:[#allocation13 + $0x90] sm:$0xff]
    %v2258 = vld [vmem:[#allocation13 + $0x98] sm:$0xff]
    %v2259 = vld [vmem:[#allocation13 + $0xa0] sm:$0xff]
    %v2260 = vld [vmem:[#allocation13 + $0xa8] sm:$0xff]
    %v2261 = vld [vmem:[#allocation13 + $0xb0] sm:$0xff]
    %v2262 = vld [vmem:[#allocation13 + $0xb8] sm:$0xff]
    %v2263 = vld [vmem:[#allocation13 + $0xc0] sm:$0xff]
    %v2264 = vld [vmem:[#allocation13 + $0xc8] sm:$0xff]
    %v2265 = vld [vmem:[#allocation13 + $0xd0] sm:$0xff]
    %v2266 = vld [vmem:[#allocation13 + $0xd8] sm:$0xff]
    %v2267 = vld [vmem:[#allocation13 + $0xe0] sm:$0xff]
    %v2268 = vld [vmem:[#allocation13 + $0xe8] sm:$0xff]
    %v2269 = vld [vmem:[#allocation13 + $0xf0] sm:$0xff]
    %v2270 = vld [vmem:[#allocation13 + $0xf8] sm:$0xff]
    %v2271 = vld [vmem:[#allocation13 + $0x100] sm:$0xff]
    %v2272 = vld [vmem:[#allocation13 + $0x108] sm:$0xff]
    %v2273 = vld [vmem:[#allocation13 + $0x110] sm:$0xff]
    %v2274 = vld [vmem:[#allocation13 + $0x118] sm:$0xff]
    %v2275 = vld [vmem:[#allocation13 + $0x120] sm:$0xff]
    %v2276 = vld [vmem:[#allocation13 + $0x128] sm:$0xff]
    %v2277 = vld [vmem:[#allocation13 + $0x130] sm:$0xff]
    %v2278 = vld [vmem:[#allocation13 + $0x138] sm:$0xff]
    %v2279 = vld [vmem:[#allocation13 + $0x140] sm:$0xff]
    %v2280 = vld [vmem:[#allocation13 + $0x148] sm:$0xff]
    %v2281 = vld [vmem:[#allocation13 + $0x150] sm:$0xff]
    %v2282 = vld [vmem:[#allocation13 + $0x158] sm:$0xff]
    %v2283 = vld [vmem:[#allocation13 + $0x160] sm:$0xff]
    %v2284 = vld [vmem:[#allocation13 + $0x168] sm:$0xff]
    %v2285 = vld [vmem:[#allocation13 + $0x170] sm:$0xff]
    %v2286 = vld [vmem:[#allocation13 + $0x178] sm:$0xff]
    %v2287 = vld [vmem:[#allocation13 + $0x180] sm:$0xff]
    %v2288 = vld [vmem:[#allocation13 + $0x188] sm:$0xff]
    %v2289 = vld [vmem:[#allocation13 + $0x190] sm:$0xff]
    %v2290 = vld [vmem:[#allocation13 + $0x198] sm:$0xff]
    %v2291 = vld [vmem:[#allocation13 + $0x1a0] sm:$0xff]
    %v2292 = vld [vmem:[#allocation13 + $0x1a8] sm:$0xff]
    %v2293 = vld [vmem:[#allocation13 + $0x1b0] sm:$0xff]
    %v2294 = vld [vmem:[#allocation13 + $0x1b8] sm:$0xff]
    %v2295 = vld [vmem:[#allocation13 + $0x1c0] sm:$0xff]
    %v2296 = vld [vmem:[#allocation13 + $0x1c8] sm:$0xff]
    %v2297 = vld [vmem:[#allocation13 + $0x1d0] sm:$0xff]
    %v2298 = vld [vmem:[#allocation13 + $0x1d8] sm:$0xff]
    %v2299 = vld [vmem:[#allocation13 + $0x1e0] sm:$0xff]
    %v2300 = vld [vmem:[#allocation13 + $0x1e8] sm:$0xff]
    %v2301 = vld [vmem:[#allocation13 + $0x1f0] sm:$0xff]
    %v2302 = vld [vmem:[#allocation13 + $0x1f8] sm:$0xff]
    %v2303 = vld [vmem:[#allocation13 + $0x200] sm:$0xff]
    %v2304 = vld [vmem:[#allocation13 + $0x208] sm:$0xff]
    %v2305 = vld [vmem:[#allocation13 + $0x210] sm:$0xff]
    %v2306 = vld [vmem:[#allocation13 + $0x218] sm:$0xff]
    %v2307 = vld [vmem:[#allocation13 + $0x220] sm:$0xff]
    %v2308 = vld [vmem:[#allocation13 + $0x228] sm:$0xff]
    %v2309 = vld [vmem:[#allocation13 + $0x230] sm:$0xff]
    %v2310 = vld [vmem:[#allocation13 + $0x238] sm:$0xff]
    %v2311 = vld [vmem:[#allocation13 + $0x240] sm:$0xff]
    %v2312 = vld [vmem:[#allocation13 + $0x248] sm:$0xff]
    %v2313 = vld [vmem:[#allocation13 + $0x250] sm:$0xff]
    %v2314 = vld [vmem:[#allocation13 + $0x258] sm:$0xff]
    %v2315 = vld [vmem:[#allocation13 + $0x260] sm:$0xff]
    %v2316 = vld [vmem:[#allocation13 + $0x268] sm:$0xff]
    %v2317 = vld [vmem:[#allocation13 + $0x270] sm:$0xff]
    %v2318 = vld [vmem:[#allocation13 + $0x278] sm:$0xff]
    %v2319 = vld [vmem:[#allocation13 + $0x280] sm:$0xff]
    %v2320 = vld [vmem:[#allocation13 + $0x288] sm:$0xff]
    %v2321 = vld [vmem:[#allocation13 + $0x290] sm:$0xff]
    %v2322 = vld [vmem:[#allocation13 + $0x298] sm:$0xff]
    %v2323 = vld [vmem:[#allocation13 + $0x2a0] sm:$0xff]
    %v2324 = vld [vmem:[#allocation13 + $0x2a8] sm:$0xff]
    %v2325 = vld [vmem:[#allocation13 + $0x2b0] sm:$0xff]
    %v2326 = vld [vmem:[#allocation13 + $0x2b8] sm:$0xff]
    %v2327 = vld [vmem:[#allocation13 + $0x2c0] sm:$0xff]
    %v2328 = vld [vmem:[#allocation13 + $0x2c8] sm:$0xff]
    %v2329 = vld [vmem:[#allocation13 + $0x2d0] sm:$0xff]
    %v2330 = vld [vmem:[#allocation13 + $0x2d8] sm:$0xff]
    %v2331 = vld [vmem:[#allocation13 + $0x2e0] sm:$0xff]
    %v2332 = vld [vmem:[#allocation13 + $0x2e8] sm:$0xff]
    %v2333 = vld [vmem:[#allocation13 + $0x2f0] sm:$0xff]
    %v2334 = vld [vmem:[#allocation13 + $0x2f8] sm:$0xff]
    %v2335 = vld [vmem:[#allocation13 + $0x300] sm:$0xff]
    %v2336 = vld [vmem:[#allocation13 + $0x308] sm:$0xff]
    %v2337 = vld [vmem:[#allocation13 + $0x310] sm:$0xff]
    %v2338 = vld [vmem:[#allocation13 + $0x318] sm:$0xff]
    %v2339 = vld [vmem:[#allocation13 + $0x320] sm:$0xff]
    %v2340 = vld [vmem:[#allocation13 + $0x328] sm:$0xff]
    %v2341 = vld [vmem:[#allocation13 + $0x330] sm:$0xff]
    %v2342 = vld [vmem:[#allocation13 + $0x338] sm:$0xff]
    %v2343 = vld [vmem:[#allocation13 + $0x340] sm:$0xff]
    %v2344 = vld [vmem:[#allocation13 + $0x348] sm:$0xff]
    %v2345 = vld [vmem:[#allocation13 + $0x350] sm:$0xff]
    %v2346 = vld [vmem:[#allocation13 + $0x358] sm:$0xff]
    %v2347 = vld [vmem:[#allocation13 + $0x360] sm:$0xff]
    %v2348 = vld [vmem:[#allocation13 + $0x368] sm:$0xff]
    %v2349 = vld [vmem:[#allocation13 + $0x370] sm:$0xff]
    %v2350 = vld [vmem:[#allocation13 + $0x378] sm:$0xff]
    %v2351 = vld [vmem:[#allocation13 + $0x380] sm:$0xff]
    %v2352 = vld [vmem:[#allocation13 + $0x388] sm:$0xff]
    %v2353 = vld [vmem:[#allocation13 + $0x390] sm:$0xff]
    %v2354 = vld [vmem:[#allocation13 + $0x398] sm:$0xff]
    %v2355 = vld [vmem:[#allocation13 + $0x3a0] sm:$0xff]
    %v2356 = vld [vmem:[#allocation13 + $0x3a8] sm:$0xff]
    %v2357 = vld [vmem:[#allocation13 + $0x3b0] sm:$0xff]
    %v2358 = vld [vmem:[#allocation13 + $0x3b8] sm:$0xff]
    %v2359 = vld [vmem:[#allocation13 + $0x3c0] sm:$0xff]
    %v2360 = vld [vmem:[#allocation13 + $0x3c8] sm:$0xff]
    %v2361 = vld [vmem:[#allocation13 + $0x3d0] sm:$0xff]
    %v2362 = vld [vmem:[#allocation13 + $0x3d8] sm:$0xff]
    %v2363 = vld [vmem:[#allocation13 + $0x3e0] sm:$0xff]
    %v2364 = vld [vmem:[#allocation13 + $0x3e8] sm:$0xff]
    %v2365 = vld [vmem:[#allocation13 + $0x3f0] sm:$0xff]
    %v2366 = vld [vmem:[#allocation13 + $0x3f8] sm:$0xff]
    %v2367 = vld [vmem:[#allocation16] sm:$0xff]
    %v2368 = vld [vmem:[#allocation16 + $0x8] sm:$0xff]
    %v2371 = vperm.slane %v2367, 0
    %v2372 = vperm.slane %v2367, 1
    %v2373 = vperm.slane %v2367, 2
    %v2374 = vperm.slane %v2367, 3
    %v2375 = vperm.slane %v2367, 4
    %v2376 = vperm.slane %v2367, 5
    %v2377 = vperm.slane %v2367, 6
    %v2378 = vperm.slane %v2367, 7
    %v2379 = vperm.slane %v2368, 0
    %v2380 = vperm.slane %v2368, 1
    %v2381 = vperm.slane %v2368, 2
    %v2382 = vperm.slane %v2368, 3
    %v2383 = vperm.slane %v2368, 4
    %v2384 = vperm.slane %v2368, 5
    %v2385 = vperm.slane %v2368, 6
    %v2386 = vperm.slane %v2368, 7
    %v2531 = vunpack.c.l.b16 %v2239
    %v2532 = vunpack.c.h.b16 %v2239
    %v2533 = vunpack.c.l.b16 %v2240
    %v2534 = vunpack.c.h.b16 %v2240
    %v2535 = vunpack.c.l.b16 %v2241
    %v2536 = vunpack.c.h.b16 %v2241
    %v2537 = vunpack.c.l.b16 %v2242
    %v2538 = vunpack.c.h.b16 %v2242
    %v2539 = vunpack.c.l.b16 %v2243
    %v2540 = vunpack.c.h.b16 %v2243
    %v2541 = vunpack.c.l.b16 %v2244
    %v2542 = vunpack.c.h.b16 %v2244
    %v2543 = vunpack.c.l.b16 %v2245
    %v2544 = vunpack.c.h.b16 %v2245
    %v2545 = vunpack.c.l.b16 %v2246
    %v2546 = vunpack.c.h.b16 %v2246
    %v2547 = vunpack.c.l.b16 %v2247
    %v2548 = vunpack.c.h.b16 %v2247
    %v2549 = vunpack.c.l.b16 %v2248
    %v2550 = vunpack.c.h.b16 %v2248
    %v2551 = vunpack.c.l.b16 %v2249
    %v2552 = vunpack.c.h.b16 %v2249
    %v2553 = vunpack.c.l.b16 %v2250
    %v2554 = vunpack.c.h.b16 %v2250
    %v2555 = vunpack.c.l.b16 %v2251
    %v2556 = vunpack.c.h.b16 %v2251
    %v2557 = vunpack.c.l.b16 %v2252
    %v2558 = vunpack.c.h.b16 %v2252
    %v2559 = vunpack.c.l.b16 %v2253
    %v2560 = vunpack.c.h.b16 %v2253
    %v2561 = vunpack.c.l.b16 %v2254
    %v2562 = vunpack.c.h.b16 %v2254
    %v2563 = vunpack.c.l.b16 %v2255
    %v2564 = vunpack.c.h.b16 %v2255
    %v2565 = vunpack.c.l.b16 %v2256
    %v2566 = vunpack.c.h.b16 %v2256
    %v2567 = vunpack.c.l.b16 %v2257
    %v2568 = vunpack.c.h.b16 %v2257
    %v2569 = vunpack.c.l.b16 %v2258
    %v2570 = vunpack.c.h.b16 %v2258
    %v2571 = vunpack.c.l.b16 %v2259
    %v2572 = vunpack.c.h.b16 %v2259
    %v2573 = vunpack.c.l.b16 %v2260
    %v2574 = vunpack.c.h.b16 %v2260
    %v2575 = vunpack.c.l.b16 %v2261
    %v2576 = vunpack.c.h.b16 %v2261
    %v2577 = vunpack.c.l.b16 %v2262
    %v2578 = vunpack.c.h.b16 %v2262
    %v2579 = vunpack.c.l.b16 %v2263
    %v2580 = vunpack.c.h.b16 %v2263
    %v2581 = vunpack.c.l.b16 %v2264
    %v2582 = vunpack.c.h.b16 %v2264
    %v2583 = vunpack.c.l.b16 %v2265
    %v2584 = vunpack.c.h.b16 %v2265
    %v2585 = vunpack.c.l.b16 %v2266
    %v2586 = vunpack.c.h.b16 %v2266
    %v2587 = vunpack.c.l.b16 %v2267
    %v2588 = vunpack.c.h.b16 %v2267
    %v2589 = vunpack.c.l.b16 %v2268
    %v2590 = vunpack.c.h.b16 %v2268
    %v2591 = vunpack.c.l.b16 %v2269
    %v2592 = vunpack.c.h.b16 %v2269
    %v2593 = vunpack.c.l.b16 %v2270
    %v2594 = vunpack.c.h.b16 %v2270
    %v2595 = vunpack.c.l.b16 %v2271
    %v2596 = vunpack.c.h.b16 %v2271
    %v2597 = vunpack.c.l.b16 %v2272
    %v2598 = vunpack.c.h.b16 %v2272
    %v2599 = vunpack.c.l.b16 %v2273
    %v2600 = vunpack.c.h.b16 %v2273
    %v2601 = vunpack.c.l.b16 %v2274
    %v2602 = vunpack.c.h.b16 %v2274
    %v2603 = vunpack.c.l.b16 %v2275
    %v2604 = vunpack.c.h.b16 %v2275
    %v2605 = vunpack.c.l.b16 %v2276
    %v2606 = vunpack.c.h.b16 %v2276
    %v2607 = vunpack.c.l.b16 %v2277
    %v2608 = vunpack.c.h.b16 %v2277
    %v2609 = vunpack.c.l.b16 %v2278
    %v2610 = vunpack.c.h.b16 %v2278
    %v2611 = vunpack.c.l.b16 %v2279
    %v2612 = vunpack.c.h.b16 %v2279
    %v2613 = vunpack.c.l.b16 %v2280
    %v2614 = vunpack.c.h.b16 %v2280
    %v2615 = vunpack.c.l.b16 %v2281
    %v2616 = vunpack.c.h.b16 %v2281
    %v2617 = vunpack.c.l.b16 %v2282
    %v2618 = vunpack.c.h.b16 %v2282
    %v2619 = vunpack.c.l.b16 %v2283
    %v2620 = vunpack.c.h.b16 %v2283
    %v2621 = vunpack.c.l.b16 %v2284
    %v2622 = vunpack.c.h.b16 %v2284
    %v2623 = vunpack.c.l.b16 %v2285
    %v2624 = vunpack.c.h.b16 %v2285
    %v2625 = vunpack.c.l.b16 %v2286
    %v2626 = vunpack.c.h.b16 %v2286
    %v2627 = vunpack.c.l.b16 %v2287
    %v2628 = vunpack.c.h.b16 %v2287
    %v2629 = vunpack.c.l.b16 %v2288
    %v2630 = vunpack.c.h.b16 %v2288
    %v2631 = vunpack.c.l.b16 %v2289
    %v2632 = vunpack.c.h.b16 %v2289
    %v2633 = vunpack.c.l.b16 %v2290
    %v2634 = vunpack.c.h.b16 %v2290
    %v2635 = vunpack.c.l.b16 %v2291
    %v2636 = vunpack.c.h.b16 %v2291
    %v2637 = vunpack.c.l.b16 %v2292
    %v2638 = vunpack.c.h.b16 %v2292
    %v2639 = vunpack.c.l.b16 %v2293
    %v2640 = vunpack.c.h.b16 %v2293
    %v2641 = vunpack.c.l.b16 %v2294
    %v2642 = vunpack.c.h.b16 %v2294
    %v2643 = vunpack.c.l.b16 %v2295
    %v2644 = vunpack.c.h.b16 %v2295
    %v2645 = vunpack.c.l.b16 %v2296
    %v2646 = vunpack.c.h.b16 %v2296
    %v2647 = vunpack.c.l.b16 %v2297
    %v2648 = vunpack.c.h.b16 %v2297
    %v2649 = vunpack.c.l.b16 %v2298
    %v2650 = vunpack.c.h.b16 %v2298
    %v2651 = vunpack.c.l.b16 %v2299
    %v2652 = vunpack.c.h.b16 %v2299
    %v2653 = vunpack.c.l.b16 %v2300
    %v2654 = vunpack.c.h.b16 %v2300
    %v2655 = vunpack.c.l.b16 %v2301
    %v2656 = vunpack.c.h.b16 %v2301
    %v2657 = vunpack.c.l.b16 %v2302
    %v2658 = vunpack.c.h.b16 %v2302
    %v2659 = vunpack.c.l.b16 %v2303
    %v2660 = vunpack.c.h.b16 %v2303
    %v2661 = vunpack.c.l.b16 %v2304
    %v2662 = vunpack.c.h.b16 %v2304
    %v2663 = vunpack.c.l.b16 %v2305
    %v2664 = vunpack.c.h.b16 %v2305
    %v2665 = vunpack.c.l.b16 %v2306
    %v2666 = vunpack.c.h.b16 %v2306
    %v2667 = vunpack.c.l.b16 %v2307
    %v2668 = vunpack.c.h.b16 %v2307
    %v2669 = vunpack.c.l.b16 %v2308
    %v2670 = vunpack.c.h.b16 %v2308
    %v2671 = vunpack.c.l.b16 %v2309
    %v2672 = vunpack.c.h.b16 %v2309
    %v2673 = vunpack.c.l.b16 %v2310
    %v2674 = vunpack.c.h.b16 %v2310
    %v2675 = vunpack.c.l.b16 %v2311
    %v2676 = vunpack.c.h.b16 %v2311
    %v2677 = vunpack.c.l.b16 %v2312
    %v2678 = vunpack.c.h.b16 %v2312
    %v2679 = vunpack.c.l.b16 %v2313
    %v2680 = vunpack.c.h.b16 %v2313
    %v2681 = vunpack.c.l.b16 %v2314
    %v2682 = vunpack.c.h.b16 %v2314
    %v2683 = vunpack.c.l.b16 %v2315
    %v2684 = vunpack.c.h.b16 %v2315
    %v2685 = vunpack.c.l.b16 %v2316
    %v2686 = vunpack.c.h.b16 %v2316
    %v2687 = vunpack.c.l.b16 %v2317
    %v2688 = vunpack.c.h.b16 %v2317
    %v2689 = vunpack.c.l.b16 %v2318
    %v2690 = vunpack.c.h.b16 %v2318
    %v2691 = vunpack.c.l.b16 %v2319
    %v2692 = vunpack.c.h.b16 %v2319
    %v2693 = vunpack.c.l.b16 %v2320
    %v2694 = vunpack.c.h.b16 %v2320
    %v2695 = vunpack.c.l.b16 %v2321
    %v2696 = vunpack.c.h.b16 %v2321
    %v2697 = vunpack.c.l.b16 %v2322
    %v2698 = vunpack.c.h.b16 %v2322
    %v2699 = vunpack.c.l.b16 %v2323
    %v2700 = vunpack.c.h.b16 %v2323
    %v2701 = vunpack.c.l.b16 %v2324
    %v2702 = vunpack.c.h.b16 %v2324
    %v2703 = vunpack.c.l.b16 %v2325
    %v2704 = vunpack.c.h.b16 %v2325
    %v2705 = vunpack.c.l.b16 %v2326
    %v2706 = vunpack.c.h.b16 %v2326
    %v2707 = vunpack.c.l.b16 %v2327
    %v2708 = vunpack.c.h.b16 %v2327
    %v2709 = vunpack.c.l.b16 %v2328
    %v2710 = vunpack.c.h.b16 %v2328
    %v2711 = vunpack.c.l.b16 %v2329
    %v2712 = vunpack.c.h.b16 %v2329
    %v2713 = vunpack.c.l.b16 %v2330
    %v2714 = vunpack.c.h.b16 %v2330
    %v2715 = vunpack.c.l.b16 %v2331
    %v2716 = vunpack.c.h.b16 %v2331
    %v2717 = vunpack.c.l.b16 %v2332
    %v2718 = vunpack.c.h.b16 %v2332
    %v2719 = vunpack.c.l.b16 %v2333
    %v2720 = vunpack.c.h.b16 %v2333
    %v2721 = vunpack.c.l.b16 %v2334
    %v2722 = vunpack.c.h.b16 %v2334
    %v2723 = vunpack.c.l.b16 %v2335
    %v2724 = vunpack.c.h.b16 %v2335
    %v2725 = vunpack.c.l.b16 %v2336
    %v2726 = vunpack.c.h.b16 %v2336
    %v2727 = vunpack.c.l.b16 %v2337
    %v2728 = vunpack.c.h.b16 %v2337
    %v2729 = vunpack.c.l.b16 %v2338
    %v2730 = vunpack.c.h.b16 %v2338
    %v2731 = vunpack.c.l.b16 %v2339
    %v2732 = vunpack.c.h.b16 %v2339
    %v2733 = vunpack.c.l.b16 %v2340
    %v2734 = vunpack.c.h.b16 %v2340
    %v2735 = vunpack.c.l.b16 %v2341
    %v2736 = vunpack.c.h.b16 %v2341
    %v2737 = vunpack.c.l.b16 %v2342
    %v2738 = vunpack.c.h.b16 %v2342
    %v2739 = vunpack.c.l.b16 %v2343
    %v2740 = vunpack.c.h.b16 %v2343
    %v2741 = vunpack.c.l.b16 %v2344
    %v2742 = vunpack.c.h.b16 %v2344
    %v2743 = vunpack.c.l.b16 %v2345
    %v2744 = vunpack.c.h.b16 %v2345
    %v2745 = vunpack.c.l.b16 %v2346
    %v2746 = vunpack.c.h.b16 %v2346
    %v2747 = vunpack.c.l.b16 %v2347
    %v2748 = vunpack.c.h.b16 %v2347
    %v2749 = vunpack.c.l.b16 %v2348
    %v2750 = vunpack.c.h.b16 %v2348
    %v2751 = vunpack.c.l.b16 %v2349
    %v2752 = vunpack.c.h.b16 %v2349
    %v2753 = vunpack.c.l.b16 %v2350
    %v2754 = vunpack.c.h.b16 %v2350
    %v2755 = vunpack.c.l.b16 %v2351
    %v2756 = vunpack.c.h.b16 %v2351
    %v2757 = vunpack.c.l.b16 %v2352
    %v2758 = vunpack.c.h.b16 %v2352
    %v2759 = vunpack.c.l.b16 %v2353
    %v2760 = vunpack.c.h.b16 %v2353
    %v2761 = vunpack.c.l.b16 %v2354
    %v2762 = vunpack.c.h.b16 %v2354
    %v2763 = vunpack.c.l.b16 %v2355
    %v2764 = vunpack.c.h.b16 %v2355
    %v2765 = vunpack.c.l.b16 %v2356
    %v2766 = vunpack.c.h.b16 %v2356
    %v2767 = vunpack.c.l.b16 %v2357
    %v2768 = vunpack.c.h.b16 %v2357
    %v2769 = vunpack.c.l.b16 %v2358
    %v2770 = vunpack.c.h.b16 %v2358
    %v2771 = vunpack.c.l.b16 %v2359
    %v2772 = vunpack.c.h.b16 %v2359
    %v2773 = vunpack.c.l.b16 %v2360
    %v2774 = vunpack.c.h.b16 %v2360
    %v2775 = vunpack.c.l.b16 %v2361
    %v2776 = vunpack.c.h.b16 %v2361
    %v2777 = vunpack.c.l.b16 %v2362
    %v2778 = vunpack.c.h.b16 %v2362
    %v2779 = vunpack.c.l.b16 %v2363
    %v2780 = vunpack.c.h.b16 %v2363
    %v2781 = vunpack.c.l.b16 %v2364
    %v2782 = vunpack.c.h.b16 %v2364
    %v2783 = vunpack.c.l.b16 %v2365
    %v2784 = vunpack.c.h.b16 %v2365
    %v2785 = vunpack.c.l.b16 %v2366
    %v2786 = vunpack.c.h.b16 %v2366
    %v2787 = vpack.c.b16 %v2547, %v2531
    %v2788 = vpack.c.b16 %v2548, %v2532
    %v2789 = vpack.c.b16 %v2549, %v2533
    %v2790 = vpack.c.b16 %v2550, %v2534
    %v2791 = vpack.c.b16 %v2551, %v2535
    %v2792 = vpack.c.b16 %v2552, %v2536
    %v2793 = vpack.c.b16 %v2553, %v2537
    %v2794 = vpack.c.b16 %v2554, %v2538
    %v2795 = vpack.c.b16 %v2555, %v2539
    %v2796 = vpack.c.b16 %v2556, %v2540
    %v2797 = vpack.c.b16 %v2557, %v2541
    %v2798 = vpack.c.b16 %v2558, %v2542
    %v2799 = vpack.c.b16 %v2559, %v2543
    %v2800 = vpack.c.b16 %v2560, %v2544
    %v2801 = vpack.c.b16 %v2561, %v2545
    %v2802 = vpack.c.b16 %v2562, %v2546
    %v2803 = vpack.c.b16 %v2579, %v2563
    %v2804 = vpack.c.b16 %v2580, %v2564
    %v2805 = vpack.c.b16 %v2581, %v2565
    %v2806 = vpack.c.b16 %v2582, %v2566
    %v2807 = vpack.c.b16 %v2583, %v2567
    %v2808 = vpack.c.b16 %v2584, %v2568
    %v2809 = vpack.c.b16 %v2585, %v2569
    %v2810 = vpack.c.b16 %v2586, %v2570
    %v2811 = vpack.c.b16 %v2587, %v2571
    %v2812 = vpack.c.b16 %v2588, %v2572
    %v2813 = vpack.c.b16 %v2589, %v2573
    %v2814 = vpack.c.b16 %v2590, %v2574
    %v2815 = vpack.c.b16 %v2591, %v2575
    %v2816 = vpack.c.b16 %v2592, %v2576
    %v2817 = vpack.c.b16 %v2593, %v2577
    %v2818 = vpack.c.b16 %v2594, %v2578
    %v2819 = vpack.c.b16 %v2611, %v2595
    %v2820 = vpack.c.b16 %v2612, %v2596
    %v2821 = vpack.c.b16 %v2613, %v2597
    %v2822 = vpack.c.b16 %v2614, %v2598
    %v2823 = vpack.c.b16 %v2615, %v2599
    %v2824 = vpack.c.b16 %v2616, %v2600
    %v2825 = vpack.c.b16 %v2617, %v2601
    %v2826 = vpack.c.b16 %v2618, %v2602
    %v2827 = vpack.c.b16 %v2619, %v2603
    %v2828 = vpack.c.b16 %v2620, %v2604
    %v2829 = vpack.c.b16 %v2621, %v2605
    %v2830 = vpack.c.b16 %v2622, %v2606
    %v2831 = vpack.c.b16 %v2623, %v2607
    %v2832 = vpack.c.b16 %v2624, %v2608
    %v2833 = vpack.c.b16 %v2625, %v2609
    %v2834 = vpack.c.b16 %v2626, %v2610
    %v2835 = vpack.c.b16 %v2643, %v2627
    %v2836 = vpack.c.b16 %v2644, %v2628
    %v2837 = vpack.c.b16 %v2645, %v2629
    %v2838 = vpack.c.b16 %v2646, %v2630
    %v2839 = vpack.c.b16 %v2647, %v2631
    %v2840 = vpack.c.b16 %v2648, %v2632
    %v2841 = vpack.c.b16 %v2649, %v2633
    %v2842 = vpack.c.b16 %v2650, %v2634
    %v2843 = vpack.c.b16 %v2651, %v2635
    %v2844 = vpack.c.b16 %v2652, %v2636
    %v2845 = vpack.c.b16 %v2653, %v2637
    %v2846 = vpack.c.b16 %v2654, %v2638
    %v2847 = vpack.c.b16 %v2655, %v2639
    %v2848 = vpack.c.b16 %v2656, %v2640
    %v2849 = vpack.c.b16 %v2657, %v2641
    %v2850 = vpack.c.b16 %v2658, %v2642
    %v2851 = vpack.c.b16 %v2675, %v2659
    %v2852 = vpack.c.b16 %v2676, %v2660
    %v2853 = vpack.c.b16 %v2677, %v2661
    %v2854 = vpack.c.b16 %v2678, %v2662
    %v2855 = vpack.c.b16 %v2679, %v2663
    %v2856 = vpack.c.b16 %v2680, %v2664
    %v2857 = vpack.c.b16 %v2681, %v2665
    %v2858 = vpack.c.b16 %v2682, %v2666
    %v2859 = vpack.c.b16 %v2683, %v2667
    %v2860 = vpack.c.b16 %v2684, %v2668
    %v2861 = vpack.c.b16 %v2685, %v2669
    %v2862 = vpack.c.b16 %v2686, %v2670
    %v2863 = vpack.c.b16 %v2687, %v2671
    %v2864 = vpack.c.b16 %v2688, %v2672
    %v2865 = vpack.c.b16 %v2689, %v2673
    %v2866 = vpack.c.b16 %v2690, %v2674
    %v2867 = vpack.c.b16 %v2707, %v2691
    %v2868 = vpack.c.b16 %v2708, %v2692
    %v2869 = vpack.c.b16 %v2709, %v2693
    %v2870 = vpack.c.b16 %v2710, %v2694
    %v2871 = vpack.c.b16 %v2711, %v2695
    %v2872 = vpack.c.b16 %v2712, %v2696
    %v2873 = vpack.c.b16 %v2713, %v2697
    %v2874 = vpack.c.b16 %v2714, %v2698
    %v2875 = vpack.c.b16 %v2715, %v2699
    %v2876 = vpack.c.b16 %v2716, %v2700
    %v2877 = vpack.c.b16 %v2717, %v2701
    %v2878 = vpack.c.b16 %v2718, %v2702
    %v2879 = vpack.c.b16 %v2719, %v2703
    %v2880 = vpack.c.b16 %v2720, %v2704
    %v2881 = vpack.c.b16 %v2721, %v2705
    %v2882 = vpack.c.b16 %v2722, %v2706
    %v2883 = vpack.c.b16 %v2739, %v2723
    %v2884 = vpack.c.b16 %v2740, %v2724
    %v2885 = vpack.c.b16 %v2741, %v2725
    %v2886 = vpack.c.b16 %v2742, %v2726
    %v2887 = vpack.c.b16 %v2743, %v2727
    %v2888 = vpack.c.b16 %v2744, %v2728
    %v2889 = vpack.c.b16 %v2745, %v2729
    %v2890 = vpack.c.b16 %v2746, %v2730
    %v2891 = vpack.c.b16 %v2747, %v2731
    %v2892 = vpack.c.b16 %v2748, %v2732
    %v2893 = vpack.c.b16 %v2749, %v2733
    %v2894 = vpack.c.b16 %v2750, %v2734
    %v2895 = vpack.c.b16 %v2751, %v2735
    %v2896 = vpack.c.b16 %v2752, %v2736
    %v2897 = vpack.c.b16 %v2753, %v2737
    %v2898 = vpack.c.b16 %v2754, %v2738
    %v2899 = vpack.c.b16 %v2771, %v2755
    %v2900 = vpack.c.b16 %v2772, %v2756
    %v2901 = vpack.c.b16 %v2773, %v2757
    %v2902 = vpack.c.b16 %v2774, %v2758
    %v2903 = vpack.c.b16 %v2775, %v2759
    %v2904 = vpack.c.b16 %v2776, %v2760
    %v2905 = vpack.c.b16 %v2777, %v2761
    %v2906 = vpack.c.b16 %v2778, %v2762
    %v2907 = vpack.c.b16 %v2779, %v2763
    %v2908 = vpack.c.b16 %v2780, %v2764
    %v2909 = vpack.c.b16 %v2781, %v2765
    %v2910 = vpack.c.b16 %v2782, %v2766
    %v2911 = vpack.c.b16 %v2783, %v2767
    %v2912 = vpack.c.b16 %v2784, %v2768
    %v2913 = vpack.c.b16 %v2785, %v2769
    %v2914 = vpack.c.b16 %v2786, %v2770
    %3043 = vmatpush.bf16.msra.mxu0 %v2899
    %3044 = vmatpush.bf16.msra.mxu0 %v2883
    %3045 = vmatpush.bf16.msra.mxu0 %v2867
    %3046 = vmatpush.bf16.msra.mxu0 %v2851
    %3047 = vmatpush.bf16.msra.mxu0 %v2835
    %3048 = vmatpush.bf16.msra.mxu0 %v2819
    %3049 = vmatpush.bf16.msra.mxu0 %v2803
    %3050 = vmatpush.bf16.msra.mxu0 %v2787
    %3051 = vmatmul.bf16.gmra.mxu0 %v2238
    %v3052 = vpop.f32.mrf.mxu0
    %v3053 = vadd.f32 %v2371, %v3052
    %v3054 = vpop.f32.mrf.mxu0
    %3055 = vdwg.mxu0
    %3056 = vmatpush.bf16.msra.mxu0 %v2900
    %3057 = vmatpush.bf16.msra.mxu0 %v2884
    %3058 = vmatpush.bf16.msra.mxu0 %v2868
    %3059 = vmatpush.bf16.msra.mxu0 %v2852
    %3060 = vmatpush.bf16.msra.mxu0 %v2836
    %3061 = vmatpush.bf16.msra.mxu0 %v2820
    %3062 = vmatpush.bf16.msra.mxu0 %v2804
    %3063 = vmatpush.bf16.msra.mxu0 %v2788
    %3064 = vmatmul.bf16.gmra.mxu0 %v2238
    %v3065 = vpop.f32.mrf.mxu0
    %v3066 = vadd.f32 %v2372, %v3065
    %v3067 = vpop.f32.mrf.mxu0
    %3068 = vdwg.mxu0
    %3069 = vmatpush.bf16.msra.mxu0 %v2901
    %3070 = vmatpush.bf16.msra.mxu0 %v2885
    %3071 = vmatpush.bf16.msra.mxu0 %v2869
    %3072 = vmatpush.bf16.msra.mxu0 %v2853
    %3073 = vmatpush.bf16.msra.mxu0 %v2837
    %3074 = vmatpush.bf16.msra.mxu0 %v2821
    %3075 = vmatpush.bf16.msra.mxu0 %v2805
    %3076 = vmatpush.bf16.msra.mxu0 %v2789
    %3077 = vmatmul.bf16.gmra.mxu0 %v2238
    %v3078 = vpop.f32.mrf.mxu0
    %v3079 = vadd.f32 %v2373, %v3078
    %v3080 = vpop.f32.mrf.mxu0
    %3081 = vdwg.mxu0
    %3082 = vmatpush.bf16.msra.mxu0 %v2902
    %3083 = vmatpush.bf16.msra.mxu0 %v2886
    %3084 = vmatpush.bf16.msra.mxu0 %v2870
    %3085 = vmatpush.bf16.msra.mxu0 %v2854
    %3086 = vmatpush.bf16.msra.mxu0 %v2838
    %3087 = vmatpush.bf16.msra.mxu0 %v2822
    %3088 = vmatpush.bf16.msra.mxu0 %v2806
    %3089 = vmatpush.bf16.msra.mxu0 %v2790
    %3090 = vmatmul.bf16.gmra.mxu0 %v2238
    %v3091 = vpop.f32.mrf.mxu0
    %v3092 = vadd.f32 %v2374, %v3091
    %v3093 = vpop.f32.mrf.mxu0
    %3094 = vdwg.mxu0
    %3095 = vmatpush.bf16.msra.mxu0 %v2903
    %3096 = vmatpush.bf16.msra.mxu0 %v2887
    %3097 = vmatpush.bf16.msra.mxu0 %v2871
    %3098 = vmatpush.bf16.msra.mxu0 %v2855
    %3099 = vmatpush.bf16.msra.mxu0 %v2839
    %3100 = vmatpush.bf16.msra.mxu0 %v2823
    %3101 = vmatpush.bf16.msra.mxu0 %v2807
    %3102 = vmatpush.bf16.msra.mxu0 %v2791
    %3103 = vmatmul.bf16.gmra.mxu0 %v2238
    %v3104 = vpop.f32.mrf.mxu0
    %v3105 = vadd.f32 %v2375, %v3104
    %v3106 = vpop.f32.mrf.mxu0
    %3107 = vdwg.mxu0
    %3108 = vmatpush.bf16.msra.mxu0 %v2904
    %3109 = vmatpush.bf16.msra.mxu0 %v2888
    %3110 = vmatpush.bf16.msra.mxu0 %v2872
    %3111 = vmatpush.bf16.msra.mxu0 %v2856
    %3112 = vmatpush.bf16.msra.mxu0 %v2840
    %3113 = vmatpush.bf16.msra.mxu0 %v2824
    %3114 = vmatpush.bf16.msra.mxu0 %v2808
    %3115 = vmatpush.bf16.msra.mxu0 %v2792
    %3116 = vmatmul.bf16.gmra.mxu0 %v2238
    %v3117 = vpop.f32.mrf.mxu0
    %v3118 = vadd.f32 %v2376, %v3117
    %v3119 = vpop.f32.mrf.mxu0
    %3120 = vdwg.mxu0
    %3121 = vmatpush.bf16.msra.mxu0 %v2905
    %3122 = vmatpush.bf16.msra.mxu0 %v2889
    %3123 = vmatpush.bf16.msra.mxu0 %v2873
    %3124 = vmatpush.bf16.msra.mxu0 %v2857
    %3125 = vmatpush.bf16.msra.mxu0 %v2841
    %3126 = vmatpush.bf16.msra.mxu0 %v2825
    %3127 = vmatpush.bf16.msra.mxu0 %v2809
    %3128 = vmatpush.bf16.msra.mxu0 %v2793
    %3129 = vmatmul.bf16.gmra.mxu0 %v2238
    %v3130 = vpop.f32.mrf.mxu0
    %v3131 = vadd.f32 %v2377, %v3130
    %v3132 = vpop.f32.mrf.mxu0
    %3133 = vdwg.mxu0
    %3134 = vmatpush.bf16.msra.mxu0 %v2906
    %3135 = vmatpush.bf16.msra.mxu0 %v2890
    %3136 = vmatpush.bf16.msra.mxu0 %v2874
    %3137 = vmatpush.bf16.msra.mxu0 %v2858
    %3138 = vmatpush.bf16.msra.mxu0 %v2842
    %3139 = vmatpush.bf16.msra.mxu0 %v2826
    %3140 = vmatpush.bf16.msra.mxu0 %v2810
    %3141 = vmatpush.bf16.msra.mxu0 %v2794
    %3142 = vmatmul.bf16.gmra.mxu0 %v2238
    %v3143 = vpop.f32.mrf.mxu0
    %v3144 = vadd.f32 %v2378, %v3143
    %v3145 = vpop.f32.mrf.mxu0
    %3146 = vdwg.mxu0
    %3147 = vmatpush.bf16.msra.mxu0 %v2907
    %3148 = vmatpush.bf16.msra.mxu0 %v2891
    %3149 = vmatpush.bf16.msra.mxu0 %v2875
    %3150 = vmatpush.bf16.msra.mxu0 %v2859
    %3151 = vmatpush.bf16.msra.mxu0 %v2843
    %3152 = vmatpush.bf16.msra.mxu0 %v2827
    %3153 = vmatpush.bf16.msra.mxu0 %v2811
    %3154 = vmatpush.bf16.msra.mxu0 %v2795
    %3155 = vmatmul.bf16.gmra.mxu0 %v2238
    %v3156 = vpop.f32.mrf.mxu0
    %v3157 = vadd.f32 %v2379, %v3156
    %v3158 = vpop.f32.mrf.mxu0
    %3159 = vdwg.mxu0
    %3160 = vmatpush.bf16.msra.mxu0 %v2908
    %3161 = vmatpush.bf16.msra.mxu0 %v2892
    %3162 = vmatpush.bf16.msra.mxu0 %v2876
    %3163 = vmatpush.bf16.msra.mxu0 %v2860
    %3164 = vmatpush.bf16.msra.mxu0 %v2844
    %3165 = vmatpush.bf16.msra.mxu0 %v2828
    %3166 = vmatpush.bf16.msra.mxu0 %v2812
    %3167 = vmatpush.bf16.msra.mxu0 %v2796
    %3168 = vmatmul.bf16.gmra.mxu0 %v2238
    %v3169 = vpop.f32.mrf.mxu0
    %v3170 = vadd.f32 %v2380, %v3169
    %v3171 = vpop.f32.mrf.mxu0
    %3172 = vdwg.mxu0
    %3173 = vmatpush.bf16.msra.mxu0 %v2909
    %3174 = vmatpush.bf16.msra.mxu0 %v2893
    %3175 = vmatpush.bf16.msra.mxu0 %v2877
    %3176 = vmatpush.bf16.msra.mxu0 %v2861
    %3177 = vmatpush.bf16.msra.mxu0 %v2845
    %3178 = vmatpush.bf16.msra.mxu0 %v2829
    %3179 = vmatpush.bf16.msra.mxu0 %v2813
    %3180 = vmatpush.bf16.msra.mxu0 %v2797
    %3181 = vmatmul.bf16.gmra.mxu0 %v2238
    %v3182 = vpop.f32.mrf.mxu0
    %v3183 = vadd.f32 %v2381, %v3182
    %v3184 = vpop.f32.mrf.mxu0
    %3185 = vdwg.mxu0
    %3186 = vmatpush.bf16.msra.mxu0 %v2910
    %3187 = vmatpush.bf16.msra.mxu0 %v2894
    %3188 = vmatpush.bf16.msra.mxu0 %v2878
    %3189 = vmatpush.bf16.msra.mxu0 %v2862
    %3190 = vmatpush.bf16.msra.mxu0 %v2846
    %3191 = vmatpush.bf16.msra.mxu0 %v2830
    %3192 = vmatpush.bf16.msra.mxu0 %v2814
    %3193 = vmatpush.bf16.msra.mxu0 %v2798
    %3194 = vmatmul.bf16.gmra.mxu0 %v2238
    %v3195 = vpop.f32.mrf.mxu0
    %v3196 = vadd.f32 %v2382, %v3195
    %v3197 = vpop.f32.mrf.mxu0
    %3198 = vdwg.mxu0
    %3199 = vmatpush.bf16.msra.mxu0 %v2911
    %3200 = vmatpush.bf16.msra.mxu0 %v2895
    %3201 = vmatpush.bf16.msra.mxu0 %v2879
    %3202 = vmatpush.bf16.msra.mxu0 %v2863
    %3203 = vmatpush.bf16.msra.mxu0 %v2847
    %3204 = vmatpush.bf16.msra.mxu0 %v2831
    %3205 = vmatpush.bf16.msra.mxu0 %v2815
    %3206 = vmatpush.bf16.msra.mxu0 %v2799
    %3207 = vmatmul.bf16.gmra.mxu0 %v2238
    %v3208 = vpop.f32.mrf.mxu0
    %v3209 = vadd.f32 %v2383, %v3208
    %v3210 = vpop.f32.mrf.mxu0
    %3211 = vdwg.mxu0
    %3212 = vmatpush.bf16.msra.mxu0 %v2912
    %3213 = vmatpush.bf16.msra.mxu0 %v2896
    %3214 = vmatpush.bf16.msra.mxu0 %v2880
    %3215 = vmatpush.bf16.msra.mxu0 %v2864
    %3216 = vmatpush.bf16.msra.mxu0 %v2848
    %3217 = vmatpush.bf16.msra.mxu0 %v2832
    %3218 = vmatpush.bf16.msra.mxu0 %v2816
    %3219 = vmatpush.bf16.msra.mxu0 %v2800
    %3220 = vmatmul.bf16.gmra.mxu0 %v2238
    %v3221 = vpop.f32.mrf.mxu0
    %v3222 = vadd.f32 %v2384, %v3221
    %v3223 = vpop.f32.mrf.mxu0
    %3224 = vdwg.mxu0
    %3225 = vmatpush.bf16.msra.mxu0 %v2913
    %3226 = vmatpush.bf16.msra.mxu0 %v2897
    %3227 = vmatpush.bf16.msra.mxu0 %v2881
    %3228 = vmatpush.bf16.msra.mxu0 %v2865
    %3229 = vmatpush.bf16.msra.mxu0 %v2849
    %3230 = vmatpush.bf16.msra.mxu0 %v2833
    %3231 = vmatpush.bf16.msra.mxu0 %v2817
    %3232 = vmatpush.bf16.msra.mxu0 %v2801
    %3233 = vmatmul.bf16.gmra.mxu0 %v2238
    %v3234 = vpop.f32.mrf.mxu0
    %v3235 = vadd.f32 %v2385, %v3234
    %v3236 = vpop.f32.mrf.mxu0
    %3237 = vdwg.mxu0
    %3238 = vmatpush.bf16.msra.mxu0 %v2914
    %3239 = vmatpush.bf16.msra.mxu0 %v2898
    %3240 = vmatpush.bf16.msra.mxu0 %v2882
    %3241 = vmatpush.bf16.msra.mxu0 %v2866
    %3242 = vmatpush.bf16.msra.mxu0 %v2850
    %3243 = vmatpush.bf16.msra.mxu0 %v2834
    %3244 = vmatpush.bf16.msra.mxu0 %v2818
    %3245 = vmatpush.bf16.msra.mxu0 %v2802
    %3246 = vmatmul.bf16.gmra.mxu0 %v2238
    %v3247 = vpop.f32.mrf.mxu0
    %v3248 = vadd.f32 %v2386, %v3247
    %v3249 = vpop.f32.mrf.mxu0
    %3250 = vdwg.mxu0
    %v3251 = vld [vmem:[#allocation17] sm:$0xf]
    %v3252 = vld [vmem:[#allocation17 + $0x4] sm:$0xf]
    %v3253 = vld [vmem:[#allocation17 + $0x8] sm:$0xf]
    %v3254 = vld [vmem:[#allocation17 + $0xc] sm:$0xf]
    %v3255 = vld [vmem:[#allocation17 + $0x10] sm:$0xf]
    %v3256 = vld [vmem:[#allocation17 + $0x14] sm:$0xf]
    %v3257 = vld [vmem:[#allocation17 + $0x18] sm:$0xf]
    %v3258 = vld [vmem:[#allocation17 + $0x1c] sm:$0xf]
    %v3259 = vld [vmem:[#allocation17 + $0x20] sm:$0xf]
    %v3260 = vld [vmem:[#allocation17 + $0x24] sm:$0xf]
    %v3261 = vld [vmem:[#allocation17 + $0x28] sm:$0xf]
    %v3262 = vld [vmem:[#allocation17 + $0x2c] sm:$0xf]
    %v3263 = vld [vmem:[#allocation17 + $0x30] sm:$0xf]
    %v3264 = vld [vmem:[#allocation17 + $0x34] sm:$0xf]
    %v3265 = vld [vmem:[#allocation17 + $0x38] sm:$0xf]
    %v3266 = vld [vmem:[#allocation17 + $0x3c] sm:$0xf]
    %v3267 = vld [vmem:[#allocation20] sm:$0x1]
    %v3269 = vperm.slane %v3267, 0
    %v3287 = vunpack.c.l.b16 %v3251
    %v3288 = vunpack.c.l.b16 %v3252
    %v3289 = vunpack.c.l.b16 %v3253
    %v3290 = vunpack.c.l.b16 %v3254
    %v3291 = vunpack.c.l.b16 %v3255
    %v3292 = vunpack.c.l.b16 %v3256
    %v3293 = vunpack.c.l.b16 %v3257
    %v3294 = vunpack.c.l.b16 %v3258
    %v3295 = vunpack.c.l.b16 %v3259
    %v3296 = vunpack.c.l.b16 %v3260
    %v3297 = vunpack.c.l.b16 %v3261
    %v3298 = vunpack.c.l.b16 %v3262
    %v3299 = vunpack.c.l.b16 %v3263
    %v3300 = vunpack.c.l.b16 %v3264
    %v3301 = vunpack.c.l.b16 %v3265
    %v3302 = vunpack.c.l.b16 %v3266
    %v3303 = vpack.c.b16 %v3288, %v3287
    %v3304 = vpack.c.b16 %v3290, %v3289
    %v3305 = vpack.c.b16 %v3292, %v3291
    %v3306 = vpack.c.b16 %v3294, %v3293
    %v3307 = vpack.c.b16 %v3296, %v3295
    %v3308 = vpack.c.b16 %v3298, %v3297
    %v3309 = vpack.c.b16 %v3300, %v3299
    %v3310 = vpack.c.b16 %v3302, %v3301
    %3319 = vmatpush.bf16.msra.mxu0 %v3310
    %3320 = vmatpush.bf16.msra.mxu0 %v3309
    %3321 = vmatpush.bf16.msra.mxu0 %v3308
    %3322 = vmatpush.bf16.msra.mxu0 %v3307
    %3323 = vmatpush.bf16.msra.mxu0 %v3306
    %3324 = vmatpush.bf16.msra.mxu0 %v3305
    %3325 = vmatpush.bf16.msra.mxu0 %v3304
    %3326 = vmatpush.bf16.msra.mxu0 %v3303
    %3327 = vmatmul.bf16.gmra.mxu0 %v2238
    %v3328 = vpop.f32.mrf.mxu0
    %v3329 = vadd.f32 %v3269, %v3328
    %v3330 = vpop.f32.mrf.mxu0
    %3331 = vdwg.mxu0
    %v3332 = vpack.c.bf16 %v2189, %v2189
    %v3333 = vld [vmem:[#allocation14] sm:$0xff]
    %v3334 = vld [vmem:[#allocation14 + $0x8] sm:$0xff]
    %v3335 = vld [vmem:[#allocation14 + $0x10] sm:$0xff]
    %v3336 = vld [vmem:[#allocation14 + $0x18] sm:$0xff]
    %v3337 = vld [vmem:[#allocation14 + $0x20] sm:$0xff]
    %v3338 = vld [vmem:[#allocation14 + $0x28] sm:$0xff]
    %v3339 = vld [vmem:[#allocation14 + $0x30] sm:$0xff]
    %v3340 = vld [vmem:[#allocation14 + $0x38] sm:$0xff]
    %v3341 = vld [vmem:[#allocation14 + $0x40] sm:$0xff]
    %v3342 = vld [vmem:[#allocation14 + $0x48] sm:$0xff]
    %v3343 = vld [vmem:[#allocation14 + $0x50] sm:$0xff]
    %v3344 = vld [vmem:[#allocation14 + $0x58] sm:$0xff]
    %v3345 = vld [vmem:[#allocation14 + $0x60] sm:$0xff]
    %v3346 = vld [vmem:[#allocation14 + $0x68] sm:$0xff]
    %v3347 = vld [vmem:[#allocation14 + $0x70] sm:$0xff]
    %v3348 = vld [vmem:[#allocation14 + $0x78] sm:$0xff]
    %v3349 = vld [vmem:[#allocation14 + $0x80] sm:$0xff]
    %v3350 = vld [vmem:[#allocation14 + $0x88] sm:$0xff]
    %v3351 = vld [vmem:[#allocation14 + $0x90] sm:$0xff]
    %v3352 = vld [vmem:[#allocation14 + $0x98] sm:$0xff]
    %v3353 = vld [vmem:[#allocation14 + $0xa0] sm:$0xff]
    %v3354 = vld [vmem:[#allocation14 + $0xa8] sm:$0xff]
    %v3355 = vld [vmem:[#allocation14 + $0xb0] sm:$0xff]
    %v3356 = vld [vmem:[#allocation14 + $0xb8] sm:$0xff]
    %v3357 = vld [vmem:[#allocation14 + $0xc0] sm:$0xff]
    %v3358 = vld [vmem:[#allocation14 + $0xc8] sm:$0xff]
    %v3359 = vld [vmem:[#allocation14 + $0xd0] sm:$0xff]
    %v3360 = vld [vmem:[#allocation14 + $0xd8] sm:$0xff]
    %v3361 = vld [vmem:[#allocation14 + $0xe0] sm:$0xff]
    %v3362 = vld [vmem:[#allocation14 + $0xe8] sm:$0xff]
    %v3363 = vld [vmem:[#allocation14 + $0xf0] sm:$0xff]
    %v3364 = vld [vmem:[#allocation14 + $0xf8] sm:$0xff]
    %v3365 = vld [vmem:[#allocation14 + $0x100] sm:$0xff]
    %v3366 = vld [vmem:[#allocation14 + $0x108] sm:$0xff]
    %v3367 = vld [vmem:[#allocation14 + $0x110] sm:$0xff]
    %v3368 = vld [vmem:[#allocation14 + $0x118] sm:$0xff]
    %v3369 = vld [vmem:[#allocation14 + $0x120] sm:$0xff]
    %v3370 = vld [vmem:[#allocation14 + $0x128] sm:$0xff]
    %v3371 = vld [vmem:[#allocation14 + $0x130] sm:$0xff]
    %v3372 = vld [vmem:[#allocation14 + $0x138] sm:$0xff]
    %v3373 = vld [vmem:[#allocation14 + $0x140] sm:$0xff]
    %v3374 = vld [vmem:[#allocation14 + $0x148] sm:$0xff]
    %v3375 = vld [vmem:[#allocation14 + $0x150] sm:$0xff]
    %v3376 = vld [vmem:[#allocation14 + $0x158] sm:$0xff]
    %v3377 = vld [vmem:[#allocation14 + $0x160] sm:$0xff]
    %v3378 = vld [vmem:[#allocation14 + $0x168] sm:$0xff]
    %v3379 = vld [vmem:[#allocation14 + $0x170] sm:$0xff]
    %v3380 = vld [vmem:[#allocation14 + $0x178] sm:$0xff]
    %v3381 = vld [vmem:[#allocation14 + $0x180] sm:$0xff]
    %v3382 = vld [vmem:[#allocation14 + $0x188] sm:$0xff]
    %v3383 = vld [vmem:[#allocation14 + $0x190] sm:$0xff]
    %v3384 = vld [vmem:[#allocation14 + $0x198] sm:$0xff]
    %v3385 = vld [vmem:[#allocation14 + $0x1a0] sm:$0xff]
    %v3386 = vld [vmem:[#allocation14 + $0x1a8] sm:$0xff]
    %v3387 = vld [vmem:[#allocation14 + $0x1b0] sm:$0xff]
    %v3388 = vld [vmem:[#allocation14 + $0x1b8] sm:$0xff]
    %v3389 = vld [vmem:[#allocation14 + $0x1c0] sm:$0xff]
    %v3390 = vld [vmem:[#allocation14 + $0x1c8] sm:$0xff]
    %v3391 = vld [vmem:[#allocation14 + $0x1d0] sm:$0xff]
    %v3392 = vld [vmem:[#allocation14 + $0x1d8] sm:$0xff]
    %v3393 = vld [vmem:[#allocation14 + $0x1e0] sm:$0xff]
    %v3394 = vld [vmem:[#allocation14 + $0x1e8] sm:$0xff]
    %v3395 = vld [vmem:[#allocation14 + $0x1f0] sm:$0xff]
    %v3396 = vld [vmem:[#allocation14 + $0x1f8] sm:$0xff]
    %v3397 = vld [vmem:[#allocation14 + $0x200] sm:$0xff]
    %v3398 = vld [vmem:[#allocation14 + $0x208] sm:$0xff]
    %v3399 = vld [vmem:[#allocation14 + $0x210] sm:$0xff]
    %v3400 = vld [vmem:[#allocation14 + $0x218] sm:$0xff]
    %v3401 = vld [vmem:[#allocation14 + $0x220] sm:$0xff]
    %v3402 = vld [vmem:[#allocation14 + $0x228] sm:$0xff]
    %v3403 = vld [vmem:[#allocation14 + $0x230] sm:$0xff]
    %v3404 = vld [vmem:[#allocation14 + $0x238] sm:$0xff]
    %v3405 = vld [vmem:[#allocation14 + $0x240] sm:$0xff]
    %v3406 = vld [vmem:[#allocation14 + $0x248] sm:$0xff]
    %v3407 = vld [vmem:[#allocation14 + $0x250] sm:$0xff]
    %v3408 = vld [vmem:[#allocation14 + $0x258] sm:$0xff]
    %v3409 = vld [vmem:[#allocation14 + $0x260] sm:$0xff]
    %v3410 = vld [vmem:[#allocation14 + $0x268] sm:$0xff]
    %v3411 = vld [vmem:[#allocation14 + $0x270] sm:$0xff]
    %v3412 = vld [vmem:[#allocation14 + $0x278] sm:$0xff]
    %v3413 = vld [vmem:[#allocation14 + $0x280] sm:$0xff]
    %v3414 = vld [vmem:[#allocation14 + $0x288] sm:$0xff]
    %v3415 = vld [vmem:[#allocation14 + $0x290] sm:$0xff]
    %v3416 = vld [vmem:[#allocation14 + $0x298] sm:$0xff]
    %v3417 = vld [vmem:[#allocation14 + $0x2a0] sm:$0xff]
    %v3418 = vld [vmem:[#allocation14 + $0x2a8] sm:$0xff]
    %v3419 = vld [vmem:[#allocation14 + $0x2b0] sm:$0xff]
    %v3420 = vld [vmem:[#allocation14 + $0x2b8] sm:$0xff]
    %v3421 = vld [vmem:[#allocation14 + $0x2c0] sm:$0xff]
    %v3422 = vld [vmem:[#allocation14 + $0x2c8] sm:$0xff]
    %v3423 = vld [vmem:[#allocation14 + $0x2d0] sm:$0xff]
    %v3424 = vld [vmem:[#allocation14 + $0x2d8] sm:$0xff]
    %v3425 = vld [vmem:[#allocation14 + $0x2e0] sm:$0xff]
    %v3426 = vld [vmem:[#allocation14 + $0x2e8] sm:$0xff]
    %v3427 = vld [vmem:[#allocation14 + $0x2f0] sm:$0xff]
    %v3428 = vld [vmem:[#allocation14 + $0x2f8] sm:$0xff]
    %v3429 = vld [vmem:[#allocation14 + $0x300] sm:$0xff]
    %v3430 = vld [vmem:[#allocation14 + $0x308] sm:$0xff]
    %v3431 = vld [vmem:[#allocation14 + $0x310] sm:$0xff]
    %v3432 = vld [vmem:[#allocation14 + $0x318] sm:$0xff]
    %v3433 = vld [vmem:[#allocation14 + $0x320] sm:$0xff]
    %v3434 = vld [vmem:[#allocation14 + $0x328] sm:$0xff]
    %v3435 = vld [vmem:[#allocation14 + $0x330] sm:$0xff]
    %v3436 = vld [vmem:[#allocation14 + $0x338] sm:$0xff]
    %v3437 = vld [vmem:[#allocation14 + $0x340] sm:$0xff]
    %v3438 = vld [vmem:[#allocation14 + $0x348] sm:$0xff]
    %v3439 = vld [vmem:[#allocation14 + $0x350] sm:$0xff]
    %v3440 = vld [vmem:[#allocation14 + $0x358] sm:$0xff]
    %v3441 = vld [vmem:[#allocation14 + $0x360] sm:$0xff]
    %v3442 = vld [vmem:[#allocation14 + $0x368] sm:$0xff]
    %v3443 = vld [vmem:[#allocation14 + $0x370] sm:$0xff]
    %v3444 = vld [vmem:[#allocation14 + $0x378] sm:$0xff]
    %v3445 = vld [vmem:[#allocation14 + $0x380] sm:$0xff]
    %v3446 = vld [vmem:[#allocation14 + $0x388] sm:$0xff]
    %v3447 = vld [vmem:[#allocation14 + $0x390] sm:$0xff]
    %v3448 = vld [vmem:[#allocation14 + $0x398] sm:$0xff]
    %v3449 = vld [vmem:[#allocation14 + $0x3a0] sm:$0xff]
    %v3450 = vld [vmem:[#allocation14 + $0x3a8] sm:$0xff]
    %v3451 = vld [vmem:[#allocation14 + $0x3b0] sm:$0xff]
    %v3452 = vld [vmem:[#allocation14 + $0x3b8] sm:$0xff]
    %v3453 = vld [vmem:[#allocation14 + $0x3c0] sm:$0xff]
    %v3454 = vld [vmem:[#allocation14 + $0x3c8] sm:$0xff]
    %v3455 = vld [vmem:[#allocation14 + $0x3d0] sm:$0xff]
    %v3456 = vld [vmem:[#allocation14 + $0x3d8] sm:$0xff]
    %v3457 = vld [vmem:[#allocation14 + $0x3e0] sm:$0xff]
    %v3458 = vld [vmem:[#allocation14 + $0x3e8] sm:$0xff]
    %v3459 = vld [vmem:[#allocation14 + $0x3f0] sm:$0xff]
    %v3460 = vld [vmem:[#allocation14 + $0x3f8] sm:$0xff]
    %v3462 = vshrl.u32 %v3332, 16
    %v3464 = vrot.slane %v3462, 2
    %v3594 = vunpack.c.l.b16 %v3333
    %v3595 = vunpack.c.h.b16 %v3333
    %v3596 = vunpack.c.l.b16 %v3334
    %v3597 = vunpack.c.h.b16 %v3334
    %v3598 = vunpack.c.l.b16 %v3335
    %v3599 = vunpack.c.h.b16 %v3335
    %v3600 = vunpack.c.l.b16 %v3336
    %v3601 = vunpack.c.h.b16 %v3336
    %v3602 = vunpack.c.l.b16 %v3337
    %v3603 = vunpack.c.h.b16 %v3337
    %v3604 = vunpack.c.l.b16 %v3338
    %v3605 = vunpack.c.h.b16 %v3338
    %v3606 = vunpack.c.l.b16 %v3339
    %v3607 = vunpack.c.h.b16 %v3339
    %v3608 = vunpack.c.l.b16 %v3340
    %v3609 = vunpack.c.h.b16 %v3340
    %v3610 = vunpack.c.l.b16 %v3341
    %v3611 = vunpack.c.h.b16 %v3341
    %v3612 = vunpack.c.l.b16 %v3342
    %v3613 = vunpack.c.h.b16 %v3342
    %v3614 = vunpack.c.l.b16 %v3343
    %v3615 = vunpack.c.h.b16 %v3343
    %v3616 = vunpack.c.l.b16 %v3344
    %v3617 = vunpack.c.h.b16 %v3344
    %v3618 = vunpack.c.l.b16 %v3345
    %v3619 = vunpack.c.h.b16 %v3345
    %v3620 = vunpack.c.l.b16 %v3346
    %v3621 = vunpack.c.h.b16 %v3346
    %v3622 = vunpack.c.l.b16 %v3347
    %v3623 = vunpack.c.h.b16 %v3347
    %v3624 = vunpack.c.l.b16 %v3348
    %v3625 = vunpack.c.h.b16 %v3348
    %v3626 = vunpack.c.l.b16 %v3349
    %v3627 = vunpack.c.h.b16 %v3349
    %v3628 = vunpack.c.l.b16 %v3350
    %v3629 = vunpack.c.h.b16 %v3350
    %v3630 = vunpack.c.l.b16 %v3351
    %v3631 = vunpack.c.h.b16 %v3351
    %v3632 = vunpack.c.l.b16 %v3352
    %v3633 = vunpack.c.h.b16 %v3352
    %v3634 = vunpack.c.l.b16 %v3353
    %v3635 = vunpack.c.h.b16 %v3353
    %v3636 = vunpack.c.l.b16 %v3354
    %v3637 = vunpack.c.h.b16 %v3354
    %v3638 = vunpack.c.l.b16 %v3355
    %v3639 = vunpack.c.h.b16 %v3355
    %v3640 = vunpack.c.l.b16 %v3356
    %v3641 = vunpack.c.h.b16 %v3356
    %v3642 = vunpack.c.l.b16 %v3357
    %v3643 = vunpack.c.h.b16 %v3357
    %v3644 = vunpack.c.l.b16 %v3358
    %v3645 = vunpack.c.h.b16 %v3358
    %v3646 = vunpack.c.l.b16 %v3359
    %v3647 = vunpack.c.h.b16 %v3359
    %v3648 = vunpack.c.l.b16 %v3360
    %v3649 = vunpack.c.h.b16 %v3360
    %v3650 = vunpack.c.l.b16 %v3361
    %v3651 = vunpack.c.h.b16 %v3361
    %v3652 = vunpack.c.l.b16 %v3362
    %v3653 = vunpack.c.h.b16 %v3362
    %v3654 = vunpack.c.l.b16 %v3363
    %v3655 = vunpack.c.h.b16 %v3363
    %v3656 = vunpack.c.l.b16 %v3364
    %v3657 = vunpack.c.h.b16 %v3364
    %v3658 = vunpack.c.l.b16 %v3365
    %v3659 = vunpack.c.h.b16 %v3365
    %v3660 = vunpack.c.l.b16 %v3366
    %v3661 = vunpack.c.h.b16 %v3366
    %v3662 = vunpack.c.l.b16 %v3367
    %v3663 = vunpack.c.h.b16 %v3367
    %v3664 = vunpack.c.l.b16 %v3368
    %v3665 = vunpack.c.h.b16 %v3368
    %v3666 = vunpack.c.l.b16 %v3369
    %v3667 = vunpack.c.h.b16 %v3369
    %v3668 = vunpack.c.l.b16 %v3370
    %v3669 = vunpack.c.h.b16 %v3370
    %v3670 = vunpack.c.l.b16 %v3371
    %v3671 = vunpack.c.h.b16 %v3371
    %v3672 = vunpack.c.l.b16 %v3372
    %v3673 = vunpack.c.h.b16 %v3372
    %v3674 = vunpack.c.l.b16 %v3373
    %v3675 = vunpack.c.h.b16 %v3373
    %v3676 = vunpack.c.l.b16 %v3374
    %v3677 = vunpack.c.h.b16 %v3374
    %v3678 = vunpack.c.l.b16 %v3375
    %v3679 = vunpack.c.h.b16 %v3375
    %v3680 = vunpack.c.l.b16 %v3376
    %v3681 = vunpack.c.h.b16 %v3376
    %v3682 = vunpack.c.l.b16 %v3377
    %v3683 = vunpack.c.h.b16 %v3377
    %v3684 = vunpack.c.l.b16 %v3378
    %v3685 = vunpack.c.h.b16 %v3378
    %v3686 = vunpack.c.l.b16 %v3379
    %v3687 = vunpack.c.h.b16 %v3379
    %v3688 = vunpack.c.l.b16 %v3380
    %v3689 = vunpack.c.h.b16 %v3380
    %v3690 = vunpack.c.l.b16 %v3381
    %v3691 = vunpack.c.h.b16 %v3381
    %v3692 = vunpack.c.l.b16 %v3382
    %v3693 = vunpack.c.h.b16 %v3382
    %v3694 = vunpack.c.l.b16 %v3383
    %v3695 = vunpack.c.h.b16 %v3383
    %v3696 = vunpack.c.l.b16 %v3384
    %v3697 = vunpack.c.h.b16 %v3384
    %v3698 = vunpack.c.l.b16 %v3385
    %v3699 = vunpack.c.h.b16 %v3385
    %v3700 = vunpack.c.l.b16 %v3386
    %v3701 = vunpack.c.h.b16 %v3386
    %v3702 = vunpack.c.l.b16 %v3387
    %v3703 = vunpack.c.h.b16 %v3387
    %v3704 = vunpack.c.l.b16 %v3388
    %v3705 = vunpack.c.h.b16 %v3388
    %v3706 = vunpack.c.l.b16 %v3389
    %v3707 = vunpack.c.h.b16 %v3389
    %v3708 = vunpack.c.l.b16 %v3390
    %v3709 = vunpack.c.h.b16 %v3390
    %v3710 = vunpack.c.l.b16 %v3391
    %v3711 = vunpack.c.h.b16 %v3391
    %v3712 = vunpack.c.l.b16 %v3392
    %v3713 = vunpack.c.h.b16 %v3392
    %v3714 = vunpack.c.l.b16 %v3393
    %v3715 = vunpack.c.h.b16 %v3393
    %v3716 = vunpack.c.l.b16 %v3394
    %v3717 = vunpack.c.h.b16 %v3394
    %v3718 = vunpack.c.l.b16 %v3395
    %v3719 = vunpack.c.h.b16 %v3395
    %v3720 = vunpack.c.l.b16 %v3396
    %v3721 = vunpack.c.h.b16 %v3396
    %v3722 = vunpack.c.l.b16 %v3397
    %v3723 = vunpack.c.h.b16 %v3397
    %v3724 = vunpack.c.l.b16 %v3398
    %v3725 = vunpack.c.h.b16 %v3398
    %v3726 = vunpack.c.l.b16 %v3399
    %v3727 = vunpack.c.h.b16 %v3399
    %v3728 = vunpack.c.l.b16 %v3400
    %v3729 = vunpack.c.h.b16 %v3400
    %v3730 = vunpack.c.l.b16 %v3401
    %v3731 = vunpack.c.h.b16 %v3401
    %v3732 = vunpack.c.l.b16 %v3402
    %v3733 = vunpack.c.h.b16 %v3402
    %v3734 = vunpack.c.l.b16 %v3403
    %v3735 = vunpack.c.h.b16 %v3403
    %v3736 = vunpack.c.l.b16 %v3404
    %v3737 = vunpack.c.h.b16 %v3404
    %v3738 = vunpack.c.l.b16 %v3405
    %v3739 = vunpack.c.h.b16 %v3405
    %v3740 = vunpack.c.l.b16 %v3406
    %v3741 = vunpack.c.h.b16 %v3406
    %v3742 = vunpack.c.l.b16 %v3407
    %v3743 = vunpack.c.h.b16 %v3407
    %v3744 = vunpack.c.l.b16 %v3408
    %v3745 = vunpack.c.h.b16 %v3408
    %v3746 = vunpack.c.l.b16 %v3409
    %v3747 = vunpack.c.h.b16 %v3409
    %v3748 = vunpack.c.l.b16 %v3410
    %v3749 = vunpack.c.h.b16 %v3410
    %v3750 = vunpack.c.l.b16 %v3411
    %v3751 = vunpack.c.h.b16 %v3411
    %v3752 = vunpack.c.l.b16 %v3412
    %v3753 = vunpack.c.h.b16 %v3412
    %v3754 = vunpack.c.l.b16 %v3413
    %v3755 = vunpack.c.h.b16 %v3413
    %v3756 = vunpack.c.l.b16 %v3414
    %v3757 = vunpack.c.h.b16 %v3414
    %v3758 = vunpack.c.l.b16 %v3415
    %v3759 = vunpack.c.h.b16 %v3415
    %v3760 = vunpack.c.l.b16 %v3416
    %v3761 = vunpack.c.h.b16 %v3416
    %v3762 = vunpack.c.l.b16 %v3417
    %v3763 = vunpack.c.h.b16 %v3417
    %v3764 = vunpack.c.l.b16 %v3418
    %v3765 = vunpack.c.h.b16 %v3418
    %v3766 = vunpack.c.l.b16 %v3419
    %v3767 = vunpack.c.h.b16 %v3419
    %v3768 = vunpack.c.l.b16 %v3420
    %v3769 = vunpack.c.h.b16 %v3420
    %v3770 = vunpack.c.l.b16 %v3421
    %v3771 = vunpack.c.h.b16 %v3421
    %v3772 = vunpack.c.l.b16 %v3422
    %v3773 = vunpack.c.h.b16 %v3422
    %v3774 = vunpack.c.l.b16 %v3423
    %v3775 = vunpack.c.h.b16 %v3423
    %v3776 = vunpack.c.l.b16 %v3424
    %v3777 = vunpack.c.h.b16 %v3424
    %v3778 = vunpack.c.l.b16 %v3425
    %v3779 = vunpack.c.h.b16 %v3425
    %v3780 = vunpack.c.l.b16 %v3426
    %v3781 = vunpack.c.h.b16 %v3426
    %v3782 = vunpack.c.l.b16 %v3427
    %v3783 = vunpack.c.h.b16 %v3427
    %v3784 = vunpack.c.l.b16 %v3428
    %v3785 = vunpack.c.h.b16 %v3428
    %v3786 = vunpack.c.l.b16 %v3429
    %v3787 = vunpack.c.h.b16 %v3429
    %v3788 = vunpack.c.l.b16 %v3430
    %v3789 = vunpack.c.h.b16 %v3430
    %v3790 = vunpack.c.l.b16 %v3431
    %v3791 = vunpack.c.h.b16 %v3431
    %v3792 = vunpack.c.l.b16 %v3432
    %v3793 = vunpack.c.h.b16 %v3432
    %v3794 = vunpack.c.l.b16 %v3433
    %v3795 = vunpack.c.h.b16 %v3433
    %v3796 = vunpack.c.l.b16 %v3434
    %v3797 = vunpack.c.h.b16 %v3434
    %v3798 = vunpack.c.l.b16 %v3435
    %v3799 = vunpack.c.h.b16 %v3435
    %v3800 = vunpack.c.l.b16 %v3436
    %v3801 = vunpack.c.h.b16 %v3436
    %v3802 = vunpack.c.l.b16 %v3437
    %v3803 = vunpack.c.h.b16 %v3437
    %v3804 = vunpack.c.l.b16 %v3438
    %v3805 = vunpack.c.h.b16 %v3438
    %v3806 = vunpack.c.l.b16 %v3439
    %v3807 = vunpack.c.h.b16 %v3439
    %v3808 = vunpack.c.l.b16 %v3440
    %v3809 = vunpack.c.h.b16 %v3440
    %v3810 = vunpack.c.l.b16 %v3441
    %v3811 = vunpack.c.h.b16 %v3441
    %v3812 = vunpack.c.l.b16 %v3442
    %v3813 = vunpack.c.h.b16 %v3442
    %v3814 = vunpack.c.l.b16 %v3443
    %v3815 = vunpack.c.h.b16 %v3443
    %v3816 = vunpack.c.l.b16 %v3444
    %v3817 = vunpack.c.h.b16 %v3444
    %v3818 = vunpack.c.l.b16 %v3445
    %v3819 = vunpack.c.h.b16 %v3445
    %v3820 = vunpack.c.l.b16 %v3446
    %v3821 = vunpack.c.h.b16 %v3446
    %v3822 = vunpack.c.l.b16 %v3447
    %v3823 = vunpack.c.h.b16 %v3447
    %v3824 = vunpack.c.l.b16 %v3448
    %v3825 = vunpack.c.h.b16 %v3448
    %v3826 = vunpack.c.l.b16 %v3449
    %v3827 = vunpack.c.h.b16 %v3449
    %v3828 = vunpack.c.l.b16 %v3450
    %v3829 = vunpack.c.h.b16 %v3450
    %v3830 = vunpack.c.l.b16 %v3451
    %v3831 = vunpack.c.h.b16 %v3451
    %v3832 = vunpack.c.l.b16 %v3452
    %v3833 = vunpack.c.h.b16 %v3452
    %v3834 = vunpack.c.l.b16 %v3453
    %v3835 = vunpack.c.h.b16 %v3453
    %v3836 = vunpack.c.l.b16 %v3454
    %v3837 = vunpack.c.h.b16 %v3454
    %v3838 = vunpack.c.l.b16 %v3455
    %v3839 = vunpack.c.h.b16 %v3455
    %v3840 = vunpack.c.l.b16 %v3456
    %v3841 = vunpack.c.h.b16 %v3456
    %v3842 = vunpack.c.l.b16 %v3457
    %v3843 = vunpack.c.h.b16 %v3457
    %v3844 = vunpack.c.l.b16 %v3458
    %v3845 = vunpack.c.h.b16 %v3458
    %v3846 = vunpack.c.l.b16 %v3459
    %v3847 = vunpack.c.h.b16 %v3459
    %v3848 = vunpack.c.l.b16 %v3460
    %v3849 = vunpack.c.h.b16 %v3460
    %v3850 = vpack.c.b16 %v3610, %v3594
    %v3851 = vpack.c.b16 %v3611, %v3595
    %v3852 = vpack.c.b16 %v3612, %v3596
    %v3853 = vpack.c.b16 %v3613, %v3597
    %v3854 = vpack.c.b16 %v3614, %v3598
    %v3855 = vpack.c.b16 %v3615, %v3599
    %v3856 = vpack.c.b16 %v3616, %v3600
    %v3857 = vpack.c.b16 %v3617, %v3601
    %v3858 = vpack.c.b16 %v3618, %v3602
    %v3859 = vpack.c.b16 %v3619, %v3603
    %v3860 = vpack.c.b16 %v3620, %v3604
    %v3861 = vpack.c.b16 %v3621, %v3605
    %v3862 = vpack.c.b16 %v3622, %v3606
    %v3863 = vpack.c.b16 %v3623, %v3607
    %v3864 = vpack.c.b16 %v3624, %v3608
    %v3865 = vpack.c.b16 %v3625, %v3609
    %v3866 = vpack.c.b16 %v3642, %v3626
    %v3867 = vpack.c.b16 %v3643, %v3627
    %v3868 = vpack.c.b16 %v3644, %v3628
    %v3869 = vpack.c.b16 %v3645, %v3629
    %v3870 = vpack.c.b16 %v3646, %v3630
    %v3871 = vpack.c.b16 %v3647, %v3631
    %v3872 = vpack.c.b16 %v3648, %v3632
    %v3873 = vpack.c.b16 %v3649, %v3633
    %v3874 = vpack.c.b16 %v3650, %v3634
    %v3875 = vpack.c.b16 %v3651, %v3635
    %v3876 = vpack.c.b16 %v3652, %v3636
    %v3877 = vpack.c.b16 %v3653, %v3637
    %v3878 = vpack.c.b16 %v3654, %v3638
    %v3879 = vpack.c.b16 %v3655, %v3639
    %v3880 = vpack.c.b16 %v3656, %v3640
    %v3881 = vpack.c.b16 %v3657, %v3641
    %v3882 = vpack.c.b16 %v3674, %v3658
    %v3883 = vpack.c.b16 %v3675, %v3659
    %v3884 = vpack.c.b16 %v3676, %v3660
    %v3885 = vpack.c.b16 %v3677, %v3661
    %v3886 = vpack.c.b16 %v3678, %v3662
    %v3887 = vpack.c.b16 %v3679, %v3663
    %v3888 = vpack.c.b16 %v3680, %v3664
    %v3889 = vpack.c.b16 %v3681, %v3665
    %v3890 = vpack.c.b16 %v3682, %v3666
    %v3891 = vpack.c.b16 %v3683, %v3667
    %v3892 = vpack.c.b16 %v3684, %v3668
    %v3893 = vpack.c.b16 %v3685, %v3669
    %v3894 = vpack.c.b16 %v3686, %v3670
    %v3895 = vpack.c.b16 %v3687, %v3671
    %v3896 = vpack.c.b16 %v3688, %v3672
    %v3897 = vpack.c.b16 %v3689, %v3673
    %v3898 = vpack.c.b16 %v3706, %v3690
    %v3899 = vpack.c.b16 %v3707, %v3691
    %v3900 = vpack.c.b16 %v3708, %v3692
    %v3901 = vpack.c.b16 %v3709, %v3693
    %v3902 = vpack.c.b16 %v3710, %v3694
    %v3903 = vpack.c.b16 %v3711, %v3695
    %v3904 = vpack.c.b16 %v3712, %v3696
    %v3905 = vpack.c.b16 %v3713, %v3697
    %v3906 = vpack.c.b16 %v3714, %v3698
    %v3907 = vpack.c.b16 %v3715, %v3699
    %v3908 = vpack.c.b16 %v3716, %v3700
    %v3909 = vpack.c.b16 %v3717, %v3701
    %v3910 = vpack.c.b16 %v3718, %v3702
    %v3911 = vpack.c.b16 %v3719, %v3703
    %v3912 = vpack.c.b16 %v3720, %v3704
    %v3913 = vpack.c.b16 %v3721, %v3705
    %v3914 = vpack.c.b16 %v3738, %v3722
    %v3915 = vpack.c.b16 %v3739, %v3723
    %v3916 = vpack.c.b16 %v3740, %v3724
    %v3917 = vpack.c.b16 %v3741, %v3725
    %v3918 = vpack.c.b16 %v3742, %v3726
    %v3919 = vpack.c.b16 %v3743, %v3727
    %v3920 = vpack.c.b16 %v3744, %v3728
    %v3921 = vpack.c.b16 %v3745, %v3729
    %v3922 = vpack.c.b16 %v3746, %v3730
    %v3923 = vpack.c.b16 %v3747, %v3731
    %v3924 = vpack.c.b16 %v3748, %v3732
    %v3925 = vpack.c.b16 %v3749, %v3733
    %v3926 = vpack.c.b16 %v3750, %v3734
    %v3927 = vpack.c.b16 %v3751, %v3735
    %v3928 = vpack.c.b16 %v3752, %v3736
    %v3929 = vpack.c.b16 %v3753, %v3737
    %v3930 = vpack.c.b16 %v3770, %v3754
    %v3931 = vpack.c.b16 %v3771, %v3755
    %v3932 = vpack.c.b16 %v3772, %v3756
    %v3933 = vpack.c.b16 %v3773, %v3757
    %v3934 = vpack.c.b16 %v3774, %v3758
    %v3935 = vpack.c.b16 %v3775, %v3759
    %v3936 = vpack.c.b16 %v3776, %v3760
    %v3937 = vpack.c.b16 %v3777, %v3761
    %v3938 = vpack.c.b16 %v3778, %v3762
    %v3939 = vpack.c.b16 %v3779, %v3763
    %v3940 = vpack.c.b16 %v3780, %v3764
    %v3941 = vpack.c.b16 %v3781, %v3765
    %v3942 = vpack.c.b16 %v3782, %v3766
    %v3943 = vpack.c.b16 %v3783, %v3767
    %v3944 = vpack.c.b16 %v3784, %v3768
    %v3945 = vpack.c.b16 %v3785, %v3769
    %v3946 = vpack.c.b16 %v3802, %v3786
    %v3947 = vpack.c.b16 %v3803, %v3787
    %v3948 = vpack.c.b16 %v3804, %v3788
    %v3949 = vpack.c.b16 %v3805, %v3789
    %v3950 = vpack.c.b16 %v3806, %v3790
    %v3951 = vpack.c.b16 %v3807, %v3791
    %v3952 = vpack.c.b16 %v3808, %v3792
    %v3953 = vpack.c.b16 %v3809, %v3793
    %v3954 = vpack.c.b16 %v3810, %v3794
    %v3955 = vpack.c.b16 %v3811, %v3795
    %v3956 = vpack.c.b16 %v3812, %v3796
    %v3957 = vpack.c.b16 %v3813, %v3797
    %v3958 = vpack.c.b16 %v3814, %v3798
    %v3959 = vpack.c.b16 %v3815, %v3799
    %v3960 = vpack.c.b16 %v3816, %v3800
    %v3961 = vpack.c.b16 %v3817, %v3801
    %v3962 = vpack.c.b16 %v3834, %v3818
    %v3963 = vpack.c.b16 %v3835, %v3819
    %v3964 = vpack.c.b16 %v3836, %v3820
    %v3965 = vpack.c.b16 %v3837, %v3821
    %v3966 = vpack.c.b16 %v3838, %v3822
    %v3967 = vpack.c.b16 %v3839, %v3823
    %v3968 = vpack.c.b16 %v3840, %v3824
    %v3969 = vpack.c.b16 %v3841, %v3825
    %v3970 = vpack.c.b16 %v3842, %v3826
    %v3971 = vpack.c.b16 %v3843, %v3827
    %v3972 = vpack.c.b16 %v3844, %v3828
    %v3973 = vpack.c.b16 %v3845, %v3829
    %v3974 = vpack.c.b16 %v3846, %v3830
    %v3975 = vpack.c.b16 %v3847, %v3831
    %v3976 = vpack.c.b16 %v3848, %v3832
    %v3977 = vpack.c.b16 %v3849, %v3833
    %4106 = vmatpush.bf16.msra.mxu0 %v3962
    %4107 = vmatpush.bf16.msra.mxu0 %v3946
    %4108 = vmatpush.bf16.msra.mxu0 %v3930
    %4109 = vmatpush.bf16.msra.mxu0 %v3914
    %4110 = vmatpush.bf16.msra.mxu0 %v3898
    %4111 = vmatpush.bf16.msra.mxu0 %v3882
    %4112 = vmatpush.bf16.msra.mxu0 %v3866
    %4113 = vmatpush.bf16.msra.mxu0 %v3850
    %4114 = vmatmul.bf16.gmra.mxu0 %v3464
    %v4115 = vpop.f32.mrf.mxu0
    %v4116 = vadd.f32 0.0, %v4115
    %v4117 = vpop.f32.mrf.mxu0
    %4118 = vdwg.mxu0
    %4119 = vmatpush.bf16.msra.mxu0 %v3963
    %4120 = vmatpush.bf16.msra.mxu0 %v3947
    %4121 = vmatpush.bf16.msra.mxu0 %v3931
    %4122 = vmatpush.bf16.msra.mxu0 %v3915
    %4123 = vmatpush.bf16.msra.mxu0 %v3899
    %4124 = vmatpush.bf16.msra.mxu0 %v3883
    %4125 = vmatpush.bf16.msra.mxu0 %v3867
    %4126 = vmatpush.bf16.msra.mxu0 %v3851
    %4127 = vmatmul.bf16.gmra.mxu0 %v3464
    %v4128 = vpop.f32.mrf.mxu0
    %v4129 = vadd.f32 0.0, %v4128
    %v4130 = vpop.f32.mrf.mxu0
    %4131 = vdwg.mxu0
    %4132 = vmatpush.bf16.msra.mxu0 %v3964
    %4133 = vmatpush.bf16.msra.mxu0 %v3948
    %4134 = vmatpush.bf16.msra.mxu0 %v3932
    %4135 = vmatpush.bf16.msra.mxu0 %v3916
    %4136 = vmatpush.bf16.msra.mxu0 %v3900
    %4137 = vmatpush.bf16.msra.mxu0 %v3884
    %4138 = vmatpush.bf16.msra.mxu0 %v3868
    %4139 = vmatpush.bf16.msra.mxu0 %v3852
    %4140 = vmatmul.bf16.gmra.mxu0 %v3464
    %v4141 = vpop.f32.mrf.mxu0
    %v4142 = vadd.f32 0.0, %v4141
    %v4143 = vpop.f32.mrf.mxu0
    %4144 = vdwg.mxu0
    %4145 = vmatpush.bf16.msra.mxu0 %v3965
    %4146 = vmatpush.bf16.msra.mxu0 %v3949
    %4147 = vmatpush.bf16.msra.mxu0 %v3933
    %4148 = vmatpush.bf16.msra.mxu0 %v3917
    %4149 = vmatpush.bf16.msra.mxu0 %v3901
    %4150 = vmatpush.bf16.msra.mxu0 %v3885
    %4151 = vmatpush.bf16.msra.mxu0 %v3869
    %4152 = vmatpush.bf16.msra.mxu0 %v3853
    %4153 = vmatmul.bf16.gmra.mxu0 %v3464
    %v4154 = vpop.f32.mrf.mxu0
    %v4155 = vadd.f32 0.0, %v4154
    %v4156 = vpop.f32.mrf.mxu0
    %4157 = vdwg.mxu0
    %4158 = vmatpush.bf16.msra.mxu0 %v3966
    %4159 = vmatpush.bf16.msra.mxu0 %v3950
    %4160 = vmatpush.bf16.msra.mxu0 %v3934
    %4161 = vmatpush.bf16.msra.mxu0 %v3918
    %4162 = vmatpush.bf16.msra.mxu0 %v3902
    %4163 = vmatpush.bf16.msra.mxu0 %v3886
    %4164 = vmatpush.bf16.msra.mxu0 %v3870
    %4165 = vmatpush.bf16.msra.mxu0 %v3854
    %4166 = vmatmul.bf16.gmra.mxu0 %v3464
    %v4167 = vpop.f32.mrf.mxu0
    %v4168 = vadd.f32 0.0, %v4167
    %v4169 = vpop.f32.mrf.mxu0
    %4170 = vdwg.mxu0
    %4171 = vmatpush.bf16.msra.mxu0 %v3967
    %4172 = vmatpush.bf16.msra.mxu0 %v3951
    %4173 = vmatpush.bf16.msra.mxu0 %v3935
    %4174 = vmatpush.bf16.msra.mxu0 %v3919
    %4175 = vmatpush.bf16.msra.mxu0 %v3903
    %4176 = vmatpush.bf16.msra.mxu0 %v3887
    %4177 = vmatpush.bf16.msra.mxu0 %v3871
    %4178 = vmatpush.bf16.msra.mxu0 %v3855
    %4179 = vmatmul.bf16.gmra.mxu0 %v3464
    %v4180 = vpop.f32.mrf.mxu0
    %v4181 = vadd.f32 0.0, %v4180
    %v4182 = vpop.f32.mrf.mxu0
    %4183 = vdwg.mxu0
    %4184 = vmatpush.bf16.msra.mxu0 %v3968
    %4185 = vmatpush.bf16.msra.mxu0 %v3952
    %4186 = vmatpush.bf16.msra.mxu0 %v3936
    %4187 = vmatpush.bf16.msra.mxu0 %v3920
    %4188 = vmatpush.bf16.msra.mxu0 %v3904
    %4189 = vmatpush.bf16.msra.mxu0 %v3888
    %4190 = vmatpush.bf16.msra.mxu0 %v3872
    %4191 = vmatpush.bf16.msra.mxu0 %v3856
    %4192 = vmatmul.bf16.gmra.mxu0 %v3464
    %v4193 = vpop.f32.mrf.mxu0
    %v4194 = vadd.f32 0.0, %v4193
    %v4195 = vpop.f32.mrf.mxu0
    %4196 = vdwg.mxu0
    %4197 = vmatpush.bf16.msra.mxu0 %v3969
    %4198 = vmatpush.bf16.msra.mxu0 %v3953
    %4199 = vmatpush.bf16.msra.mxu0 %v3937
    %4200 = vmatpush.bf16.msra.mxu0 %v3921
    %4201 = vmatpush.bf16.msra.mxu0 %v3905
    %4202 = vmatpush.bf16.msra.mxu0 %v3889
    %4203 = vmatpush.bf16.msra.mxu0 %v3873
    %4204 = vmatpush.bf16.msra.mxu0 %v3857
    %4205 = vmatmul.bf16.gmra.mxu0 %v3464
    %v4206 = vpop.f32.mrf.mxu0
    %v4207 = vadd.f32 0.0, %v4206
    %v4208 = vpop.f32.mrf.mxu0
    %4209 = vdwg.mxu0
    %4210 = vmatpush.bf16.msra.mxu0 %v3970
    %4211 = vmatpush.bf16.msra.mxu0 %v3954
    %4212 = vmatpush.bf16.msra.mxu0 %v3938
    %4213 = vmatpush.bf16.msra.mxu0 %v3922
    %4214 = vmatpush.bf16.msra.mxu0 %v3906
    %4215 = vmatpush.bf16.msra.mxu0 %v3890
    %4216 = vmatpush.bf16.msra.mxu0 %v3874
    %4217 = vmatpush.bf16.msra.mxu0 %v3858
    %4218 = vmatmul.bf16.gmra.mxu0 %v3464
    %v4219 = vpop.f32.mrf.mxu0
    %v4220 = vadd.f32 0.0, %v4219
    %v4221 = vpop.f32.mrf.mxu0
    %4222 = vdwg.mxu0
    %4223 = vmatpush.bf16.msra.mxu0 %v3971
    %4224 = vmatpush.bf16.msra.mxu0 %v3955
    %4225 = vmatpush.bf16.msra.mxu0 %v3939
    %4226 = vmatpush.bf16.msra.mxu0 %v3923
    %4227 = vmatpush.bf16.msra.mxu0 %v3907
    %4228 = vmatpush.bf16.msra.mxu0 %v3891
    %4229 = vmatpush.bf16.msra.mxu0 %v3875
    %4230 = vmatpush.bf16.msra.mxu0 %v3859
    %4231 = vmatmul.bf16.gmra.mxu0 %v3464
    %v4232 = vpop.f32.mrf.mxu0
    %v4233 = vadd.f32 0.0, %v4232
    %v4234 = vpop.f32.mrf.mxu0
    %4235 = vdwg.mxu0
    %4236 = vmatpush.bf16.msra.mxu0 %v3972
    %4237 = vmatpush.bf16.msra.mxu0 %v3956
    %4238 = vmatpush.bf16.msra.mxu0 %v3940
    %4239 = vmatpush.bf16.msra.mxu0 %v3924
    %4240 = vmatpush.bf16.msra.mxu0 %v3908
    %4241 = vmatpush.bf16.msra.mxu0 %v3892
    %4242 = vmatpush.bf16.msra.mxu0 %v3876
    %4243 = vmatpush.bf16.msra.mxu0 %v3860
    %4244 = vmatmul.bf16.gmra.mxu0 %v3464
    %v4245 = vpop.f32.mrf.mxu0
    %v4246 = vadd.f32 0.0, %v4245
    %v4247 = vpop.f32.mrf.mxu0
    %4248 = vdwg.mxu0
    %4249 = vmatpush.bf16.msra.mxu0 %v3973
    %4250 = vmatpush.bf16.msra.mxu0 %v3957
    %4251 = vmatpush.bf16.msra.mxu0 %v3941
    %4252 = vmatpush.bf16.msra.mxu0 %v3925
    %4253 = vmatpush.bf16.msra.mxu0 %v3909
    %4254 = vmatpush.bf16.msra.mxu0 %v3893
    %4255 = vmatpush.bf16.msra.mxu0 %v3877
    %4256 = vmatpush.bf16.msra.mxu0 %v3861
    %4257 = vmatmul.bf16.gmra.mxu0 %v3464
    %v4258 = vpop.f32.mrf.mxu0
    %v4259 = vadd.f32 0.0, %v4258
    %v4260 = vpop.f32.mrf.mxu0
    %4261 = vdwg.mxu0
    %4262 = vmatpush.bf16.msra.mxu0 %v3974
    %4263 = vmatpush.bf16.msra.mxu0 %v3958
    %4264 = vmatpush.bf16.msra.mxu0 %v3942
    %4265 = vmatpush.bf16.msra.mxu0 %v3926
    %4266 = vmatpush.bf16.msra.mxu0 %v3910
    %4267 = vmatpush.bf16.msra.mxu0 %v3894
    %4268 = vmatpush.bf16.msra.mxu0 %v3878
    %4269 = vmatpush.bf16.msra.mxu0 %v3862
    %4270 = vmatmul.bf16.gmra.mxu0 %v3464
    %v4271 = vpop.f32.mrf.mxu0
    %v4272 = vadd.f32 0.0, %v4271
    %v4273 = vpop.f32.mrf.mxu0
    %4274 = vdwg.mxu0
    %4275 = vmatpush.bf16.msra.mxu0 %v3975
    %4276 = vmatpush.bf16.msra.mxu0 %v3959
    %4277 = vmatpush.bf16.msra.mxu0 %v3943
    %4278 = vmatpush.bf16.msra.mxu0 %v3927
    %4279 = vmatpush.bf16.msra.mxu0 %v3911
    %4280 = vmatpush.bf16.msra.mxu0 %v3895
    %4281 = vmatpush.bf16.msra.mxu0 %v3879
    %4282 = vmatpush.bf16.msra.mxu0 %v3863
    %4283 = vmatmul.bf16.gmra.mxu0 %v3464
    %v4284 = vpop.f32.mrf.mxu0
    %v4285 = vadd.f32 0.0, %v4284
    %v4286 = vpop.f32.mrf.mxu0
    %4287 = vdwg.mxu0
    %4288 = vmatpush.bf16.msra.mxu0 %v3976
    %4289 = vmatpush.bf16.msra.mxu0 %v3960
    %4290 = vmatpush.bf16.msra.mxu0 %v3944
    %4291 = vmatpush.bf16.msra.mxu0 %v3928
    %4292 = vmatpush.bf16.msra.mxu0 %v3912
    %4293 = vmatpush.bf16.msra.mxu0 %v3896
    %4294 = vmatpush.bf16.msra.mxu0 %v3880
    %4295 = vmatpush.bf16.msra.mxu0 %v3864
    %4296 = vmatmul.bf16.gmra.mxu0 %v3464
    %v4297 = vpop.f32.mrf.mxu0
    %v4298 = vadd.f32 0.0, %v4297
    %v4299 = vpop.f32.mrf.mxu0
    %4300 = vdwg.mxu0
    %4301 = vmatpush.bf16.msra.mxu0 %v3977
    %4302 = vmatpush.bf16.msra.mxu0 %v3961
    %4303 = vmatpush.bf16.msra.mxu0 %v3945
    %4304 = vmatpush.bf16.msra.mxu0 %v3929
    %4305 = vmatpush.bf16.msra.mxu0 %v3913
    %4306 = vmatpush.bf16.msra.mxu0 %v3897
    %4307 = vmatpush.bf16.msra.mxu0 %v3881
    %4308 = vmatpush.bf16.msra.mxu0 %v3865
    %4309 = vmatmul.bf16.gmra.mxu0 %v3464
    %v4310 = vpop.f32.mrf.mxu0
    %v4311 = vadd.f32 0.0, %v4310
    %v4312 = vpop.f32.mrf.mxu0
    %4313 = vdwg.mxu0
    %v4314 = vadd.f32 %v3053, %v4116
    %v4315 = vadd.f32 %v3066, %v4129
    %v4316 = vadd.f32 %v3079, %v4142
    %v4317 = vadd.f32 %v3092, %v4155
    %v4318 = vadd.f32 %v3105, %v4168
    %v4319 = vadd.f32 %v3118, %v4181
    %v4320 = vadd.f32 %v3131, %v4194
    %v4321 = vadd.f32 %v3144, %v4207
    %v4322 = vadd.f32 %v3157, %v4220
    %v4323 = vadd.f32 %v3170, %v4233
    %v4324 = vadd.f32 %v3183, %v4246
    %v4325 = vadd.f32 %v3196, %v4259
    %v4326 = vadd.f32 %v3209, %v4272
    %v4327 = vadd.f32 %v3222, %v4285
    %v4328 = vadd.f32 %v3235, %v4298
    %v4329 = vadd.f32 %v3248, %v4311
    %v4330 = vsel %vm363, %v4314, -inf
    %v4331 = vsel %vm363, %v4315, -inf
    %v4332 = vsel %vm363, %v4316, -inf
    %v4333 = vsel %vm363, %v4317, -inf
    %v4334 = vsel %vm363, %v4318, -inf
    %v4335 = vmax.f32 %v4330, %v4334
    %v4336 = vsel %vm363, %v4319, -inf
    %v4337 = vmax.f32 %v4331, %v4336
    %v4338 = vsel %vm363, %v4320, -inf
    %v4339 = vmax.f32 %v4332, %v4338
    %v4340 = vsel %vm363, %v4321, -inf
    %v4341 = vmax.f32 %v4333, %v4340
    %v4342 = vsel %vm363, %v4322, -inf
    %v4343 = vmax.f32 %v4335, %v4342
    %v4344 = vsel %vm363, %v4323, -inf
    %v4345 = vmax.f32 %v4337, %v4344
    %v4346 = vsel %vm363, %v4324, -inf
    %v4347 = vmax.f32 %v4339, %v4346
    %v4348 = vsel %vm363, %v4325, -inf
    %v4349 = vmax.f32 %v4341, %v4348
    %v4350 = vsel %vm363, %v4326, -inf
    %v4351 = vmax.f32 %v4343, %v4350
    %v4352 = vsel %vm363, %v4327, -inf
    %v4353 = vmax.f32 %v4345, %v4352
    %v4354 = vsel %vm363, %v4328, -inf
    %v4355 = vmax.f32 %v4347, %v4354
    %v4356 = vsel %vm363, %v4329, -inf
    %v4357 = vmax.f32 %v4349, %v4356
    %v4358 = vmax.f32 %v4351, %v4353
    %v4359 = vmax.f32 %v4355, %v4357
    %v4360 = vmax.f32 %v4358, %v4359
    %4361 = vmax.xlane.f32.xlu0 %v4360
    %v4362 = vpop.xlane.xlu0 %4361
    %v4363 = vsub.f32 %v4314, %v4362
    %v4364 = vsub.f32 %v4315, %v4362
    %v4365 = vsub.f32 %v4316, %v4362
    %v4366 = vsub.f32 %v4317, %v4362
    %v4367 = vsub.f32 %v4318, %v4362
    %v4368 = vsub.f32 %v4319, %v4362
    %v4369 = vsub.f32 %v4320, %v4362
    %v4370 = vsub.f32 %v4321, %v4362
    %v4371 = vsub.f32 %v4322, %v4362
    %v4372 = vsub.f32 %v4323, %v4362
    %v4373 = vsub.f32 %v4324, %v4362
    %v4374 = vsub.f32 %v4325, %v4362
    %v4375 = vsub.f32 %v4326, %v4362
    %v4376 = vsub.f32 %v4327, %v4362
    %v4377 = vsub.f32 %v4328, %v4362
    %v4378 = vsub.f32 %v4329, %v4362
    %v4379 = vmul.f32 %v4363, 1.442695
    %v4380 = vpow.pop %v4379
    %v4381 = vmul.f32 %v4364, 1.442695
    %v4382 = vpow.pop %v4381
    %v4383 = vmul.f32 %v4365, 1.442695
    %v4384 = vpow.pop %v4383
    %v4385 = vmul.f32 %v4366, 1.442695
    %v4386 = vpow.pop %v4385
    %v4387 = vmul.f32 %v4367, 1.442695
    %v4388 = vpow.pop %v4387
    %v4389 = vmul.f32 %v4368, 1.442695
    %v4390 = vpow.pop %v4389
    %v4391 = vmul.f32 %v4369, 1.442695
    %v4392 = vpow.pop %v4391
    %v4393 = vmul.f32 %v4370, 1.442695
    %v4394 = vpow.pop %v4393
    %v4395 = vmul.f32 %v4371, 1.442695
    %v4396 = vpow.pop %v4395
    %v4397 = vmul.f32 %v4372, 1.442695
    %v4398 = vpow.pop %v4397
    %v4399 = vmul.f32 %v4373, 1.442695
    %v4400 = vpow.pop %v4399
    %v4401 = vmul.f32 %v4374, 1.442695
    %v4402 = vpow.pop %v4401
    %v4403 = vmul.f32 %v4375, 1.442695
    %v4404 = vpow.pop %v4403
    %v4405 = vmul.f32 %v4376, 1.442695
    %v4406 = vpow.pop %v4405
    %v4407 = vmul.f32 %v4377, 1.442695
    %v4408 = vpow.pop %v4407
    %v4409 = vmul.f32 %v4378, 1.442695
    %v4410 = vpow.pop %v4409
    %v4411 = vsel %vm363, %v4380, 0.0
    %v4412 = vsel %vm363, %v4382, 0.0
    %v4413 = vadd.f32 %v4411, %v4412
    %v4414 = vsel %vm363, %v4384, 0.0
    %v4415 = vadd.f32 %v4413, %v4414
    %v4416 = vsel %vm363, %v4386, 0.0
    %v4417 = vadd.f32 %v4415, %v4416
    %v4418 = vsel %vm363, %v4388, 0.0
    %v4419 = vadd.f32 %v4417, %v4418
    %v4420 = vsel %vm363, %v4390, 0.0
    %v4421 = vadd.f32 %v4419, %v4420
    %v4422 = vsel %vm363, %v4392, 0.0
    %v4423 = vadd.f32 %v4421, %v4422
    %v4424 = vsel %vm363, %v4394, 0.0
    %v4425 = vadd.f32 %v4423, %v4424
    %v4426 = vsel %vm363, %v4396, 0.0
    %v4427 = vadd.f32 %v4425, %v4426
    %v4428 = vsel %vm363, %v4398, 0.0
    %v4429 = vadd.f32 %v4427, %v4428
    %v4430 = vsel %vm363, %v4400, 0.0
    %v4431 = vadd.f32 %v4429, %v4430
    %v4432 = vsel %vm363, %v4402, 0.0
    %v4433 = vadd.f32 %v4431, %v4432
    %v4434 = vsel %vm363, %v4404, 0.0
    %v4435 = vadd.f32 %v4433, %v4434
    %v4436 = vsel %vm363, %v4406, 0.0
    %v4437 = vadd.f32 %v4435, %v4436
    %v4438 = vsel %vm363, %v4408, 0.0
    %v4439 = vadd.f32 %v4437, %v4438
    %v4440 = vsel %vm363, %v4410, 0.0
    %v4441 = vadd.f32 %v4439, %v4440
    %4442 = vadd.xlane.f32.xlu0 %v4441
    %v4443 = vpop.xlane.xlu0 %4442
    %v4444 = vrcp.pop %v4443
    %v4445 = vmul.f32 %v4443, %v4444
    %v4446 = vsub.f32 1.0, %v4445
    %v4447 = vmul.f32 %v4444, %v4446
    %v4448 = vadd.f32 %v4444, %v4447
    %vm4449 = vweird.f32 %v4443
    %vm4450 = vweird.f32 %v4444
    %vm4451 = vmor %vm4449, %vm4450
    %v4452 = vsel %vm4451, %v4444, %v4448
    %v4453 = vand.u32 2147483647, %v4443
    %vm4454 = vcmp.eq.f32.partialorder %v4453, 8.507059e+37
    %v4455 = vand.u32 %v4443, 2147483648
    %v4456 = vor.u32 1.1754944e-38, %v4455
    %v4457 = vsel %vm4454, %v4456, %v4452
    %v4458 = vmul.f32 %v4380, %v4457
    %4459 = vmatpush.msra.mxu0 %v2206
    %4460 = vmatpush.msra.mxu0 %v2205
    %4461 = vmatpush.msra.mxu0 %v2204
    %4462 = vmatpush.msra.mxu0 %v2203
    %4463 = vmatpush.msra.mxu0 %v2202
    %4464 = vmatpush.msra.mxu0 %v2201
    %4465 = vmatpush.msra.mxu0 %v2200
    %4466 = vmatpush.msra.mxu0 %v2199
    %4467 = vmatpush.msra.mxu0 %v2198
    %4468 = vmatpush.msra.mxu0 %v2197
    %4469 = vmatpush.msra.mxu0 %v2196
    %4470 = vmatpush.msra.mxu0 %v2195
    %4471 = vmatpush.msra.mxu0 %v2194
    %4472 = vmatpush.msra.mxu0 %v2193
    %4473 = vmatpush.msra.mxu0 %v2192
    %4474 = vmatpush.msra.mxu0 %v2191
    %4475 = vmatmul.f32.gmra.mxu0 %v4458
    %v4476 = vpop.f32.mrf.mxu0
    %v4477 = vadd.f32 0.0, %v4476
    %4478 = vdwg.mxu0
    %v4479 = vpack.c.bf16 %v4477, %v4477
    %v4480 = vld [vmem:[#allocation19] sm:$0xf]
    %v4481 = vld [vmem:[#allocation19 + $0x4] sm:$0xf]
    %v4482 = vld [vmem:[#allocation19 + $0x8] sm:$0xf]
    %v4483 = vld [vmem:[#allocation19 + $0xc] sm:$0xf]
    %v4484 = vld [vmem:[#allocation19 + $0x10] sm:$0xf]
    %v4485 = vld [vmem:[#allocation19 + $0x14] sm:$0xf]
    %v4486 = vld [vmem:[#allocation19 + $0x18] sm:$0xf]
    %v4487 = vld [vmem:[#allocation19 + $0x1c] sm:$0xf]
    %v4488 = vld [vmem:[#allocation19 + $0x20] sm:$0xf]
    %v4489 = vld [vmem:[#allocation19 + $0x24] sm:$0xf]
    %v4490 = vld [vmem:[#allocation19 + $0x28] sm:$0xf]
    %v4491 = vld [vmem:[#allocation19 + $0x2c] sm:$0xf]
    %v4492 = vld [vmem:[#allocation19 + $0x30] sm:$0xf]
    %v4493 = vld [vmem:[#allocation19 + $0x34] sm:$0xf]
    %v4494 = vld [vmem:[#allocation19 + $0x38] sm:$0xf]
    %v4495 = vld [vmem:[#allocation19 + $0x3c] sm:$0xf]
    %v4512 = vunpack.c.l.b16 %v4480
    %v4513 = vunpack.c.l.b16 %v4481
    %v4514 = vunpack.c.l.b16 %v4482
    %v4515 = vunpack.c.l.b16 %v4483
    %v4516 = vunpack.c.l.b16 %v4484
    %v4517 = vunpack.c.l.b16 %v4485
    %v4518 = vunpack.c.l.b16 %v4486
    %v4519 = vunpack.c.l.b16 %v4487
    %v4520 = vunpack.c.l.b16 %v4488
    %v4521 = vunpack.c.l.b16 %v4489
    %v4522 = vunpack.c.l.b16 %v4490
    %v4523 = vunpack.c.l.b16 %v4491
    %v4524 = vunpack.c.l.b16 %v4492
    %v4525 = vunpack.c.l.b16 %v4493
    %v4526 = vunpack.c.l.b16 %v4494
    %v4527 = vunpack.c.l.b16 %v4495
    %v4528 = vpack.c.b16 %v4513, %v4512
    %v4529 = vpack.c.b16 %v4515, %v4514
    %v4530 = vpack.c.b16 %v4517, %v4516
    %v4531 = vpack.c.b16 %v4519, %v4518
    %v4532 = vpack.c.b16 %v4521, %v4520
    %v4533 = vpack.c.b16 %v4523, %v4522
    %v4534 = vpack.c.b16 %v4525, %v4524
    %v4535 = vpack.c.b16 %v4527, %v4526
    %4544 = vmatpush.bf16.msra.mxu0 %v4535
    %4545 = vmatpush.bf16.msra.mxu0 %v4534
    %4546 = vmatpush.bf16.msra.mxu0 %v4533
    %4547 = vmatpush.bf16.msra.mxu0 %v4532
    %4548 = vmatpush.bf16.msra.mxu0 %v4531
    %4549 = vmatpush.bf16.msra.mxu0 %v4530
    %4550 = vmatpush.bf16.msra.mxu0 %v4529
    %4551 = vmatpush.bf16.msra.mxu0 %v4528
    %4552 = vmatmul.bf16.gmra.mxu0 %v4479
    %v4553 = vpop.f32.mrf.mxu0
    %v4554 = vadd.f32 0.0, %v4553
    %v4555 = vpop.f32.mrf.mxu0
    %4556 = vdwg.mxu0
    %v4557 = vadd.f32 %v3329, %v4554
    %v4558 = vmax.f32 %v4557, 0.0
    %v4559 = vpack.c.bf16 %v4558, %v4558
    %v4560 = vld [vmem:[#allocation22] sm:$0xff]
    %v4561 = vld [vmem:[#allocation22 + $0x8] sm:$0xf]
    %v4562 = vld [vmem:[#allocation22 + $0xc] sm:$0xff]
    %v4563 = vld [vmem:[#allocation22 + $0x14] sm:$0xf]
    %v4564 = vld [vmem:[#allocation22 + $0x18] sm:$0xff]
    %v4565 = vld [vmem:[#allocation22 + $0x20] sm:$0xf]
    %v4566 = vld [vmem:[#allocation22 + $0x24] sm:$0xff]
    %v4567 = vld [vmem:[#allocation22 + $0x2c] sm:$0xf]
    %v4568 = vld [vmem:[#allocation22 + $0x30] sm:$0xff]
    %v4569 = vld [vmem:[#allocation22 + $0x38] sm:$0xf]
    %v4570 = vld [vmem:[#allocation22 + $0x3c] sm:$0xff]
    %v4571 = vld [vmem:[#allocation22 + $0x44] sm:$0xf]
    %v4572 = vld [vmem:[#allocation22 + $0x48] sm:$0xff]
    %v4573 = vld [vmem:[#allocation22 + $0x50] sm:$0xf]
    %v4574 = vld [vmem:[#allocation22 + $0x54] sm:$0xff]
    %v4575 = vld [vmem:[#allocation22 + $0x5c] sm:$0xf]
    %v4576 = vld [vmem:[#allocation22 + $0x60] sm:$0xff]
    %v4577 = vld [vmem:[#allocation22 + $0x68] sm:$0xf]
    %v4578 = vld [vmem:[#allocation22 + $0x6c] sm:$0xff]
    %v4579 = vld [vmem:[#allocation22 + $0x74] sm:$0xf]
    %v4580 = vld [vmem:[#allocation22 + $0x78] sm:$0xff]
    %v4581 = vld [vmem:[#allocation22 + $0x80] sm:$0xf]
    %v4582 = vld [vmem:[#allocation22 + $0x84] sm:$0xff]
    %v4583 = vld [vmem:[#allocation22 + $0x8c] sm:$0xf]
    %v4584 = vld [vmem:[#allocation22 + $0x90] sm:$0xff]
    %v4585 = vld [vmem:[#allocation22 + $0x98] sm:$0xf]
    %v4586 = vld [vmem:[#allocation22 + $0x9c] sm:$0xff]
    %v4587 = vld [vmem:[#allocation22 + $0xa4] sm:$0xf]
    %v4588 = vld [vmem:[#allocation22 + $0xa8] sm:$0xff]
    %v4589 = vld [vmem:[#allocation22 + $0xb0] sm:$0xf]
    %v4590 = vld [vmem:[#allocation22 + $0xb4] sm:$0xff]
    %v4591 = vld [vmem:[#allocation22 + $0xbc] sm:$0xf]
    %v4592 = vld [vmem:[#allocation25] sm:$0x7]
    %v4625 = vunpack.c.l.b16 %v4560
    %v4626 = vunpack.c.h.b16 %v4560
    %v4627 = vunpack.c.l.b16 %v4561
    %v4628 = vunpack.c.l.b16 %v4562
    %v4629 = vunpack.c.h.b16 %v4562
    %v4630 = vunpack.c.l.b16 %v4563
    %v4631 = vunpack.c.l.b16 %v4564
    %v4632 = vunpack.c.h.b16 %v4564
    %v4633 = vunpack.c.l.b16 %v4565
    %v4634 = vunpack.c.l.b16 %v4566
    %v4635 = vunpack.c.h.b16 %v4566
    %v4636 = vunpack.c.l.b16 %v4567
    %v4637 = vunpack.c.l.b16 %v4568
    %v4638 = vunpack.c.h.b16 %v4568
    %v4639 = vunpack.c.l.b16 %v4569
    %v4640 = vunpack.c.l.b16 %v4570
    %v4641 = vunpack.c.h.b16 %v4570
    %v4642 = vunpack.c.l.b16 %v4571
    %v4643 = vunpack.c.l.b16 %v4572
    %v4644 = vunpack.c.h.b16 %v4572
    %v4645 = vunpack.c.l.b16 %v4573
    %v4646 = vunpack.c.l.b16 %v4574
    %v4647 = vunpack.c.h.b16 %v4574
    %v4648 = vunpack.c.l.b16 %v4575
    %v4649 = vunpack.c.l.b16 %v4576
    %v4650 = vunpack.c.h.b16 %v4576
    %v4651 = vunpack.c.l.b16 %v4577
    %v4652 = vunpack.c.l.b16 %v4578
    %v4653 = vunpack.c.h.b16 %v4578
    %v4654 = vunpack.c.l.b16 %v4579
    %v4655 = vunpack.c.l.b16 %v4580
    %v4656 = vunpack.c.h.b16 %v4580
    %v4657 = vunpack.c.l.b16 %v4581
    %v4658 = vunpack.c.l.b16 %v4582
    %v4659 = vunpack.c.h.b16 %v4582
    %v4660 = vunpack.c.l.b16 %v4583
    %v4661 = vunpack.c.l.b16 %v4584
    %v4662 = vunpack.c.h.b16 %v4584
    %v4663 = vunpack.c.l.b16 %v4585
    %v4664 = vunpack.c.l.b16 %v4586
    %v4665 = vunpack.c.h.b16 %v4586
    %v4666 = vunpack.c.l.b16 %v4587
    %v4667 = vunpack.c.l.b16 %v4588
    %v4668 = vunpack.c.h.b16 %v4588
    %v4669 = vunpack.c.l.b16 %v4589
    %v4670 = vunpack.c.l.b16 %v4590
    %v4671 = vunpack.c.h.b16 %v4590
    %v4672 = vunpack.c.l.b16 %v4591
    %v4673 = vpack.c.b16 %v4628, %v4625
    %v4674 = vpack.c.b16 %v4629, %v4626
    %v4675 = vpack.c.b16 %v4630, %v4627
    %v4676 = vpack.c.b16 %v4634, %v4631
    %v4677 = vpack.c.b16 %v4635, %v4632
    %v4678 = vpack.c.b16 %v4636, %v4633
    %v4679 = vpack.c.b16 %v4640, %v4637
    %v4680 = vpack.c.b16 %v4641, %v4638
    %v4681 = vpack.c.b16 %v4642, %v4639
    %v4682 = vpack.c.b16 %v4646, %v4643
    %v4683 = vpack.c.b16 %v4647, %v4644
    %v4684 = vpack.c.b16 %v4648, %v4645
    %v4685 = vpack.c.b16 %v4652, %v4649
    %v4686 = vpack.c.b16 %v4653, %v4650
    %v4687 = vpack.c.b16 %v4654, %v4651
    %v4688 = vpack.c.b16 %v4658, %v4655
    %v4689 = vpack.c.b16 %v4659, %v4656
    %v4690 = vpack.c.b16 %v4660, %v4657
    %v4691 = vpack.c.b16 %v4664, %v4661
    %v4692 = vpack.c.b16 %v4665, %v4662
    %v4693 = vpack.c.b16 %v4666, %v4663
    %v4694 = vpack.c.b16 %v4670, %v4667
    %v4695 = vpack.c.b16 %v4671, %v4668
    %v4696 = vpack.c.b16 %v4672, %v4669
    %v4722 = vperm.slane %v4592, 0
    %v4723 = vperm.slane %v4592, 1
    %v4724 = vperm.slane %v4592, 2
    %4728 = vmatpush.bf16.msra.mxu0 %v4694
    %4729 = vmatpush.bf16.msra.mxu0 %v4691
    %4730 = vmatpush.bf16.msra.mxu0 %v4688
    %4731 = vmatpush.bf16.msra.mxu0 %v4685
    %4732 = vmatpush.bf16.msra.mxu0 %v4682
    %4733 = vmatpush.bf16.msra.mxu0 %v4679
    %4734 = vmatpush.bf16.msra.mxu0 %v4676
    %4735 = vmatpush.bf16.msra.mxu0 %v4673
    %4736 = vmatmul.bf16.gmra.mxu0 %v4559
    %v4737 = vpop.f32.mrf.mxu0
    %v4738 = vadd.f32 %v4722, %v4737
    %v4739 = vpop.f32.mrf.mxu0
    %4740 = vdwg.mxu0
    %4741 = vmatpush.bf16.msra.mxu0 %v4695
    %4742 = vmatpush.bf16.msra.mxu0 %v4692
    %4743 = vmatpush.bf16.msra.mxu0 %v4689
    %4744 = vmatpush.bf16.msra.mxu0 %v4686
    %4745 = vmatpush.bf16.msra.mxu0 %v4683
    %4746 = vmatpush.bf16.msra.mxu0 %v4680
    %4747 = vmatpush.bf16.msra.mxu0 %v4677
    %4748 = vmatpush.bf16.msra.mxu0 %v4674
    %4749 = vmatmul.bf16.gmra.mxu0 %v4559
    %v4750 = vpop.f32.mrf.mxu0
    %v4751 = vadd.f32 %v4723, %v4750
    %v4752 = vpop.f32.mrf.mxu0
    %4753 = vdwg.mxu0
    %4754 = vmatpush.bf16.msra.mxu0 %v4696
    %4755 = vmatpush.bf16.msra.mxu0 %v4693
    %4756 = vmatpush.bf16.msra.mxu0 %v4690
    %4757 = vmatpush.bf16.msra.mxu0 %v4687
    %4758 = vmatpush.bf16.msra.mxu0 %v4684
    %4759 = vmatpush.bf16.msra.mxu0 %v4681
    %4760 = vmatpush.bf16.msra.mxu0 %v4678
    %4761 = vmatpush.bf16.msra.mxu0 %v4675
    %4762 = vmatmul.bf16.gmra.mxu0 %v4559
    %v4763 = vpop.f32.mrf.mxu0
    %v4764 = vadd.f32 %v4724, %v4763
    %v4765 = vpop.f32.mrf.mxu0
    %4766 = vdwg.mxu0
    %v4767 = vld [vmem:[#allocation23] sm:$0xff]
    %v4768 = vld [vmem:[#allocation23 + $0x8] sm:$0xf]
    %v4769 = vld [vmem:[#allocation23 + $0xc] sm:$0xff]
    %v4770 = vld [vmem:[#allocation23 + $0x14] sm:$0xf]
    %v4771 = vld [vmem:[#allocation23 + $0x18] sm:$0xff]
    %v4772 = vld [vmem:[#allocation23 + $0x20] sm:$0xf]
    %v4773 = vld [vmem:[#allocation23 + $0x24] sm:$0xff]
    %v4774 = vld [vmem:[#allocation23 + $0x2c] sm:$0xf]
    %v4775 = vld [vmem:[#allocation23 + $0x30] sm:$0xff]
    %v4776 = vld [vmem:[#allocation23 + $0x38] sm:$0xf]
    %v4777 = vld [vmem:[#allocation23 + $0x3c] sm:$0xff]
    %v4778 = vld [vmem:[#allocation23 + $0x44] sm:$0xf]
    %v4779 = vld [vmem:[#allocation23 + $0x48] sm:$0xff]
    %v4780 = vld [vmem:[#allocation23 + $0x50] sm:$0xf]
    %v4781 = vld [vmem:[#allocation23 + $0x54] sm:$0xff]
    %v4782 = vld [vmem:[#allocation23 + $0x5c] sm:$0xf]
    %v4783 = vld [vmem:[#allocation23 + $0x60] sm:$0xff]
    %v4784 = vld [vmem:[#allocation23 + $0x68] sm:$0xf]
    %v4785 = vld [vmem:[#allocation23 + $0x6c] sm:$0xff]
    %v4786 = vld [vmem:[#allocation23 + $0x74] sm:$0xf]
    %v4787 = vld [vmem:[#allocation23 + $0x78] sm:$0xff]
    %v4788 = vld [vmem:[#allocation23 + $0x80] sm:$0xf]
    %v4789 = vld [vmem:[#allocation23 + $0x84] sm:$0xff]
    %v4790 = vld [vmem:[#allocation23 + $0x8c] sm:$0xf]
    %v4791 = vld [vmem:[#allocation23 + $0x90] sm:$0xff]
    %v4792 = vld [vmem:[#allocation23 + $0x98] sm:$0xf]
    %v4793 = vld [vmem:[#allocation23 + $0x9c] sm:$0xff]
    %v4794 = vld [vmem:[#allocation23 + $0xa4] sm:$0xf]
    %v4795 = vld [vmem:[#allocation23 + $0xa8] sm:$0xff]
    %v4796 = vld [vmem:[#allocation23 + $0xb0] sm:$0xf]
    %v4797 = vld [vmem:[#allocation23 + $0xb4] sm:$0xff]
    %v4798 = vld [vmem:[#allocation23 + $0xbc] sm:$0xf]
    %v4799 = vld [vmem:[#allocation26] sm:$0x7]
    %v4832 = vunpack.c.l.b16 %v4767
    %v4833 = vunpack.c.h.b16 %v4767
    %v4834 = vunpack.c.l.b16 %v4768
    %v4835 = vunpack.c.l.b16 %v4769
    %v4836 = vunpack.c.h.b16 %v4769
    %v4837 = vunpack.c.l.b16 %v4770
    %v4838 = vunpack.c.l.b16 %v4771
    %v4839 = vunpack.c.h.b16 %v4771
    %v4840 = vunpack.c.l.b16 %v4772
    %v4841 = vunpack.c.l.b16 %v4773
    %v4842 = vunpack.c.h.b16 %v4773
    %v4843 = vunpack.c.l.b16 %v4774
    %v4844 = vunpack.c.l.b16 %v4775
    %v4845 = vunpack.c.h.b16 %v4775
    %v4846 = vunpack.c.l.b16 %v4776
    %v4847 = vunpack.c.l.b16 %v4777
    %v4848 = vunpack.c.h.b16 %v4777
    %v4849 = vunpack.c.l.b16 %v4778
    %v4850 = vunpack.c.l.b16 %v4779
    %v4851 = vunpack.c.h.b16 %v4779
    %v4852 = vunpack.c.l.b16 %v4780
    %v4853 = vunpack.c.l.b16 %v4781
    %v4854 = vunpack.c.h.b16 %v4781
    %v4855 = vunpack.c.l.b16 %v4782
    %v4856 = vunpack.c.l.b16 %v4783
    %v4857 = vunpack.c.h.b16 %v4783
    %v4858 = vunpack.c.l.b16 %v4784
    %v4859 = vunpack.c.l.b16 %v4785
    %v4860 = vunpack.c.h.b16 %v4785
    %v4861 = vunpack.c.l.b16 %v4786
    %v4862 = vunpack.c.l.b16 %v4787
    %v4863 = vunpack.c.h.b16 %v4787
    %v4864 = vunpack.c.l.b16 %v4788
    %v4865 = vunpack.c.l.b16 %v4789
    %v4866 = vunpack.c.h.b16 %v4789
    %v4867 = vunpack.c.l.b16 %v4790
    %v4868 = vunpack.c.l.b16 %v4791
    %v4869 = vunpack.c.h.b16 %v4791
    %v4870 = vunpack.c.l.b16 %v4792
    %v4871 = vunpack.c.l.b16 %v4793
    %v4872 = vunpack.c.h.b16 %v4793
    %v4873 = vunpack.c.l.b16 %v4794
    %v4874 = vunpack.c.l.b16 %v4795
    %v4875 = vunpack.c.h.b16 %v4795
    %v4876 = vunpack.c.l.b16 %v4796
    %v4877 = vunpack.c.l.b16 %v4797
    %v4878 = vunpack.c.h.b16 %v4797
    %v4879 = vunpack.c.l.b16 %v4798
    %v4880 = vpack.c.b16 %v4835, %v4832
    %v4881 = vpack.c.b16 %v4836, %v4833
    %v4882 = vpack.c.b16 %v4837, %v4834
    %v4883 = vpack.c.b16 %v4841, %v4838
    %v4884 = vpack.c.b16 %v4842, %v4839
    %v4885 = vpack.c.b16 %v4843, %v4840
    %v4886 = vpack.c.b16 %v4847, %v4844
    %v4887 = vpack.c.b16 %v4848, %v4845
    %v4888 = vpack.c.b16 %v4849, %v4846
    %v4889 = vpack.c.b16 %v4853, %v4850
    %v4890 = vpack.c.b16 %v4854, %v4851
    %v4891 = vpack.c.b16 %v4855, %v4852
    %v4892 = vpack.c.b16 %v4859, %v4856
    %v4893 = vpack.c.b16 %v4860, %v4857
    %v4894 = vpack.c.b16 %v4861, %v4858
    %v4895 = vpack.c.b16 %v4865, %v4862
    %v4896 = vpack.c.b16 %v4866, %v4863
    %v4897 = vpack.c.b16 %v4867, %v4864
    %v4898 = vpack.c.b16 %v4871, %v4868
    %v4899 = vpack.c.b16 %v4872, %v4869
    %v4900 = vpack.c.b16 %v4873, %v4870
    %v4901 = vpack.c.b16 %v4877, %v4874
    %v4902 = vpack.c.b16 %v4878, %v4875
    %v4903 = vpack.c.b16 %v4879, %v4876
    %v4929 = vperm.slane %v4799, 0
    %v4930 = vperm.slane %v4799, 1
    %v4931 = vperm.slane %v4799, 2
    %4935 = vmatpush.bf16.msra.mxu0 %v4901
    %4936 = vmatpush.bf16.msra.mxu0 %v4898
    %4937 = vmatpush.bf16.msra.mxu0 %v4895
    %4938 = vmatpush.bf16.msra.mxu0 %v4892
    %4939 = vmatpush.bf16.msra.mxu0 %v4889
    %4940 = vmatpush.bf16.msra.mxu0 %v4886
    %4941 = vmatpush.bf16.msra.mxu0 %v4883
    %4942 = vmatpush.bf16.msra.mxu0 %v4880
    %4943 = vmatmul.bf16.gmra.mxu0 %v3464
    %v4944 = vpop.f32.mrf.mxu0
    %v4945 = vadd.f32 %v4929, %v4944
    %v4946 = vpop.f32.mrf.mxu0
    %4947 = vdwg.mxu0
    %4948 = vmatpush.bf16.msra.mxu0 %v4902
    %4949 = vmatpush.bf16.msra.mxu0 %v4899
    %4950 = vmatpush.bf16.msra.mxu0 %v4896
    %4951 = vmatpush.bf16.msra.mxu0 %v4893
    %4952 = vmatpush.bf16.msra.mxu0 %v4890
    %4953 = vmatpush.bf16.msra.mxu0 %v4887
    %4954 = vmatpush.bf16.msra.mxu0 %v4884
    %4955 = vmatpush.bf16.msra.mxu0 %v4881
    %4956 = vmatmul.bf16.gmra.mxu0 %v3464
    %v4957 = vpop.f32.mrf.mxu0
    %v4958 = vadd.f32 %v4930, %v4957
    %v4959 = vpop.f32.mrf.mxu0
    %4960 = vdwg.mxu0
    %4961 = vmatpush.bf16.msra.mxu0 %v4903
    %4962 = vmatpush.bf16.msra.mxu0 %v4900
    %4963 = vmatpush.bf16.msra.mxu0 %v4897
    %4964 = vmatpush.bf16.msra.mxu0 %v4894
    %4965 = vmatpush.bf16.msra.mxu0 %v4891
    %4966 = vmatpush.bf16.msra.mxu0 %v4888
    %4967 = vmatpush.bf16.msra.mxu0 %v4885
    %4968 = vmatpush.bf16.msra.mxu0 %v4882
    %4969 = vmatmul.bf16.gmra.mxu0 %v3464
    %v4970 = vpop.f32.mrf.mxu0
    %v4971 = vadd.f32 %v4931, %v4970
    %v4972 = vpop.f32.mrf.mxu0
    %4973 = vdwg.mxu0
    %v4974 = vadd.f32 %v4738, %v4945
    %v4975 = vxor.u32 %v4974, 2147483648
    %v4976 = vmul.f32 %v4975, 1.442695
    %v4977 = vpow.pop %v4976
    %v4978 = vadd.f32 %v4977, 1.0
    %v4979 = vrcp.pop %v4978
    %v4980 = vmul.f32 %v4978, %v4979
    %v4981 = vsub.f32 1.0, %v4980
    %v4982 = vmul.f32 %v4979, %v4981
    %v4983 = vadd.f32 %v4979, %v4982
    %vm4984 = vweird.f32 %v4978
    %vm4985 = vweird.f32 %v4979
    %vm4986 = vmor %vm4984, %vm4985
    %v4987 = vsel %vm4986, %v4979, %v4983
    %v4988 = vand.u32 2147483647, %v4978
    %vm4989 = vcmp.eq.f32.partialorder %v4988, 8.507059e+37
    %v4990 = vand.u32 %v4978, 2147483648
    %v4991 = vor.u32 1.1754944e-38, %v4990
    %v4992 = vsel %vm4989, %v4991, %v4987
    %v4993 = vmul.f32 1.0, %v4992
    %v4994 = vadd.f32 %v4751, %v4958
    %v4995 = vxor.u32 %v4994, 2147483648
    %v4996 = vmul.f32 %v4995, 1.442695
    %v4997 = vpow.pop %v4996
    %v4998 = vadd.f32 %v4997, 1.0
    %v4999 = vrcp.pop %v4998
    %v5000 = vmul.f32 %v4998, %v4999
    %v5001 = vsub.f32 1.0, %v5000
    %v5002 = vmul.f32 %v4999, %v5001
    %v5003 = vadd.f32 %v4999, %v5002
    %vm5004 = vweird.f32 %v4998
    %vm5005 = vweird.f32 %v4999
    %vm5006 = vmor %vm5004, %vm5005
    %v5007 = vsel %vm5006, %v4999, %v5003
    %v5008 = vand.u32 2147483647, %v4998
    %vm5009 = vcmp.eq.f32.partialorder %v5008, 8.507059e+37
    %v5010 = vand.u32 %v4998, 2147483648
    %v5011 = vor.u32 1.1754944e-38, %v5010
    %v5012 = vsel %vm5009, %v5011, %v5007
    %v5013 = vmul.f32 1.0, %v5012
    %v5014 = vmul.f32 %v4993, %v4971
    %v5015 = vadd.f32 %v4764, %v5014
    %v5016 = vtanh.pop %v5015
    %v5017 = vsub.f32 1.0, %v5013
    %v5018 = vmul.f32 %v5017, %v5016
    %v5020 = vrot.slane %v2189, 5
    %v5022 = vmul.f32 %v5013, %v5020
    %v5023 = vadd.f32 %v5018, %v5022
    %v5024 = vpack.c.bf16 %v5023, %v5023
    %v5025 = vld [vmem:[#allocation28] sm:$0xf]
    %v5026 = vld [vmem:[#allocation28 + $0x4] sm:$0xf]
    %v5027 = vld [vmem:[#allocation28 + $0x8] sm:$0xf]
    %v5028 = vld [vmem:[#allocation28 + $0xc] sm:$0xf]
    %v5029 = vld [vmem:[#allocation28 + $0x10] sm:$0xf]
    %v5030 = vld [vmem:[#allocation28 + $0x14] sm:$0xf]
    %v5031 = vld [vmem:[#allocation28 + $0x18] sm:$0xf]
    %v5032 = vld [vmem:[#allocation28 + $0x1c] sm:$0xf]
    %v5033 = vld [vmem:[#allocation28 + $0x20] sm:$0xf]
    %v5034 = vld [vmem:[#allocation28 + $0x24] sm:$0xf]
    %v5035 = vld [vmem:[#allocation28 + $0x28] sm:$0xf]
    %v5036 = vld [vmem:[#allocation28 + $0x2c] sm:$0xf]
    %v5037 = vld [vmem:[#allocation28 + $0x30] sm:$0xf]
    %v5038 = vld [vmem:[#allocation28 + $0x34] sm:$0xf]
    %v5039 = vld [vmem:[#allocation28 + $0x38] sm:$0xf]
    %v5040 = vld [vmem:[#allocation28 + $0x3c] sm:$0xf]
    %v5041 = vld [vmem:[#allocation29] sm:$0x1]
    %v5058 = vunpack.c.l.b16 %v5025
    %v5059 = vunpack.c.l.b16 %v5026
    %v5060 = vunpack.c.l.b16 %v5027
    %v5061 = vunpack.c.l.b16 %v5028
    %v5062 = vunpack.c.l.b16 %v5029
    %v5063 = vunpack.c.l.b16 %v5030
    %v5064 = vunpack.c.l.b16 %v5031
    %v5065 = vunpack.c.l.b16 %v5032
    %v5066 = vunpack.c.l.b16 %v5033
    %v5067 = vunpack.c.l.b16 %v5034
    %v5068 = vunpack.c.l.b16 %v5035
    %v5069 = vunpack.c.l.b16 %v5036
    %v5070 = vunpack.c.l.b16 %v5037
    %v5071 = vunpack.c.l.b16 %v5038
    %v5072 = vunpack.c.l.b16 %v5039
    %v5073 = vunpack.c.l.b16 %v5040
    %v5074 = vpack.c.b16 %v5059, %v5058
    %v5075 = vpack.c.b16 %v5061, %v5060
    %v5076 = vpack.c.b16 %v5063, %v5062
    %v5077 = vpack.c.b16 %v5065, %v5064
    %v5078 = vpack.c.b16 %v5067, %v5066
    %v5079 = vpack.c.b16 %v5069, %v5068
    %v5080 = vpack.c.b16 %v5071, %v5070
    %v5081 = vpack.c.b16 %v5073, %v5072
    %5090 = vmatpush.bf16.msra.mxu0 %v5081
    %5091 = vmatpush.bf16.msra.mxu0 %v5080
    %5092 = vmatpush.bf16.msra.mxu0 %v5079
    %5093 = vmatpush.bf16.msra.mxu0 %v5078
    %5094 = vmatpush.bf16.msra.mxu0 %v5077
    %5095 = vmatpush.bf16.msra.mxu0 %v5076
    %5096 = vmatpush.bf16.msra.mxu0 %v5075
    %5097 = vmatpush.bf16.msra.mxu0 %v5074
    %5098 = vmatmul.bf16.gmra.mxu0 %v5024
    %v5099 = vpop.f32.mrf.mxu0
    %v5100 = vadd.f32 %v5041, %v5099
    %v5101 = vpop.f32.mrf.mxu0
    %5102 = vdwg.mxu0
    %v5103 = vsel %vm363, %v5100, -inf
    %5104 = vmax.xlane.f32.xlu0 %v5103
    %v5105 = vpop.xlane.xlu0 %5104
    %v5106 = vsub.f32 %v5100, %v5105
    %v5107 = vmul.f32 %v5106, 1.442695
    %v5108 = vpow.pop %v5107
    %v5109 = vsel %vm363, %v5108, 0.0
    %5110 = vadd.xlane.f32.xlu0 %v5109
    %v5111 = vpop.xlane.xlu0 %5110
    %v5112 = vlog2.pop %v5111
    %v5113 = vmul.f32 %v5112, 0.6931472
    %v5114 = vsub.f32 %v5106, %v5113
    %5115 = vmatpush.bf16.msra.mxu0 %v3962
    %5116 = vmatpush.bf16.msra.mxu0 %v3946
    %5117 = vmatpush.bf16.msra.mxu0 %v3930
    %5118 = vmatpush.bf16.msra.mxu0 %v3914
    %5119 = vmatpush.bf16.msra.mxu0 %v3898
    %5120 = vmatpush.bf16.msra.mxu0 %v3882
    %5121 = vmatpush.bf16.msra.mxu0 %v3866
    %5122 = vmatpush.bf16.msra.mxu0 %v3850
    %5123 = vmatmul.bf16.gmra.mxu0 %v5024
    %v5124 = vpop.f32.mrf.mxu0
    %v5125 = vadd.f32 0.0, %v5124
    %v5126 = vpop.f32.mrf.mxu0
    %5127 = vdwg.mxu0
    %5128 = vmatpush.bf16.msra.mxu0 %v3963
    %5129 = vmatpush.bf16.msra.mxu0 %v3947
    %5130 = vmatpush.bf16.msra.mxu0 %v3931
    %5131 = vmatpush.bf16.msra.mxu0 %v3915
    %5132 = vmatpush.bf16.msra.mxu0 %v3899
    %5133 = vmatpush.bf16.msra.mxu0 %v3883
    %5134 = vmatpush.bf16.msra.mxu0 %v3867
    %5135 = vmatpush.bf16.msra.mxu0 %v3851
    %5136 = vmatmul.bf16.gmra.mxu0 %v5024
    %v5137 = vpop.f32.mrf.mxu0
    %v5138 = vadd.f32 0.0, %v5137
    %v5139 = vpop.f32.mrf.mxu0
    %5140 = vdwg.mxu0
    %5141 = vmatpush.bf16.msra.mxu0 %v3964
    %5142 = vmatpush.bf16.msra.mxu0 %v3948
    %5143 = vmatpush.bf16.msra.mxu0 %v3932
    %5144 = vmatpush.bf16.msra.mxu0 %v3916
    %5145 = vmatpush.bf16.msra.mxu0 %v3900
    %5146 = vmatpush.bf16.msra.mxu0 %v3884
    %5147 = vmatpush.bf16.msra.mxu0 %v3868
    %5148 = vmatpush.bf16.msra.mxu0 %v3852
    %5149 = vmatmul.bf16.gmra.mxu0 %v5024
    %v5150 = vpop.f32.mrf.mxu0
    %v5151 = vadd.f32 0.0, %v5150
    %v5152 = vpop.f32.mrf.mxu0
    %5153 = vdwg.mxu0
    %5154 = vmatpush.bf16.msra.mxu0 %v3965
    %5155 = vmatpush.bf16.msra.mxu0 %v3949
    %5156 = vmatpush.bf16.msra.mxu0 %v3933
    %5157 = vmatpush.bf16.msra.mxu0 %v3917
    %5158 = vmatpush.bf16.msra.mxu0 %v3901
    %5159 = vmatpush.bf16.msra.mxu0 %v3885
    %5160 = vmatpush.bf16.msra.mxu0 %v3869
    %5161 = vmatpush.bf16.msra.mxu0 %v3853
    %5162 = vmatmul.bf16.gmra.mxu0 %v5024
    %v5163 = vpop.f32.mrf.mxu0
    %v5164 = vadd.f32 0.0, %v5163
    %v5165 = vpop.f32.mrf.mxu0
    %5166 = vdwg.mxu0
    %5167 = vmatpush.bf16.msra.mxu0 %v3966
    %5168 = vmatpush.bf16.msra.mxu0 %v3950
    %5169 = vmatpush.bf16.msra.mxu0 %v3934
    %5170 = vmatpush.bf16.msra.mxu0 %v3918
    %5171 = vmatpush.bf16.msra.mxu0 %v3902
    %5172 = vmatpush.bf16.msra.mxu0 %v3886
    %5173 = vmatpush.bf16.msra.mxu0 %v3870
    %5174 = vmatpush.bf16.msra.mxu0 %v3854
    %5175 = vmatmul.bf16.gmra.mxu0 %v5024
    %v5176 = vpop.f32.mrf.mxu0
    %v5177 = vadd.f32 0.0, %v5176
    %v5178 = vpop.f32.mrf.mxu0
    %5179 = vdwg.mxu0
    %5180 = vmatpush.bf16.msra.mxu0 %v3967
    %5181 = vmatpush.bf16.msra.mxu0 %v3951
    %5182 = vmatpush.bf16.msra.mxu0 %v3935
    %5183 = vmatpush.bf16.msra.mxu0 %v3919
    %5184 = vmatpush.bf16.msra.mxu0 %v3903
    %5185 = vmatpush.bf16.msra.mxu0 %v3887
    %5186 = vmatpush.bf16.msra.mxu0 %v3871
    %5187 = vmatpush.bf16.msra.mxu0 %v3855
    %5188 = vmatmul.bf16.gmra.mxu0 %v5024
    %v5189 = vpop.f32.mrf.mxu0
    %v5190 = vadd.f32 0.0, %v5189
    %v5191 = vpop.f32.mrf.mxu0
    %5192 = vdwg.mxu0
    %5193 = vmatpush.bf16.msra.mxu0 %v3968
    %5194 = vmatpush.bf16.msra.mxu0 %v3952
    %5195 = vmatpush.bf16.msra.mxu0 %v3936
    %5196 = vmatpush.bf16.msra.mxu0 %v3920
    %5197 = vmatpush.bf16.msra.mxu0 %v3904
    %5198 = vmatpush.bf16.msra.mxu0 %v3888
    %5199 = vmatpush.bf16.msra.mxu0 %v3872
    %5200 = vmatpush.bf16.msra.mxu0 %v3856
    %5201 = vmatmul.bf16.gmra.mxu0 %v5024
    %v5202 = vpop.f32.mrf.mxu0
    %v5203 = vadd.f32 0.0, %v5202
    %v5204 = vpop.f32.mrf.mxu0
    %5205 = vdwg.mxu0
    %5206 = vmatpush.bf16.msra.mxu0 %v3969
    %5207 = vmatpush.bf16.msra.mxu0 %v3953
    %5208 = vmatpush.bf16.msra.mxu0 %v3937
    %5209 = vmatpush.bf16.msra.mxu0 %v3921
    %5210 = vmatpush.bf16.msra.mxu0 %v3905
    %5211 = vmatpush.bf16.msra.mxu0 %v3889
    %5212 = vmatpush.bf16.msra.mxu0 %v3873
    %5213 = vmatpush.bf16.msra.mxu0 %v3857
    %5214 = vmatmul.bf16.gmra.mxu0 %v5024
    %v5215 = vpop.f32.mrf.mxu0
    %v5216 = vadd.f32 0.0, %v5215
    %v5217 = vpop.f32.mrf.mxu0
    %5218 = vdwg.mxu0
    %5219 = vmatpush.bf16.msra.mxu0 %v3970
    %5220 = vmatpush.bf16.msra.mxu0 %v3954
    %5221 = vmatpush.bf16.msra.mxu0 %v3938
    %5222 = vmatpush.bf16.msra.mxu0 %v3922
    %5223 = vmatpush.bf16.msra.mxu0 %v3906
    %5224 = vmatpush.bf16.msra.mxu0 %v3890
    %5225 = vmatpush.bf16.msra.mxu0 %v3874
    %5226 = vmatpush.bf16.msra.mxu0 %v3858
    %5227 = vmatmul.bf16.gmra.mxu0 %v5024
    %v5228 = vpop.f32.mrf.mxu0
    %v5229 = vadd.f32 0.0, %v5228
    %v5230 = vpop.f32.mrf.mxu0
    %5231 = vdwg.mxu0
    %5232 = vmatpush.bf16.msra.mxu0 %v3971
    %5233 = vmatpush.bf16.msra.mxu0 %v3955
    %5234 = vmatpush.bf16.msra.mxu0 %v3939
    %5235 = vmatpush.bf16.msra.mxu0 %v3923
    %5236 = vmatpush.bf16.msra.mxu0 %v3907
    %5237 = vmatpush.bf16.msra.mxu0 %v3891
    %5238 = vmatpush.bf16.msra.mxu0 %v3875
    %5239 = vmatpush.bf16.msra.mxu0 %v3859
    %5240 = vmatmul.bf16.gmra.mxu0 %v5024
    %v5241 = vpop.f32.mrf.mxu0
    %v5242 = vadd.f32 0.0, %v5241
    %v5243 = vpop.f32.mrf.mxu0
    %5244 = vdwg.mxu0
    %5245 = vmatpush.bf16.msra.mxu0 %v3972
    %5246 = vmatpush.bf16.msra.mxu0 %v3956
    %5247 = vmatpush.bf16.msra.mxu0 %v3940
    %5248 = vmatpush.bf16.msra.mxu0 %v3924
    %5249 = vmatpush.bf16.msra.mxu0 %v3908
    %5250 = vmatpush.bf16.msra.mxu0 %v3892
    %5251 = vmatpush.bf16.msra.mxu0 %v3876
    %5252 = vmatpush.bf16.msra.mxu0 %v3860
    %5253 = vmatmul.bf16.gmra.mxu0 %v5024
    %v5254 = vpop.f32.mrf.mxu0
    %v5255 = vadd.f32 0.0, %v5254
    %v5256 = vpop.f32.mrf.mxu0
    %5257 = vdwg.mxu0
    %5258 = vmatpush.bf16.msra.mxu0 %v3973
    %5259 = vmatpush.bf16.msra.mxu0 %v3957
    %5260 = vmatpush.bf16.msra.mxu0 %v3941
    %5261 = vmatpush.bf16.msra.mxu0 %v3925
    %5262 = vmatpush.bf16.msra.mxu0 %v3909
    %5263 = vmatpush.bf16.msra.mxu0 %v3893
    %5264 = vmatpush.bf16.msra.mxu0 %v3877
    %5265 = vmatpush.bf16.msra.mxu0 %v3861
    %5266 = vmatmul.bf16.gmra.mxu0 %v5024
    %v5267 = vpop.f32.mrf.mxu0
    %v5268 = vadd.f32 0.0, %v5267
    %v5269 = vpop.f32.mrf.mxu0
    %5270 = vdwg.mxu0
    %5271 = vmatpush.bf16.msra.mxu0 %v3974
    %5272 = vmatpush.bf16.msra.mxu0 %v3958
    %5273 = vmatpush.bf16.msra.mxu0 %v3942
    %5274 = vmatpush.bf16.msra.mxu0 %v3926
    %5275 = vmatpush.bf16.msra.mxu0 %v3910
    %5276 = vmatpush.bf16.msra.mxu0 %v3894
    %5277 = vmatpush.bf16.msra.mxu0 %v3878
    %5278 = vmatpush.bf16.msra.mxu0 %v3862
    %5279 = vmatmul.bf16.gmra.mxu0 %v5024
    %v5280 = vpop.f32.mrf.mxu0
    %v5281 = vadd.f32 0.0, %v5280
    %v5282 = vpop.f32.mrf.mxu0
    %5283 = vdwg.mxu0
    %5284 = vmatpush.bf16.msra.mxu0 %v3975
    %5285 = vmatpush.bf16.msra.mxu0 %v3959
    %5286 = vmatpush.bf16.msra.mxu0 %v3943
    %5287 = vmatpush.bf16.msra.mxu0 %v3927
    %5288 = vmatpush.bf16.msra.mxu0 %v3911
    %5289 = vmatpush.bf16.msra.mxu0 %v3895
    %5290 = vmatpush.bf16.msra.mxu0 %v3879
    %5291 = vmatpush.bf16.msra.mxu0 %v3863
    %5292 = vmatmul.bf16.gmra.mxu0 %v5024
    %v5293 = vpop.f32.mrf.mxu0
    %v5294 = vadd.f32 0.0, %v5293
    %v5295 = vpop.f32.mrf.mxu0
    %5296 = vdwg.mxu0
    %5297 = vmatpush.bf16.msra.mxu0 %v3976
    %5298 = vmatpush.bf16.msra.mxu0 %v3960
    %5299 = vmatpush.bf16.msra.mxu0 %v3944
    %5300 = vmatpush.bf16.msra.mxu0 %v3928
    %5301 = vmatpush.bf16.msra.mxu0 %v3912
    %5302 = vmatpush.bf16.msra.mxu0 %v3896
    %5303 = vmatpush.bf16.msra.mxu0 %v3880
    %5304 = vmatpush.bf16.msra.mxu0 %v3864
    %5305 = vmatmul.bf16.gmra.mxu0 %v5024
    %v5306 = vpop.f32.mrf.mxu0
    %v5307 = vadd.f32 0.0, %v5306
    %v5308 = vpop.f32.mrf.mxu0
    %5309 = vdwg.mxu0
    %5310 = vmatpush.bf16.msra.mxu0 %v3977
    %5311 = vmatpush.bf16.msra.mxu0 %v3961
    %5312 = vmatpush.bf16.msra.mxu0 %v3945
    %5313 = vmatpush.bf16.msra.mxu0 %v3929
    %5314 = vmatpush.bf16.msra.mxu0 %v3913
    %5315 = vmatpush.bf16.msra.mxu0 %v3897
    %5316 = vmatpush.bf16.msra.mxu0 %v3881
    %5317 = vmatpush.bf16.msra.mxu0 %v3865
    %5318 = vmatmul.bf16.gmra.mxu0 %v5024
    %v5319 = vpop.f32.mrf.mxu0
    %v5320 = vadd.f32 0.0, %v5319
    %v5321 = vpop.f32.mrf.mxu0
    %5322 = vdwg.mxu0
    %v5339 = vrot.slane %v5125, 7
    %v5340 = vrot.slane %v5138, 7
    %v5341 = vrot.slane %v5151, 7
    %v5342 = vrot.slane %v5164, 7
    %v5343 = vrot.slane %v5177, 7
    %v5344 = vrot.slane %v5190, 7
    %v5345 = vrot.slane %v5203, 7
    %v5346 = vrot.slane %v5216, 7
    %v5347 = vrot.slane %v5229, 7
    %v5348 = vrot.slane %v5242, 7
    %v5349 = vrot.slane %v5255, 7
    %v5350 = vrot.slane %v5268, 7
    %v5351 = vrot.slane %v5281, 7
    %v5352 = vrot.slane %v5294, 7
    %v5353 = vrot.slane %v5307, 7
    %v5354 = vrot.slane %v5320, 7
    %v5371 = vadd.f32 %v3053, %v5339
    %v5372 = vadd.f32 %v3066, %v5340
    %v5373 = vadd.f32 %v3079, %v5341
    %v5374 = vadd.f32 %v3092, %v5342
    %v5375 = vadd.f32 %v3105, %v5343
    %v5376 = vadd.f32 %v3118, %v5344
    %v5377 = vadd.f32 %v3131, %v5345
    %v5378 = vadd.f32 %v3144, %v5346
    %v5379 = vadd.f32 %v3157, %v5347
    %v5380 = vadd.f32 %v3170, %v5348
    %v5381 = vadd.f32 %v3183, %v5349
    %v5382 = vadd.f32 %v3196, %v5350
    %v5383 = vadd.f32 %v3209, %v5351
    %v5384 = vadd.f32 %v3222, %v5352
    %v5385 = vadd.f32 %v3235, %v5353
    %v5386 = vadd.f32 %v3248, %v5354
    %vm5387 = vcmask 1041409
    %v5388 = vsel %vm5387, %v5371, -inf
    %v5389 = vsel %vm5387, %v5372, -inf
    %v5390 = vsel %vm5387, %v5373, -inf
    %v5391 = vsel %vm5387, %v5374, -inf
    %v5392 = vsel %vm5387, %v5375, -inf
    %v5393 = vmax.f32 %v5388, %v5392
    %v5394 = vsel %vm5387, %v5376, -inf
    %v5395 = vmax.f32 %v5389, %v5394
    %v5396 = vsel %vm5387, %v5377, -inf
    %v5397 = vmax.f32 %v5390, %v5396
    %v5398 = vsel %vm5387, %v5378, -inf
    %v5399 = vmax.f32 %v5391, %v5398
    %v5400 = vsel %vm5387, %v5379, -inf
    %v5401 = vmax.f32 %v5393, %v5400
    %v5402 = vsel %vm5387, %v5380, -inf
    %v5403 = vmax.f32 %v5395, %v5402
    %v5404 = vsel %vm5387, %v5381, -inf
    %v5405 = vmax.f32 %v5397, %v5404
    %v5406 = vsel %vm5387, %v5382, -inf
    %v5407 = vmax.f32 %v5399, %v5406
    %v5408 = vsel %vm5387, %v5383, -inf
    %v5409 = vmax.f32 %v5401, %v5408
    %v5410 = vsel %vm5387, %v5384, -inf
    %v5411 = vmax.f32 %v5403, %v5410
    %v5412 = vsel %vm5387, %v5385, -inf
    %v5413 = vmax.f32 %v5405, %v5412
    %v5414 = vsel %vm5387, %v5386, -inf
    %v5415 = vmax.f32 %v5407, %v5414
    %v5416 = vmax.f32 %v5409, %v5411
    %v5417 = vmax.f32 %v5413, %v5415
    %v5418 = vmax.f32 %v5416, %v5417
    %5419 = vmax.xlane.f32.xlu0 %v5418
    %v5420 = vpop.xlane.xlu0 %5419
    %v5421 = vsub.f32 %v5371, %v5420
    %v5422 = vsub.f32 %v5372, %v5420
    %v5423 = vsub.f32 %v5373, %v5420
    %v5424 = vsub.f32 %v5374, %v5420
    %v5425 = vsub.f32 %v5375, %v5420
    %v5426 = vsub.f32 %v5376, %v5420
    %v5427 = vsub.f32 %v5377, %v5420
    %v5428 = vsub.f32 %v5378, %v5420
    %v5429 = vsub.f32 %v5379, %v5420
    %v5430 = vsub.f32 %v5380, %v5420
    %v5431 = vsub.f32 %v5381, %v5420
    %v5432 = vsub.f32 %v5382, %v5420
    %v5433 = vsub.f32 %v5383, %v5420
    %v5434 = vsub.f32 %v5384, %v5420
    %v5435 = vsub.f32 %v5385, %v5420
    %v5436 = vsub.f32 %v5386, %v5420
    %v5437 = vmul.f32 %v5421, 1.442695
    %v5438 = vpow.pop %v5437
    %v5439 = vmul.f32 %v5422, 1.442695
    %v5440 = vpow.pop %v5439
    %v5441 = vmul.f32 %v5423, 1.442695
    %v5442 = vpow.pop %v5441
    %v5443 = vmul.f32 %v5424, 1.442695
    %v5444 = vpow.pop %v5443
    %v5445 = vmul.f32 %v5425, 1.442695
    %v5446 = vpow.pop %v5445
    %v5447 = vmul.f32 %v5426, 1.442695
    %v5448 = vpow.pop %v5447
    %v5449 = vmul.f32 %v5427, 1.442695
    %v5450 = vpow.pop %v5449
    %v5451 = vmul.f32 %v5428, 1.442695
    %v5452 = vpow.pop %v5451
    %v5453 = vmul.f32 %v5429, 1.442695
    %v5454 = vpow.pop %v5453
    %v5455 = vmul.f32 %v5430, 1.442695
    %v5456 = vpow.pop %v5455
    %v5457 = vmul.f32 %v5431, 1.442695
    %v5458 = vpow.pop %v5457
    %v5459 = vmul.f32 %v5432, 1.442695
    %v5460 = vpow.pop %v5459
    %v5461 = vmul.f32 %v5433, 1.442695
    %v5462 = vpow.pop %v5461
    %v5463 = vmul.f32 %v5434, 1.442695
    %v5464 = vpow.pop %v5463
    %v5465 = vmul.f32 %v5435, 1.442695
    %v5466 = vpow.pop %v5465
    %v5467 = vmul.f32 %v5436, 1.442695
    %v5468 = vpow.pop %v5467
    %v5469 = vsel %vm5387, %v5438, 0.0
    %v5470 = vsel %vm5387, %v5440, 0.0
    %v5471 = vadd.f32 %v5469, %v5470
    %v5472 = vsel %vm5387, %v5442, 0.0
    %v5473 = vadd.f32 %v5471, %v5472
    %v5474 = vsel %vm5387, %v5444, 0.0
    %v5475 = vadd.f32 %v5473, %v5474
    %v5476 = vsel %vm5387, %v5446, 0.0
    %v5477 = vadd.f32 %v5475, %v5476
    %v5478 = vsel %vm5387, %v5448, 0.0
    %v5479 = vadd.f32 %v5477, %v5478
    %v5480 = vsel %vm5387, %v5450, 0.0
    %v5481 = vadd.f32 %v5479, %v5480
    %v5482 = vsel %vm5387, %v5452, 0.0
    %v5483 = vadd.f32 %v5481, %v5482
    %v5484 = vsel %vm5387, %v5454, 0.0
    %v5485 = vadd.f32 %v5483, %v5484
    %v5486 = vsel %vm5387, %v5456, 0.0
    %v5487 = vadd.f32 %v5485, %v5486
    %v5488 = vsel %vm5387, %v5458, 0.0
    %v5489 = vadd.f32 %v5487, %v5488
    %v5490 = vsel %vm5387, %v5460, 0.0
    %v5491 = vadd.f32 %v5489, %v5490
    %v5492 = vsel %vm5387, %v5462, 0.0
    %v5493 = vadd.f32 %v5491, %v5492
    %v5494 = vsel %vm5387, %v5464, 0.0
    %v5495 = vadd.f32 %v5493, %v5494
    %v5496 = vsel %vm5387, %v5466, 0.0
    %v5497 = vadd.f32 %v5495, %v5496
    %v5498 = vsel %vm5387, %v5468, 0.0
    %v5499 = vadd.f32 %v5497, %v5498
    %5500 = vadd.xlane.f32.xlu0 %v5499
    %v5501 = vpop.xlane.xlu0 %5500
    %v5502 = vrcp.pop %v5501
    %v5503 = vmul.f32 %v5501, %v5502
    %v5504 = vsub.f32 1.0, %v5503
    %v5505 = vmul.f32 %v5502, %v5504
    %v5506 = vadd.f32 %v5502, %v5505
    %vm5507 = vweird.f32 %v5501
    %vm5508 = vweird.f32 %v5502
    %vm5509 = vmor %vm5507, %vm5508
    %v5510 = vsel %vm5509, %v5502, %v5506
    %v5511 = vand.u32 2147483647, %v5501
    %vm5512 = vcmp.eq.f32.partialorder %v5511, 8.507059e+37
    %v5513 = vand.u32 %v5501, 2147483648
    %v5514 = vor.u32 1.1754944e-38, %v5513
    %v5515 = vsel %vm5512, %v5514, %v5510
    %v5516 = vmul.f32 %v5438, %v5515
    %v5518 = vrot.slane %v5516, 1
    %5520 = vmatpush.msra.mxu0 %v2206
    %5521 = vmatpush.msra.mxu0 %v2205
    %5522 = vmatpush.msra.mxu0 %v2204
    %5523 = vmatpush.msra.mxu0 %v2203
    %5524 = vmatpush.msra.mxu0 %v2202
    %5525 = vmatpush.msra.mxu0 %v2201
    %5526 = vmatpush.msra.mxu0 %v2200
    %5527 = vmatpush.msra.mxu0 %v2199
    %5528 = vmatpush.msra.mxu0 %v2198
    %5529 = vmatpush.msra.mxu0 %v2197
    %5530 = vmatpush.msra.mxu0 %v2196
    %5531 = vmatpush.msra.mxu0 %v2195
    %5532 = vmatpush.msra.mxu0 %v2194
    %5533 = vmatpush.msra.mxu0 %v2193
    %5534 = vmatpush.msra.mxu0 %v2192
    %5535 = vmatpush.msra.mxu0 %v2191
    %5536 = vmatmul.f32.gmra.mxu0 %v5518
    %v5537 = vpop.f32.mrf.mxu0
    %v5538 = vadd.f32 0.0, %v5537
    %5539 = vdwg.mxu0
    %v5540 = vpack.c.bf16 %v5538, %v5538
    %5541 = vmatpush.bf16.msra.mxu0 %v4535
    %5542 = vmatpush.bf16.msra.mxu0 %v4534
    %5543 = vmatpush.bf16.msra.mxu0 %v4533
    %5544 = vmatpush.bf16.msra.mxu0 %v4532
    %5545 = vmatpush.bf16.msra.mxu0 %v4531
    %5546 = vmatpush.bf16.msra.mxu0 %v4530
    %5547 = vmatpush.bf16.msra.mxu0 %v4529
    %5548 = vmatpush.bf16.msra.mxu0 %v4528
    %5549 = vmatmul.bf16.gmra.mxu0 %v5540
    %v5550 = vpop.f32.mrf.mxu0
    %v5551 = vadd.f32 0.0, %v5550
    %v5552 = vpop.f32.mrf.mxu0
    %5553 = vdwg.mxu0
    %v5555 = vrot.slane %v5551, 7
    %v5557 = vadd.f32 %v3329, %v5555
    %v5558 = vmax.f32 %v5557, 0.0
    %v5559 = vpack.c.bf16 %v5558, %v5558
    %v5561 = vshrl.u32 %v5559, 16
    %5564 = vmatpush.bf16.msra.mxu0 %v4694
    %5565 = vmatpush.bf16.msra.mxu0 %v4691
    %5566 = vmatpush.bf16.msra.mxu0 %v4688
    %5567 = vmatpush.bf16.msra.mxu0 %v4685
    %5568 = vmatpush.bf16.msra.mxu0 %v4682
    %5569 = vmatpush.bf16.msra.mxu0 %v4679
    %5570 = vmatpush.bf16.msra.mxu0 %v4676
    %5571 = vmatpush.bf16.msra.mxu0 %v4673
    %5572 = vmatmul.bf16.gmra.mxu0 %v5561
    %v5573 = vpop.f32.mrf.mxu0
    %v5574 = vadd.f32 %v4722, %v5573
    %v5575 = vpop.f32.mrf.mxu0
    %5576 = vdwg.mxu0
    %5577 = vmatpush.bf16.msra.mxu0 %v4695
    %5578 = vmatpush.bf16.msra.mxu0 %v4692
    %5579 = vmatpush.bf16.msra.mxu0 %v4689
    %5580 = vmatpush.bf16.msra.mxu0 %v4686
    %5581 = vmatpush.bf16.msra.mxu0 %v4683
    %5582 = vmatpush.bf16.msra.mxu0 %v4680
    %5583 = vmatpush.bf16.msra.mxu0 %v4677
    %5584 = vmatpush.bf16.msra.mxu0 %v4674
    %5585 = vmatmul.bf16.gmra.mxu0 %v5561
    %v5586 = vpop.f32.mrf.mxu0
    %v5587 = vadd.f32 %v4723, %v5586
    %v5588 = vpop.f32.mrf.mxu0
    %5589 = vdwg.mxu0
    %5590 = vmatpush.bf16.msra.mxu0 %v4696
    %5591 = vmatpush.bf16.msra.mxu0 %v4693
    %5592 = vmatpush.bf16.msra.mxu0 %v4690
    %5593 = vmatpush.bf16.msra.mxu0 %v4687
    %5594 = vmatpush.bf16.msra.mxu0 %v4684
    %5595 = vmatpush.bf16.msra.mxu0 %v4681
    %5596 = vmatpush.bf16.msra.mxu0 %v4678
    %5597 = vmatpush.bf16.msra.mxu0 %v4675
    %5598 = vmatmul.bf16.gmra.mxu0 %v5561
    %v5599 = vpop.f32.mrf.mxu0
    %v5600 = vadd.f32 %v4724, %v5599
    %v5601 = vpop.f32.mrf.mxu0
    %5602 = vdwg.mxu0
    %5603 = vmatpush.bf16.msra.mxu0 %v4901
    %5604 = vmatpush.bf16.msra.mxu0 %v4898
    %5605 = vmatpush.bf16.msra.mxu0 %v4895
    %5606 = vmatpush.bf16.msra.mxu0 %v4892
    %5607 = vmatpush.bf16.msra.mxu0 %v4889
    %5608 = vmatpush.bf16.msra.mxu0 %v4886
    %5609 = vmatpush.bf16.msra.mxu0 %v4883
    %5610 = vmatpush.bf16.msra.mxu0 %v4880
    %5611 = vmatmul.bf16.gmra.mxu0 %v5024
    %v5612 = vpop.f32.mrf.mxu0
    %v5613 = vadd.f32 %v4929, %v5612
    %v5614 = vpop.f32.mrf.mxu0
    %5615 = vdwg.mxu0
    %5616 = vmatpush.bf16.msra.mxu0 %v4902
    %5617 = vmatpush.bf16.msra.mxu0 %v4899
    %5618 = vmatpush.bf16.msra.mxu0 %v4896
    %5619 = vmatpush.bf16.msra.mxu0 %v4893
    %5620 = vmatpush.bf16.msra.mxu0 %v4890
    %5621 = vmatpush.bf16.msra.mxu0 %v4887
    %5622 = vmatpush.bf16.msra.mxu0 %v4884
    %5623 = vmatpush.bf16.msra.mxu0 %v4881
    %5624 = vmatmul.bf16.gmra.mxu0 %v5024
    %v5625 = vpop.f32.mrf.mxu0
    %v5626 = vadd.f32 %v4930, %v5625
    %v5627 = vpop.f32.mrf.mxu0
    %5628 = vdwg.mxu0
    %5629 = vmatpush.bf16.msra.mxu0 %v4903
    %5630 = vmatpush.bf16.msra.mxu0 %v4900
    %5631 = vmatpush.bf16.msra.mxu0 %v4897
    %5632 = vmatpush.bf16.msra.mxu0 %v4894
    %5633 = vmatpush.bf16.msra.mxu0 %v4891
    %5634 = vmatpush.bf16.msra.mxu0 %v4888
    %5635 = vmatpush.bf16.msra.mxu0 %v4885
    %5636 = vmatpush.bf16.msra.mxu0 %v4882
    %5637 = vmatmul.bf16.gmra.mxu0 %v5024
    %v5638 = vpop.f32.mrf.mxu0
    %v5639 = vadd.f32 %v4931, %v5638
    %v5640 = vpop.f32.mrf.mxu0
    %5641 = vdwg.mxu0
    %v5642 = vadd.f32 %v5574, %v5613
    %v5643 = vxor.u32 %v5642, 2147483648
    %v5644 = vmul.f32 %v5643, 1.442695
    %v5645 = vpow.pop %v5644
    %v5646 = vadd.f32 %v5645, 1.0
    %v5647 = vrcp.pop %v5646
    %v5648 = vmul.f32 %v5646, %v5647
    %v5649 = vsub.f32 1.0, %v5648
    %v5650 = vmul.f32 %v5647, %v5649
    %v5651 = vadd.f32 %v5647, %v5650
    %vm5652 = vweird.f32 %v5646
    %vm5653 = vweird.f32 %v5647
    %vm5654 = vmor %vm5652, %vm5653
    %v5655 = vsel %vm5654, %v5647, %v5651
    %v5656 = vand.u32 2147483647, %v5646
    %vm5657 = vcmp.eq.f32.partialorder %v5656, 8.507059e+37
    %v5658 = vand.u32 %v5646, 2147483648
    %v5659 = vor.u32 1.1754944e-38, %v5658
    %v5660 = vsel %vm5657, %v5659, %v5655
    %v5661 = vmul.f32 1.0, %v5660
    %v5662 = vadd.f32 %v5587, %v5626
    %v5663 = vxor.u32 %v5662, 2147483648
    %v5664 = vmul.f32 %v5663, 1.442695
    %v5665 = vpow.pop %v5664
    %v5666 = vadd.f32 %v5665, 1.0
    %v5667 = vrcp.pop %v5666
    %v5668 = vmul.f32 %v5666, %v5667
    %v5669 = vsub.f32 1.0, %v5668
    %v5670 = vmul.f32 %v5667, %v5669
    %v5671 = vadd.f32 %v5667, %v5670
    %vm5672 = vweird.f32 %v5666
    %vm5673 = vweird.f32 %v5667
    %vm5674 = vmor %vm5672, %vm5673
    %v5675 = vsel %vm5674, %v5667, %v5671
    %v5676 = vand.u32 2147483647, %v5666
    %vm5677 = vcmp.eq.f32.partialorder %v5676, 8.507059e+37
    %v5678 = vand.u32 %v5666, 2147483648
    %v5679 = vor.u32 1.1754944e-38, %v5678
    %v5680 = vsel %vm5677, %v5679, %v5675
    %v5681 = vmul.f32 1.0, %v5680
    %v5682 = vmul.f32 %v5661, %v5639
    %v5683 = vadd.f32 %v5600, %v5682
    %v5684 = vtanh.pop %v5683
    %v5685 = vsub.f32 1.0, %v5681
    %v5686 = vmul.f32 %v5685, %v5684
    %v5687 = vmul.f32 %v5681, %v5023
    %v5688 = vadd.f32 %v5686, %v5687
    %v5689 = vpack.c.bf16 %v5688, %v5688
    %5690 = vmatpush.bf16.msra.mxu0 %v5081
    %5691 = vmatpush.bf16.msra.mxu0 %v5080
    %5692 = vmatpush.bf16.msra.mxu0 %v5079
    %5693 = vmatpush.bf16.msra.mxu0 %v5078
    %5694 = vmatpush.bf16.msra.mxu0 %v5077
    %5695 = vmatpush.bf16.msra.mxu0 %v5076
    %5696 = vmatpush.bf16.msra.mxu0 %v5075
    %5697 = vmatpush.bf16.msra.mxu0 %v5074
    %5698 = vmatmul.bf16.gmra.mxu0 %v5689
    %v5699 = vpop.f32.mrf.mxu0
    %v5700 = vadd.f32 %v5041, %v5699
    %v5701 = vpop.f32.mrf.mxu0
    %5702 = vdwg.mxu0
    %v5703 = vsel %vm363, %v5700, -inf
    %5704 = vmax.xlane.f32.xlu0 %v5703
    %v5705 = vpop.xlane.xlu0 %5704
    %v5706 = vsub.f32 %v5700, %v5705
    %v5707 = vmul.f32 %v5706, 1.442695
    %v5708 = vpow.pop %v5707
    %v5709 = vsel %vm363, %v5708, 0.0
    %5710 = vadd.xlane.f32.xlu0 %v5709
    %v5711 = vpop.xlane.xlu0 %5710
    %v5712 = vlog2.pop %v5711
    %v5713 = vmul.f32 %v5712, 0.6931472
    %v5714 = vsub.f32 %v5706, %v5713
    %5715 = vmatpush.bf16.msra.mxu0 %v3962
    %5716 = vmatpush.bf16.msra.mxu0 %v3946
    %5717 = vmatpush.bf16.msra.mxu0 %v3930
    %5718 = vmatpush.bf16.msra.mxu0 %v3914
    %5719 = vmatpush.bf16.msra.mxu0 %v3898
    %5720 = vmatpush.bf16.msra.mxu0 %v3882
    %5721 = vmatpush.bf16.msra.mxu0 %v3866
    %5722 = vmatpush.bf16.msra.mxu0 %v3850
    %5723 = vmatmul.bf16.gmra.mxu0 %v5689
    %v5724 = vpop.f32.mrf.mxu0
    %v5725 = vadd.f32 0.0, %v5724
    %v5726 = vpop.f32.mrf.mxu0
    %5727 = vdwg.mxu0
    %5728 = vmatpush.bf16.msra.mxu0 %v3963
    %5729 = vmatpush.bf16.msra.mxu0 %v3947
    %5730 = vmatpush.bf16.msra.mxu0 %v3931
    %5731 = vmatpush.bf16.msra.mxu0 %v3915
    %5732 = vmatpush.bf16.msra.mxu0 %v3899
    %5733 = vmatpush.bf16.msra.mxu0 %v3883
    %5734 = vmatpush.bf16.msra.mxu0 %v3867
    %5735 = vmatpush.bf16.msra.mxu0 %v3851
    %5736 = vmatmul.bf16.gmra.mxu0 %v5689
    %v5737 = vpop.f32.mrf.mxu0
    %v5738 = vadd.f32 0.0, %v5737
    %v5739 = vpop.f32.mrf.mxu0
    %5740 = vdwg.mxu0
    %5741 = vmatpush.bf16.msra.mxu0 %v3964
    %5742 = vmatpush.bf16.msra.mxu0 %v3948
    %5743 = vmatpush.bf16.msra.mxu0 %v3932
    %5744 = vmatpush.bf16.msra.mxu0 %v3916
    %5745 = vmatpush.bf16.msra.mxu0 %v3900
    %5746 = vmatpush.bf16.msra.mxu0 %v3884
    %5747 = vmatpush.bf16.msra.mxu0 %v3868
    %5748 = vmatpush.bf16.msra.mxu0 %v3852
    %5749 = vmatmul.bf16.gmra.mxu0 %v5689
    %v5750 = vpop.f32.mrf.mxu0
    %v5751 = vadd.f32 0.0, %v5750
    %v5752 = vpop.f32.mrf.mxu0
    %5753 = vdwg.mxu0
    %5754 = vmatpush.bf16.msra.mxu0 %v3965
    %5755 = vmatpush.bf16.msra.mxu0 %v3949
    %5756 = vmatpush.bf16.msra.mxu0 %v3933
    %5757 = vmatpush.bf16.msra.mxu0 %v3917
    %5758 = vmatpush.bf16.msra.mxu0 %v3901
    %5759 = vmatpush.bf16.msra.mxu0 %v3885
    %5760 = vmatpush.bf16.msra.mxu0 %v3869
    %5761 = vmatpush.bf16.msra.mxu0 %v3853
    %5762 = vmatmul.bf16.gmra.mxu0 %v5689
    %v5763 = vpop.f32.mrf.mxu0
    %v5764 = vadd.f32 0.0, %v5763
    %v5765 = vpop.f32.mrf.mxu0
    %5766 = vdwg.mxu0
    %5767 = vmatpush.bf16.msra.mxu0 %v3966
    %5768 = vmatpush.bf16.msra.mxu0 %v3950
    %5769 = vmatpush.bf16.msra.mxu0 %v3934
    %5770 = vmatpush.bf16.msra.mxu0 %v3918
    %5771 = vmatpush.bf16.msra.mxu0 %v3902
    %5772 = vmatpush.bf16.msra.mxu0 %v3886
    %5773 = vmatpush.bf16.msra.mxu0 %v3870
    %5774 = vmatpush.bf16.msra.mxu0 %v3854
    %5775 = vmatmul.bf16.gmra.mxu0 %v5689
    %v5776 = vpop.f32.mrf.mxu0
    %v5777 = vadd.f32 0.0, %v5776
    %v5778 = vpop.f32.mrf.mxu0
    %5779 = vdwg.mxu0
    %5780 = vmatpush.bf16.msra.mxu0 %v3967
    %5781 = vmatpush.bf16.msra.mxu0 %v3951
    %5782 = vmatpush.bf16.msra.mxu0 %v3935
    %5783 = vmatpush.bf16.msra.mxu0 %v3919
    %5784 = vmatpush.bf16.msra.mxu0 %v3903
    %5785 = vmatpush.bf16.msra.mxu0 %v3887
    %5786 = vmatpush.bf16.msra.mxu0 %v3871
    %5787 = vmatpush.bf16.msra.mxu0 %v3855
    %5788 = vmatmul.bf16.gmra.mxu0 %v5689
    %v5789 = vpop.f32.mrf.mxu0
    %v5790 = vadd.f32 0.0, %v5789
    %v5791 = vpop.f32.mrf.mxu0
    %5792 = vdwg.mxu0
    %5793 = vmatpush.bf16.msra.mxu0 %v3968
    %5794 = vmatpush.bf16.msra.mxu0 %v3952
    %5795 = vmatpush.bf16.msra.mxu0 %v3936
    %5796 = vmatpush.bf16.msra.mxu0 %v3920
    %5797 = vmatpush.bf16.msra.mxu0 %v3904
    %5798 = vmatpush.bf16.msra.mxu0 %v3888
    %5799 = vmatpush.bf16.msra.mxu0 %v3872
    %5800 = vmatpush.bf16.msra.mxu0 %v3856
    %5801 = vmatmul.bf16.gmra.mxu0 %v5689
    %v5802 = vpop.f32.mrf.mxu0
    %v5803 = vadd.f32 0.0, %v5802
    %v5804 = vpop.f32.mrf.mxu0
    %5805 = vdwg.mxu0
    %5806 = vmatpush.bf16.msra.mxu0 %v3969
    %5807 = vmatpush.bf16.msra.mxu0 %v3953
    %5808 = vmatpush.bf16.msra.mxu0 %v3937
    %5809 = vmatpush.bf16.msra.mxu0 %v3921
    %5810 = vmatpush.bf16.msra.mxu0 %v3905
    %5811 = vmatpush.bf16.msra.mxu0 %v3889
    %5812 = vmatpush.bf16.msra.mxu0 %v3873
    %5813 = vmatpush.bf16.msra.mxu0 %v3857
    %5814 = vmatmul.bf16.gmra.mxu0 %v5689
    %v5815 = vpop.f32.mrf.mxu0
    %v5816 = vadd.f32 0.0, %v5815
    %v5817 = vpop.f32.mrf.mxu0
    %5818 = vdwg.mxu0
    %5819 = vmatpush.bf16.msra.mxu0 %v3970
    %5820 = vmatpush.bf16.msra.mxu0 %v3954
    %5821 = vmatpush.bf16.msra.mxu0 %v3938
    %5822 = vmatpush.bf16.msra.mxu0 %v3922
    %5823 = vmatpush.bf16.msra.mxu0 %v3906
    %5824 = vmatpush.bf16.msra.mxu0 %v3890
    %5825 = vmatpush.bf16.msra.mxu0 %v3874
    %5826 = vmatpush.bf16.msra.mxu0 %v3858
    %5827 = vmatmul.bf16.gmra.mxu0 %v5689
    %v5828 = vpop.f32.mrf.mxu0
    %v5829 = vadd.f32 0.0, %v5828
    %v5830 = vpop.f32.mrf.mxu0
    %5831 = vdwg.mxu0
    %5832 = vmatpush.bf16.msra.mxu0 %v3971
    %5833 = vmatpush.bf16.msra.mxu0 %v3955
    %5834 = vmatpush.bf16.msra.mxu0 %v3939
    %5835 = vmatpush.bf16.msra.mxu0 %v3923
    %5836 = vmatpush.bf16.msra.mxu0 %v3907
    %5837 = vmatpush.bf16.msra.mxu0 %v3891
    %5838 = vmatpush.bf16.msra.mxu0 %v3875
    %5839 = vmatpush.bf16.msra.mxu0 %v3859
    %5840 = vmatmul.bf16.gmra.mxu0 %v5689
    %v5841 = vpop.f32.mrf.mxu0
    %v5842 = vadd.f32 0.0, %v5841
    %v5843 = vpop.f32.mrf.mxu0
    %5844 = vdwg.mxu0
    %5845 = vmatpush.bf16.msra.mxu0 %v3972
    %5846 = vmatpush.bf16.msra.mxu0 %v3956
    %5847 = vmatpush.bf16.msra.mxu0 %v3940
    %5848 = vmatpush.bf16.msra.mxu0 %v3924
    %5849 = vmatpush.bf16.msra.mxu0 %v3908
    %5850 = vmatpush.bf16.msra.mxu0 %v3892
    %5851 = vmatpush.bf16.msra.mxu0 %v3876
    %5852 = vmatpush.bf16.msra.mxu0 %v3860
    %5853 = vmatmul.bf16.gmra.mxu0 %v5689
    %v5854 = vpop.f32.mrf.mxu0
    %v5855 = vadd.f32 0.0, %v5854
    %v5856 = vpop.f32.mrf.mxu0
    %5857 = vdwg.mxu0
    %5858 = vmatpush.bf16.msra.mxu0 %v3973
    %5859 = vmatpush.bf16.msra.mxu0 %v3957
    %5860 = vmatpush.bf16.msra.mxu0 %v3941
    %5861 = vmatpush.bf16.msra.mxu0 %v3925
    %5862 = vmatpush.bf16.msra.mxu0 %v3909
    %5863 = vmatpush.bf16.msra.mxu0 %v3893
    %5864 = vmatpush.bf16.msra.mxu0 %v3877
    %5865 = vmatpush.bf16.msra.mxu0 %v3861
    %5866 = vmatmul.bf16.gmra.mxu0 %v5689
    %v5867 = vpop.f32.mrf.mxu0
    %v5868 = vadd.f32 0.0, %v5867
    %v5869 = vpop.f32.mrf.mxu0
    %5870 = vdwg.mxu0
    %5871 = vmatpush.bf16.msra.mxu0 %v3974
    %5872 = vmatpush.bf16.msra.mxu0 %v3958
    %5873 = vmatpush.bf16.msra.mxu0 %v3942
    %5874 = vmatpush.bf16.msra.mxu0 %v3926
    %5875 = vmatpush.bf16.msra.mxu0 %v3910
    %5876 = vmatpush.bf16.msra.mxu0 %v3894
    %5877 = vmatpush.bf16.msra.mxu0 %v3878
    %5878 = vmatpush.bf16.msra.mxu0 %v3862
    %5879 = vmatmul.bf16.gmra.mxu0 %v5689
    %v5880 = vpop.f32.mrf.mxu0
    %v5881 = vadd.f32 0.0, %v5880
    %v5882 = vpop.f32.mrf.mxu0
    %5883 = vdwg.mxu0
    %5884 = vmatpush.bf16.msra.mxu0 %v3975
    %5885 = vmatpush.bf16.msra.mxu0 %v3959
    %5886 = vmatpush.bf16.msra.mxu0 %v3943
    %5887 = vmatpush.bf16.msra.mxu0 %v3927
    %5888 = vmatpush.bf16.msra.mxu0 %v3911
    %5889 = vmatpush.bf16.msra.mxu0 %v3895
    %5890 = vmatpush.bf16.msra.mxu0 %v3879
    %5891 = vmatpush.bf16.msra.mxu0 %v3863
    %5892 = vmatmul.bf16.gmra.mxu0 %v5689
    %v5893 = vpop.f32.mrf.mxu0
    %v5894 = vadd.f32 0.0, %v5893
    %v5895 = vpop.f32.mrf.mxu0
    %5896 = vdwg.mxu0
    %5897 = vmatpush.bf16.msra.mxu0 %v3976
    %5898 = vmatpush.bf16.msra.mxu0 %v3960
    %5899 = vmatpush.bf16.msra.mxu0 %v3944
    %5900 = vmatpush.bf16.msra.mxu0 %v3928
    %5901 = vmatpush.bf16.msra.mxu0 %v3912
    %5902 = vmatpush.bf16.msra.mxu0 %v3896
    %5903 = vmatpush.bf16.msra.mxu0 %v3880
    %5904 = vmatpush.bf16.msra.mxu0 %v3864
    %5905 = vmatmul.bf16.gmra.mxu0 %v5689
    %v5906 = vpop.f32.mrf.mxu0
    %v5907 = vadd.f32 0.0, %v5906
    %v5908 = vpop.f32.mrf.mxu0
    %5909 = vdwg.mxu0
    %5910 = vmatpush.bf16.msra.mxu0 %v3977
    %5911 = vmatpush.bf16.msra.mxu0 %v3961
    %5912 = vmatpush.bf16.msra.mxu0 %v3945
    %5913 = vmatpush.bf16.msra.mxu0 %v3929
    %5914 = vmatpush.bf16.msra.mxu0 %v3913
    %5915 = vmatpush.bf16.msra.mxu0 %v3897
    %5916 = vmatpush.bf16.msra.mxu0 %v3881
    %5917 = vmatpush.bf16.msra.mxu0 %v3865
    %5918 = vmatmul.bf16.gmra.mxu0 %v5689
    %v5919 = vpop.f32.mrf.mxu0
    %v5920 = vadd.f32 0.0, %v5919
    %v5921 = vpop.f32.mrf.mxu0
    %5922 = vdwg.mxu0
    %v5939 = vrot.slane %v5725, 6
    %v5940 = vrot.slane %v5738, 6
    %v5941 = vrot.slane %v5751, 6
    %v5942 = vrot.slane %v5764, 6
    %v5943 = vrot.slane %v5777, 6
    %v5944 = vrot.slane %v5790, 6
    %v5945 = vrot.slane %v5803, 6
    %v5946 = vrot.slane %v5816, 6
    %v5947 = vrot.slane %v5829, 6
    %v5948 = vrot.slane %v5842, 6
    %v5949 = vrot.slane %v5855, 6
    %v5950 = vrot.slane %v5868, 6
    %v5951 = vrot.slane %v5881, 6
    %v5952 = vrot.slane %v5894, 6
    %v5953 = vrot.slane %v5907, 6
    %v5954 = vrot.slane %v5920, 6
    %v5971 = vadd.f32 %v3053, %v5939
    %v5972 = vadd.f32 %v3066, %v5940
    %v5973 = vadd.f32 %v3079, %v5941
    %v5974 = vadd.f32 %v3092, %v5942
    %v5975 = vadd.f32 %v3105, %v5943
    %v5976 = vadd.f32 %v3118, %v5944
    %v5977 = vadd.f32 %v3131, %v5945
    %v5978 = vadd.f32 %v3144, %v5946
    %v5979 = vadd.f32 %v3157, %v5947
    %v5980 = vadd.f32 %v3170, %v5948
    %v5981 = vadd.f32 %v3183, %v5949
    %v5982 = vadd.f32 %v3196, %v5950
    %v5983 = vadd.f32 %v3209, %v5951
    %v5984 = vadd.f32 %v3222, %v5952
    %v5985 = vadd.f32 %v3235, %v5953
    %v5986 = vadd.f32 %v3248, %v5954
    %vm5987 = vcmask 1042434
    %v5988 = vsel %vm5987, %v5971, -inf
    %v5989 = vsel %vm5987, %v5972, -inf
    %v5990 = vsel %vm5987, %v5973, -inf
    %v5991 = vsel %vm5987, %v5974, -inf
    %v5992 = vsel %vm5987, %v5975, -inf
    %v5993 = vmax.f32 %v5988, %v5992
    %v5994 = vsel %vm5987, %v5976, -inf
    %v5995 = vmax.f32 %v5989, %v5994
    %v5996 = vsel %vm5987, %v5977, -inf
    %v5997 = vmax.f32 %v5990, %v5996
    %v5998 = vsel %vm5987, %v5978, -inf
    %v5999 = vmax.f32 %v5991, %v5998
    %v6000 = vsel %vm5987, %v5979, -inf
    %v6001 = vmax.f32 %v5993, %v6000
    %v6002 = vsel %vm5987, %v5980, -inf
    %v6003 = vmax.f32 %v5995, %v6002
    %v6004 = vsel %vm5987, %v5981, -inf
    %v6005 = vmax.f32 %v5997, %v6004
    %v6006 = vsel %vm5987, %v5982, -inf
    %v6007 = vmax.f32 %v5999, %v6006
    %v6008 = vsel %vm5987, %v5983, -inf
    %v6009 = vmax.f32 %v6001, %v6008
    %v6010 = vsel %vm5987, %v5984, -inf
    %v6011 = vmax.f32 %v6003, %v6010
    %v6012 = vsel %vm5987, %v5985, -inf
    %v6013 = vmax.f32 %v6005, %v6012
    %v6014 = vsel %vm5987, %v5986, -inf
    %v6015 = vmax.f32 %v6007, %v6014
    %v6016 = vmax.f32 %v6009, %v6011
    %v6017 = vmax.f32 %v6013, %v6015
    %v6018 = vmax.f32 %v6016, %v6017
    %6019 = vmax.xlane.f32.xlu0 %v6018
    %v6020 = vpop.xlane.xlu0 %6019
    %v6021 = vsub.f32 %v5971, %v6020
    %v6022 = vsub.f32 %v5972, %v6020
    %v6023 = vsub.f32 %v5973, %v6020
    %v6024 = vsub.f32 %v5974, %v6020
    %v6025 = vsub.f32 %v5975, %v6020
    %v6026 = vsub.f32 %v5976, %v6020
    %v6027 = vsub.f32 %v5977, %v6020
    %v6028 = vsub.f32 %v5978, %v6020
    %v6029 = vsub.f32 %v5979, %v6020
    %v6030 = vsub.f32 %v5980, %v6020
    %v6031 = vsub.f32 %v5981, %v6020
    %v6032 = vsub.f32 %v5982, %v6020
    %v6033 = vsub.f32 %v5983, %v6020
    %v6034 = vsub.f32 %v5984, %v6020
    %v6035 = vsub.f32 %v5985, %v6020
    %v6036 = vsub.f32 %v5986, %v6020
    %v6037 = vmul.f32 %v6021, 1.442695
    %v6038 = vpow.pop %v6037
    %v6039 = vmul.f32 %v6022, 1.442695
    %v6040 = vpow.pop %v6039
    %v6041 = vmul.f32 %v6023, 1.442695
    %v6042 = vpow.pop %v6041
    %v6043 = vmul.f32 %v6024, 1.442695
    %v6044 = vpow.pop %v6043
    %v6045 = vmul.f32 %v6025, 1.442695
    %v6046 = vpow.pop %v6045
    %v6047 = vmul.f32 %v6026, 1.442695
    %v6048 = vpow.pop %v6047
    %v6049 = vmul.f32 %v6027, 1.442695
    %v6050 = vpow.pop %v6049
    %v6051 = vmul.f32 %v6028, 1.442695
    %v6052 = vpow.pop %v6051
    %v6053 = vmul.f32 %v6029, 1.442695
    %v6054 = vpow.pop %v6053
    %v6055 = vmul.f32 %v6030, 1.442695
    %v6056 = vpow.pop %v6055
    %v6057 = vmul.f32 %v6031, 1.442695
    %v6058 = vpow.pop %v6057
    %v6059 = vmul.f32 %v6032, 1.442695
    %v6060 = vpow.pop %v6059
    %v6061 = vmul.f32 %v6033, 1.442695
    %v6062 = vpow.pop %v6061
    %v6063 = vmul.f32 %v6034, 1.442695
    %v6064 = vpow.pop %v6063
    %v6065 = vmul.f32 %v6035, 1.442695
    %v6066 = vpow.pop %v6065
    %v6067 = vmul.f32 %v6036, 1.442695
    %v6068 = vpow.pop %v6067
    %v6069 = vsel %vm5987, %v6038, 0.0
    %v6070 = vsel %vm5987, %v6040, 0.0
    %v6071 = vadd.f32 %v6069, %v6070
    %v6072 = vsel %vm5987, %v6042, 0.0
    %v6073 = vadd.f32 %v6071, %v6072
    %v6074 = vsel %vm5987, %v6044, 0.0
    %v6075 = vadd.f32 %v6073, %v6074
    %v6076 = vsel %vm5987, %v6046, 0.0
    %v6077 = vadd.f32 %v6075, %v6076
    %v6078 = vsel %vm5987, %v6048, 0.0
    %v6079 = vadd.f32 %v6077, %v6078
    %v6080 = vsel %vm5987, %v6050, 0.0
    %v6081 = vadd.f32 %v6079, %v6080
    %v6082 = vsel %vm5987, %v6052, 0.0
    %v6083 = vadd.f32 %v6081, %v6082
    %v6084 = vsel %vm5987, %v6054, 0.0
    %v6085 = vadd.f32 %v6083, %v6084
    %v6086 = vsel %vm5987, %v6056, 0.0
    %v6087 = vadd.f32 %v6085, %v6086
    %v6088 = vsel %vm5987, %v6058, 0.0
    %v6089 = vadd.f32 %v6087, %v6088
    %v6090 = vsel %vm5987, %v6060, 0.0
    %v6091 = vadd.f32 %v6089, %v6090
    %v6092 = vsel %vm5987, %v6062, 0.0
    %v6093 = vadd.f32 %v6091, %v6092
    %v6094 = vsel %vm5987, %v6064, 0.0
    %v6095 = vadd.f32 %v6093, %v6094
    %v6096 = vsel %vm5987, %v6066, 0.0
    %v6097 = vadd.f32 %v6095, %v6096
    %v6098 = vsel %vm5987, %v6068, 0.0
    %v6099 = vadd.f32 %v6097, %v6098
    %6100 = vadd.xlane.f32.xlu0 %v6099
    %v6101 = vpop.xlane.xlu0 %6100
    %v6102 = vrcp.pop %v6101
    %v6103 = vmul.f32 %v6101, %v6102
    %v6104 = vsub.f32 1.0, %v6103
    %v6105 = vmul.f32 %v6102, %v6104
    %v6106 = vadd.f32 %v6102, %v6105
    %vm6107 = vweird.f32 %v6101
    %vm6108 = vweird.f32 %v6102
    %vm6109 = vmor %vm6107, %vm6108
    %v6110 = vsel %vm6109, %v6102, %v6106
    %v6111 = vand.u32 2147483647, %v6101
    %vm6112 = vcmp.eq.f32.partialorder %v6111, 8.507059e+37
    %v6113 = vand.u32 %v6101, 2147483648
    %v6114 = vor.u32 1.1754944e-38, %v6113
    %v6115 = vsel %vm6112, %v6114, %v6110
    %v6116 = vmul.f32 %v6038, %v6115
    %v6118 = vrot.slane %v6116, 2
    %6120 = vmatpush.msra.mxu0 %v2206
    %6121 = vmatpush.msra.mxu0 %v2205
    %6122 = vmatpush.msra.mxu0 %v2204
    %6123 = vmatpush.msra.mxu0 %v2203
    %6124 = vmatpush.msra.mxu0 %v2202
    %6125 = vmatpush.msra.mxu0 %v2201
    %6126 = vmatpush.msra.mxu0 %v2200
    %6127 = vmatpush.msra.mxu0 %v2199
    %6128 = vmatpush.msra.mxu0 %v2198
    %6129 = vmatpush.msra.mxu0 %v2197
    %6130 = vmatpush.msra.mxu0 %v2196
    %6131 = vmatpush.msra.mxu0 %v2195
    %6132 = vmatpush.msra.mxu0 %v2194
    %6133 = vmatpush.msra.mxu0 %v2193
    %6134 = vmatpush.msra.mxu0 %v2192
    %6135 = vmatpush.msra.mxu0 %v2191
    %6136 = vmatmul.f32.gmra.mxu0 %v6118
    %v6137 = vpop.f32.mrf.mxu0
    %v6138 = vadd.f32 0.0, %v6137
    %6139 = vdwg.mxu0
    %v6140 = vpack.c.bf16 %v6138, %v6138
    %6141 = vmatpush.bf16.msra.mxu0 %v4535
    %6142 = vmatpush.bf16.msra.mxu0 %v4534
    %6143 = vmatpush.bf16.msra.mxu0 %v4533
    %6144 = vmatpush.bf16.msra.mxu0 %v4532
    %6145 = vmatpush.bf16.msra.mxu0 %v4531
    %6146 = vmatpush.bf16.msra.mxu0 %v4530
    %6147 = vmatpush.bf16.msra.mxu0 %v4529
    %6148 = vmatpush.bf16.msra.mxu0 %v4528
    %6149 = vmatmul.bf16.gmra.mxu0 %v6140
    %v6150 = vpop.f32.mrf.mxu0
    %v6151 = vadd.f32 0.0, %v6150
    %v6152 = vpop.f32.mrf.mxu0
    %6153 = vdwg.mxu0
    %v6155 = vrot.slane %v6151, 6
    %v6157 = vadd.f32 %v3329, %v6155
    %v6158 = vmax.f32 %v6157, 0.0
    %v6159 = vpack.c.bf16 %v6158, %v6158
    %v6161 = vrot.slane %v6159, 1
    %6163 = vmatpush.bf16.msra.mxu0 %v4694
    %6164 = vmatpush.bf16.msra.mxu0 %v4691
    %6165 = vmatpush.bf16.msra.mxu0 %v4688
    %6166 = vmatpush.bf16.msra.mxu0 %v4685
    %6167 = vmatpush.bf16.msra.mxu0 %v4682
    %6168 = vmatpush.bf16.msra.mxu0 %v4679
    %6169 = vmatpush.bf16.msra.mxu0 %v4676
    %6170 = vmatpush.bf16.msra.mxu0 %v4673
    %6171 = vmatmul.bf16.gmra.mxu0 %v6161
    %v6172 = vpop.f32.mrf.mxu0
    %v6173 = vadd.f32 %v4722, %v6172
    %v6174 = vpop.f32.mrf.mxu0
    %6175 = vdwg.mxu0
    %6176 = vmatpush.bf16.msra.mxu0 %v4695
    %6177 = vmatpush.bf16.msra.mxu0 %v4692
    %6178 = vmatpush.bf16.msra.mxu0 %v4689
    %6179 = vmatpush.bf16.msra.mxu0 %v4686
    %6180 = vmatpush.bf16.msra.mxu0 %v4683
    %6181 = vmatpush.bf16.msra.mxu0 %v4680
    %6182 = vmatpush.bf16.msra.mxu0 %v4677
    %6183 = vmatpush.bf16.msra.mxu0 %v4674
    %6184 = vmatmul.bf16.gmra.mxu0 %v6161
    %v6185 = vpop.f32.mrf.mxu0
    %v6186 = vadd.f32 %v4723, %v6185
    %v6187 = vpop.f32.mrf.mxu0
    %6188 = vdwg.mxu0
    %6189 = vmatpush.bf16.msra.mxu0 %v4696
    %6190 = vmatpush.bf16.msra.mxu0 %v4693
    %6191 = vmatpush.bf16.msra.mxu0 %v4690
    %6192 = vmatpush.bf16.msra.mxu0 %v4687
    %6193 = vmatpush.bf16.msra.mxu0 %v4684
    %6194 = vmatpush.bf16.msra.mxu0 %v4681
    %6195 = vmatpush.bf16.msra.mxu0 %v4678
    %6196 = vmatpush.bf16.msra.mxu0 %v4675
    %6197 = vmatmul.bf16.gmra.mxu0 %v6161
    %v6198 = vpop.f32.mrf.mxu0
    %v6199 = vadd.f32 %v4724, %v6198
    %v6200 = vpop.f32.mrf.mxu0
    %6201 = vdwg.mxu0
    %6202 = vmatpush.bf16.msra.mxu0 %v4901
    %6203 = vmatpush.bf16.msra.mxu0 %v4898
    %6204 = vmatpush.bf16.msra.mxu0 %v4895
    %6205 = vmatpush.bf16.msra.mxu0 %v4892
    %6206 = vmatpush.bf16.msra.mxu0 %v4889
    %6207 = vmatpush.bf16.msra.mxu0 %v4886
    %6208 = vmatpush.bf16.msra.mxu0 %v4883
    %6209 = vmatpush.bf16.msra.mxu0 %v4880
    %6210 = vmatmul.bf16.gmra.mxu0 %v5689
    %v6211 = vpop.f32.mrf.mxu0
    %v6212 = vadd.f32 %v4929, %v6211
    %v6213 = vpop.f32.mrf.mxu0
    %6214 = vdwg.mxu0
    %6215 = vmatpush.bf16.msra.mxu0 %v4902
    %6216 = vmatpush.bf16.msra.mxu0 %v4899
    %6217 = vmatpush.bf16.msra.mxu0 %v4896
    %6218 = vmatpush.bf16.msra.mxu0 %v4893
    %6219 = vmatpush.bf16.msra.mxu0 %v4890
    %6220 = vmatpush.bf16.msra.mxu0 %v4887
    %6221 = vmatpush.bf16.msra.mxu0 %v4884
    %6222 = vmatpush.bf16.msra.mxu0 %v4881
    %6223 = vmatmul.bf16.gmra.mxu0 %v5689
    %v6224 = vpop.f32.mrf.mxu0
    %v6225 = vadd.f32 %v4930, %v6224
    %v6226 = vpop.f32.mrf.mxu0
    %6227 = vdwg.mxu0
    %6228 = vmatpush.bf16.msra.mxu0 %v4903
    %6229 = vmatpush.bf16.msra.mxu0 %v4900
    %6230 = vmatpush.bf16.msra.mxu0 %v4897
    %6231 = vmatpush.bf16.msra.mxu0 %v4894
    %6232 = vmatpush.bf16.msra.mxu0 %v4891
    %6233 = vmatpush.bf16.msra.mxu0 %v4888
    %6234 = vmatpush.bf16.msra.mxu0 %v4885
    %6235 = vmatpush.bf16.msra.mxu0 %v4882
    %6236 = vmatmul.bf16.gmra.mxu0 %v5689
    %v6237 = vpop.f32.mrf.mxu0
    %v6238 = vadd.f32 %v4931, %v6237
    %v6239 = vpop.f32.mrf.mxu0
    %6240 = vdwg.mxu0
    %v6241 = vadd.f32 %v6173, %v6212
    %v6242 = vxor.u32 %v6241, 2147483648
    %v6243 = vmul.f32 %v6242, 1.442695
    %v6244 = vpow.pop %v6243
    %v6245 = vadd.f32 %v6244, 1.0
    %v6246 = vrcp.pop %v6245
    %v6247 = vmul.f32 %v6245, %v6246
    %v6248 = vsub.f32 1.0, %v6247
    %v6249 = vmul.f32 %v6246, %v6248
    %v6250 = vadd.f32 %v6246, %v6249
    %vm6251 = vweird.f32 %v6245
    %vm6252 = vweird.f32 %v6246
    %vm6253 = vmor %vm6251, %vm6252
    %v6254 = vsel %vm6253, %v6246, %v6250
    %v6255 = vand.u32 2147483647, %v6245
    %vm6256 = vcmp.eq.f32.partialorder %v6255, 8.507059e+37
    %v6257 = vand.u32 %v6245, 2147483648
    %v6258 = vor.u32 1.1754944e-38, %v6257
    %v6259 = vsel %vm6256, %v6258, %v6254
    %v6260 = vmul.f32 1.0, %v6259
    %v6261 = vadd.f32 %v6186, %v6225
    %v6262 = vxor.u32 %v6261, 2147483648
    %v6263 = vmul.f32 %v6262, 1.442695
    %v6264 = vpow.pop %v6263
    %v6265 = vadd.f32 %v6264, 1.0
    %v6266 = vrcp.pop %v6265
    %v6267 = vmul.f32 %v6265, %v6266
    %v6268 = vsub.f32 1.0, %v6267
    %v6269 = vmul.f32 %v6266, %v6268
    %v6270 = vadd.f32 %v6266, %v6269
    %vm6271 = vweird.f32 %v6265
    %vm6272 = vweird.f32 %v6266
    %vm6273 = vmor %vm6271, %vm6272
    %v6274 = vsel %vm6273, %v6266, %v6270
    %v6275 = vand.u32 2147483647, %v6265
    %vm6276 = vcmp.eq.f32.partialorder %v6275, 8.507059e+37
    %v6277 = vand.u32 %v6265, 2147483648
    %v6278 = vor.u32 1.1754944e-38, %v6277
    %v6279 = vsel %vm6276, %v6278, %v6274
    %v6280 = vmul.f32 1.0, %v6279
    %v6281 = vmul.f32 %v6260, %v6238
    %v6282 = vadd.f32 %v6199, %v6281
    %v6283 = vtanh.pop %v6282
    %v6284 = vsub.f32 1.0, %v6280
    %v6285 = vmul.f32 %v6284, %v6283
    %v6286 = vmul.f32 %v6280, %v5688
    %v6287 = vadd.f32 %v6285, %v6286
    %v6288 = vpack.c.bf16 %v6287, %v6287
    %6289 = vmatpush.bf16.msra.mxu0 %v5081
    %6290 = vmatpush.bf16.msra.mxu0 %v5080
    %6291 = vmatpush.bf16.msra.mxu0 %v5079
    %6292 = vmatpush.bf16.msra.mxu0 %v5078
    %6293 = vmatpush.bf16.msra.mxu0 %v5077
    %6294 = vmatpush.bf16.msra.mxu0 %v5076
    %6295 = vmatpush.bf16.msra.mxu0 %v5075
    %6296 = vmatpush.bf16.msra.mxu0 %v5074
    %6297 = vmatmul.bf16.gmra.mxu0 %v6288
    %v6298 = vpop.f32.mrf.mxu0
    %v6299 = vadd.f32 %v5041, %v6298
    %v6300 = vpop.f32.mrf.mxu0
    %6301 = vdwg.mxu0
    %v6302 = vsel %vm363, %v6299, -inf
    %6303 = vmax.xlane.f32.xlu0 %v6302
    %v6304 = vpop.xlane.xlu0 %6303
    %v6305 = vsub.f32 %v6299, %v6304
    %v6306 = vmul.f32 %v6305, 1.442695
    %v6307 = vpow.pop %v6306
    %v6308 = vsel %vm363, %v6307, 0.0
    %6309 = vadd.xlane.f32.xlu0 %v6308
    %v6310 = vpop.xlane.xlu0 %6309
    %v6311 = vlog2.pop %v6310
    %v6312 = vmul.f32 %v6311, 0.6931472
    %v6313 = vsub.f32 %v6305, %v6312
    %6314 = vmatpush.bf16.msra.mxu0 %v3962
    %6315 = vmatpush.bf16.msra.mxu0 %v3946
    %6316 = vmatpush.bf16.msra.mxu0 %v3930
    %6317 = vmatpush.bf16.msra.mxu0 %v3914
    %6318 = vmatpush.bf16.msra.mxu0 %v3898
    %6319 = vmatpush.bf16.msra.mxu0 %v3882
    %6320 = vmatpush.bf16.msra.mxu0 %v3866
    %6321 = vmatpush.bf16.msra.mxu0 %v3850
    %6322 = vmatmul.bf16.gmra.mxu0 %v6288
    %v6323 = vpop.f32.mrf.mxu0
    %v6324 = vadd.f32 0.0, %v6323
    %v6325 = vpop.f32.mrf.mxu0
    %6326 = vdwg.mxu0
    %6327 = vmatpush.bf16.msra.mxu0 %v3963
    %6328 = vmatpush.bf16.msra.mxu0 %v3947
    %6329 = vmatpush.bf16.msra.mxu0 %v3931
    %6330 = vmatpush.bf16.msra.mxu0 %v3915
    %6331 = vmatpush.bf16.msra.mxu0 %v3899
    %6332 = vmatpush.bf16.msra.mxu0 %v3883
    %6333 = vmatpush.bf16.msra.mxu0 %v3867
    %6334 = vmatpush.bf16.msra.mxu0 %v3851
    %6335 = vmatmul.bf16.gmra.mxu0 %v6288
    %v6336 = vpop.f32.mrf.mxu0
    %v6337 = vadd.f32 0.0, %v6336
    %v6338 = vpop.f32.mrf.mxu0
    %6339 = vdwg.mxu0
    %6340 = vmatpush.bf16.msra.mxu0 %v3964
    %6341 = vmatpush.bf16.msra.mxu0 %v3948
    %6342 = vmatpush.bf16.msra.mxu0 %v3932
    %6343 = vmatpush.bf16.msra.mxu0 %v3916
    %6344 = vmatpush.bf16.msra.mxu0 %v3900
    %6345 = vmatpush.bf16.msra.mxu0 %v3884
    %6346 = vmatpush.bf16.msra.mxu0 %v3868
    %6347 = vmatpush.bf16.msra.mxu0 %v3852
    %6348 = vmatmul.bf16.gmra.mxu0 %v6288
    %v6349 = vpop.f32.mrf.mxu0
    %v6350 = vadd.f32 0.0, %v6349
    %v6351 = vpop.f32.mrf.mxu0
    %6352 = vdwg.mxu0
    %6353 = vmatpush.bf16.msra.mxu0 %v3965
    %6354 = vmatpush.bf16.msra.mxu0 %v3949
    %6355 = vmatpush.bf16.msra.mxu0 %v3933
    %6356 = vmatpush.bf16.msra.mxu0 %v3917
    %6357 = vmatpush.bf16.msra.mxu0 %v3901
    %6358 = vmatpush.bf16.msra.mxu0 %v3885
    %6359 = vmatpush.bf16.msra.mxu0 %v3869
    %6360 = vmatpush.bf16.msra.mxu0 %v3853
    %6361 = vmatmul.bf16.gmra.mxu0 %v6288
    %v6362 = vpop.f32.mrf.mxu0
    %v6363 = vadd.f32 0.0, %v6362
    %v6364 = vpop.f32.mrf.mxu0
    %6365 = vdwg.mxu0
    %6366 = vmatpush.bf16.msra.mxu0 %v3966
    %6367 = vmatpush.bf16.msra.mxu0 %v3950
    %6368 = vmatpush.bf16.msra.mxu0 %v3934
    %6369 = vmatpush.bf16.msra.mxu0 %v3918
    %6370 = vmatpush.bf16.msra.mxu0 %v3902
    %6371 = vmatpush.bf16.msra.mxu0 %v3886
    %6372 = vmatpush.bf16.msra.mxu0 %v3870
    %6373 = vmatpush.bf16.msra.mxu0 %v3854
    %6374 = vmatmul.bf16.gmra.mxu0 %v6288
    %v6375 = vpop.f32.mrf.mxu0
    %v6376 = vadd.f32 0.0, %v6375
    %v6377 = vpop.f32.mrf.mxu0
    %6378 = vdwg.mxu0
    %6379 = vmatpush.bf16.msra.mxu0 %v3967
    %6380 = vmatpush.bf16.msra.mxu0 %v3951
    %6381 = vmatpush.bf16.msra.mxu0 %v3935
    %6382 = vmatpush.bf16.msra.mxu0 %v3919
    %6383 = vmatpush.bf16.msra.mxu0 %v3903
    %6384 = vmatpush.bf16.msra.mxu0 %v3887
    %6385 = vmatpush.bf16.msra.mxu0 %v3871
    %6386 = vmatpush.bf16.msra.mxu0 %v3855
    %6387 = vmatmul.bf16.gmra.mxu0 %v6288
    %v6388 = vpop.f32.mrf.mxu0
    %v6389 = vadd.f32 0.0, %v6388
    %v6390 = vpop.f32.mrf.mxu0
    %6391 = vdwg.mxu0
    %6392 = vmatpush.bf16.msra.mxu0 %v3968
    %6393 = vmatpush.bf16.msra.mxu0 %v3952
    %6394 = vmatpush.bf16.msra.mxu0 %v3936
    %6395 = vmatpush.bf16.msra.mxu0 %v3920
    %6396 = vmatpush.bf16.msra.mxu0 %v3904
    %6397 = vmatpush.bf16.msra.mxu0 %v3888
    %6398 = vmatpush.bf16.msra.mxu0 %v3872
    %6399 = vmatpush.bf16.msra.mxu0 %v3856
    %6400 = vmatmul.bf16.gmra.mxu0 %v6288
    %v6401 = vpop.f32.mrf.mxu0
    %v6402 = vadd.f32 0.0, %v6401
    %v6403 = vpop.f32.mrf.mxu0
    %6404 = vdwg.mxu0
    %6405 = vmatpush.bf16.msra.mxu0 %v3969
    %6406 = vmatpush.bf16.msra.mxu0 %v3953
    %6407 = vmatpush.bf16.msra.mxu0 %v3937
    %6408 = vmatpush.bf16.msra.mxu0 %v3921
    %6409 = vmatpush.bf16.msra.mxu0 %v3905
    %6410 = vmatpush.bf16.msra.mxu0 %v3889
    %6411 = vmatpush.bf16.msra.mxu0 %v3873
    %6412 = vmatpush.bf16.msra.mxu0 %v3857
    %6413 = vmatmul.bf16.gmra.mxu0 %v6288
    %v6414 = vpop.f32.mrf.mxu0
    %v6415 = vadd.f32 0.0, %v6414
    %v6416 = vpop.f32.mrf.mxu0
    %6417 = vdwg.mxu0
    %6418 = vmatpush.bf16.msra.mxu0 %v3970
    %6419 = vmatpush.bf16.msra.mxu0 %v3954
    %6420 = vmatpush.bf16.msra.mxu0 %v3938
    %6421 = vmatpush.bf16.msra.mxu0 %v3922
    %6422 = vmatpush.bf16.msra.mxu0 %v3906
    %6423 = vmatpush.bf16.msra.mxu0 %v3890
    %6424 = vmatpush.bf16.msra.mxu0 %v3874
    %6425 = vmatpush.bf16.msra.mxu0 %v3858
    %6426 = vmatmul.bf16.gmra.mxu0 %v6288
    %v6427 = vpop.f32.mrf.mxu0
    %v6428 = vadd.f32 0.0, %v6427
    %v6429 = vpop.f32.mrf.mxu0
    %6430 = vdwg.mxu0
    %6431 = vmatpush.bf16.msra.mxu0 %v3971
    %6432 = vmatpush.bf16.msra.mxu0 %v3955
    %6433 = vmatpush.bf16.msra.mxu0 %v3939
    %6434 = vmatpush.bf16.msra.mxu0 %v3923
    %6435 = vmatpush.bf16.msra.mxu0 %v3907
    %6436 = vmatpush.bf16.msra.mxu0 %v3891
    %6437 = vmatpush.bf16.msra.mxu0 %v3875
    %6438 = vmatpush.bf16.msra.mxu0 %v3859
    %6439 = vmatmul.bf16.gmra.mxu0 %v6288
    %v6440 = vpop.f32.mrf.mxu0
    %v6441 = vadd.f32 0.0, %v6440
    %v6442 = vpop.f32.mrf.mxu0
    %6443 = vdwg.mxu0
    %6444 = vmatpush.bf16.msra.mxu0 %v3972
    %6445 = vmatpush.bf16.msra.mxu0 %v3956
    %6446 = vmatpush.bf16.msra.mxu0 %v3940
    %6447 = vmatpush.bf16.msra.mxu0 %v3924
    %6448 = vmatpush.bf16.msra.mxu0 %v3908
    %6449 = vmatpush.bf16.msra.mxu0 %v3892
    %6450 = vmatpush.bf16.msra.mxu0 %v3876
    %6451 = vmatpush.bf16.msra.mxu0 %v3860
    %6452 = vmatmul.bf16.gmra.mxu0 %v6288
    %v6453 = vpop.f32.mrf.mxu0
    %v6454 = vadd.f32 0.0, %v6453
    %v6455 = vpop.f32.mrf.mxu0
    %6456 = vdwg.mxu0
    %6457 = vmatpush.bf16.msra.mxu0 %v3973
    %6458 = vmatpush.bf16.msra.mxu0 %v3957
    %6459 = vmatpush.bf16.msra.mxu0 %v3941
    %6460 = vmatpush.bf16.msra.mxu0 %v3925
    %6461 = vmatpush.bf16.msra.mxu0 %v3909
    %6462 = vmatpush.bf16.msra.mxu0 %v3893
    %6463 = vmatpush.bf16.msra.mxu0 %v3877
    %6464 = vmatpush.bf16.msra.mxu0 %v3861
    %6465 = vmatmul.bf16.gmra.mxu0 %v6288
    %v6466 = vpop.f32.mrf.mxu0
    %v6467 = vadd.f32 0.0, %v6466
    %v6468 = vpop.f32.mrf.mxu0
    %6469 = vdwg.mxu0
    %6470 = vmatpush.bf16.msra.mxu0 %v3974
    %6471 = vmatpush.bf16.msra.mxu0 %v3958
    %6472 = vmatpush.bf16.msra.mxu0 %v3942
    %6473 = vmatpush.bf16.msra.mxu0 %v3926
    %6474 = vmatpush.bf16.msra.mxu0 %v3910
    %6475 = vmatpush.bf16.msra.mxu0 %v3894
    %6476 = vmatpush.bf16.msra.mxu0 %v3878
    %6477 = vmatpush.bf16.msra.mxu0 %v3862
    %6478 = vmatmul.bf16.gmra.mxu0 %v6288
    %v6479 = vpop.f32.mrf.mxu0
    %v6480 = vadd.f32 0.0, %v6479
    %v6481 = vpop.f32.mrf.mxu0
    %6482 = vdwg.mxu0
    %6483 = vmatpush.bf16.msra.mxu0 %v3975
    %6484 = vmatpush.bf16.msra.mxu0 %v3959
    %6485 = vmatpush.bf16.msra.mxu0 %v3943
    %6486 = vmatpush.bf16.msra.mxu0 %v3927
    %6487 = vmatpush.bf16.msra.mxu0 %v3911
    %6488 = vmatpush.bf16.msra.mxu0 %v3895
    %6489 = vmatpush.bf16.msra.mxu0 %v3879
    %6490 = vmatpush.bf16.msra.mxu0 %v3863
    %6491 = vmatmul.bf16.gmra.mxu0 %v6288
    %v6492 = vpop.f32.mrf.mxu0
    %v6493 = vadd.f32 0.0, %v6492
    %v6494 = vpop.f32.mrf.mxu0
    %6495 = vdwg.mxu0
    %6496 = vmatpush.bf16.msra.mxu0 %v3976
    %6497 = vmatpush.bf16.msra.mxu0 %v3960
    %6498 = vmatpush.bf16.msra.mxu0 %v3944
    %6499 = vmatpush.bf16.msra.mxu0 %v3928
    %6500 = vmatpush.bf16.msra.mxu0 %v3912
    %6501 = vmatpush.bf16.msra.mxu0 %v3896
    %6502 = vmatpush.bf16.msra.mxu0 %v3880
    %6503 = vmatpush.bf16.msra.mxu0 %v3864
    %6504 = vmatmul.bf16.gmra.mxu0 %v6288
    %v6505 = vpop.f32.mrf.mxu0
    %v6506 = vadd.f32 0.0, %v6505
    %v6507 = vpop.f32.mrf.mxu0
    %6508 = vdwg.mxu0
    %6509 = vmatpush.bf16.msra.mxu0 %v3977
    %6510 = vmatpush.bf16.msra.mxu0 %v3961
    %6511 = vmatpush.bf16.msra.mxu0 %v3945
    %6512 = vmatpush.bf16.msra.mxu0 %v3929
    %6513 = vmatpush.bf16.msra.mxu0 %v3913
    %6514 = vmatpush.bf16.msra.mxu0 %v3897
    %6515 = vmatpush.bf16.msra.mxu0 %v3881
    %6516 = vmatpush.bf16.msra.mxu0 %v3865
    %6517 = vmatmul.bf16.gmra.mxu0 %v6288
    %v6518 = vpop.f32.mrf.mxu0
    %v6519 = vadd.f32 0.0, %v6518
    %v6520 = vpop.f32.mrf.mxu0
    %6521 = vdwg.mxu0
    %v6538 = vrot.slane %v6324, 5
    %v6539 = vrot.slane %v6337, 5
    %v6540 = vrot.slane %v6350, 5
    %v6541 = vrot.slane %v6363, 5
    %v6542 = vrot.slane %v6376, 5
    %v6543 = vrot.slane %v6389, 5
    %v6544 = vrot.slane %v6402, 5
    %v6545 = vrot.slane %v6415, 5
    %v6546 = vrot.slane %v6428, 5
    %v6547 = vrot.slane %v6441, 5
    %v6548 = vrot.slane %v6454, 5
    %v6549 = vrot.slane %v6467, 5
    %v6550 = vrot.slane %v6480, 5
    %v6551 = vrot.slane %v6493, 5
    %v6552 = vrot.slane %v6506, 5
    %v6553 = vrot.slane %v6519, 5
    %v6570 = vadd.f32 %v3053, %v6538
    %v6571 = vadd.f32 %v3066, %v6539
    %v6572 = vadd.f32 %v3079, %v6540
    %v6573 = vadd.f32 %v3092, %v6541
    %v6574 = vadd.f32 %v3105, %v6542
    %v6575 = vadd.f32 %v3118, %v6543
    %v6576 = vadd.f32 %v3131, %v6544
    %v6577 = vadd.f32 %v3144, %v6545
    %v6578 = vadd.f32 %v3157, %v6546
    %v6579 = vadd.f32 %v3170, %v6547
    %v6580 = vadd.f32 %v3183, %v6548
    %v6581 = vadd.f32 %v3196, %v6549
    %v6582 = vadd.f32 %v3209, %v6550
    %v6583 = vadd.f32 %v3222, %v6551
    %v6584 = vadd.f32 %v3235, %v6552
    %v6585 = vadd.f32 %v3248, %v6553
    %vm6586 = vcmask 1043459
    %v6587 = vsel %vm6586, %v6570, -inf
    %v6588 = vsel %vm6586, %v6571, -inf
    %v6589 = vsel %vm6586, %v6572, -inf
    %v6590 = vsel %vm6586, %v6573, -inf
    %v6591 = vsel %vm6586, %v6574, -inf
    %v6592 = vmax.f32 %v6587, %v6591
    %v6593 = vsel %vm6586, %v6575, -inf
    %v6594 = vmax.f32 %v6588, %v6593
    %v6595 = vsel %vm6586, %v6576, -inf
    %v6596 = vmax.f32 %v6589, %v6595
    %v6597 = vsel %vm6586, %v6577, -inf
    %v6598 = vmax.f32 %v6590, %v6597
    %v6599 = vsel %vm6586, %v6578, -inf
    %v6600 = vmax.f32 %v6592, %v6599
    %v6601 = vsel %vm6586, %v6579, -inf
    %v6602 = vmax.f32 %v6594, %v6601
    %v6603 = vsel %vm6586, %v6580, -inf
    %v6604 = vmax.f32 %v6596, %v6603
    %v6605 = vsel %vm6586, %v6581, -inf
    %v6606 = vmax.f32 %v6598, %v6605
    %v6607 = vsel %vm6586, %v6582, -inf
    %v6608 = vmax.f32 %v6600, %v6607
    %v6609 = vsel %vm6586, %v6583, -inf
    %v6610 = vmax.f32 %v6602, %v6609
    %v6611 = vsel %vm6586, %v6584, -inf
    %v6612 = vmax.f32 %v6604, %v6611
    %v6613 = vsel %vm6586, %v6585, -inf
    %v6614 = vmax.f32 %v6606, %v6613
    %v6615 = vmax.f32 %v6608, %v6610
    %v6616 = vmax.f32 %v6612, %v6614
    %v6617 = vmax.f32 %v6615, %v6616
    %6618 = vmax.xlane.f32.xlu0 %v6617
    %v6619 = vpop.xlane.xlu0 %6618
    %v6620 = vsub.f32 %v6570, %v6619
    %v6621 = vsub.f32 %v6571, %v6619
    %v6622 = vsub.f32 %v6572, %v6619
    %v6623 = vsub.f32 %v6573, %v6619
    %v6624 = vsub.f32 %v6574, %v6619
    %v6625 = vsub.f32 %v6575, %v6619
    %v6626 = vsub.f32 %v6576, %v6619
    %v6627 = vsub.f32 %v6577, %v6619
    %v6628 = vsub.f32 %v6578, %v6619
    %v6629 = vsub.f32 %v6579, %v6619
    %v6630 = vsub.f32 %v6580, %v6619
    %v6631 = vsub.f32 %v6581, %v6619
    %v6632 = vsub.f32 %v6582, %v6619
    %v6633 = vsub.f32 %v6583, %v6619
    %v6634 = vsub.f32 %v6584, %v6619
    %v6635 = vsub.f32 %v6585, %v6619
    %v6636 = vmul.f32 %v6620, 1.442695
    %v6637 = vpow.pop %v6636
    %v6638 = vmul.f32 %v6621, 1.442695
    %v6639 = vpow.pop %v6638
    %v6640 = vmul.f32 %v6622, 1.442695
    %v6641 = vpow.pop %v6640
    %v6642 = vmul.f32 %v6623, 1.442695
    %v6643 = vpow.pop %v6642
    %v6644 = vmul.f32 %v6624, 1.442695
    %v6645 = vpow.pop %v6644
    %v6646 = vmul.f32 %v6625, 1.442695
    %v6647 = vpow.pop %v6646
    %v6648 = vmul.f32 %v6626, 1.442695
    %v6649 = vpow.pop %v6648
    %v6650 = vmul.f32 %v6627, 1.442695
    %v6651 = vpow.pop %v6650
    %v6652 = vmul.f32 %v6628, 1.442695
    %v6653 = vpow.pop %v6652
    %v6654 = vmul.f32 %v6629, 1.442695
    %v6655 = vpow.pop %v6654
    %v6656 = vmul.f32 %v6630, 1.442695
    %v6657 = vpow.pop %v6656
    %v6658 = vmul.f32 %v6631, 1.442695
    %v6659 = vpow.pop %v6658
    %v6660 = vmul.f32 %v6632, 1.442695
    %v6661 = vpow.pop %v6660
    %v6662 = vmul.f32 %v6633, 1.442695
    %v6663 = vpow.pop %v6662
    %v6664 = vmul.f32 %v6634, 1.442695
    %v6665 = vpow.pop %v6664
    %v6666 = vmul.f32 %v6635, 1.442695
    %v6667 = vpow.pop %v6666
    %v6668 = vsel %vm6586, %v6637, 0.0
    %v6669 = vsel %vm6586, %v6639, 0.0
    %v6670 = vadd.f32 %v6668, %v6669
    %v6671 = vsel %vm6586, %v6641, 0.0
    %v6672 = vadd.f32 %v6670, %v6671
    %v6673 = vsel %vm6586, %v6643, 0.0
    %v6674 = vadd.f32 %v6672, %v6673
    %v6675 = vsel %vm6586, %v6645, 0.0
    %v6676 = vadd.f32 %v6674, %v6675
    %v6677 = vsel %vm6586, %v6647, 0.0
    %v6678 = vadd.f32 %v6676, %v6677
    %v6679 = vsel %vm6586, %v6649, 0.0
    %v6680 = vadd.f32 %v6678, %v6679
    %v6681 = vsel %vm6586, %v6651, 0.0
    %v6682 = vadd.f32 %v6680, %v6681
    %v6683 = vsel %vm6586, %v6653, 0.0
    %v6684 = vadd.f32 %v6682, %v6683
    %v6685 = vsel %vm6586, %v6655, 0.0
    %v6686 = vadd.f32 %v6684, %v6685
    %v6687 = vsel %vm6586, %v6657, 0.0
    %v6688 = vadd.f32 %v6686, %v6687
    %v6689 = vsel %vm6586, %v6659, 0.0
    %v6690 = vadd.f32 %v6688, %v6689
    %v6691 = vsel %vm6586, %v6661, 0.0
    %v6692 = vadd.f32 %v6690, %v6691
    %v6693 = vsel %vm6586, %v6663, 0.0
    %v6694 = vadd.f32 %v6692, %v6693
    %v6695 = vsel %vm6586, %v6665, 0.0
    %v6696 = vadd.f32 %v6694, %v6695
    %v6697 = vsel %vm6586, %v6667, 0.0
    %v6698 = vadd.f32 %v6696, %v6697
    %6699 = vadd.xlane.f32.xlu0 %v6698
    %v6700 = vpop.xlane.xlu0 %6699
    %v6701 = vrcp.pop %v6700
    %v6702 = vmul.f32 %v6700, %v6701
    %v6703 = vsub.f32 1.0, %v6702
    %v6704 = vmul.f32 %v6701, %v6703
    %v6705 = vadd.f32 %v6701, %v6704
    %vm6706 = vweird.f32 %v6700
    %vm6707 = vweird.f32 %v6701
    %vm6708 = vmor %vm6706, %vm6707
    %v6709 = vsel %vm6708, %v6701, %v6705
    %v6710 = vand.u32 2147483647, %v6700
    %vm6711 = vcmp.eq.f32.partialorder %v6710, 8.507059e+37
    %v6712 = vand.u32 %v6700, 2147483648
    %v6713 = vor.u32 1.1754944e-38, %v6712
    %v6714 = vsel %vm6711, %v6713, %v6709
    %v6715 = vmul.f32 %v6637, %v6714
    %v6717 = vrot.slane %v6715, 3
    %6719 = vmatpush.msra.mxu0 %v2206
    %6720 = vmatpush.msra.mxu0 %v2205
    %6721 = vmatpush.msra.mxu0 %v2204
    %6722 = vmatpush.msra.mxu0 %v2203
    %6723 = vmatpush.msra.mxu0 %v2202
    %6724 = vmatpush.msra.mxu0 %v2201
    %6725 = vmatpush.msra.mxu0 %v2200
    %6726 = vmatpush.msra.mxu0 %v2199
    %6727 = vmatpush.msra.mxu0 %v2198
    %6728 = vmatpush.msra.mxu0 %v2197
    %6729 = vmatpush.msra.mxu0 %v2196
    %6730 = vmatpush.msra.mxu0 %v2195
    %6731 = vmatpush.msra.mxu0 %v2194
    %6732 = vmatpush.msra.mxu0 %v2193
    %6733 = vmatpush.msra.mxu0 %v2192
    %6734 = vmatpush.msra.mxu0 %v2191
    %6735 = vmatmul.f32.gmra.mxu0 %v6717
    %v6736 = vpop.f32.mrf.mxu0
    %v6737 = vadd.f32 0.0, %v6736
    %6738 = vdwg.mxu0
    %v6739 = vpack.c.bf16 %v6737, %v6737
    %6740 = vmatpush.bf16.msra.mxu0 %v4535
    %6741 = vmatpush.bf16.msra.mxu0 %v4534
    %6742 = vmatpush.bf16.msra.mxu0 %v4533
    %6743 = vmatpush.bf16.msra.mxu0 %v4532
    %6744 = vmatpush.bf16.msra.mxu0 %v4531
    %6745 = vmatpush.bf16.msra.mxu0 %v4530
    %6746 = vmatpush.bf16.msra.mxu0 %v4529
    %6747 = vmatpush.bf16.msra.mxu0 %v4528
    %6748 = vmatmul.bf16.gmra.mxu0 %v6739
    %v6749 = vpop.f32.mrf.mxu0
    %v6750 = vadd.f32 0.0, %v6749
    %v6751 = vpop.f32.mrf.mxu0
    %6752 = vdwg.mxu0
    %v6754 = vrot.slane %v6750, 5
    %v6756 = vadd.f32 %v3329, %v6754
    %v6757 = vmax.f32 %v6756, 0.0
    %v6758 = vpack.c.bf16 %v6757, %v6757
    %v6760 = vshrl.u32 %v6758, 16
    %v6762 = vrot.slane %v6760, 1
    %6764 = vmatpush.bf16.msra.mxu0 %v4694
    %6765 = vmatpush.bf16.msra.mxu0 %v4691
    %6766 = vmatpush.bf16.msra.mxu0 %v4688
    %6767 = vmatpush.bf16.msra.mxu0 %v4685
    %6768 = vmatpush.bf16.msra.mxu0 %v4682
    %6769 = vmatpush.bf16.msra.mxu0 %v4679
    %6770 = vmatpush.bf16.msra.mxu0 %v4676
    %6771 = vmatpush.bf16.msra.mxu0 %v4673
    %6772 = vmatmul.bf16.gmra.mxu0 %v6762
    %v6773 = vpop.f32.mrf.mxu0
    %v6774 = vadd.f32 %v4722, %v6773
    %v6775 = vpop.f32.mrf.mxu0
    %6776 = vdwg.mxu0
    %6777 = vmatpush.bf16.msra.mxu0 %v4695
    %6778 = vmatpush.bf16.msra.mxu0 %v4692
    %6779 = vmatpush.bf16.msra.mxu0 %v4689
    %6780 = vmatpush.bf16.msra.mxu0 %v4686
    %6781 = vmatpush.bf16.msra.mxu0 %v4683
    %6782 = vmatpush.bf16.msra.mxu0 %v4680
    %6783 = vmatpush.bf16.msra.mxu0 %v4677
    %6784 = vmatpush.bf16.msra.mxu0 %v4674
    %6785 = vmatmul.bf16.gmra.mxu0 %v6762
    %v6786 = vpop.f32.mrf.mxu0
    %v6787 = vadd.f32 %v4723, %v6786
    %v6788 = vpop.f32.mrf.mxu0
    %6789 = vdwg.mxu0
    %6790 = vmatpush.bf16.msra.mxu0 %v4696
    %6791 = vmatpush.bf16.msra.mxu0 %v4693
    %6792 = vmatpush.bf16.msra.mxu0 %v4690
    %6793 = vmatpush.bf16.msra.mxu0 %v4687
    %6794 = vmatpush.bf16.msra.mxu0 %v4684
    %6795 = vmatpush.bf16.msra.mxu0 %v4681
    %6796 = vmatpush.bf16.msra.mxu0 %v4678
    %6797 = vmatpush.bf16.msra.mxu0 %v4675
    %6798 = vmatmul.bf16.gmra.mxu0 %v6762
    %v6799 = vpop.f32.mrf.mxu0
    %v6800 = vadd.f32 %v4724, %v6799
    %v6801 = vpop.f32.mrf.mxu0
    %6802 = vdwg.mxu0
    %6803 = vmatpush.bf16.msra.mxu0 %v4901
    %6804 = vmatpush.bf16.msra.mxu0 %v4898
    %6805 = vmatpush.bf16.msra.mxu0 %v4895
    %6806 = vmatpush.bf16.msra.mxu0 %v4892
    %6807 = vmatpush.bf16.msra.mxu0 %v4889
    %6808 = vmatpush.bf16.msra.mxu0 %v4886
    %6809 = vmatpush.bf16.msra.mxu0 %v4883
    %6810 = vmatpush.bf16.msra.mxu0 %v4880
    %6811 = vmatmul.bf16.gmra.mxu0 %v6288
    %v6812 = vpop.f32.mrf.mxu0
    %v6813 = vadd.f32 %v4929, %v6812
    %v6814 = vpop.f32.mrf.mxu0
    %6815 = vdwg.mxu0
    %6816 = vmatpush.bf16.msra.mxu0 %v4902
    %6817 = vmatpush.bf16.msra.mxu0 %v4899
    %6818 = vmatpush.bf16.msra.mxu0 %v4896
    %6819 = vmatpush.bf16.msra.mxu0 %v4893
    %6820 = vmatpush.bf16.msra.mxu0 %v4890
    %6821 = vmatpush.bf16.msra.mxu0 %v4887
    %6822 = vmatpush.bf16.msra.mxu0 %v4884
    %6823 = vmatpush.bf16.msra.mxu0 %v4881
    %6824 = vmatmul.bf16.gmra.mxu0 %v6288
    %v6825 = vpop.f32.mrf.mxu0
    %v6826 = vadd.f32 %v4930, %v6825
    %v6827 = vpop.f32.mrf.mxu0
    %6828 = vdwg.mxu0
    %6829 = vmatpush.bf16.msra.mxu0 %v4903
    %6830 = vmatpush.bf16.msra.mxu0 %v4900
    %6831 = vmatpush.bf16.msra.mxu0 %v4897
    %6832 = vmatpush.bf16.msra.mxu0 %v4894
    %6833 = vmatpush.bf16.msra.mxu0 %v4891
    %6834 = vmatpush.bf16.msra.mxu0 %v4888
    %6835 = vmatpush.bf16.msra.mxu0 %v4885
    %6836 = vmatpush.bf16.msra.mxu0 %v4882
    %6837 = vmatmul.bf16.gmra.mxu0 %v6288
    %v6838 = vpop.f32.mrf.mxu0
    %v6839 = vadd.f32 %v4931, %v6838
    %v6840 = vpop.f32.mrf.mxu0
    %6841 = vdwg.mxu0
    %v6842 = vadd.f32 %v6774, %v6813
    %v6843 = vxor.u32 %v6842, 2147483648
    %v6844 = vmul.f32 %v6843, 1.442695
    %v6845 = vpow.pop %v6844
    %v6846 = vadd.f32 %v6845, 1.0
    %v6847 = vrcp.pop %v6846
    %v6848 = vmul.f32 %v6846, %v6847
    %v6849 = vsub.f32 1.0, %v6848
    %v6850 = vmul.f32 %v6847, %v6849
    %v6851 = vadd.f32 %v6847, %v6850
    %vm6852 = vweird.f32 %v6846
    %vm6853 = vweird.f32 %v6847
    %vm6854 = vmor %vm6852, %vm6853
    %v6855 = vsel %vm6854, %v6847, %v6851
    %v6856 = vand.u32 2147483647, %v6846
    %vm6857 = vcmp.eq.f32.partialorder %v6856, 8.507059e+37
    %v6858 = vand.u32 %v6846, 2147483648
    %v6859 = vor.u32 1.1754944e-38, %v6858
    %v6860 = vsel %vm6857, %v6859, %v6855
    %v6861 = vmul.f32 1.0, %v6860
    %v6862 = vadd.f32 %v6787, %v6826
    %v6863 = vxor.u32 %v6862, 2147483648
    %v6864 = vmul.f32 %v6863, 1.442695
    %v6865 = vpow.pop %v6864
    %v6866 = vadd.f32 %v6865, 1.0
    %v6867 = vrcp.pop %v6866
    %v6868 = vmul.f32 %v6866, %v6867
    %v6869 = vsub.f32 1.0, %v6868
    %v6870 = vmul.f32 %v6867, %v6869
    %v6871 = vadd.f32 %v6867, %v6870
    %vm6872 = vweird.f32 %v6866
    %vm6873 = vweird.f32 %v6867
    %vm6874 = vmor %vm6872, %vm6873
    %v6875 = vsel %vm6874, %v6867, %v6871
    %v6876 = vand.u32 2147483647, %v6866
    %vm6877 = vcmp.eq.f32.partialorder %v6876, 8.507059e+37
    %v6878 = vand.u32 %v6866, 2147483648
    %v6879 = vor.u32 1.1754944e-38, %v6878
    %v6880 = vsel %vm6877, %v6879, %v6875
    %v6881 = vmul.f32 1.0, %v6880
    %v6882 = vmul.f32 %v6861, %v6839
    %v6883 = vadd.f32 %v6800, %v6882
    %v6884 = vtanh.pop %v6883
    %v6885 = vsub.f32 1.0, %v6881
    %v6886 = vmul.f32 %v6885, %v6884
    %v6887 = vmul.f32 %v6881, %v6287
    %v6888 = vadd.f32 %v6886, %v6887
    %v6889 = vpack.c.bf16 %v6888, %v6888
    %6890 = vmatpush.bf16.msra.mxu0 %v5081
    %6891 = vmatpush.bf16.msra.mxu0 %v5080
    %6892 = vmatpush.bf16.msra.mxu0 %v5079
    %6893 = vmatpush.bf16.msra.mxu0 %v5078
    %6894 = vmatpush.bf16.msra.mxu0 %v5077
    %6895 = vmatpush.bf16.msra.mxu0 %v5076
    %6896 = vmatpush.bf16.msra.mxu0 %v5075
    %6897 = vmatpush.bf16.msra.mxu0 %v5074
    %6898 = vmatmul.bf16.gmra.mxu0 %v6889
    %v6899 = vpop.f32.mrf.mxu0
    %v6900 = vadd.f32 %v5041, %v6899
    %v6901 = vpop.f32.mrf.mxu0
    %6902 = vdwg.mxu0
    %v6903 = vsel %vm363, %v6900, -inf
    %6904 = vmax.xlane.f32.xlu0 %v6903
    %v6905 = vpop.xlane.xlu0 %6904
    %v6906 = vsub.f32 %v6900, %v6905
    %v6907 = vmul.f32 %v6906, 1.442695
    %v6908 = vpow.pop %v6907
    %v6909 = vsel %vm363, %v6908, 0.0
    %6910 = vadd.xlane.f32.xlu0 %v6909
    %v6911 = vpop.xlane.xlu0 %6910
    %v6912 = vlog2.pop %v6911
    %v6913 = vmul.f32 %v6912, 0.6931472
    %v6914 = vsub.f32 %v6906, %v6913
    %6915 = vmatpush.bf16.msra.mxu0 %v3962
    %6916 = vmatpush.bf16.msra.mxu0 %v3946
    %6917 = vmatpush.bf16.msra.mxu0 %v3930
    %6918 = vmatpush.bf16.msra.mxu0 %v3914
    %6919 = vmatpush.bf16.msra.mxu0 %v3898
    %6920 = vmatpush.bf16.msra.mxu0 %v3882
    %6921 = vmatpush.bf16.msra.mxu0 %v3866
    %6922 = vmatpush.bf16.msra.mxu0 %v3850
    %6923 = vmatmul.bf16.gmra.mxu0 %v6889
    %v6924 = vpop.f32.mrf.mxu0
    %v6925 = vadd.f32 0.0, %v6924
    %v6926 = vpop.f32.mrf.mxu0
    %6927 = vdwg.mxu0
    %6928 = vmatpush.bf16.msra.mxu0 %v3963
    %6929 = vmatpush.bf16.msra.mxu0 %v3947
    %6930 = vmatpush.bf16.msra.mxu0 %v3931
    %6931 = vmatpush.bf16.msra.mxu0 %v3915
    %6932 = vmatpush.bf16.msra.mxu0 %v3899
    %6933 = vmatpush.bf16.msra.mxu0 %v3883
    %6934 = vmatpush.bf16.msra.mxu0 %v3867
    %6935 = vmatpush.bf16.msra.mxu0 %v3851
    %6936 = vmatmul.bf16.gmra.mxu0 %v6889
    %v6937 = vpop.f32.mrf.mxu0
    %v6938 = vadd.f32 0.0, %v6937
    %v6939 = vpop.f32.mrf.mxu0
    %6940 = vdwg.mxu0
    %6941 = vmatpush.bf16.msra.mxu0 %v3964
    %6942 = vmatpush.bf16.msra.mxu0 %v3948
    %6943 = vmatpush.bf16.msra.mxu0 %v3932
    %6944 = vmatpush.bf16.msra.mxu0 %v3916
    %6945 = vmatpush.bf16.msra.mxu0 %v3900
    %6946 = vmatpush.bf16.msra.mxu0 %v3884
    %6947 = vmatpush.bf16.msra.mxu0 %v3868
    %6948 = vmatpush.bf16.msra.mxu0 %v3852
    %6949 = vmatmul.bf16.gmra.mxu0 %v6889
    %v6950 = vpop.f32.mrf.mxu0
    %v6951 = vadd.f32 0.0, %v6950
    %v6952 = vpop.f32.mrf.mxu0
    %6953 = vdwg.mxu0
    %6954 = vmatpush.bf16.msra.mxu0 %v3965
    %6955 = vmatpush.bf16.msra.mxu0 %v3949
    %6956 = vmatpush.bf16.msra.mxu0 %v3933
    %6957 = vmatpush.bf16.msra.mxu0 %v3917
    %6958 = vmatpush.bf16.msra.mxu0 %v3901
    %6959 = vmatpush.bf16.msra.mxu0 %v3885
    %6960 = vmatpush.bf16.msra.mxu0 %v3869
    %6961 = vmatpush.bf16.msra.mxu0 %v3853
    %6962 = vmatmul.bf16.gmra.mxu0 %v6889
    %v6963 = vpop.f32.mrf.mxu0
    %v6964 = vadd.f32 0.0, %v6963
    %v6965 = vpop.f32.mrf.mxu0
    %6966 = vdwg.mxu0
    %6967 = vmatpush.bf16.msra.mxu0 %v3966
    %6968 = vmatpush.bf16.msra.mxu0 %v3950
    %6969 = vmatpush.bf16.msra.mxu0 %v3934
    %6970 = vmatpush.bf16.msra.mxu0 %v3918
    %6971 = vmatpush.bf16.msra.mxu0 %v3902
    %6972 = vmatpush.bf16.msra.mxu0 %v3886
    %6973 = vmatpush.bf16.msra.mxu0 %v3870
    %6974 = vmatpush.bf16.msra.mxu0 %v3854
    %6975 = vmatmul.bf16.gmra.mxu0 %v6889
    %v6976 = vpop.f32.mrf.mxu0
    %v6977 = vadd.f32 0.0, %v6976
    %v6978 = vpop.f32.mrf.mxu0
    %6979 = vdwg.mxu0
    %6980 = vmatpush.bf16.msra.mxu0 %v3967
    %6981 = vmatpush.bf16.msra.mxu0 %v3951
    %6982 = vmatpush.bf16.msra.mxu0 %v3935
    %6983 = vmatpush.bf16.msra.mxu0 %v3919
    %6984 = vmatpush.bf16.msra.mxu0 %v3903
    %6985 = vmatpush.bf16.msra.mxu0 %v3887
    %6986 = vmatpush.bf16.msra.mxu0 %v3871
    %6987 = vmatpush.bf16.msra.mxu0 %v3855
    %6988 = vmatmul.bf16.gmra.mxu0 %v6889
    %v6989 = vpop.f32.mrf.mxu0
    %v6990 = vadd.f32 0.0, %v6989
    %v6991 = vpop.f32.mrf.mxu0
    %6992 = vdwg.mxu0
    %6993 = vmatpush.bf16.msra.mxu0 %v3968
    %6994 = vmatpush.bf16.msra.mxu0 %v3952
    %6995 = vmatpush.bf16.msra.mxu0 %v3936
    %6996 = vmatpush.bf16.msra.mxu0 %v3920
    %6997 = vmatpush.bf16.msra.mxu0 %v3904
    %6998 = vmatpush.bf16.msra.mxu0 %v3888
    %6999 = vmatpush.bf16.msra.mxu0 %v3872
    %7000 = vmatpush.bf16.msra.mxu0 %v3856
    %7001 = vmatmul.bf16.gmra.mxu0 %v6889
    %v7002 = vpop.f32.mrf.mxu0
    %v7003 = vadd.f32 0.0, %v7002
    %v7004 = vpop.f32.mrf.mxu0
    %7005 = vdwg.mxu0
    %7006 = vmatpush.bf16.msra.mxu0 %v3969
    %7007 = vmatpush.bf16.msra.mxu0 %v3953
    %7008 = vmatpush.bf16.msra.mxu0 %v3937
    %7009 = vmatpush.bf16.msra.mxu0 %v3921
    %7010 = vmatpush.bf16.msra.mxu0 %v3905
    %7011 = vmatpush.bf16.msra.mxu0 %v3889
    %7012 = vmatpush.bf16.msra.mxu0 %v3873
    %7013 = vmatpush.bf16.msra.mxu0 %v3857
    %7014 = vmatmul.bf16.gmra.mxu0 %v6889
    %v7015 = vpop.f32.mrf.mxu0
    %v7016 = vadd.f32 0.0, %v7015
    %v7017 = vpop.f32.mrf.mxu0
    %7018 = vdwg.mxu0
    %7019 = vmatpush.bf16.msra.mxu0 %v3970
    %7020 = vmatpush.bf16.msra.mxu0 %v3954
    %7021 = vmatpush.bf16.msra.mxu0 %v3938
    %7022 = vmatpush.bf16.msra.mxu0 %v3922
    %7023 = vmatpush.bf16.msra.mxu0 %v3906
    %7024 = vmatpush.bf16.msra.mxu0 %v3890
    %7025 = vmatpush.bf16.msra.mxu0 %v3874
    %7026 = vmatpush.bf16.msra.mxu0 %v3858
    %7027 = vmatmul.bf16.gmra.mxu0 %v6889
    %v7028 = vpop.f32.mrf.mxu0
    %v7029 = vadd.f32 0.0, %v7028
    %v7030 = vpop.f32.mrf.mxu0
    %7031 = vdwg.mxu0
    %7032 = vmatpush.bf16.msra.mxu0 %v3971
    %7033 = vmatpush.bf16.msra.mxu0 %v3955
    %7034 = vmatpush.bf16.msra.mxu0 %v3939
    %7035 = vmatpush.bf16.msra.mxu0 %v3923
    %7036 = vmatpush.bf16.msra.mxu0 %v3907
    %7037 = vmatpush.bf16.msra.mxu0 %v3891
    %7038 = vmatpush.bf16.msra.mxu0 %v3875
    %7039 = vmatpush.bf16.msra.mxu0 %v3859
    %7040 = vmatmul.bf16.gmra.mxu0 %v6889
    %v7041 = vpop.f32.mrf.mxu0
    %v7042 = vadd.f32 0.0, %v7041
    %v7043 = vpop.f32.mrf.mxu0
    %7044 = vdwg.mxu0
    %7045 = vmatpush.bf16.msra.mxu0 %v3972
    %7046 = vmatpush.bf16.msra.mxu0 %v3956
    %7047 = vmatpush.bf16.msra.mxu0 %v3940
    %7048 = vmatpush.bf16.msra.mxu0 %v3924
    %7049 = vmatpush.bf16.msra.mxu0 %v3908
    %7050 = vmatpush.bf16.msra.mxu0 %v3892
    %7051 = vmatpush.bf16.msra.mxu0 %v3876
    %7052 = vmatpush.bf16.msra.mxu0 %v3860
    %7053 = vmatmul.bf16.gmra.mxu0 %v6889
    %v7054 = vpop.f32.mrf.mxu0
    %v7055 = vadd.f32 0.0, %v7054
    %v7056 = vpop.f32.mrf.mxu0
    %7057 = vdwg.mxu0
    %7058 = vmatpush.bf16.msra.mxu0 %v3973
    %7059 = vmatpush.bf16.msra.mxu0 %v3957
    %7060 = vmatpush.bf16.msra.mxu0 %v3941
    %7061 = vmatpush.bf16.msra.mxu0 %v3925
    %7062 = vmatpush.bf16.msra.mxu0 %v3909
    %7063 = vmatpush.bf16.msra.mxu0 %v3893
    %7064 = vmatpush.bf16.msra.mxu0 %v3877
    %7065 = vmatpush.bf16.msra.mxu0 %v3861
    %7066 = vmatmul.bf16.gmra.mxu0 %v6889
    %v7067 = vpop.f32.mrf.mxu0
    %v7068 = vadd.f32 0.0, %v7067
    %v7069 = vpop.f32.mrf.mxu0
    %7070 = vdwg.mxu0
    %7071 = vmatpush.bf16.msra.mxu0 %v3974
    %7072 = vmatpush.bf16.msra.mxu0 %v3958
    %7073 = vmatpush.bf16.msra.mxu0 %v3942
    %7074 = vmatpush.bf16.msra.mxu0 %v3926
    %7075 = vmatpush.bf16.msra.mxu0 %v3910
    %7076 = vmatpush.bf16.msra.mxu0 %v3894
    %7077 = vmatpush.bf16.msra.mxu0 %v3878
    %7078 = vmatpush.bf16.msra.mxu0 %v3862
    %7079 = vmatmul.bf16.gmra.mxu0 %v6889
    %v7080 = vpop.f32.mrf.mxu0
    %v7081 = vadd.f32 0.0, %v7080
    %v7082 = vpop.f32.mrf.mxu0
    %7083 = vdwg.mxu0
    %7084 = vmatpush.bf16.msra.mxu0 %v3975
    %7085 = vmatpush.bf16.msra.mxu0 %v3959
    %7086 = vmatpush.bf16.msra.mxu0 %v3943
    %7087 = vmatpush.bf16.msra.mxu0 %v3927
    %7088 = vmatpush.bf16.msra.mxu0 %v3911
    %7089 = vmatpush.bf16.msra.mxu0 %v3895
    %7090 = vmatpush.bf16.msra.mxu0 %v3879
    %7091 = vmatpush.bf16.msra.mxu0 %v3863
    %7092 = vmatmul.bf16.gmra.mxu0 %v6889
    %v7093 = vpop.f32.mrf.mxu0
    %v7094 = vadd.f32 0.0, %v7093
    %v7095 = vpop.f32.mrf.mxu0
    %7096 = vdwg.mxu0
    %7097 = vmatpush.bf16.msra.mxu0 %v3976
    %7098 = vmatpush.bf16.msra.mxu0 %v3960
    %7099 = vmatpush.bf16.msra.mxu0 %v3944
    %7100 = vmatpush.bf16.msra.mxu0 %v3928
    %7101 = vmatpush.bf16.msra.mxu0 %v3912
    %7102 = vmatpush.bf16.msra.mxu0 %v3896
    %7103 = vmatpush.bf16.msra.mxu0 %v3880
    %7104 = vmatpush.bf16.msra.mxu0 %v3864
    %7105 = vmatmul.bf16.gmra.mxu0 %v6889
    %v7106 = vpop.f32.mrf.mxu0
    %v7107 = vadd.f32 0.0, %v7106
    %v7108 = vpop.f32.mrf.mxu0
    %7109 = vdwg.mxu0
    %7110 = vmatpush.bf16.msra.mxu0 %v3977
    %7111 = vmatpush.bf16.msra.mxu0 %v3961
    %7112 = vmatpush.bf16.msra.mxu0 %v3945
    %7113 = vmatpush.bf16.msra.mxu0 %v3929
    %7114 = vmatpush.bf16.msra.mxu0 %v3913
    %7115 = vmatpush.bf16.msra.mxu0 %v3897
    %7116 = vmatpush.bf16.msra.mxu0 %v3881
    %7117 = vmatpush.bf16.msra.mxu0 %v3865
    %7118 = vmatmul.bf16.gmra.mxu0 %v6889
    %v7119 = vpop.f32.mrf.mxu0
    %v7120 = vadd.f32 0.0, %v7119
    %v7121 = vpop.f32.mrf.mxu0
    %7122 = vdwg.mxu0
    %v7139 = vrot.slane %v6925, 4
    %v7140 = vrot.slane %v6938, 4
    %v7141 = vrot.slane %v6951, 4
    %v7142 = vrot.slane %v6964, 4
    %v7143 = vrot.slane %v6977, 4
    %v7144 = vrot.slane %v6990, 4
    %v7145 = vrot.slane %v7003, 4
    %v7146 = vrot.slane %v7016, 4
    %v7147 = vrot.slane %v7029, 4
    %v7148 = vrot.slane %v7042, 4
    %v7149 = vrot.slane %v7055, 4
    %v7150 = vrot.slane %v7068, 4
    %v7151 = vrot.slane %v7081, 4
    %v7152 = vrot.slane %v7094, 4
    %v7153 = vrot.slane %v7107, 4
    %v7154 = vrot.slane %v7120, 4
    %v7171 = vadd.f32 %v3053, %v7139
    %v7172 = vadd.f32 %v3066, %v7140
    %v7173 = vadd.f32 %v3079, %v7141
    %v7174 = vadd.f32 %v3092, %v7142
    %v7175 = vadd.f32 %v3105, %v7143
    %v7176 = vadd.f32 %v3118, %v7144
    %v7177 = vadd.f32 %v3131, %v7145
    %v7178 = vadd.f32 %v3144, %v7146
    %v7179 = vadd.f32 %v3157, %v7147
    %v7180 = vadd.f32 %v3170, %v7148
    %v7181 = vadd.f32 %v3183, %v7149
    %v7182 = vadd.f32 %v3196, %v7150
    %v7183 = vadd.f32 %v3209, %v7151
    %v7184 = vadd.f32 %v3222, %v7152
    %v7185 = vadd.f32 %v3235, %v7153
    %v7186 = vadd.f32 %v3248, %v7154
    %vm7187 = vcmask 1044484
    %v7188 = vsel %vm7187, %v7171, -inf
    %v7189 = vsel %vm7187, %v7172, -inf
    %v7190 = vsel %vm7187, %v7173, -inf
    %v7191 = vsel %vm7187, %v7174, -inf
    %v7192 = vsel %vm7187, %v7175, -inf
    %v7193 = vmax.f32 %v7188, %v7192
    %v7194 = vsel %vm7187, %v7176, -inf
    %v7195 = vmax.f32 %v7189, %v7194
    %v7196 = vsel %vm7187, %v7177, -inf
    %v7197 = vmax.f32 %v7190, %v7196
    %v7198 = vsel %vm7187, %v7178, -inf
    %v7199 = vmax.f32 %v7191, %v7198
    %v7200 = vsel %vm7187, %v7179, -inf
    %v7201 = vmax.f32 %v7193, %v7200
    %v7202 = vsel %vm7187, %v7180, -inf
    %v7203 = vmax.f32 %v7195, %v7202
    %v7204 = vsel %vm7187, %v7181, -inf
    %v7205 = vmax.f32 %v7197, %v7204
    %v7206 = vsel %vm7187, %v7182, -inf
    %v7207 = vmax.f32 %v7199, %v7206
    %v7208 = vsel %vm7187, %v7183, -inf
    %v7209 = vmax.f32 %v7201, %v7208
    %v7210 = vsel %vm7187, %v7184, -inf
    %v7211 = vmax.f32 %v7203, %v7210
    %v7212 = vsel %vm7187, %v7185, -inf
    %v7213 = vmax.f32 %v7205, %v7212
    %v7214 = vsel %vm7187, %v7186, -inf
    %v7215 = vmax.f32 %v7207, %v7214
    %v7216 = vmax.f32 %v7209, %v7211
    %v7217 = vmax.f32 %v7213, %v7215
    %v7218 = vmax.f32 %v7216, %v7217
    %7219 = vmax.xlane.f32.xlu0 %v7218
    %v7220 = vpop.xlane.xlu0 %7219
    %v7221 = vsub.f32 %v7171, %v7220
    %v7222 = vsub.f32 %v7172, %v7220
    %v7223 = vsub.f32 %v7173, %v7220
    %v7224 = vsub.f32 %v7174, %v7220
    %v7225 = vsub.f32 %v7175, %v7220
    %v7226 = vsub.f32 %v7176, %v7220
    %v7227 = vsub.f32 %v7177, %v7220
    %v7228 = vsub.f32 %v7178, %v7220
    %v7229 = vsub.f32 %v7179, %v7220
    %v7230 = vsub.f32 %v7180, %v7220
    %v7231 = vsub.f32 %v7181, %v7220
    %v7232 = vsub.f32 %v7182, %v7220
    %v7233 = vsub.f32 %v7183, %v7220
    %v7234 = vsub.f32 %v7184, %v7220
    %v7235 = vsub.f32 %v7185, %v7220
    %v7236 = vsub.f32 %v7186, %v7220
    %v7237 = vmul.f32 %v7221, 1.442695
    %v7238 = vpow.pop %v7237
    %v7239 = vmul.f32 %v7222, 1.442695
    %v7240 = vpow.pop %v7239
    %v7241 = vmul.f32 %v7223, 1.442695
    %v7242 = vpow.pop %v7241
    %v7243 = vmul.f32 %v7224, 1.442695
    %v7244 = vpow.pop %v7243
    %v7245 = vmul.f32 %v7225, 1.442695
    %v7246 = vpow.pop %v7245
    %v7247 = vmul.f32 %v7226, 1.442695
    %v7248 = vpow.pop %v7247
    %v7249 = vmul.f32 %v7227, 1.442695
    %v7250 = vpow.pop %v7249
    %v7251 = vmul.f32 %v7228, 1.442695
    %v7252 = vpow.pop %v7251
    %v7253 = vmul.f32 %v7229, 1.442695
    %v7254 = vpow.pop %v7253
    %v7255 = vmul.f32 %v7230, 1.442695
    %v7256 = vpow.pop %v7255
    %v7257 = vmul.f32 %v7231, 1.442695
    %v7258 = vpow.pop %v7257
    %v7259 = vmul.f32 %v7232, 1.442695
    %v7260 = vpow.pop %v7259
    %v7261 = vmul.f32 %v7233, 1.442695
    %v7262 = vpow.pop %v7261
    %v7263 = vmul.f32 %v7234, 1.442695
    %v7264 = vpow.pop %v7263
    %v7265 = vmul.f32 %v7235, 1.442695
    %v7266 = vpow.pop %v7265
    %v7267 = vmul.f32 %v7236, 1.442695
    %v7268 = vpow.pop %v7267
    %v7269 = vsel %vm7187, %v7238, 0.0
    %v7270 = vsel %vm7187, %v7240, 0.0
    %v7271 = vadd.f32 %v7269, %v7270
    %v7272 = vsel %vm7187, %v7242, 0.0
    %v7273 = vadd.f32 %v7271, %v7272
    %v7274 = vsel %vm7187, %v7244, 0.0
    %v7275 = vadd.f32 %v7273, %v7274
    %v7276 = vsel %vm7187, %v7246, 0.0
    %v7277 = vadd.f32 %v7275, %v7276
    %v7278 = vsel %vm7187, %v7248, 0.0
    %v7279 = vadd.f32 %v7277, %v7278
    %v7280 = vsel %vm7187, %v7250, 0.0
    %v7281 = vadd.f32 %v7279, %v7280
    %v7282 = vsel %vm7187, %v7252, 0.0
    %v7283 = vadd.f32 %v7281, %v7282
    %v7284 = vsel %vm7187, %v7254, 0.0
    %v7285 = vadd.f32 %v7283, %v7284
    %v7286 = vsel %vm7187, %v7256, 0.0
    %v7287 = vadd.f32 %v7285, %v7286
    %v7288 = vsel %vm7187, %v7258, 0.0
    %v7289 = vadd.f32 %v7287, %v7288
    %v7290 = vsel %vm7187, %v7260, 0.0
    %v7291 = vadd.f32 %v7289, %v7290
    %v7292 = vsel %vm7187, %v7262, 0.0
    %v7293 = vadd.f32 %v7291, %v7292
    %v7294 = vsel %vm7187, %v7264, 0.0
    %v7295 = vadd.f32 %v7293, %v7294
    %v7296 = vsel %vm7187, %v7266, 0.0
    %v7297 = vadd.f32 %v7295, %v7296
    %v7298 = vsel %vm7187, %v7268, 0.0
    %v7299 = vadd.f32 %v7297, %v7298
    %7300 = vadd.xlane.f32.xlu0 %v7299
    %v7301 = vpop.xlane.xlu0 %7300
    %v7302 = vrcp.pop %v7301
    %v7303 = vmul.f32 %v7301, %v7302
    %v7304 = vsub.f32 1.0, %v7303
    %v7305 = vmul.f32 %v7302, %v7304
    %v7306 = vadd.f32 %v7302, %v7305
    %vm7307 = vweird.f32 %v7301
    %vm7308 = vweird.f32 %v7302
    %vm7309 = vmor %vm7307, %vm7308
    %v7310 = vsel %vm7309, %v7302, %v7306
    %v7311 = vand.u32 2147483647, %v7301
    %vm7312 = vcmp.eq.f32.partialorder %v7311, 8.507059e+37
    %v7313 = vand.u32 %v7301, 2147483648
    %v7314 = vor.u32 1.1754944e-38, %v7313
    %v7315 = vsel %vm7312, %v7314, %v7310
    %v7316 = vmul.f32 %v7238, %v7315
    %v7318 = vrot.slane %v7316, 4
    %7320 = vmatpush.msra.mxu0 %v2206
    %7321 = vmatpush.msra.mxu0 %v2205
    %7322 = vmatpush.msra.mxu0 %v2204
    %7323 = vmatpush.msra.mxu0 %v2203
    %7324 = vmatpush.msra.mxu0 %v2202
    %7325 = vmatpush.msra.mxu0 %v2201
    %7326 = vmatpush.msra.mxu0 %v2200
    %7327 = vmatpush.msra.mxu0 %v2199
    %7328 = vmatpush.msra.mxu0 %v2198
    %7329 = vmatpush.msra.mxu0 %v2197
    %7330 = vmatpush.msra.mxu0 %v2196
    %7331 = vmatpush.msra.mxu0 %v2195
    %7332 = vmatpush.msra.mxu0 %v2194
    %7333 = vmatpush.msra.mxu0 %v2193
    %7334 = vmatpush.msra.mxu0 %v2192
    %7335 = vmatpush.msra.mxu0 %v2191
    %7336 = vmatmul.f32.gmra.mxu0 %v7318
    %v7337 = vpop.f32.mrf.mxu0
    %v7338 = vadd.f32 0.0, %v7337
    %7339 = vdwg.mxu0
    %v7340 = vpack.c.bf16 %v7338, %v7338
    %7341 = vmatpush.bf16.msra.mxu0 %v4535
    %7342 = vmatpush.bf16.msra.mxu0 %v4534
    %7343 = vmatpush.bf16.msra.mxu0 %v4533
    %7344 = vmatpush.bf16.msra.mxu0 %v4532
    %7345 = vmatpush.bf16.msra.mxu0 %v4531
    %7346 = vmatpush.bf16.msra.mxu0 %v4530
    %7347 = vmatpush.bf16.msra.mxu0 %v4529
    %7348 = vmatpush.bf16.msra.mxu0 %v4528
    %7349 = vmatmul.bf16.gmra.mxu0 %v7340
    %v7350 = vpop.f32.mrf.mxu0
    %v7351 = vadd.f32 0.0, %v7350
    %v7352 = vpop.f32.mrf.mxu0
    %7353 = vdwg.mxu0
    %v7355 = vrot.slane %v7351, 4
    %v7357 = vadd.f32 %v3329, %v7355
    %v7358 = vmax.f32 %v7357, 0.0
    %v7359 = vpack.c.bf16 %v7358, %v7358
    %v7361 = vrot.slane %v7359, 2
    %7363 = vmatpush.bf16.msra.mxu0 %v4694
    %7364 = vmatpush.bf16.msra.mxu0 %v4691
    %7365 = vmatpush.bf16.msra.mxu0 %v4688
    %7366 = vmatpush.bf16.msra.mxu0 %v4685
    %7367 = vmatpush.bf16.msra.mxu0 %v4682
    %7368 = vmatpush.bf16.msra.mxu0 %v4679
    %7369 = vmatpush.bf16.msra.mxu0 %v4676
    %7370 = vmatpush.bf16.msra.mxu0 %v4673
    %7371 = vmatmul.bf16.gmra.mxu0 %v7361
    %v7372 = vpop.f32.mrf.mxu0
    %v7373 = vadd.f32 %v4722, %v7372
    %v7374 = vpop.f32.mrf.mxu0
    %7375 = vdwg.mxu0
    %7376 = vmatpush.bf16.msra.mxu0 %v4695
    %7377 = vmatpush.bf16.msra.mxu0 %v4692
    %7378 = vmatpush.bf16.msra.mxu0 %v4689
    %7379 = vmatpush.bf16.msra.mxu0 %v4686
    %7380 = vmatpush.bf16.msra.mxu0 %v4683
    %7381 = vmatpush.bf16.msra.mxu0 %v4680
    %7382 = vmatpush.bf16.msra.mxu0 %v4677
    %7383 = vmatpush.bf16.msra.mxu0 %v4674
    %7384 = vmatmul.bf16.gmra.mxu0 %v7361
    %v7385 = vpop.f32.mrf.mxu0
    %v7386 = vadd.f32 %v4723, %v7385
    %v7387 = vpop.f32.mrf.mxu0
    %7388 = vdwg.mxu0
    %7389 = vmatpush.bf16.msra.mxu0 %v4696
    %7390 = vmatpush.bf16.msra.mxu0 %v4693
    %7391 = vmatpush.bf16.msra.mxu0 %v4690
    %7392 = vmatpush.bf16.msra.mxu0 %v4687
    %7393 = vmatpush.bf16.msra.mxu0 %v4684
    %7394 = vmatpush.bf16.msra.mxu0 %v4681
    %7395 = vmatpush.bf16.msra.mxu0 %v4678
    %7396 = vmatpush.bf16.msra.mxu0 %v4675
    %7397 = vmatmul.bf16.gmra.mxu0 %v7361
    %v7398 = vpop.f32.mrf.mxu0
    %v7399 = vadd.f32 %v4724, %v7398
    %v7400 = vpop.f32.mrf.mxu0
    %7401 = vdwg.mxu0
    %7402 = vmatpush.bf16.msra.mxu0 %v4901
    %7403 = vmatpush.bf16.msra.mxu0 %v4898
    %7404 = vmatpush.bf16.msra.mxu0 %v4895
    %7405 = vmatpush.bf16.msra.mxu0 %v4892
    %7406 = vmatpush.bf16.msra.mxu0 %v4889
    %7407 = vmatpush.bf16.msra.mxu0 %v4886
    %7408 = vmatpush.bf16.msra.mxu0 %v4883
    %7409 = vmatpush.bf16.msra.mxu0 %v4880
    %7410 = vmatmul.bf16.gmra.mxu0 %v6889
    %v7411 = vpop.f32.mrf.mxu0
    %v7412 = vadd.f32 %v4929, %v7411
    %v7413 = vpop.f32.mrf.mxu0
    %7414 = vdwg.mxu0
    %7415 = vmatpush.bf16.msra.mxu0 %v4902
    %7416 = vmatpush.bf16.msra.mxu0 %v4899
    %7417 = vmatpush.bf16.msra.mxu0 %v4896
    %7418 = vmatpush.bf16.msra.mxu0 %v4893
    %7419 = vmatpush.bf16.msra.mxu0 %v4890
    %7420 = vmatpush.bf16.msra.mxu0 %v4887
    %7421 = vmatpush.bf16.msra.mxu0 %v4884
    %7422 = vmatpush.bf16.msra.mxu0 %v4881
    %7423 = vmatmul.bf16.gmra.mxu0 %v6889
    %v7424 = vpop.f32.mrf.mxu0
    %v7425 = vadd.f32 %v4930, %v7424
    %v7426 = vpop.f32.mrf.mxu0
    %7427 = vdwg.mxu0
    %7428 = vmatpush.bf16.msra.mxu0 %v4903
    %7429 = vmatpush.bf16.msra.mxu0 %v4900
    %7430 = vmatpush.bf16.msra.mxu0 %v4897
    %7431 = vmatpush.bf16.msra.mxu0 %v4894
    %7432 = vmatpush.bf16.msra.mxu0 %v4891
    %7433 = vmatpush.bf16.msra.mxu0 %v4888
    %7434 = vmatpush.bf16.msra.mxu0 %v4885
    %7435 = vmatpush.bf16.msra.mxu0 %v4882
    %7436 = vmatmul.bf16.gmra.mxu0 %v6889
    %v7437 = vpop.f32.mrf.mxu0
    %v7438 = vadd.f32 %v4931, %v7437
    %v7439 = vpop.f32.mrf.mxu0
    %7440 = vdwg.mxu0
    %v7441 = vadd.f32 %v7373, %v7412
    %v7442 = vxor.u32 %v7441, 2147483648
    %v7443 = vmul.f32 %v7442, 1.442695
    %v7444 = vpow.pop %v7443
    %v7445 = vadd.f32 %v7444, 1.0
    %v7446 = vrcp.pop %v7445
    %v7447 = vmul.f32 %v7445, %v7446
    %v7448 = vsub.f32 1.0, %v7447
    %v7449 = vmul.f32 %v7446, %v7448
    %v7450 = vadd.f32 %v7446, %v7449
    %vm7451 = vweird.f32 %v7445
    %vm7452 = vweird.f32 %v7446
    %vm7453 = vmor %vm7451, %vm7452
    %v7454 = vsel %vm7453, %v7446, %v7450
    %v7455 = vand.u32 2147483647, %v7445
    %vm7456 = vcmp.eq.f32.partialorder %v7455, 8.507059e+37
    %v7457 = vand.u32 %v7445, 2147483648
    %v7458 = vor.u32 1.1754944e-38, %v7457
    %v7459 = vsel %vm7456, %v7458, %v7454
    %v7460 = vmul.f32 1.0, %v7459
    %v7461 = vadd.f32 %v7386, %v7425
    %v7462 = vxor.u32 %v7461, 2147483648
    %v7463 = vmul.f32 %v7462, 1.442695
    %v7464 = vpow.pop %v7463
    %v7465 = vadd.f32 %v7464, 1.0
    %v7466 = vrcp.pop %v7465
    %v7467 = vmul.f32 %v7465, %v7466
    %v7468 = vsub.f32 1.0, %v7467
    %v7469 = vmul.f32 %v7466, %v7468
    %v7470 = vadd.f32 %v7466, %v7469
    %vm7471 = vweird.f32 %v7465
    %vm7472 = vweird.f32 %v7466
    %vm7473 = vmor %vm7471, %vm7472
    %v7474 = vsel %vm7473, %v7466, %v7470
    %v7475 = vand.u32 2147483647, %v7465
    %vm7476 = vcmp.eq.f32.partialorder %v7475, 8.507059e+37
    %v7477 = vand.u32 %v7465, 2147483648
    %v7478 = vor.u32 1.1754944e-38, %v7477
    %v7479 = vsel %vm7476, %v7478, %v7474
    %v7480 = vmul.f32 1.0, %v7479
    %v7481 = vmul.f32 %v7460, %v7438
    %v7482 = vadd.f32 %v7399, %v7481
    %v7483 = vtanh.pop %v7482
    %v7484 = vsub.f32 1.0, %v7480
    %v7485 = vmul.f32 %v7484, %v7483
    %v7486 = vmul.f32 %v7480, %v6888
    %v7487 = vadd.f32 %v7485, %v7486
    %v7488 = vpack.c.bf16 %v7487, %v7487
    %7489 = vmatpush.bf16.msra.mxu0 %v5081
    %7490 = vmatpush.bf16.msra.mxu0 %v5080
    %7491 = vmatpush.bf16.msra.mxu0 %v5079
    %7492 = vmatpush.bf16.msra.mxu0 %v5078
    %7493 = vmatpush.bf16.msra.mxu0 %v5077
    %7494 = vmatpush.bf16.msra.mxu0 %v5076
    %7495 = vmatpush.bf16.msra.mxu0 %v5075
    %7496 = vmatpush.bf16.msra.mxu0 %v5074
    %7497 = vmatmul.bf16.gmra.mxu0 %v7488
    %v7498 = vpop.f32.mrf.mxu0
    %v7499 = vadd.f32 %v5041, %v7498
    %v7500 = vpop.f32.mrf.mxu0
    %7501 = vdwg.mxu0
    %v7502 = vsel %vm363, %v7499, -inf
    %7503 = vmax.xlane.f32.xlu0 %v7502
    %v7504 = vpop.xlane.xlu0 %7503
    %v7505 = vsub.f32 %v7499, %v7504
    %v7506 = vmul.f32 %v7505, 1.442695
    %v7507 = vpow.pop %v7506
    %v7508 = vsel %vm363, %v7507, 0.0
    %7509 = vadd.xlane.f32.xlu0 %v7508
    %v7510 = vpop.xlane.xlu0 %7509
    %v7511 = vlog2.pop %v7510
    %v7512 = vmul.f32 %v7511, 0.6931472
    %v7513 = vsub.f32 %v7505, %v7512
    %v7515 = vrot.slane %v5714, 7
    %v7518 = vrot.slane %v6313, 6
    %v7521 = vrot.slane %v6914, 5
    %v7524 = vrot.slane %v7513, 4
    %v7526 = vsel %vm363, %v5114, %v7515
    %v7527 = vsel %vm365, %v7526, %v7518
    %v7528 = vsel %vm367, %v7527, %v7521
    %v7529 = vsel %vm369, %v7528, %v7524
    %7530 = vst [vmem:[%s20] sm:$0x1f] %v7529
    // Predicated region
    $region138: #{seq_to_seq_forward.1} parent=1 // pred_check
      _
    $region139: #{seq_to_seq_forward.1} parent=1 // pred_check_branch
      %7532 = sbr.rel (0) target = $region141
    $region140: #{seq_to_seq_forward.1} parent=1 // pred_region
      _
    $region141: #{seq_to_seq_forward.1} parent=1 // pred_fallthru
      _
    // Predicated region
    $region142: #{seq_to_seq_forward.1} parent=1 // pred_check
      _
    $region143: #{seq_to_seq_forward.1} parent=1 // pred_check_branch
      %7534 = sbr.rel (0) target = $region145
    $region144: #{seq_to_seq_forward.1} parent=1 // pred_region
      _
    $region145: #{seq_to_seq_forward.1} parent=1 // pred_fallthru
      _
    %7535 = vsyncpa [#allocation7], 1
    %7536 = vsyncpa [#allocation9], 1
    %7537 = vsyncpa [#allocation12], 1
    %7538 = vsyncpa [#allocation15], 1
    %7539 = vsyncpa [#allocation18], 1
    %7540 = vsyncpa [#allocation21], 1
    %7541 = vsyncpa [#allocation24], 1
    %7542 = vsyncpa [#allocation27], 1
    %7543 = vsyncpa [#allocation30], 1

</llo_original>
